<compile_context>
chip_gen: v5e
topology: v5e:2x2
jax: 0.10.0
libtpu: 0.0.40
codegen_flags: <defaults>
</compile_context>

<pallas_src>
import jax
import jax.numpy as jnp
from jax.experimental import pallas as pl
from jax.experimental.pallas import tpu as pltpu

M_DIM = 500
L_DIM = 128
NUM_CLASSES = 4
_VMEM_LIMIT = 48 * 1024 * 1024     # <= 64 MiB (v7x per-TC), << 128 MiB (v5e/v6e)


def _round_up(x, m):
    return ((x + m - 1) // m) * m


def _row_tile(rows, max_tile, align=16):
    """Pick a row tile: multiple of `align`, capped at max_tile and at
    ceil(rows/2) (so "parallel" grids get >=2 steps for v7x's two TCs).
    Falls back to the full row count (a full-dim block) when rows are too few
    to split."""
    half = -(-rows // 2)
    t = min(max_tile, _round_up(max(half, 1), align))
    return rows if t >= rows else t


# ---------------------------------------------------------------------------
# Glue: pool-grouped im2col patches built directly from the NHWC activation
# in ONE strided-slice gather (no intermediate im2col array, no transpose
# pass, no padding).
#   pg[g=(dr,dc), (b,ph,pw), (i,j,c)] = x[b, 2*ph+dr+i, 2*pw+dc+j, c]
# Feature order (kh, kw, cin) matches the conv weight row order at init.
# ---------------------------------------------------------------------------
def grouped_patches(x, k):
    B, H, W, C = x.shape
    OH, OW = H - k + 1, W - k + 1
    PH, PW = OH // 2, OW // 2
    slabs = []
    for dr in range(2):
        for dc in range(2):
            taps = []
            for i in range(k):
                for j in range(k):
                    a, b = dr + i, dc + j
                    taps.append(jax.lax.slice(
                        x, (0, a, b, 0),
                        (B, a + 2 * PH - 1, b + 2 * PW - 1, C),
                        (1, 2, 2, 1)))
            slabs.append(jnp.concatenate(taps, axis=-1).reshape(B * PH * PW, k * k * C))
    return jnp.stack(slabs, axis=0), (PH, PW)


# ---------------------------------------------------------------------------
# Kernel 1: conv (im2col GEMM) + bias + ReLU + 2x2/stride-2 max-pool.
# p_ref: (4, TR, F) bf16 -- the 4 positions of each pooling window, row-tiled.
# One tall GEMM (M = 4*TR), max over the 4 position slabs, then bias+ReLU once
# (max_g relu(d_g + b) == relu(max_g d_g + b)).
# ---------------------------------------------------------------------------
def conv_relu_pool_kernel(p_ref, w_ref, b_ref, o_ref):
    g, tr, f = p_ref.shape
    p = p_ref[...].reshape(g * tr, f)                                  # tall M
    y = jnp.dot(p, w_ref[...], preferred_element_type=jnp.float32)    # (4*TR, Cout)
    m = y[0:tr]
    for gg in range(1, g):
        m = jnp.maximum(m, y[gg * tr:(gg + 1) * tr])
    o_ref[...] = jnp.maximum(m + b_ref[...], 0.0).astype(o_ref.dtype)


def conv_relu_pool(patches_g, w, b, row_tile):
    G, R, F = patches_g.shape
    cout = w.shape[1]
    tr = _row_tile(R, row_tile)            # R is always a multiple of 16 here
    return pl.pallas_call(
        conv_relu_pool_kernel,
        grid=(pl.cdiv(R, tr),),
        in_specs=[
            pl.BlockSpec((G, tr, F), lambda r: (0, r, 0)),
            pl.BlockSpec((F, cout), lambda r: (0, 0)),     # weights resident
            pl.BlockSpec((1, cout), lambda r: (0, 0)),
        ],
        out_specs=pl.BlockSpec((tr, cout), lambda r: (r, 0)),
        out_shape=jax.ShapeDtypeStruct((R, cout), jnp.bfloat16),
        compiler_params=pltpu.CompilerParams(
            dimension_semantics=("parallel",),
            vmem_limit_bytes=_VMEM_LIMIT),
    )(patches_g, w, b)


# ---------------------------------------------------------------------------
# Kernel 2: instance-level GEMMs over ALL N*K instances (tall M), row-tiled.
#   h      = relu(x @ W1 + b1)                      (TM, 500)  in-register only
#   z      = h @ [Wa1 | Wc]                         (TM, 132)  fused RHS
#   logit  = sum(tanh(z[:, :128] + ba1) * wa2) + ba2 (lane-reduce, no matmul)
#   out    = [logit | hc(4) | 0(3)]                 (TM, 8)    single packed store
# ---------------------------------------------------------------------------
def instance_kernel(x_ref, w1_ref, b1_ref, wacl_ref, ba1_ref, wa2_ref, ba2_ref,
                    out_ref):
    tm = x_ref.shape[0]
    h = jnp.maximum(
        jnp.dot(x_ref[...], w1_ref[...], preferred_element_type=jnp.float32)
        + b1_ref[...], 0.0)                                            # (TM, 500) f32
    hb = h.astype(jnp.bfloat16)
    z = jnp.dot(hb, wacl_ref[...], preferred_element_type=jnp.float32)  # (TM, 132)
    ah = jnp.tanh(z[:, :L_DIM] + ba1_ref[...])                         # (TM, 128)
    hc = z[:, L_DIM:L_DIM + NUM_CLASSES]                               # (TM, 4)
    logit = (jnp.sum(ah * wa2_ref[...], axis=-1, keepdims=True)
             + ba2_ref[...])                                           # (TM, 1)
    out_ref[...] = jnp.concatenate(
        [logit, hc, jnp.zeros((tm, 8 - 1 - NUM_CLASSES), jnp.float32)], axis=-1)


def instance_call(hflat, params, row_tile=512):
    M, F = hflat.shape
    tm = _row_tile(M, row_tile)

    def const_spec(arr):
        nd = arr.ndim
        return pl.BlockSpec(arr.shape, lambda m, _nd=nd: (0,) * _nd)

    return pl.pallas_call(
        instance_kernel,
        grid=(pl.cdiv(M, tm),),
        in_specs=[pl.BlockSpec((tm, F), lambda m: (m, 0))]
                 + [const_spec(p) for p in params],
        out_specs=pl.BlockSpec((tm, 8), lambda m: (m, 0)),
        out_shape=jax.ShapeDtypeStruct((M, 8), jnp.float32),
        compiler_params=pltpu.CompilerParams(
            dimension_semantics=("parallel",),
            vmem_limit_bytes=_VMEM_LIMIT),
    )(hflat, *params)


# ---------------------------------------------------------------------------
# Kernel 3: batched per-bag tail over a tile of bags (no matmuls):
#   A = softmax_K(logit);  P = sigmoid(A * (H@Wc) + bc);  y = mean_K(P)
# (A is a per-row scalar, so classifier(A*H) == A*(H@Wc)+bc.)
# ---------------------------------------------------------------------------
def bag_kernel(z_ref, bc_ref, y_ref, a_ref, p_ref):
    z = z_ref[...]                                       # (TN, K, 8) f32
    logit = z[:, :, 0:1]                                 # (TN, K, 1)
    hc = z[:, :, 1:1 + NUM_CLASSES]                      # (TN, K, C)
    m = jnp.max(logit, axis=1, keepdims=True)
    e = jnp.exp(logit - m)
    att = e / jnp.sum(e, axis=1, keepdims=True)          # (TN, K, 1)
    p = jax.nn.sigmoid(att * hc + bc_ref[...])           # (TN, K, C)
    y_ref[...] = jnp.mean(p, axis=1)                     # (TN, C)
    a_ref[...] = att
    p_ref[...] = p


def bag_call(z3, bcl):
    N, K, Wz = z3.shape
    tn = N if N <= 1024 else 1024
    return pl.pallas_call(
        bag_kernel,
        grid=(pl.cdiv(N, tn),),
        in_specs=[pl.BlockSpec((tn, K, Wz), lambda n: (n, 0, 0)),
                  pl.BlockSpec((1, NUM_CLASSES), lambda n: (0, 0))],
        out_specs=(pl.BlockSpec((tn, NUM_CLASSES), lambda n: (n, 0)),
                   pl.BlockSpec((tn, K, 1), lambda n: (n, 0, 0)),
                   pl.BlockSpec((tn, K, NUM_CLASSES), lambda n: (n, 0, 0))),
        out_shape=(jax.ShapeDtypeStruct((N, NUM_CLASSES), jnp.float32),
                   jax.ShapeDtypeStruct((N, K, 1), jnp.float32),
                   jax.ShapeDtypeStruct((N, K, NUM_CLASSES), jnp.float32)),
        compiler_params=pltpu.CompilerParams(
            dimension_semantics=("arbitrary",)),
    )(z3, bcl)


# ---------------------------------------------------------------------------
# Forward pass
# ---------------------------------------------------------------------------
def additive_forward(x, params):
    (wc1, bc1, wc2, bc2, w1, b1, wacl, ba1, wa2, ba2, bcl) = params
    N, K, C, H, W = x.shape
    B = N * K
    # NHWC, bf16 activations (f32 accumulation inside kernels).
    xb = jnp.transpose(x.reshape(B, C, H, W), (0, 2, 3, 1)).astype(jnp.bfloat16)

    # conv1(1->20, k=5) + ReLU + maxpool2
    pg1, (PH1, PW1) = grouped_patches(xb, 5)                     # (4, B*144, 25)
    o1 = conv_relu_pool(pg1, wc1, bc1, row_tile=2048).reshape(B, PH1, PW1, 20)

    # conv2(20->50, k=5) + ReLU + maxpool2 (channel-last; wc2 rows stored in
    # (kh, kw, cin) order so no transpose is needed)
    pg2, (PH2, PW2) = grouped_patches(o1, 5)                     # (4, B*16, 500)
    o2 = conv_relu_pool(pg2, wc2, bc2, row_tile=1024).reshape(B, PH2, PW2, 50)

    # flatten channel-last (w1 rows stored in (h, w, c) order to match)
    hflat = o2.reshape(B, PH2 * PW2 * 50)                        # (B, 800) bf16

    # instance-level GEMMs over all N*K rows -> packed (B, 8) = [logit | hc | 0]
    z = instance_call(hflat, (w1, b1, wacl, ba1, wa2, ba2), row_tile=512)
    z3 = z.reshape(N, K, 8)

    # batched per-bag softmax / gating / sigmoid / mean
    y_proba, a3, p3 = bag_call(z3, bcl)
    y_hat = jnp.argmax(y_proba, axis=1)                          # tiny argmax in glue
    return y_proba, y_hat, a3.reshape(N, K), p3


def init_params(key):
    # Matmul operands stored in bf16 (f32 accumulation); biases f32.
    # NOTE: wc2 rows are in (kh, kw, cin) order, w1 rows in (h, w, c) order,
    # and wacl = [Wa1 | Wc] column-concatenated; loading PyTorch weights would
    # need the corresponding permutations / concat.
    ks = jax.random.split(key, 6)
    s = 0.05
    wc1 = (jax.random.normal(ks[0], (1 * 5 * 5, 20), jnp.float32) * s).astype(jnp.bfloat16)
    bc1 = jnp.zeros((1, 20), jnp.float32)
    wc2 = (jax.random.normal(ks[1], (5 * 5 * 20, 50), jnp.float32) * s).astype(jnp.bfloat16)
    bc2 = jnp.zeros((1, 50), jnp.float32)
    w1 = (jax.random.normal(ks[2], (4 * 4 * 50, M_DIM), jnp.float32) * s).astype(jnp.bfloat16)
    b1 = jnp.zeros((1, M_DIM), jnp.float32)
    wa1 = jax.random.normal(ks[3], (M_DIM, L_DIM), jnp.float32) * s
    wcl = jax.random.normal(ks[5], (M_DIM, NUM_CLASSES), jnp.float32) * s
    wacl = jnp.concatenate([wa1, wcl], axis=1).astype(jnp.bfloat16)   # (500, 132)
    ba1 = jnp.zeros((1, L_DIM), jnp.float32)
    wa2 = jax.random.normal(ks[4], (1, L_DIM), jnp.float32) * s       # row vector, f32
    ba2 = jnp.zeros((1, 1), jnp.float32)
    bcl = jnp.zeros((1, NUM_CLASSES), jnp.float32)
    return (wc1, bc1, wc2, bc2, w1, b1, wacl, ba1, wa2, ba2, bcl)


if __name__ == "__main__":
    key = jax.random.PRNGKey(0)
    kx, kp = jax.random.split(key)
    N, K = 2, 3                                   # bags x instances
    x = jax.random.normal(kx, (N, K, 1, 28, 28), jnp.float32)
    params = init_params(kp)

    fwd = jax.jit(additive_forward)
    y_proba, y_hat, A, P = fwd(x, params)
    jax.tree_util.tree_map(jax.block_until_ready, (y_proba, y_hat, A, P))

    assert y_proba.shape == (N, NUM_CLASSES)
    assert y_hat.shape == (N,)
    assert A.shape == (N, K)
    assert P.shape == (N, K, NUM_CLASSES)
    print("KERNEL_OK")
</pallas_src>

<mosaic_0001>
module attributes {stable_mosaic.version = 11 : i64} {
  func.func @conv_relu_pool_kernel(%arg0: i32, %arg1: memref<4x432x25xbf16, #tpu.memory_space<vmem>>, %arg2: memref<25x20xbf16, #tpu.memory_space<vmem>>, %arg3: memref<1x20xf32, #tpu.memory_space<vmem>>, %arg4: memref<432x20xbf16, #tpu.memory_space<vmem>>) attributes {dimension_semantics = [#tpu.dimension_semantics<parallel>], iteration_bounds = array<i64: 2>, scalar_prefetch = 0 : i64, scratch_operands = 0 : i64, tpu.core_type = #tpu.core_type<tc>, window_params = [{transform_indices = @transform_0, window_bounds = array<i64: 4, 432, 25>}, {pipeline_mode = #tpu.pipeline_mode<synchronous>, transform_indices = @transform_1, window_bounds = array<i64: 25, 20>}, {pipeline_mode = #tpu.pipeline_mode<synchronous>, transform_indices = @transform_2, window_bounds = array<i64: 1, 20>}, {transform_indices = @transform_3, window_bounds = array<i64: 432, 20>}]} {
    %c0 = arith.constant 0 : index
    %c0_0 = arith.constant 0 : index
    %c0_1 = arith.constant 0 : index
    %0 = vector.load %arg1[%c0, %c0_0, %c0_1] : memref<4x432x25xbf16, #tpu.memory_space<vmem>>, vector<4x432x25xbf16>
    %1 = vector.shape_cast %0 : vector<4x432x25xbf16> to vector<1728x25xbf16>
    %c0_2 = arith.constant 0 : index
    %c0_3 = arith.constant 0 : index
    %2 = vector.load %arg2[%c0_2, %c0_3] : memref<25x20xbf16, #tpu.memory_space<vmem>>, vector<25x20xbf16>
    %cst = arith.constant dense<0.000000e+00> : vector<1728x20xf32>
    %3 = tpu.matmul %1, %2, %cst {dimension_numbers = #tpu.dot_dimension_numbers<[1], [0], [0], [1], [0, 0, 1, 1], [], []>} : vector<1728x25xbf16>, vector<25x20xbf16>, vector<1728x20xf32> -> vector<1728x20xf32>
    %4 = vector.extract_strided_slice %3 {offsets = [0, 0], sizes = [432, 20], strides = [1, 1]} : vector<1728x20xf32> to vector<432x20xf32>
    %5 = vector.extract_strided_slice %3 {offsets = [432, 0], sizes = [432, 20], strides = [1, 1]} : vector<1728x20xf32> to vector<432x20xf32>
    %6 = arith.maximumf %4, %5 : vector<432x20xf32>
    %7 = vector.extract_strided_slice %3 {offsets = [864, 0], sizes = [432, 20], strides = [1, 1]} : vector<1728x20xf32> to vector<432x20xf32>
    %8 = arith.maximumf %6, %7 : vector<432x20xf32>
    %9 = vector.extract_strided_slice %3 {offsets = [1296, 0], sizes = [432, 20], strides = [1, 1]} : vector<1728x20xf32> to vector<432x20xf32>
    %10 = arith.maximumf %8, %9 : vector<432x20xf32>
    %c0_4 = arith.constant 0 : index
    %c0_5 = arith.constant 0 : index
    %11 = vector.load %arg3[%c0_4, %c0_5] : memref<1x20xf32, #tpu.memory_space<vmem>>, vector<1x20xf32>
    %12 = vector.broadcast %11 : vector<1x20xf32> to vector<432x20xf32>
    %13 = arith.addf %10, %12 : vector<432x20xf32>
    %cst_6 = arith.constant 0.000000e+00 : f32
    %14 = vector.broadcast %cst_6 : f32 to vector<432x20xf32>
    %15 = arith.maximumf %13, %14 : vector<432x20xf32>
    %16 = arith.truncf %15 : vector<432x20xf32> to vector<432x20xbf16>
    %c0_7 = arith.constant 0 : index
    %c0_8 = arith.constant 0 : index
    %17 = vector.load %arg4[%c0_7, %c0_8] : memref<432x20xbf16, #tpu.memory_space<vmem>>, vector<432x20xbf16>
    tpu.vector_store %arg4[%c0_7, %c0_8], %16 {strides = array<i32>} : memref<432x20xbf16, #tpu.memory_space<vmem>>, vector<432x20xbf16>,
    return
  }
  func.func @transform_0(%arg0: i32) -> (i32, i32, i32) {
    %c0_i32 = arith.constant 0 : i32
    %c0_i32_0 = arith.constant 0 : i32
    %c0_i32_1 = arith.constant 0 : i32
    return %c0_i32, %arg0, %c0_i32_0 : i32, i32, i32
  }
  func.func @transform_1(%arg0: i32) -> (i32, i32) {
    %c0_i32 = arith.constant 0 : i32
    %c0_i32_0 = arith.constant 0 : i32
    %c0_i32_1 = arith.constant 0 : i32
    return %c0_i32, %c0_i32_0 : i32, i32
  }
  func.func @transform_2(%arg0: i32) -> (i32, i32) {
    %c0_i32 = arith.constant 0 : i32
    %c0_i32_0 = arith.constant 0 : i32
    %c0_i32_1 = arith.constant 0 : i32
    return %c0_i32, %c0_i32_0 : i32, i32
  }
  func.func @transform_3(%arg0: i32) -> (i32, i32) {
    %c0_i32 = arith.constant 0 : i32
    %c0_i32_0 = arith.constant 0 : i32
    return %arg0, %c0_i32 : i32, i32
  }
}

module attributes {stable_mosaic.version = 11 : i64} {
  func.func @conv_relu_pool_kernel(%arg0: i32, %arg1: memref<4x48x500xbf16, #tpu.memory_space<vmem>>, %arg2: memref<500x50xbf16, #tpu.memory_space<vmem>>, %arg3: memref<1x50xf32, #tpu.memory_space<vmem>>, %arg4: memref<48x50xbf16, #tpu.memory_space<vmem>>) attributes {dimension_semantics = [#tpu.dimension_semantics<parallel>], iteration_bounds = array<i64: 2>, scalar_prefetch = 0 : i64, scratch_operands = 0 : i64, tpu.core_type = #tpu.core_type<tc>, window_params = [{transform_indices = @transform_0, window_bounds = array<i64: 4, 48, 500>}, {pipeline_mode = #tpu.pipeline_mode<synchronous>, transform_indices = @transform_1, window_bounds = array<i64: 500, 50>}, {pipeline_mode = #tpu.pipeline_mode<synchronous>, transform_indices = @transform_2, window_bounds = array<i64: 1, 50>}, {transform_indices = @transform_3, window_bounds = array<i64: 48, 50>}]} {
    %c0 = arith.constant 0 : index
    %c0_0 = arith.constant 0 : index
    %c0_1 = arith.constant 0 : index
    %0 = vector.load %arg1[%c0, %c0_0, %c0_1] : memref<4x48x500xbf16, #tpu.memory_space<vmem>>, vector<4x48x500xbf16>
    %1 = vector.shape_cast %0 : vector<4x48x500xbf16> to vector<192x500xbf16>
    %c0_2 = arith.constant 0 : index
    %c0_3 = arith.constant 0 : index
    %2 = vector.load %arg2[%c0_2, %c0_3] : memref<500x50xbf16, #tpu.memory_space<vmem>>, vector<500x50xbf16>
    %cst = arith.constant dense<0.000000e+00> : vector<192x50xf32>
    %3 = tpu.matmul %1, %2, %cst {dimension_numbers = #tpu.dot_dimension_numbers<[1], [0], [0], [1], [0, 0, 1, 1], [], []>} : vector<192x500xbf16>, vector<500x50xbf16>, vector<192x50xf32> -> vector<192x50xf32>
    %4 = vector.extract_strided_slice %3 {offsets = [0, 0], sizes = [48, 50], strides = [1, 1]} : vector<192x50xf32> to vector<48x50xf32>
    %5 = vector.extract_strided_slice %3 {offsets = [48, 0], sizes = [48, 50], strides = [1, 1]} : vector<192x50xf32> to vector<48x50xf32>
    %6 = arith.maximumf %4, %5 : vector<48x50xf32>
    %7 = vector.extract_strided_slice %3 {offsets = [96, 0], sizes = [48, 50], strides = [1, 1]} : vector<192x50xf32> to vector<48x50xf32>
    %8 = arith.maximumf %6, %7 : vector<48x50xf32>
    %9 = vector.extract_strided_slice %3 {offsets = [144, 0], sizes = [48, 50], strides = [1, 1]} : vector<192x50xf32> to vector<48x50xf32>
    %10 = arith.maximumf %8, %9 : vector<48x50xf32>
    %c0_4 = arith.constant 0 : index
    %c0_5 = arith.constant 0 : index
    %11 = vector.load %arg3[%c0_4, %c0_5] : memref<1x50xf32, #tpu.memory_space<vmem>>, vector<1x50xf32>
    %12 = vector.broadcast %11 : vector<1x50xf32> to vector<48x50xf32>
    %13 = arith.addf %10, %12 : vector<48x50xf32>
    %cst_6 = arith.constant 0.000000e+00 : f32
    %14 = vector.broadcast %cst_6 : f32 to vector<48x50xf32>
    %15 = arith.maximumf %13, %14 : vector<48x50xf32>
    %16 = arith.truncf %15 : vector<48x50xf32> to vector<48x50xbf16>
    %c0_7 = arith.constant 0 : index
    %c0_8 = arith.constant 0 : index
    %17 = vector.load %arg4[%c0_7, %c0_8] : memref<48x50xbf16, #tpu.memory_space<vmem>>, vector<48x50xbf16>
    tpu.vector_store %arg4[%c0_7, %c0_8], %16 {strides = array<i32>} : memref<48x50xbf16, #tpu.memory_space<vmem>>, vector<48x50xbf16>,
    return
  }
  func.func @transform_0(%arg0: i32) -> (i32, i32, i32) {
    %c0_i32 = arith.constant 0 : i32
    %c0_i32_0 = arith.constant 0 : i32
    %c0_i32_1 = arith.constant 0 : i32
    return %c0_i32, %arg0, %c0_i32_0 : i32, i32, i32
  }
  func.func @transform_1(%arg0: i32) -> (i32, i32) {
    %c0_i32 = arith.constant 0 : i32
    %c0_i32_0 = arith.constant 0 : i32
    %c0_i32_1 = arith.constant 0 : i32
    return %c0_i32, %c0_i32_0 : i32, i32
  }
  func.func @transform_2(%arg0: i32) -> (i32, i32) {
    %c0_i32 = arith.constant 0 : i32
    %c0_i32_0 = arith.constant 0 : i32
    %c0_i32_1 = arith.constant 0 : i32
    return %c0_i32, %c0_i32_0 : i32, i32
  }
  func.func @transform_3(%arg0: i32) -> (i32, i32) {
    %c0_i32 = arith.constant 0 : i32
    %c0_i32_0 = arith.constant 0 : i32
    return %arg0, %c0_i32 : i32, i32
  }
}

module attributes {stable_mosaic.version = 11 : i64} {
  func.func @instance_kernel(%arg0: i32, %arg1: memref<6x800xbf16, #tpu.memory_space<vmem>>, %arg2: memref<800x500xbf16, #tpu.memory_space<vmem>>, %arg3: memref<1x500xf32, #tpu.memory_space<vmem>>, %arg4: memref<500x132xbf16, #tpu.memory_space<vmem>>, %arg5: memref<1x128xf32, #tpu.memory_space<vmem>>, %arg6: memref<1x128xf32, #tpu.memory_space<vmem>>, %arg7: memref<1x1xf32, #tpu.memory_space<vmem>>, %arg8: memref<6x8xf32, #tpu.memory_space<vmem>>) attributes {dimension_semantics = [#tpu.dimension_semantics<parallel>], iteration_bounds = array<i64: 1>, scalar_prefetch = 0 : i64, scratch_operands = 0 : i64, tpu.core_type = #tpu.core_type<tc>, window_params = [{transform_indices = @transform_0, window_bounds = array<i64: 6, 800>}, {pipeline_mode = #tpu.pipeline_mode<synchronous>, transform_indices = @transform_1, window_bounds = array<i64: 800, 500>}, {pipeline_mode = #tpu.pipeline_mode<synchronous>, transform_indices = @transform_2, window_bounds = array<i64: 1, 500>}, {pipeline_mode = #tpu.pipeline_mode<synchronous>, transform_indices = @transform_3, window_bounds = array<i64: 500, 132>}, {pipeline_mode = #tpu.pipeline_mode<synchronous>, transform_indices = @transform_4, window_bounds = array<i64: 1, 128>}, {pipeline_mode = #tpu.pipeline_mode<synchronous>, transform_indices = @transform_5, window_bounds = array<i64: 1, 128>}, {pipeline_mode = #tpu.pipeline_mode<synchronous>, transform_indices = @transform_6, window_bounds = array<i64: 1, 1>}, {transform_indices = @transform_7, window_bounds = array<i64: 6, 8>}]} {
    %c0 = arith.constant 0 : index
    %c0_0 = arith.constant 0 : index
    %0 = vector.load %arg1[%c0, %c0_0] : memref<6x800xbf16, #tpu.memory_space<vmem>>, vector<6x800xbf16>
    %c0_1 = arith.constant 0 : index
    %c0_2 = arith.constant 0 : index
    %1 = vector.load %arg2[%c0_1, %c0_2] : memref<800x500xbf16, #tpu.memory_space<vmem>>, vector<800x500xbf16>
    %cst = arith.constant dense<0.000000e+00> : vector<6x500xf32>
    %2 = tpu.matmul %0, %1, %cst {dimension_numbers = #tpu.dot_dimension_numbers<[1], [0], [0], [1], [0, 0, 1, 1], [], []>} : vector<6x800xbf16>, vector<800x500xbf16>, vector<6x500xf32> -> vector<6x500xf32>
    %c0_3 = arith.constant 0 : index
    %c0_4 = arith.constant 0 : index
    %3 = vector.load %arg3[%c0_3, %c0_4] : memref<1x500xf32, #tpu.memory_space<vmem>>, vector<1x500xf32>
    %4 = vector.broadcast %3 : vector<1x500xf32> to vector<6x500xf32>
    %5 = arith.addf %2, %4 : vector<6x500xf32>
    %cst_5 = arith.constant 0.000000e+00 : f32
    %6 = vector.broadcast %cst_5 : f32 to vector<6x500xf32>
    %7 = arith.maximumf %5, %6 : vector<6x500xf32>
    %8 = arith.truncf %7 : vector<6x500xf32> to vector<6x500xbf16>
    %c0_6 = arith.constant 0 : index
    %c0_7 = arith.constant 0 : index
    %9 = vector.load %arg4[%c0_6, %c0_7] : memref<500x132xbf16, #tpu.memory_space<vmem>>, vector<500x132xbf16>
    %cst_8 = arith.constant dense<0.000000e+00> : vector<6x132xf32>
    %10 = tpu.matmul %8, %9, %cst_8 {dimension_numbers = #tpu.dot_dimension_numbers<[1], [0], [0], [1], [0, 0, 1, 1], [], []>} : vector<6x500xbf16>, vector<500x132xbf16>, vector<6x132xf32> -> vector<6x132xf32>
    %11 = vector.extract_strided_slice %10 {offsets = [0, 0], sizes = [6, 128], strides = [1, 1]} : vector<6x132xf32> to vector<6x128xf32>
    %c0_9 = arith.constant 0 : index
    %c0_10 = arith.constant 0 : index
    %12 = vector.load %arg5[%c0_9, %c0_10] : memref<1x128xf32, #tpu.memory_space<vmem>>, vector<1x128xf32>
    %13 = vector.broadcast %12 : vector<1x128xf32> to vector<6x128xf32>
    %14 = arith.addf %11, %13 : vector<6x128xf32>
    %15 = math.tanh %14 : vector<6x128xf32>
    %16 = vector.extract_strided_slice %10 {offsets = [0, 128], sizes = [6, 4], strides = [1, 1]} : vector<6x132xf32> to vector<6x4xf32>
    %c0_11 = arith.constant 0 : index
    %c0_12 = arith.constant 0 : index
    %17 = vector.load %arg6[%c0_11, %c0_12] : memref<1x128xf32, #tpu.memory_space<vmem>>, vector<1x128xf32>
    %18 = vector.broadcast %17 : vector<1x128xf32> to vector<6x128xf32>
    %19 = arith.mulf %15, %18 : vector<6x128xf32>
    %cst_13 = arith.constant dense<0.000000e+00> : vector<6xf32>
    %20 = vector.multi_reduction <add>, %19, %cst_13 [1] : vector<6x128xf32> to vector<6xf32>
    %21 = vector.shape_cast %20 : vector<6xf32> to vector<6x1xf32>
    %c0_14 = arith.constant 0 : index
    %c0_15 = arith.constant 0 : index
    %22 = vector.load %arg7[%c0_14, %c0_15] : memref<1x1xf32, #tpu.memory_space<vmem>>, vector<1x1xf32>
    %23 = vector.broadcast %22 : vector<1x1xf32> to vector<6x1xf32>
    %24 = arith.addf %21, %23 : vector<6x1xf32>
    %cst_16 = arith.constant 0.000000e+00 : f32
    %25 = vector.broadcast %cst_16 : f32 to vector<6x3xf32>
    %26 = tpu.concatenate %24, %16, %25 in 1 : vector<6x1xf32>, vector<6x4xf32>, vector<6x3xf32> -> vector<6x8xf32>
    %c0_17 = arith.constant 0 : index
    %c0_18 = arith.constant 0 : index
    %27 = vector.load %arg8[%c0_17, %c0_18] : memref<6x8xf32, #tpu.memory_space<vmem>>, vector<6x8xf32>
    tpu.vector_store %arg8[%c0_17, %c0_18], %26 {strides = array<i32>} : memref<6x8xf32, #tpu.memory_space<vmem>>, vector<6x8xf32>,
    return
  }
  func.func @transform_0(%arg0: i32) -> (i32, i32) {
    %c0_i32 = arith.constant 0 : i32
    %c0_i32_0 = arith.constant 0 : i32
    return %arg0, %c0_i32 : i32, i32
  }
  func.func @transform_1(%arg0: i32) -> (i32, i32) {
    %c0_i32 = arith.constant 0 : i32
    %c0_i32_0 = arith.constant 0 : i32
    %c0_i32_1 = arith.constant 0 : i32
    return %c0_i32, %c0_i32_0 : i32, i32
  }
  func.func @transform_2(%arg0: i32) -> (i32, i32) {
    %c0_i32 = arith.constant 0 : i32
    %c0_i32_0 = arith.constant 0 : i32
    %c0_i32_1 = arith.constant 0 : i32
    return %c0_i32, %c0_i32_0 : i32, i32
  }
  func.func @transform_3(%arg0: i32) -> (i32, i32) {
    %c0_i32 = arith.constant 0 : i32
    %c0_i32_0 = arith.constant 0 : i32
    %c0_i32_1 = arith.constant 0 : i32
    return %c0_i32, %c0_i32_0 : i32, i32
  }
  func.func @transform_4(%arg0: i32) -> (i32, i32) {
    %c0_i32 = arith.constant 0 : i32
    %c0_i32_0 = arith.constant 0 : i32
    %c0_i32_1 = arith.constant 0 : i32
    return %c0_i32, %c0_i32_0 : i32, i32
  }
  func.func @transform_5(%arg0: i32) -> (i32, i32) {
    %c0_i32 = arith.constant 0 : i32
    %c0_i32_0 = arith.constant 0 : i32
    %c0_i32_1 = arith.constant 0 : i32
    return %c0_i32, %c0_i32_0 : i32, i32
  }
  func.func @transform_6(%arg0: i32) -> (i32, i32) {
    %c0_i32 = arith.constant 0 : i32
    %c0_i32_0 = arith.constant 0 : i32
    %c0_i32_1 = arith.constant 0 : i32
    return %c0_i32, %c0_i32_0 : i32, i32
  }
  func.func @transform_7(%arg0: i32) -> (i32, i32) {
    %c0_i32 = arith.constant 0 : i32
    %c0_i32_0 = arith.constant 0 : i32
    return %arg0, %c0_i32 : i32, i32
  }
}

module attributes {stable_mosaic.version = 11 : i64} {
  func.func @bag_kernel(%arg0: i32, %arg1: memref<2x3x8xf32, #tpu.memory_space<vmem>>, %arg2: memref<1x4xf32, #tpu.memory_space<vmem>>, %arg3: memref<2x4xf32, #tpu.memory_space<vmem>>, %arg4: memref<2x3x1xf32, #tpu.memory_space<vmem>>, %arg5: memref<2x3x4xf32, #tpu.memory_space<vmem>>) attributes {dimension_semantics = [#tpu.dimension_semantics<arbitrary>], iteration_bounds = array<i64: 1>, scalar_prefetch = 0 : i64, scratch_operands = 0 : i64, tpu.core_type = #tpu.core_type<tc>, window_params = [{transform_indices = @transform_0, window_bounds = array<i64: 2, 3, 8>}, {pipeline_mode = #tpu.pipeline_mode<synchronous>, transform_indices = @transform_1, window_bounds = array<i64: 1, 4>}, {transform_indices = @transform_2, window_bounds = array<i64: 2, 4>}, {transform_indices = @transform_3, window_bounds = array<i64: 2, 3, 1>}, {transform_indices = @transform_4, window_bounds = array<i64: 2, 3, 4>}]} {
    %c0 = arith.constant 0 : index
    %c0_0 = arith.constant 0 : index
    %c0_1 = arith.constant 0 : index
    %0 = vector.load %arg1[%c0, %c0_0, %c0_1] : memref<2x3x8xf32, #tpu.memory_space<vmem>>, vector<2x3x8xf32>
    %1 = vector.extract_strided_slice %0 {offsets = [0, 0, 0], sizes = [2, 3, 1], strides = [1, 1, 1]} : vector<2x3x8xf32> to vector<2x3x1xf32>
    %2 = vector.extract_strided_slice %0 {offsets = [0, 0, 1], sizes = [2, 3, 4], strides = [1, 1, 1]} : vector<2x3x8xf32> to vector<2x3x4xf32>
    %cst = arith.constant dense<0xFF800000> : vector<2x1xf32>
    %3 = vector.multi_reduction <maximumf>, %1, %cst [1] : vector<2x3x1xf32> to vector<2x1xf32>
    %4 = vector.shape_cast %3 : vector<2x1xf32> to vector<2x1x1xf32>
    %5 = vector.broadcast %4 : vector<2x1x1xf32> to vector<2x3x1xf32>
    %6 = arith.subf %1, %5 : vector<2x3x1xf32>
    %7 = math.exp %6 : vector<2x3x1xf32>
    %cst_2 = arith.constant dense<0.000000e+00> : vector<2x1xf32>
    %8 = vector.multi_reduction <add>, %7, %cst_2 [1] : vector<2x3x1xf32> to vector<2x1xf32>
    %9 = vector.shape_cast %8 : vector<2x1xf32> to vector<2x1x1xf32>
    %10 = vector.broadcast %9 : vector<2x1x1xf32> to vector<2x3x1xf32>
    %11 = arith.divf %7, %10 : vector<2x3x1xf32>
    %12 = vector.broadcast %11 : vector<2x3x1xf32> to vector<2x3x4xf32>
    %13 = arith.mulf %12, %2 : vector<2x3x4xf32>
    %c0_3 = arith.constant 0 : index
    %c0_4 = arith.constant 0 : index
    %14 = vector.load %arg2[%c0_3, %c0_4] : memref<1x4xf32, #tpu.memory_space<vmem>>, vector<1x4xf32>
    %15 = vector.shape_cast %14 : vector<1x4xf32> to vector<1x1x4xf32>
    %16 = vector.broadcast %15 : vector<1x1x4xf32> to vector<2x3x4xf32>
    %17 = arith.addf %13, %16 : vector<2x3x4xf32>
    %18 = arith.negf %17 : vector<2x3x4xf32>
    %19 = math.exp %18 : vector<2x3x4xf32>
    %cst_5 = arith.constant 1.000000e+00 : f32
    %20 = vector.broadcast %cst_5 : f32 to vector<2x3x4xf32>
    %21 = arith.addf %20, %19 : vector<2x3x4xf32>
    %22 = arith.divf %20, %21 : vector<2x3x4xf32>
    %cst_6 = arith.constant dense<0.000000e+00> : vector<2x4xf32>
    %23 = vector.multi_reduction <add>, %22, %cst_6 [1] : vector<2x3x4xf32> to vector<2x4xf32>
    %cst_7 = arith.constant 3.000000e+00 : f32
    %24 = vector.broadcast %cst_7 : f32 to vector<2x4xf32>
    %25 = arith.divf %23, %24 : vector<2x4xf32>
    %c0_8 = arith.constant 0 : index
    %c0_9 = arith.constant 0 : index
    %26 = vector.load %arg3[%c0_8, %c0_9] : memref<2x4xf32, #tpu.memory_space<vmem>>, vector<2x4xf32>
    tpu.vector_store %arg3[%c0_8, %c0_9], %25 {strides = array<i32>} : memref<2x4xf32, #tpu.memory_space<vmem>>, vector<2x4xf32>,
    %c0_10 = arith.constant 0 : index
    %c0_11 = arith.constant 0 : index
    %c0_12 = arith.constant 0 : index
    %27 = vector.load %arg4[%c0_10, %c0_11, %c0_12] : memref<2x3x1xf32, #tpu.memory_space<vmem>>, vector<2x3x1xf32>
    tpu.vector_store %arg4[%c0_10, %c0_11, %c0_12], %11 {strides = array<i32>} : memref<2x3x1xf32, #tpu.memory_space<vmem>>, vector<2x3x1xf32>,
    %c0_13 = arith.constant 0 : index
    %c0_14 = arith.constant 0 : index
    %c0_15 = arith.constant 0 : index
    %28 = vector.load %arg5[%c0_13, %c0_14, %c0_15] : memref<2x3x4xf32, #tpu.memory_space<vmem>>, vector<2x3x4xf32>
    tpu.vector_store %arg5[%c0_13, %c0_14, %c0_15], %22 {strides = array<i32>} : memref<2x3x4xf32, #tpu.memory_space<vmem>>, vector<2x3x4xf32>,
    return
  }
  func.func @transform_0(%arg0: i32) -> (i32, i32, i32) {
    %c0_i32 = arith.constant 0 : i32
    %c0_i32_0 = arith.constant 0 : i32
    %c0_i32_1 = arith.constant 0 : i32
    return %arg0, %c0_i32, %c0_i32_0 : i32, i32, i32
  }
  func.func @transform_1(%arg0: i32) -> (i32, i32) {
    %c0_i32 = arith.constant 0 : i32
    %c0_i32_0 = arith.constant 0 : i32
    %c0_i32_1 = arith.constant 0 : i32
    return %c0_i32, %c0_i32_0 : i32, i32
  }
  func.func @transform_2(%arg0: i32) -> (i32, i32) {
    %c0_i32 = arith.constant 0 : i32
    %c0_i32_0 = arith.constant 0 : i32
    return %arg0, %c0_i32 : i32, i32
  }
  func.func @transform_3(%arg0: i32) -> (i32, i32, i32) {
    %c0_i32 = arith.constant 0 : i32
    %c0_i32_0 = arith.constant 0 : i32
    %c0_i32_1 = arith.constant 0 : i32
    return %arg0, %c0_i32, %c0_i32_0 : i32, i32, i32
  }
  func.func @transform_4(%arg0: i32) -> (i32, i32, i32) {
    %c0_i32 = arith.constant 0 : i32
    %c0_i32_0 = arith.constant 0 : i32
    %c0_i32_1 = arith.constant 0 : i32
    return %arg0, %c0_i32, %c0_i32_0 : i32, i32, i32
  }
}

</mosaic_0001>

<llo_original>
// kernel: additive_forward.4
$region0: #{additive_forward.4}
  #allocation0 [shape = 'u32[]', space=smem, size = 0x4, offset = 0x4, fixed_abs, tag = 'smem constant byte address 0x4 - core index']
  #allocation1 [shape = 'u32[72,128]{1,0:T(1,128)}', space=vmem, size = 0x9000, scoped, tag = 'internal scratch']
  %s0 = inlined_call_operand.vmem [shape: bf16[4,864,25], index: 0, kind: input, shape index: {}]
  %s1 = inlined_call_operand.vmem [shape: bf16[25,20], index: 1, kind: input, shape index: {}]
  %s2 = inlined_call_operand.vmem [shape: f32[1,20], index: 2, kind: input, shape index: {}]
  %s3 = inlined_call_operand.vmem [shape: bf16[864,20], index: 3, kind: output, shape index: {}]
  %s4 = sld [smem:[#allocation0]]
  $region86: #{additive_forward.4} parent=0
    _
  %s6 = ssub.s32 1, %s4
  %s7 = scalar_select 0, %s6, %s4
  $region1: #{additive_forward.4} parent=0
    #allocation2 [shape = 'u8[884736]{0}', space=vmem, size = 0xd8000, scoped, tag = 'input window, operand 0']
    loop: start=0, step=1, limit=4
    $region2: #{additive_forward.4} parent=1 // loop_pre_header
      _
    $region3: #{additive_forward.4} parent=1 // loop_header
      %s9 = sphi 0, %s13
      %p10 = scmp.ge.s32.totalorder %s9, 4
      %s19 = sphi 0, %s21
      %s22 = sphi 0, %s19
      %s23 = sphi 0, %s22
      %s39 = sphi 0, %s23
      %s43 = sphi 0, %s43
      %s45 = sphi 0, %s43
      %s46 = sphi 0, %s45
      %s60 = sphi 0, %s46
      %s64 = sphi 0, %s64
      %s66 = sphi 0, %s64
      %s67 = sphi 0, %s66
      %s81 = sphi 0, %s67
      %s87 = sphi 0, %s89
      %s90 = sphi 0, %s87
      %s91 = sphi 0, %s90
      %s107 = sphi 0, %s91
    $region4: #{additive_forward.4} parent=1 // loop_header_branch
      %12 = sbr.rel (%p10) target = $region8
    $region5: #{additive_forward.4} parent=1 // loop_body
      %s14 = ssub.s32 %s9, 1
      %s15 = ssub.s32 %s9, 2
      %s16 = sadd.s32 %s9, 1
      %s17 = ssub.s32 %s9, %s16
      %p18 = scmp.eq.s32.totalorder %s17, 0
      %s20 = sadd.s32 %s19, 1
      %s21 = scalar_select %p18, %s19, %s20
      %p24 = pneg %p18
      %p25 = scmp.eq.s32.totalorder %s9, 1
      %p26 = por %p24, %p25
      %p27 = scmp.ne.s32.totalorder %s19, %s22
      %p28 = scmp.eq.s32.totalorder %s9, 0
      %p29 = por %p27, %p28
      %p30 = scmp.ne.s32.totalorder %s19, %s22
      %p31 = scmp.eq.s32.totalorder %s14, 1
      %p32 = por %p30, %p31
      %p33 = scmp.ne.s32.totalorder %s22, %s23
      %p34 = scmp.eq.s32.totalorder %s14, 0
      %p35 = por %p33, %p34
      %p36 = scmp.ne.s32.totalorder %s22, %s23
      %p37 = scmp.eq.s32.totalorder %s15, 1
      %p38 = por %p36, %p37
      %p40 = scmp.ne.s32.totalorder %s23, %s39
      %p41 = scmp.eq.s32.totalorder %s15, 0
      %p42 = por %p40, %p41
      %s44 = sadd.s32 %s43, 1
      %p47 = scmp.eq.s32.totalorder %s9, 1
      %p48 = scmp.ne.s32.totalorder %s43, %s45
      %p49 = scmp.eq.s32.totalorder %s9, 0
      %p50 = por %p48, %p49
      %p51 = scmp.ne.s32.totalorder %s43, %s45
      %p52 = scmp.eq.s32.totalorder %s14, 1
      %p53 = por %p51, %p52
      %p54 = scmp.ne.s32.totalorder %s45, %s46
      %p55 = scmp.eq.s32.totalorder %s14, 0
      %p56 = por %p54, %p55
      %p57 = scmp.ne.s32.totalorder %s45, %s46
      %p58 = scmp.eq.s32.totalorder %s15, 1
      %p59 = por %p57, %p58
      %p61 = scmp.ne.s32.totalorder %s46, %s60
      %p62 = scmp.eq.s32.totalorder %s15, 0
      %p63 = por %p61, %p62
      %s65 = sadd.s32 %s64, 1
      %p68 = scmp.eq.s32.totalorder %s9, 1
      %p69 = scmp.ne.s32.totalorder %s64, %s66
      %p70 = scmp.eq.s32.totalorder %s9, 0
      %p71 = por %p69, %p70
      %p72 = scmp.ne.s32.totalorder %s64, %s66
      %p73 = scmp.eq.s32.totalorder %s14, 1
      %p74 = por %p72, %p73
      %p75 = scmp.ne.s32.totalorder %s66, %s67
      %p76 = scmp.eq.s32.totalorder %s14, 0
      %p77 = por %p75, %p76
      %p78 = scmp.ne.s32.totalorder %s66, %s67
      %p79 = scmp.eq.s32.totalorder %s15, 1
      %p80 = por %p78, %p79
      %p82 = scmp.ne.s32.totalorder %s67, %s81
      %p83 = scmp.eq.s32.totalorder %s15, 0
      %p84 = por %p82, %p83
      %s85 = ssub.s32 %s9, %s16
      %p86 = scmp.eq.s32.totalorder %s85, 0
      %s88 = sadd.s32 %s87, 1
      %s89 = scalar_select %p86, %s87, %s88
      %p92 = pneg %p86
      %p93 = scmp.eq.s32.totalorder %s9, 1
      %p94 = por %p92, %p93
      %p95 = scmp.ne.s32.totalorder %s87, %s90
      %p96 = scmp.eq.s32.totalorder %s9, 0
      %p97 = por %p95, %p96
      %p98 = scmp.ne.s32.totalorder %s87, %s90
      %p99 = scmp.eq.s32.totalorder %s14, 1
      %p100 = por %p98, %p99
      %p101 = scmp.ne.s32.totalorder %s90, %s91
      %p102 = scmp.eq.s32.totalorder %s14, 0
      %p103 = por %p101, %p102
      %p104 = scmp.ne.s32.totalorder %s90, %s91
      %p105 = scmp.eq.s32.totalorder %s15, 1
      %p106 = por %p104, %p105
      %p108 = scmp.ne.s32.totalorder %s91, %s107
      %p109 = scmp.eq.s32.totalorder %s15, 0
      %p110 = por %p108, %p109
      %p111 = scmp.le.s32.totalorder 1, %s9
      %p112 = scmp.lt.s32.totalorder %s9, 3
      %p113 = pnand %p111, %p112
      %p114 = pneg %p113
      // Predicated region
      $region9: #{additive_forward.4} parent=5 // pred_check
        _
      $region10: #{additive_forward.4} parent=5 // pred_check_branch
        %116 = sbr.rel (%p113) target = $region12
      $region11: #{additive_forward.4} parent=5 // pred_region
        %s117 = ssub.s32 %s9, 1
        // Predicated region
        $region13: #{additive_forward.4} parent=11 // pred_check
          %p118 = pneg %p56
        $region14: #{additive_forward.4} parent=11 // pred_check_branch
          %120 = sbr.rel (%p118) target = $region16
        $region15: #{additive_forward.4} parent=11 // pred_region
          _
        $region16: #{additive_forward.4} parent=11 // pred_fallthru
          _
        // Predicated region
        $region17: #{additive_forward.4} parent=11 // pred_check
          %p121 = pneg %p77
        $region18: #{additive_forward.4} parent=11 // pred_check_branch
          %123 = sbr.rel (%p121) target = $region20
        $region19: #{additive_forward.4} parent=11 // pred_region
          _
        $region20: #{additive_forward.4} parent=11 // pred_fallthru
          _
      $region12: #{additive_forward.4} parent=5 // pred_fallthru
        _
      %p124 = scmp.lt.s32.totalorder %s9, 2
      // Predicated region
      $region21: #{additive_forward.4} parent=5 // pred_check
        %p125 = pneg %p124
      $region22: #{additive_forward.4} parent=5 // pred_check_branch
        %127 = sbr.rel (%p125) target = $region24
      $region23: #{additive_forward.4} parent=5 // pred_region
        // Predicated region
        $region25: #{additive_forward.4} parent=23 // pred_check
          %p128 = pneg %p29
        $region26: #{additive_forward.4} parent=23 // pred_check_branch
          %130 = sbr.rel (%p128) target = $region28
        $region27: #{additive_forward.4} parent=23 // pred_region
          %s131 = sand.u32 %s19, 1
          %s132 = sand.u32 %s19, 1
          %s133 = smul.addr %s132, 864
          %s134 = scalar_lea.vmem [#allocation2], %s133
          %s135 = smul.u32 54, %s9
          %s136 = smul.addr %s135, 4
          %s137 = scalar_lea.vmem %s0, %s136
          // Predicated region
          $region29: #{additive_forward.4} parent=27 // pred_check
            _
          $region30: #{additive_forward.4} parent=27 // pred_check_branch
            %139 = sbr.rel (0) target = $region32
          $region31: #{additive_forward.4} parent=27 // pred_region
            // Predicated region
            $region33: #{additive_forward.4} parent=31 // pred_check
              _
            $region34: #{additive_forward.4} parent=31 // pred_check_branch
              %141 = sbr.rel target = $region36
            $region35: #{additive_forward.4} parent=31 // pred_region
              // Predicated region
              $region48: #{additive_forward.4} parent=35 // pred_check
                _
              $region49: #{additive_forward.4} parent=35 // pred_check_branch
                %587 = sbr.rel (0) target = $region51
              $region50: #{additive_forward.4} parent=35 // pred_region
                loop: start=0, step=1, limit=1
                $region52: #{additive_forward.4} parent=50 // loop_pre_header
                  _
                $region53: #{additive_forward.4} parent=50 // loop_header
                  %s589 = sphi 0, %s593
                  %p590 = scmp.ge.s32.totalorder %s589, 1
                  %s594 = sphi %s137, %s137
                  %s595 = sphi %s134, %s134
                $region54: #{additive_forward.4} parent=50 // loop_header_branch
                  %592 = sbr.rel (%p590) target = $region58
                $region55: #{additive_forward.4} parent=50 // loop_body
                  _
                $region56: #{additive_forward.4} parent=50 // loop_footer
                  %s593 = sadd.s32 1, %s589
                $region57: #{additive_forward.4} parent=50 // loop_footer_branch
                  %588 = sbr.rel target = $region53
                $region58: #{additive_forward.4} parent=50 // loop_exit
                  _
                %s597 = ssub.s32 16, 1
                loop: start=0, step=1, limit=1
                $region59: #{additive_forward.4} parent=50 // loop_pre_header
                  _
                $region60: #{additive_forward.4} parent=50 // loop_header
                  %s599 = sphi 0, %s603
                  %p600 = scmp.ge.s32.totalorder %s599, 1
                  %s604 = sphi %s137, %s137
                  %s605 = sphi %s134, %s134
                $region61: #{additive_forward.4} parent=50 // loop_header_branch
                  %602 = sbr.rel (%p600) target = $region65
                $region62: #{additive_forward.4} parent=50 // loop_body
                  %v606 = vld [vmem:[%s604] sm:%s597]
                  %607 = vst [vmem:[%s605] sm:%s597] %v606
                  %v608 = vld [vmem:[%s604 + $0x4] sm:%s597]
                  %609 = vst [vmem:[%s605 + $0x4] sm:%s597] %v608
                  %v610 = vld [vmem:[%s604 + $0x8] sm:%s597]
                  %611 = vst [vmem:[%s605 + $0x8] sm:%s597] %v610
                  %v612 = vld [vmem:[%s604 + $0xc] sm:%s597]
                  %613 = vst [vmem:[%s605 + $0xc] sm:%s597] %v612
                  %v614 = vld [vmem:[%s604 + $0x10] sm:%s597]
                  %615 = vst [vmem:[%s605 + $0x10] sm:%s597] %v614
                  %v616 = vld [vmem:[%s604 + $0x14] sm:%s597]
                  %617 = vst [vmem:[%s605 + $0x14] sm:%s597] %v616
                  %v618 = vld [vmem:[%s604 + $0x18] sm:%s597]
                  %619 = vst [vmem:[%s605 + $0x18] sm:%s597] %v618
                  %v620 = vld [vmem:[%s604 + $0x1c] sm:%s597]
                  %621 = vst [vmem:[%s605 + $0x1c] sm:%s597] %v620
                  %v622 = vld [vmem:[%s604 + $0x20] sm:%s597]
                  %623 = vst [vmem:[%s605 + $0x20] sm:%s597] %v622
                  %v624 = vld [vmem:[%s604 + $0x24] sm:%s597]
                  %625 = vst [vmem:[%s605 + $0x24] sm:%s597] %v624
                  %v626 = vld [vmem:[%s604 + $0x28] sm:%s597]
                  %627 = vst [vmem:[%s605 + $0x28] sm:%s597] %v626
                  %v628 = vld [vmem:[%s604 + $0x2c] sm:%s597]
                  %629 = vst [vmem:[%s605 + $0x2c] sm:%s597] %v628
                  %v630 = vld [vmem:[%s604 + $0x30] sm:%s597]
                  %631 = vst [vmem:[%s605 + $0x30] sm:%s597] %v630
                  %v632 = vld [vmem:[%s604 + $0x34] sm:%s597]
                  %633 = vst [vmem:[%s605 + $0x34] sm:%s597] %v632
                  %v634 = vld [vmem:[%s604 + $0x38] sm:%s597]
                  %635 = vst [vmem:[%s605 + $0x38] sm:%s597] %v634
                  %v636 = vld [vmem:[%s604 + $0x3c] sm:%s597]
                  %637 = vst [vmem:[%s605 + $0x3c] sm:%s597] %v636
                  %v638 = vld [vmem:[%s604 + $0x40] sm:%s597]
                  %639 = vst [vmem:[%s605 + $0x40] sm:%s597] %v638
                  %v640 = vld [vmem:[%s604 + $0x44] sm:%s597]
                  %641 = vst [vmem:[%s605 + $0x44] sm:%s597] %v640
                  %v642 = vld [vmem:[%s604 + $0x48] sm:%s597]
                  %643 = vst [vmem:[%s605 + $0x48] sm:%s597] %v642
                  %v644 = vld [vmem:[%s604 + $0x4c] sm:%s597]
                  %645 = vst [vmem:[%s605 + $0x4c] sm:%s597] %v644
                  %v646 = vld [vmem:[%s604 + $0x50] sm:%s597]
                  %647 = vst [vmem:[%s605 + $0x50] sm:%s597] %v646
                  %v648 = vld [vmem:[%s604 + $0x54] sm:%s597]
                  %649 = vst [vmem:[%s605 + $0x54] sm:%s597] %v648
                  %v650 = vld [vmem:[%s604 + $0x58] sm:%s597]
                  %651 = vst [vmem:[%s605 + $0x58] sm:%s597] %v650
                  %v652 = vld [vmem:[%s604 + $0x5c] sm:%s597]
                  %653 = vst [vmem:[%s605 + $0x5c] sm:%s597] %v652
                  %v654 = vld [vmem:[%s604 + $0x60] sm:%s597]
                  %655 = vst [vmem:[%s605 + $0x60] sm:%s597] %v654
                  %v656 = vld [vmem:[%s604 + $0x64] sm:%s597]
                  %657 = vst [vmem:[%s605 + $0x64] sm:%s597] %v656
                  %v658 = vld [vmem:[%s604 + $0x68] sm:%s597]
                  %659 = vst [vmem:[%s605 + $0x68] sm:%s597] %v658
                  %v660 = vld [vmem:[%s604 + $0x6c] sm:%s597]
                  %661 = vst [vmem:[%s605 + $0x6c] sm:%s597] %v660
                  %v662 = vld [vmem:[%s604 + $0x70] sm:%s597]
                  %663 = vst [vmem:[%s605 + $0x70] sm:%s597] %v662
                  %v664 = vld [vmem:[%s604 + $0x74] sm:%s597]
                  %665 = vst [vmem:[%s605 + $0x74] sm:%s597] %v664
                  %v666 = vld [vmem:[%s604 + $0x78] sm:%s597]
                  %667 = vst [vmem:[%s605 + $0x78] sm:%s597] %v666
                  %v668 = vld [vmem:[%s604 + $0x7c] sm:%s597]
                  %669 = vst [vmem:[%s605 + $0x7c] sm:%s597] %v668
                  %v670 = vld [vmem:[%s604 + $0x80] sm:%s597]
                  %671 = vst [vmem:[%s605 + $0x80] sm:%s597] %v670
                  %v672 = vld [vmem:[%s604 + $0x84] sm:%s597]
                  %673 = vst [vmem:[%s605 + $0x84] sm:%s597] %v672
                  %v674 = vld [vmem:[%s604 + $0x88] sm:%s597]
                  %675 = vst [vmem:[%s605 + $0x88] sm:%s597] %v674
                  %v676 = vld [vmem:[%s604 + $0x8c] sm:%s597]
                  %677 = vst [vmem:[%s605 + $0x8c] sm:%s597] %v676
                  %v678 = vld [vmem:[%s604 + $0x90] sm:%s597]
                  %679 = vst [vmem:[%s605 + $0x90] sm:%s597] %v678
                  %v680 = vld [vmem:[%s604 + $0x94] sm:%s597]
                  %681 = vst [vmem:[%s605 + $0x94] sm:%s597] %v680
                  %v682 = vld [vmem:[%s604 + $0x98] sm:%s597]
                  %683 = vst [vmem:[%s605 + $0x98] sm:%s597] %v682
                  %v684 = vld [vmem:[%s604 + $0x9c] sm:%s597]
                  %685 = vst [vmem:[%s605 + $0x9c] sm:%s597] %v684
                  %v686 = vld [vmem:[%s604 + $0xa0] sm:%s597]
                  %687 = vst [vmem:[%s605 + $0xa0] sm:%s597] %v686
                  %v688 = vld [vmem:[%s604 + $0xa4] sm:%s597]
                  %689 = vst [vmem:[%s605 + $0xa4] sm:%s597] %v688
                  %v690 = vld [vmem:[%s604 + $0xa8] sm:%s597]
                  %691 = vst [vmem:[%s605 + $0xa8] sm:%s597] %v690
                  %v692 = vld [vmem:[%s604 + $0xac] sm:%s597]
                  %693 = vst [vmem:[%s605 + $0xac] sm:%s597] %v692
                  %v694 = vld [vmem:[%s604 + $0xb0] sm:%s597]
                  %695 = vst [vmem:[%s605 + $0xb0] sm:%s597] %v694
                  %v696 = vld [vmem:[%s604 + $0xb4] sm:%s597]
                  %697 = vst [vmem:[%s605 + $0xb4] sm:%s597] %v696
                  %v698 = vld [vmem:[%s604 + $0xb8] sm:%s597]
                  %699 = vst [vmem:[%s605 + $0xb8] sm:%s597] %v698
                  %v700 = vld [vmem:[%s604 + $0xbc] sm:%s597]
                  %701 = vst [vmem:[%s605 + $0xbc] sm:%s597] %v700
                  %v702 = vld [vmem:[%s604 + $0xc0] sm:%s597]
                  %703 = vst [vmem:[%s605 + $0xc0] sm:%s597] %v702
                  %v704 = vld [vmem:[%s604 + $0xc4] sm:%s597]
                  %705 = vst [vmem:[%s605 + $0xc4] sm:%s597] %v704
                  %v706 = vld [vmem:[%s604 + $0xc8] sm:%s597]
                  %707 = vst [vmem:[%s605 + $0xc8] sm:%s597] %v706
                  %v708 = vld [vmem:[%s604 + $0xcc] sm:%s597]
                  %709 = vst [vmem:[%s605 + $0xcc] sm:%s597] %v708
                  %v710 = vld [vmem:[%s604 + $0xd0] sm:%s597]
                  %711 = vst [vmem:[%s605 + $0xd0] sm:%s597] %v710
                  %v712 = vld [vmem:[%s604 + $0xd4] sm:%s597]
                  %713 = vst [vmem:[%s605 + $0xd4] sm:%s597] %v712
                  %v714 = vld [vmem:[%s604 + $0x1b0] sm:%s597]
                  %715 = vst [vmem:[%s605 + $0xd8] sm:%s597] %v714
                  %v716 = vld [vmem:[%s604 + $0x1b4] sm:%s597]
                  %717 = vst [vmem:[%s605 + $0xdc] sm:%s597] %v716
                  %v718 = vld [vmem:[%s604 + $0x1b8] sm:%s597]
                  %719 = vst [vmem:[%s605 + $0xe0] sm:%s597] %v718
                  %v720 = vld [vmem:[%s604 + $0x1bc] sm:%s597]
                  %721 = vst [vmem:[%s605 + $0xe4] sm:%s597] %v720
                  %v722 = vld [vmem:[%s604 + $0x1c0] sm:%s597]
                  %723 = vst [vmem:[%s605 + $0xe8] sm:%s597] %v722
                  %v724 = vld [vmem:[%s604 + $0x1c4] sm:%s597]
                  %725 = vst [vmem:[%s605 + $0xec] sm:%s597] %v724
                  %v726 = vld [vmem:[%s604 + $0x1c8] sm:%s597]
                  %727 = vst [vmem:[%s605 + $0xf0] sm:%s597] %v726
                  %v728 = vld [vmem:[%s604 + $0x1cc] sm:%s597]
                  %729 = vst [vmem:[%s605 + $0xf4] sm:%s597] %v728
                  %v730 = vld [vmem:[%s604 + $0x1d0] sm:%s597]
                  %731 = vst [vmem:[%s605 + $0xf8] sm:%s597] %v730
                  %v732 = vld [vmem:[%s604 + $0x1d4] sm:%s597]
                  %733 = vst [vmem:[%s605 + $0xfc] sm:%s597] %v732
                  %v734 = vld [vmem:[%s604 + $0x1d8] sm:%s597]
                  %735 = vst [vmem:[%s605 + $0x100] sm:%s597] %v734
                  %v736 = vld [vmem:[%s604 + $0x1dc] sm:%s597]
                  %737 = vst [vmem:[%s605 + $0x104] sm:%s597] %v736
                  %v738 = vld [vmem:[%s604 + $0x1e0] sm:%s597]
                  %739 = vst [vmem:[%s605 + $0x108] sm:%s597] %v738
                  %v740 = vld [vmem:[%s604 + $0x1e4] sm:%s597]
                  %741 = vst [vmem:[%s605 + $0x10c] sm:%s597] %v740
                  %v742 = vld [vmem:[%s604 + $0x1e8] sm:%s597]
                  %743 = vst [vmem:[%s605 + $0x110] sm:%s597] %v742
                  %v744 = vld [vmem:[%s604 + $0x1ec] sm:%s597]
                  %745 = vst [vmem:[%s605 + $0x114] sm:%s597] %v744
                  %v746 = vld [vmem:[%s604 + $0x1f0] sm:%s597]
                  %747 = vst [vmem:[%s605 + $0x118] sm:%s597] %v746
                  %v748 = vld [vmem:[%s604 + $0x1f4] sm:%s597]
                  %749 = vst [vmem:[%s605 + $0x11c] sm:%s597] %v748
                  %v750 = vld [vmem:[%s604 + $0x1f8] sm:%s597]
                  %751 = vst [vmem:[%s605 + $0x120] sm:%s597] %v750
                  %v752 = vld [vmem:[%s604 + $0x1fc] sm:%s597]
                  %753 = vst [vmem:[%s605 + $0x124] sm:%s597] %v752
                  %v754 = vld [vmem:[%s604 + $0x200] sm:%s597]
                  %755 = vst [vmem:[%s605 + $0x128] sm:%s597] %v754
                  %v756 = vld [vmem:[%s604 + $0x204] sm:%s597]
                  %757 = vst [vmem:[%s605 + $0x12c] sm:%s597] %v756
                  %v758 = vld [vmem:[%s604 + $0x208] sm:%s597]
                  %759 = vst [vmem:[%s605 + $0x130] sm:%s597] %v758
                  %v760 = vld [vmem:[%s604 + $0x20c] sm:%s597]
                  %761 = vst [vmem:[%s605 + $0x134] sm:%s597] %v760
                  %v762 = vld [vmem:[%s604 + $0x210] sm:%s597]
                  %763 = vst [vmem:[%s605 + $0x138] sm:%s597] %v762
                  %v764 = vld [vmem:[%s604 + $0x214] sm:%s597]
                  %765 = vst [vmem:[%s605 + $0x13c] sm:%s597] %v764
                  %v766 = vld [vmem:[%s604 + $0x218] sm:%s597]
                  %767 = vst [vmem:[%s605 + $0x140] sm:%s597] %v766
                  %v768 = vld [vmem:[%s604 + $0x21c] sm:%s597]
                  %769 = vst [vmem:[%s605 + $0x144] sm:%s597] %v768
                  %v770 = vld [vmem:[%s604 + $0x220] sm:%s597]
                  %771 = vst [vmem:[%s605 + $0x148] sm:%s597] %v770
                  %v772 = vld [vmem:[%s604 + $0x224] sm:%s597]
                  %773 = vst [vmem:[%s605 + $0x14c] sm:%s597] %v772
                  %v774 = vld [vmem:[%s604 + $0x228] sm:%s597]
                  %775 = vst [vmem:[%s605 + $0x150] sm:%s597] %v774
                  %v776 = vld [vmem:[%s604 + $0x22c] sm:%s597]
                  %777 = vst [vmem:[%s605 + $0x154] sm:%s597] %v776
                  %v778 = vld [vmem:[%s604 + $0x230] sm:%s597]
                  %779 = vst [vmem:[%s605 + $0x158] sm:%s597] %v778
                  %v780 = vld [vmem:[%s604 + $0x234] sm:%s597]
                  %781 = vst [vmem:[%s605 + $0x15c] sm:%s597] %v780
                  %v782 = vld [vmem:[%s604 + $0x238] sm:%s597]
                  %783 = vst [vmem:[%s605 + $0x160] sm:%s597] %v782
                  %v784 = vld [vmem:[%s604 + $0x23c] sm:%s597]
                  %785 = vst [vmem:[%s605 + $0x164] sm:%s597] %v784
                  %v786 = vld [vmem:[%s604 + $0x240] sm:%s597]
                  %787 = vst [vmem:[%s605 + $0x168] sm:%s597] %v786
                  %v788 = vld [vmem:[%s604 + $0x244] sm:%s597]
                  %789 = vst [vmem:[%s605 + $0x16c] sm:%s597] %v788
                  %v790 = vld [vmem:[%s604 + $0x248] sm:%s597]
                  %791 = vst [vmem:[%s605 + $0x170] sm:%s597] %v790
                  %v792 = vld [vmem:[%s604 + $0x24c] sm:%s597]
                  %793 = vst [vmem:[%s605 + $0x174] sm:%s597] %v792
                  %v794 = vld [vmem:[%s604 + $0x250] sm:%s597]
                  %795 = vst [vmem:[%s605 + $0x178] sm:%s597] %v794
                  %v796 = vld [vmem:[%s604 + $0x254] sm:%s597]
                  %797 = vst [vmem:[%s605 + $0x17c] sm:%s597] %v796
                  %v798 = vld [vmem:[%s604 + $0x258] sm:%s597]
                  %799 = vst [vmem:[%s605 + $0x180] sm:%s597] %v798
                  %v800 = vld [vmem:[%s604 + $0x25c] sm:%s597]
                  %801 = vst [vmem:[%s605 + $0x184] sm:%s597] %v800
                  %v802 = vld [vmem:[%s604 + $0x260] sm:%s597]
                  %803 = vst [vmem:[%s605 + $0x188] sm:%s597] %v802
                  %v804 = vld [vmem:[%s604 + $0x264] sm:%s597]
                  %805 = vst [vmem:[%s605 + $0x18c] sm:%s597] %v804
                  %v806 = vld [vmem:[%s604 + $0x268] sm:%s597]
                  %807 = vst [vmem:[%s605 + $0x190] sm:%s597] %v806
                  %v808 = vld [vmem:[%s604 + $0x26c] sm:%s597]
                  %809 = vst [vmem:[%s605 + $0x194] sm:%s597] %v808
                  %v810 = vld [vmem:[%s604 + $0x270] sm:%s597]
                  %811 = vst [vmem:[%s605 + $0x198] sm:%s597] %v810
                  %v812 = vld [vmem:[%s604 + $0x274] sm:%s597]
                  %813 = vst [vmem:[%s605 + $0x19c] sm:%s597] %v812
                  %v814 = vld [vmem:[%s604 + $0x278] sm:%s597]
                  %815 = vst [vmem:[%s605 + $0x1a0] sm:%s597] %v814
                  %v816 = vld [vmem:[%s604 + $0x27c] sm:%s597]
                  %817 = vst [vmem:[%s605 + $0x1a4] sm:%s597] %v816
                  %v818 = vld [vmem:[%s604 + $0x280] sm:%s597]
                  %819 = vst [vmem:[%s605 + $0x1a8] sm:%s597] %v818
                  %v820 = vld [vmem:[%s604 + $0x284] sm:%s597]
                  %821 = vst [vmem:[%s605 + $0x1ac] sm:%s597] %v820
                  %v822 = vld [vmem:[%s604 + $0x360] sm:%s597]
                  %823 = vst [vmem:[%s605 + $0x1b0] sm:%s597] %v822
                  %v824 = vld [vmem:[%s604 + $0x364] sm:%s597]
                  %825 = vst [vmem:[%s605 + $0x1b4] sm:%s597] %v824
                  %v826 = vld [vmem:[%s604 + $0x368] sm:%s597]
                  %827 = vst [vmem:[%s605 + $0x1b8] sm:%s597] %v826
                  %v828 = vld [vmem:[%s604 + $0x36c] sm:%s597]
                  %829 = vst [vmem:[%s605 + $0x1bc] sm:%s597] %v828
                  %v830 = vld [vmem:[%s604 + $0x370] sm:%s597]
                  %831 = vst [vmem:[%s605 + $0x1c0] sm:%s597] %v830
                  %v832 = vld [vmem:[%s604 + $0x374] sm:%s597]
                  %833 = vst [vmem:[%s605 + $0x1c4] sm:%s597] %v832
                  %v834 = vld [vmem:[%s604 + $0x378] sm:%s597]
                  %835 = vst [vmem:[%s605 + $0x1c8] sm:%s597] %v834
                  %v836 = vld [vmem:[%s604 + $0x37c] sm:%s597]
                  %837 = vst [vmem:[%s605 + $0x1cc] sm:%s597] %v836
                  %v838 = vld [vmem:[%s604 + $0x380] sm:%s597]
                  %839 = vst [vmem:[%s605 + $0x1d0] sm:%s597] %v838
                  %v840 = vld [vmem:[%s604 + $0x384] sm:%s597]
                  %841 = vst [vmem:[%s605 + $0x1d4] sm:%s597] %v840
                  %v842 = vld [vmem:[%s604 + $0x388] sm:%s597]
                  %843 = vst [vmem:[%s605 + $0x1d8] sm:%s597] %v842
                  %v844 = vld [vmem:[%s604 + $0x38c] sm:%s597]
                  %845 = vst [vmem:[%s605 + $0x1dc] sm:%s597] %v844
                  %v846 = vld [vmem:[%s604 + $0x390] sm:%s597]
                  %847 = vst [vmem:[%s605 + $0x1e0] sm:%s597] %v846
                  %v848 = vld [vmem:[%s604 + $0x394] sm:%s597]
                  %849 = vst [vmem:[%s605 + $0x1e4] sm:%s597] %v848
                  %v850 = vld [vmem:[%s604 + $0x398] sm:%s597]
                  %851 = vst [vmem:[%s605 + $0x1e8] sm:%s597] %v850
                  %v852 = vld [vmem:[%s604 + $0x39c] sm:%s597]
                  %853 = vst [vmem:[%s605 + $0x1ec] sm:%s597] %v852
                  %v854 = vld [vmem:[%s604 + $0x3a0] sm:%s597]
                  %855 = vst [vmem:[%s605 + $0x1f0] sm:%s597] %v854
                  %v856 = vld [vmem:[%s604 + $0x3a4] sm:%s597]
                  %857 = vst [vmem:[%s605 + $0x1f4] sm:%s597] %v856
                  %v858 = vld [vmem:[%s604 + $0x3a8] sm:%s597]
                  %859 = vst [vmem:[%s605 + $0x1f8] sm:%s597] %v858
                  %v860 = vld [vmem:[%s604 + $0x3ac] sm:%s597]
                  %861 = vst [vmem:[%s605 + $0x1fc] sm:%s597] %v860
                  %v862 = vld [vmem:[%s604 + $0x3b0] sm:%s597]
                  %863 = vst [vmem:[%s605 + $0x200] sm:%s597] %v862
                  %v864 = vld [vmem:[%s604 + $0x3b4] sm:%s597]
                  %865 = vst [vmem:[%s605 + $0x204] sm:%s597] %v864
                  %v866 = vld [vmem:[%s604 + $0x3b8] sm:%s597]
                  %867 = vst [vmem:[%s605 + $0x208] sm:%s597] %v866
                  %v868 = vld [vmem:[%s604 + $0x3bc] sm:%s597]
                  %869 = vst [vmem:[%s605 + $0x20c] sm:%s597] %v868
                  %v870 = vld [vmem:[%s604 + $0x3c0] sm:%s597]
                  %871 = vst [vmem:[%s605 + $0x210] sm:%s597] %v870
                  %v872 = vld [vmem:[%s604 + $0x3c4] sm:%s597]
                  %873 = vst [vmem:[%s605 + $0x214] sm:%s597] %v872
                  %v874 = vld [vmem:[%s604 + $0x3c8] sm:%s597]
                  %875 = vst [vmem:[%s605 + $0x218] sm:%s597] %v874
                  %v876 = vld [vmem:[%s604 + $0x3cc] sm:%s597]
                  %877 = vst [vmem:[%s605 + $0x21c] sm:%s597] %v876
                  %v878 = vld [vmem:[%s604 + $0x3d0] sm:%s597]
                  %879 = vst [vmem:[%s605 + $0x220] sm:%s597] %v878
                  %v880 = vld [vmem:[%s604 + $0x3d4] sm:%s597]
                  %881 = vst [vmem:[%s605 + $0x224] sm:%s597] %v880
                  %v882 = vld [vmem:[%s604 + $0x3d8] sm:%s597]
                  %883 = vst [vmem:[%s605 + $0x228] sm:%s597] %v882
                  %v884 = vld [vmem:[%s604 + $0x3dc] sm:%s597]
                  %885 = vst [vmem:[%s605 + $0x22c] sm:%s597] %v884
                  %v886 = vld [vmem:[%s604 + $0x3e0] sm:%s597]
                  %887 = vst [vmem:[%s605 + $0x230] sm:%s597] %v886
                  %v888 = vld [vmem:[%s604 + $0x3e4] sm:%s597]
                  %889 = vst [vmem:[%s605 + $0x234] sm:%s597] %v888
                  %v890 = vld [vmem:[%s604 + $0x3e8] sm:%s597]
                  %891 = vst [vmem:[%s605 + $0x238] sm:%s597] %v890
                  %v892 = vld [vmem:[%s604 + $0x3ec] sm:%s597]
                  %893 = vst [vmem:[%s605 + $0x23c] sm:%s597] %v892
                  %v894 = vld [vmem:[%s604 + $0x3f0] sm:%s597]
                  %895 = vst [vmem:[%s605 + $0x240] sm:%s597] %v894
                  %v896 = vld [vmem:[%s604 + $0x3f4] sm:%s597]
                  %897 = vst [vmem:[%s605 + $0x244] sm:%s597] %v896
                  %v898 = vld [vmem:[%s604 + $0x3f8] sm:%s597]
                  %899 = vst [vmem:[%s605 + $0x248] sm:%s597] %v898
                  %v900 = vld [vmem:[%s604 + $0x3fc] sm:%s597]
                  %901 = vst [vmem:[%s605 + $0x24c] sm:%s597] %v900
                  %v902 = vld [vmem:[%s604 + $0x400] sm:%s597]
                  %903 = vst [vmem:[%s605 + $0x250] sm:%s597] %v902
                  %v904 = vld [vmem:[%s604 + $0x404] sm:%s597]
                  %905 = vst [vmem:[%s605 + $0x254] sm:%s597] %v904
                  %v906 = vld [vmem:[%s604 + $0x408] sm:%s597]
                  %907 = vst [vmem:[%s605 + $0x258] sm:%s597] %v906
                  %v908 = vld [vmem:[%s604 + $0x40c] sm:%s597]
                  %909 = vst [vmem:[%s605 + $0x25c] sm:%s597] %v908
                  %v910 = vld [vmem:[%s604 + $0x410] sm:%s597]
                  %911 = vst [vmem:[%s605 + $0x260] sm:%s597] %v910
                  %v912 = vld [vmem:[%s604 + $0x414] sm:%s597]
                  %913 = vst [vmem:[%s605 + $0x264] sm:%s597] %v912
                  %v914 = vld [vmem:[%s604 + $0x418] sm:%s597]
                  %915 = vst [vmem:[%s605 + $0x268] sm:%s597] %v914
                  %v916 = vld [vmem:[%s604 + $0x41c] sm:%s597]
                  %917 = vst [vmem:[%s605 + $0x26c] sm:%s597] %v916
                  %v918 = vld [vmem:[%s604 + $0x420] sm:%s597]
                  %919 = vst [vmem:[%s605 + $0x270] sm:%s597] %v918
                  %v920 = vld [vmem:[%s604 + $0x424] sm:%s597]
                  %921 = vst [vmem:[%s605 + $0x274] sm:%s597] %v920
                  %v922 = vld [vmem:[%s604 + $0x428] sm:%s597]
                  %923 = vst [vmem:[%s605 + $0x278] sm:%s597] %v922
                  %v924 = vld [vmem:[%s604 + $0x42c] sm:%s597]
                  %925 = vst [vmem:[%s605 + $0x27c] sm:%s597] %v924
                  %v926 = vld [vmem:[%s604 + $0x430] sm:%s597]
                  %927 = vst [vmem:[%s605 + $0x280] sm:%s597] %v926
                  %v928 = vld [vmem:[%s604 + $0x434] sm:%s597]
                  %929 = vst [vmem:[%s605 + $0x284] sm:%s597] %v928
                  %v930 = vld [vmem:[%s604 + $0x510] sm:%s597]
                  %931 = vst [vmem:[%s605 + $0x288] sm:%s597] %v930
                  %v932 = vld [vmem:[%s604 + $0x514] sm:%s597]
                  %933 = vst [vmem:[%s605 + $0x28c] sm:%s597] %v932
                  %v934 = vld [vmem:[%s604 + $0x518] sm:%s597]
                  %935 = vst [vmem:[%s605 + $0x290] sm:%s597] %v934
                  %v936 = vld [vmem:[%s604 + $0x51c] sm:%s597]
                  %937 = vst [vmem:[%s605 + $0x294] sm:%s597] %v936
                  %v938 = vld [vmem:[%s604 + $0x520] sm:%s597]
                  %939 = vst [vmem:[%s605 + $0x298] sm:%s597] %v938
                  %v940 = vld [vmem:[%s604 + $0x524] sm:%s597]
                  %941 = vst [vmem:[%s605 + $0x29c] sm:%s597] %v940
                  %v942 = vld [vmem:[%s604 + $0x528] sm:%s597]
                  %943 = vst [vmem:[%s605 + $0x2a0] sm:%s597] %v942
                  %v944 = vld [vmem:[%s604 + $0x52c] sm:%s597]
                  %945 = vst [vmem:[%s605 + $0x2a4] sm:%s597] %v944
                  %v946 = vld [vmem:[%s604 + $0x530] sm:%s597]
                  %947 = vst [vmem:[%s605 + $0x2a8] sm:%s597] %v946
                  %v948 = vld [vmem:[%s604 + $0x534] sm:%s597]
                  %949 = vst [vmem:[%s605 + $0x2ac] sm:%s597] %v948
                  %v950 = vld [vmem:[%s604 + $0x538] sm:%s597]
                  %951 = vst [vmem:[%s605 + $0x2b0] sm:%s597] %v950
                  %v952 = vld [vmem:[%s604 + $0x53c] sm:%s597]
                  %953 = vst [vmem:[%s605 + $0x2b4] sm:%s597] %v952
                  %v954 = vld [vmem:[%s604 + $0x540] sm:%s597]
                  %955 = vst [vmem:[%s605 + $0x2b8] sm:%s597] %v954
                  %v956 = vld [vmem:[%s604 + $0x544] sm:%s597]
                  %957 = vst [vmem:[%s605 + $0x2bc] sm:%s597] %v956
                  %v958 = vld [vmem:[%s604 + $0x548] sm:%s597]
                  %959 = vst [vmem:[%s605 + $0x2c0] sm:%s597] %v958
                  %v960 = vld [vmem:[%s604 + $0x54c] sm:%s597]
                  %961 = vst [vmem:[%s605 + $0x2c4] sm:%s597] %v960
                  %v962 = vld [vmem:[%s604 + $0x550] sm:%s597]
                  %963 = vst [vmem:[%s605 + $0x2c8] sm:%s597] %v962
                  %v964 = vld [vmem:[%s604 + $0x554] sm:%s597]
                  %965 = vst [vmem:[%s605 + $0x2cc] sm:%s597] %v964
                  %v966 = vld [vmem:[%s604 + $0x558] sm:%s597]
                  %967 = vst [vmem:[%s605 + $0x2d0] sm:%s597] %v966
                  %v968 = vld [vmem:[%s604 + $0x55c] sm:%s597]
                  %969 = vst [vmem:[%s605 + $0x2d4] sm:%s597] %v968
                  %v970 = vld [vmem:[%s604 + $0x560] sm:%s597]
                  %971 = vst [vmem:[%s605 + $0x2d8] sm:%s597] %v970
                  %v972 = vld [vmem:[%s604 + $0x564] sm:%s597]
                  %973 = vst [vmem:[%s605 + $0x2dc] sm:%s597] %v972
                  %v974 = vld [vmem:[%s604 + $0x568] sm:%s597]
                  %975 = vst [vmem:[%s605 + $0x2e0] sm:%s597] %v974
                  %v976 = vld [vmem:[%s604 + $0x56c] sm:%s597]
                  %977 = vst [vmem:[%s605 + $0x2e4] sm:%s597] %v976
                  %v978 = vld [vmem:[%s604 + $0x570] sm:%s597]
                  %979 = vst [vmem:[%s605 + $0x2e8] sm:%s597] %v978
                  %v980 = vld [vmem:[%s604 + $0x574] sm:%s597]
                  %981 = vst [vmem:[%s605 + $0x2ec] sm:%s597] %v980
                  %v982 = vld [vmem:[%s604 + $0x578] sm:%s597]
                  %983 = vst [vmem:[%s605 + $0x2f0] sm:%s597] %v982
                  %v984 = vld [vmem:[%s604 + $0x57c] sm:%s597]
                  %985 = vst [vmem:[%s605 + $0x2f4] sm:%s597] %v984
                  %v986 = vld [vmem:[%s604 + $0x580] sm:%s597]
                  %987 = vst [vmem:[%s605 + $0x2f8] sm:%s597] %v986
                  %v988 = vld [vmem:[%s604 + $0x584] sm:%s597]
                  %989 = vst [vmem:[%s605 + $0x2fc] sm:%s597] %v988
                  %v990 = vld [vmem:[%s604 + $0x588] sm:%s597]
                  %991 = vst [vmem:[%s605 + $0x300] sm:%s597] %v990
                  %v992 = vld [vmem:[%s604 + $0x58c] sm:%s597]
                  %993 = vst [vmem:[%s605 + $0x304] sm:%s597] %v992
                  %v994 = vld [vmem:[%s604 + $0x590] sm:%s597]
                  %995 = vst [vmem:[%s605 + $0x308] sm:%s597] %v994
                  %v996 = vld [vmem:[%s604 + $0x594] sm:%s597]
                  %997 = vst [vmem:[%s605 + $0x30c] sm:%s597] %v996
                  %v998 = vld [vmem:[%s604 + $0x598] sm:%s597]
                  %999 = vst [vmem:[%s605 + $0x310] sm:%s597] %v998
                  %v1000 = vld [vmem:[%s604 + $0x59c] sm:%s597]
                  %1001 = vst [vmem:[%s605 + $0x314] sm:%s597] %v1000
                  %v1002 = vld [vmem:[%s604 + $0x5a0] sm:%s597]
                  %1003 = vst [vmem:[%s605 + $0x318] sm:%s597] %v1002
                  %v1004 = vld [vmem:[%s604 + $0x5a4] sm:%s597]
                  %1005 = vst [vmem:[%s605 + $0x31c] sm:%s597] %v1004
                  %v1006 = vld [vmem:[%s604 + $0x5a8] sm:%s597]
                  %1007 = vst [vmem:[%s605 + $0x320] sm:%s597] %v1006
                  %v1008 = vld [vmem:[%s604 + $0x5ac] sm:%s597]
                  %1009 = vst [vmem:[%s605 + $0x324] sm:%s597] %v1008
                  %v1010 = vld [vmem:[%s604 + $0x5b0] sm:%s597]
                  %1011 = vst [vmem:[%s605 + $0x328] sm:%s597] %v1010
                  %v1012 = vld [vmem:[%s604 + $0x5b4] sm:%s597]
                  %1013 = vst [vmem:[%s605 + $0x32c] sm:%s597] %v1012
                  %v1014 = vld [vmem:[%s604 + $0x5b8] sm:%s597]
                  %1015 = vst [vmem:[%s605 + $0x330] sm:%s597] %v1014
                  %v1016 = vld [vmem:[%s604 + $0x5bc] sm:%s597]
                  %1017 = vst [vmem:[%s605 + $0x334] sm:%s597] %v1016
                  %v1018 = vld [vmem:[%s604 + $0x5c0] sm:%s597]
                  %1019 = vst [vmem:[%s605 + $0x338] sm:%s597] %v1018
                  %v1020 = vld [vmem:[%s604 + $0x5c4] sm:%s597]
                  %1021 = vst [vmem:[%s605 + $0x33c] sm:%s597] %v1020
                  %v1022 = vld [vmem:[%s604 + $0x5c8] sm:%s597]
                  %1023 = vst [vmem:[%s605 + $0x340] sm:%s597] %v1022
                  %v1024 = vld [vmem:[%s604 + $0x5cc] sm:%s597]
                  %1025 = vst [vmem:[%s605 + $0x344] sm:%s597] %v1024
                  %v1026 = vld [vmem:[%s604 + $0x5d0] sm:%s597]
                  %1027 = vst [vmem:[%s605 + $0x348] sm:%s597] %v1026
                  %v1028 = vld [vmem:[%s604 + $0x5d4] sm:%s597]
                  %1029 = vst [vmem:[%s605 + $0x34c] sm:%s597] %v1028
                  %v1030 = vld [vmem:[%s604 + $0x5d8] sm:%s597]
                  %1031 = vst [vmem:[%s605 + $0x350] sm:%s597] %v1030
                  %v1032 = vld [vmem:[%s604 + $0x5dc] sm:%s597]
                  %1033 = vst [vmem:[%s605 + $0x354] sm:%s597] %v1032
                  %v1034 = vld [vmem:[%s604 + $0x5e0] sm:%s597]
                  %1035 = vst [vmem:[%s605 + $0x358] sm:%s597] %v1034
                  %v1036 = vld [vmem:[%s604 + $0x5e4] sm:%s597]
                  %1037 = vst [vmem:[%s605 + $0x35c] sm:%s597] %v1036
                $region63: #{additive_forward.4} parent=50 // loop_footer
                  %s603 = sadd.s32 1, %s599
                $region64: #{additive_forward.4} parent=50 // loop_footer_branch
                  %598 = sbr.rel target = $region60
                $region65: #{additive_forward.4} parent=50 // loop_exit
                  _
              $region51: #{additive_forward.4} parent=35 // pred_fallthru
                _
            $region36: #{additive_forward.4} parent=31 // pred_fallthru
              _
            // Predicated region
            $region37: #{additive_forward.4} parent=31 // pred_check
              _
            $region38: #{additive_forward.4} parent=31 // pred_check_branch
              %143 = sbr.rel (0) target = $region40
            $region39: #{additive_forward.4} parent=31 // pred_region
              %s145 = ssub.s32 16, 1
              loop: start=0, step=1, limit=1
              $region41: #{additive_forward.4} parent=39 // loop_pre_header
                _
              $region42: #{additive_forward.4} parent=39 // loop_header
                %s147 = sphi 0, %s151
                %p148 = scmp.ge.s32.totalorder %s147, 1
                %s152 = sphi %s137, %s137
                %s153 = sphi %s134, %s134
              $region43: #{additive_forward.4} parent=39 // loop_header_branch
                %150 = sbr.rel (%p148) target = $region47
              $region44: #{additive_forward.4} parent=39 // loop_body
                %v154 = vld [vmem:[%s152] sm:%s145]
                %155 = vst [vmem:[%s153] sm:%s145] %v154
                %v156 = vld [vmem:[%s152 + $0x4] sm:%s145]
                %157 = vst [vmem:[%s153 + $0x4] sm:%s145] %v156
                %v158 = vld [vmem:[%s152 + $0x8] sm:%s145]
                %159 = vst [vmem:[%s153 + $0x8] sm:%s145] %v158
                %v160 = vld [vmem:[%s152 + $0xc] sm:%s145]
                %161 = vst [vmem:[%s153 + $0xc] sm:%s145] %v160
                %v162 = vld [vmem:[%s152 + $0x10] sm:%s145]
                %163 = vst [vmem:[%s153 + $0x10] sm:%s145] %v162
                %v164 = vld [vmem:[%s152 + $0x14] sm:%s145]
                %165 = vst [vmem:[%s153 + $0x14] sm:%s145] %v164
                %v166 = vld [vmem:[%s152 + $0x18] sm:%s145]
                %167 = vst [vmem:[%s153 + $0x18] sm:%s145] %v166
                %v168 = vld [vmem:[%s152 + $0x1c] sm:%s145]
                %169 = vst [vmem:[%s153 + $0x1c] sm:%s145] %v168
                %v170 = vld [vmem:[%s152 + $0x20] sm:%s145]
                %171 = vst [vmem:[%s153 + $0x20] sm:%s145] %v170
                %v172 = vld [vmem:[%s152 + $0x24] sm:%s145]
                %173 = vst [vmem:[%s153 + $0x24] sm:%s145] %v172
                %v174 = vld [vmem:[%s152 + $0x28] sm:%s145]
                %175 = vst [vmem:[%s153 + $0x28] sm:%s145] %v174
                %v176 = vld [vmem:[%s152 + $0x2c] sm:%s145]
                %177 = vst [vmem:[%s153 + $0x2c] sm:%s145] %v176
                %v178 = vld [vmem:[%s152 + $0x30] sm:%s145]
                %179 = vst [vmem:[%s153 + $0x30] sm:%s145] %v178
                %v180 = vld [vmem:[%s152 + $0x34] sm:%s145]
                %181 = vst [vmem:[%s153 + $0x34] sm:%s145] %v180
                %v182 = vld [vmem:[%s152 + $0x38] sm:%s145]
                %183 = vst [vmem:[%s153 + $0x38] sm:%s145] %v182
                %v184 = vld [vmem:[%s152 + $0x3c] sm:%s145]
                %185 = vst [vmem:[%s153 + $0x3c] sm:%s145] %v184
                %v186 = vld [vmem:[%s152 + $0x40] sm:%s145]
                %187 = vst [vmem:[%s153 + $0x40] sm:%s145] %v186
                %v188 = vld [vmem:[%s152 + $0x44] sm:%s145]
                %189 = vst [vmem:[%s153 + $0x44] sm:%s145] %v188
                %v190 = vld [vmem:[%s152 + $0x48] sm:%s145]
                %191 = vst [vmem:[%s153 + $0x48] sm:%s145] %v190
                %v192 = vld [vmem:[%s152 + $0x4c] sm:%s145]
                %193 = vst [vmem:[%s153 + $0x4c] sm:%s145] %v192
                %v194 = vld [vmem:[%s152 + $0x50] sm:%s145]
                %195 = vst [vmem:[%s153 + $0x50] sm:%s145] %v194
                %v196 = vld [vmem:[%s152 + $0x54] sm:%s145]
                %197 = vst [vmem:[%s153 + $0x54] sm:%s145] %v196
                %v198 = vld [vmem:[%s152 + $0x58] sm:%s145]
                %199 = vst [vmem:[%s153 + $0x58] sm:%s145] %v198
                %v200 = vld [vmem:[%s152 + $0x5c] sm:%s145]
                %201 = vst [vmem:[%s153 + $0x5c] sm:%s145] %v200
                %v202 = vld [vmem:[%s152 + $0x60] sm:%s145]
                %203 = vst [vmem:[%s153 + $0x60] sm:%s145] %v202
                %v204 = vld [vmem:[%s152 + $0x64] sm:%s145]
                %205 = vst [vmem:[%s153 + $0x64] sm:%s145] %v204
                %v206 = vld [vmem:[%s152 + $0x68] sm:%s145]
                %207 = vst [vmem:[%s153 + $0x68] sm:%s145] %v206
                %v208 = vld [vmem:[%s152 + $0x6c] sm:%s145]
                %209 = vst [vmem:[%s153 + $0x6c] sm:%s145] %v208
                %v210 = vld [vmem:[%s152 + $0x70] sm:%s145]
                %211 = vst [vmem:[%s153 + $0x70] sm:%s145] %v210
                %v212 = vld [vmem:[%s152 + $0x74] sm:%s145]
                %213 = vst [vmem:[%s153 + $0x74] sm:%s145] %v212
                %v214 = vld [vmem:[%s152 + $0x78] sm:%s145]
                %215 = vst [vmem:[%s153 + $0x78] sm:%s145] %v214
                %v216 = vld [vmem:[%s152 + $0x7c] sm:%s145]
                %217 = vst [vmem:[%s153 + $0x7c] sm:%s145] %v216
                %v218 = vld [vmem:[%s152 + $0x80] sm:%s145]
                %219 = vst [vmem:[%s153 + $0x80] sm:%s145] %v218
                %v220 = vld [vmem:[%s152 + $0x84] sm:%s145]
                %221 = vst [vmem:[%s153 + $0x84] sm:%s145] %v220
                %v222 = vld [vmem:[%s152 + $0x88] sm:%s145]
                %223 = vst [vmem:[%s153 + $0x88] sm:%s145] %v222
                %v224 = vld [vmem:[%s152 + $0x8c] sm:%s145]
                %225 = vst [vmem:[%s153 + $0x8c] sm:%s145] %v224
                %v226 = vld [vmem:[%s152 + $0x90] sm:%s145]
                %227 = vst [vmem:[%s153 + $0x90] sm:%s145] %v226
                %v228 = vld [vmem:[%s152 + $0x94] sm:%s145]
                %229 = vst [vmem:[%s153 + $0x94] sm:%s145] %v228
                %v230 = vld [vmem:[%s152 + $0x98] sm:%s145]
                %231 = vst [vmem:[%s153 + $0x98] sm:%s145] %v230
                %v232 = vld [vmem:[%s152 + $0x9c] sm:%s145]
                %233 = vst [vmem:[%s153 + $0x9c] sm:%s145] %v232
                %v234 = vld [vmem:[%s152 + $0xa0] sm:%s145]
                %235 = vst [vmem:[%s153 + $0xa0] sm:%s145] %v234
                %v236 = vld [vmem:[%s152 + $0xa4] sm:%s145]
                %237 = vst [vmem:[%s153 + $0xa4] sm:%s145] %v236
                %v238 = vld [vmem:[%s152 + $0xa8] sm:%s145]
                %239 = vst [vmem:[%s153 + $0xa8] sm:%s145] %v238
                %v240 = vld [vmem:[%s152 + $0xac] sm:%s145]
                %241 = vst [vmem:[%s153 + $0xac] sm:%s145] %v240
                %v242 = vld [vmem:[%s152 + $0xb0] sm:%s145]
                %243 = vst [vmem:[%s153 + $0xb0] sm:%s145] %v242
                %v244 = vld [vmem:[%s152 + $0xb4] sm:%s145]
                %245 = vst [vmem:[%s153 + $0xb4] sm:%s145] %v244
                %v246 = vld [vmem:[%s152 + $0xb8] sm:%s145]
                %247 = vst [vmem:[%s153 + $0xb8] sm:%s145] %v246
                %v248 = vld [vmem:[%s152 + $0xbc] sm:%s145]
                %249 = vst [vmem:[%s153 + $0xbc] sm:%s145] %v248
                %v250 = vld [vmem:[%s152 + $0xc0] sm:%s145]
                %251 = vst [vmem:[%s153 + $0xc0] sm:%s145] %v250
                %v252 = vld [vmem:[%s152 + $0xc4] sm:%s145]
                %253 = vst [vmem:[%s153 + $0xc4] sm:%s145] %v252
                %v254 = vld [vmem:[%s152 + $0xc8] sm:%s145]
                %255 = vst [vmem:[%s153 + $0xc8] sm:%s145] %v254
                %v256 = vld [vmem:[%s152 + $0xcc] sm:%s145]
                %257 = vst [vmem:[%s153 + $0xcc] sm:%s145] %v256
                %v258 = vld [vmem:[%s152 + $0xd0] sm:%s145]
                %259 = vst [vmem:[%s153 + $0xd0] sm:%s145] %v258
                %v260 = vld [vmem:[%s152 + $0xd4] sm:%s145]
                %261 = vst [vmem:[%s153 + $0xd4] sm:%s145] %v260
                %v262 = vld [vmem:[%s152 + $0x1b0] sm:%s145]
                %263 = vst [vmem:[%s153 + $0xd8] sm:%s145] %v262
                %v264 = vld [vmem:[%s152 + $0x1b4] sm:%s145]
                %265 = vst [vmem:[%s153 + $0xdc] sm:%s145] %v264
                %v266 = vld [vmem:[%s152 + $0x1b8] sm:%s145]
                %267 = vst [vmem:[%s153 + $0xe0] sm:%s145] %v266
                %v268 = vld [vmem:[%s152 + $0x1bc] sm:%s145]
                %269 = vst [vmem:[%s153 + $0xe4] sm:%s145] %v268
                %v270 = vld [vmem:[%s152 + $0x1c0] sm:%s145]
                %271 = vst [vmem:[%s153 + $0xe8] sm:%s145] %v270
                %v272 = vld [vmem:[%s152 + $0x1c4] sm:%s145]
                %273 = vst [vmem:[%s153 + $0xec] sm:%s145] %v272
                %v274 = vld [vmem:[%s152 + $0x1c8] sm:%s145]
                %275 = vst [vmem:[%s153 + $0xf0] sm:%s145] %v274
                %v276 = vld [vmem:[%s152 + $0x1cc] sm:%s145]
                %277 = vst [vmem:[%s153 + $0xf4] sm:%s145] %v276
                %v278 = vld [vmem:[%s152 + $0x1d0] sm:%s145]
                %279 = vst [vmem:[%s153 + $0xf8] sm:%s145] %v278
                %v280 = vld [vmem:[%s152 + $0x1d4] sm:%s145]
                %281 = vst [vmem:[%s153 + $0xfc] sm:%s145] %v280
                %v282 = vld [vmem:[%s152 + $0x1d8] sm:%s145]
                %283 = vst [vmem:[%s153 + $0x100] sm:%s145] %v282
                %v284 = vld [vmem:[%s152 + $0x1dc] sm:%s145]
                %285 = vst [vmem:[%s153 + $0x104] sm:%s145] %v284
                %v286 = vld [vmem:[%s152 + $0x1e0] sm:%s145]
                %287 = vst [vmem:[%s153 + $0x108] sm:%s145] %v286
                %v288 = vld [vmem:[%s152 + $0x1e4] sm:%s145]
                %289 = vst [vmem:[%s153 + $0x10c] sm:%s145] %v288
                %v290 = vld [vmem:[%s152 + $0x1e8] sm:%s145]
                %291 = vst [vmem:[%s153 + $0x110] sm:%s145] %v290
                %v292 = vld [vmem:[%s152 + $0x1ec] sm:%s145]
                %293 = vst [vmem:[%s153 + $0x114] sm:%s145] %v292
                %v294 = vld [vmem:[%s152 + $0x1f0] sm:%s145]
                %295 = vst [vmem:[%s153 + $0x118] sm:%s145] %v294
                %v296 = vld [vmem:[%s152 + $0x1f4] sm:%s145]
                %297 = vst [vmem:[%s153 + $0x11c] sm:%s145] %v296
                %v298 = vld [vmem:[%s152 + $0x1f8] sm:%s145]
                %299 = vst [vmem:[%s153 + $0x120] sm:%s145] %v298
                %v300 = vld [vmem:[%s152 + $0x1fc] sm:%s145]
                %301 = vst [vmem:[%s153 + $0x124] sm:%s145] %v300
                %v302 = vld [vmem:[%s152 + $0x200] sm:%s145]
                %303 = vst [vmem:[%s153 + $0x128] sm:%s145] %v302
                %v304 = vld [vmem:[%s152 + $0x204] sm:%s145]
                %305 = vst [vmem:[%s153 + $0x12c] sm:%s145] %v304
                %v306 = vld [vmem:[%s152 + $0x208] sm:%s145]
                %307 = vst [vmem:[%s153 + $0x130] sm:%s145] %v306
                %v308 = vld [vmem:[%s152 + $0x20c] sm:%s145]
                %309 = vst [vmem:[%s153 + $0x134] sm:%s145] %v308
                %v310 = vld [vmem:[%s152 + $0x210] sm:%s145]
                %311 = vst [vmem:[%s153 + $0x138] sm:%s145] %v310
                %v312 = vld [vmem:[%s152 + $0x214] sm:%s145]
                %313 = vst [vmem:[%s153 + $0x13c] sm:%s145] %v312
                %v314 = vld [vmem:[%s152 + $0x218] sm:%s145]
                %315 = vst [vmem:[%s153 + $0x140] sm:%s145] %v314
                %v316 = vld [vmem:[%s152 + $0x21c] sm:%s145]
                %317 = vst [vmem:[%s153 + $0x144] sm:%s145] %v316
                %v318 = vld [vmem:[%s152 + $0x220] sm:%s145]
                %319 = vst [vmem:[%s153 + $0x148] sm:%s145] %v318
                %v320 = vld [vmem:[%s152 + $0x224] sm:%s145]
                %321 = vst [vmem:[%s153 + $0x14c] sm:%s145] %v320
                %v322 = vld [vmem:[%s152 + $0x228] sm:%s145]
                %323 = vst [vmem:[%s153 + $0x150] sm:%s145] %v322
                %v324 = vld [vmem:[%s152 + $0x22c] sm:%s145]
                %325 = vst [vmem:[%s153 + $0x154] sm:%s145] %v324
                %v326 = vld [vmem:[%s152 + $0x230] sm:%s145]
                %327 = vst [vmem:[%s153 + $0x158] sm:%s145] %v326
                %v328 = vld [vmem:[%s152 + $0x234] sm:%s145]
                %329 = vst [vmem:[%s153 + $0x15c] sm:%s145] %v328
                %v330 = vld [vmem:[%s152 + $0x238] sm:%s145]
                %331 = vst [vmem:[%s153 + $0x160] sm:%s145] %v330
                %v332 = vld [vmem:[%s152 + $0x23c] sm:%s145]
                %333 = vst [vmem:[%s153 + $0x164] sm:%s145] %v332
                %v334 = vld [vmem:[%s152 + $0x240] sm:%s145]
                %335 = vst [vmem:[%s153 + $0x168] sm:%s145] %v334
                %v336 = vld [vmem:[%s152 + $0x244] sm:%s145]
                %337 = vst [vmem:[%s153 + $0x16c] sm:%s145] %v336
                %v338 = vld [vmem:[%s152 + $0x248] sm:%s145]
                %339 = vst [vmem:[%s153 + $0x170] sm:%s145] %v338
                %v340 = vld [vmem:[%s152 + $0x24c] sm:%s145]
                %341 = vst [vmem:[%s153 + $0x174] sm:%s145] %v340
                %v342 = vld [vmem:[%s152 + $0x250] sm:%s145]
                %343 = vst [vmem:[%s153 + $0x178] sm:%s145] %v342
                %v344 = vld [vmem:[%s152 + $0x254] sm:%s145]
                %345 = vst [vmem:[%s153 + $0x17c] sm:%s145] %v344
                %v346 = vld [vmem:[%s152 + $0x258] sm:%s145]
                %347 = vst [vmem:[%s153 + $0x180] sm:%s145] %v346
                %v348 = vld [vmem:[%s152 + $0x25c] sm:%s145]
                %349 = vst [vmem:[%s153 + $0x184] sm:%s145] %v348
                %v350 = vld [vmem:[%s152 + $0x260] sm:%s145]
                %351 = vst [vmem:[%s153 + $0x188] sm:%s145] %v350
                %v352 = vld [vmem:[%s152 + $0x264] sm:%s145]
                %353 = vst [vmem:[%s153 + $0x18c] sm:%s145] %v352
                %v354 = vld [vmem:[%s152 + $0x268] sm:%s145]
                %355 = vst [vmem:[%s153 + $0x190] sm:%s145] %v354
                %v356 = vld [vmem:[%s152 + $0x26c] sm:%s145]
                %357 = vst [vmem:[%s153 + $0x194] sm:%s145] %v356
                %v358 = vld [vmem:[%s152 + $0x270] sm:%s145]
                %359 = vst [vmem:[%s153 + $0x198] sm:%s145] %v358
                %v360 = vld [vmem:[%s152 + $0x274] sm:%s145]
                %361 = vst [vmem:[%s153 + $0x19c] sm:%s145] %v360
                %v362 = vld [vmem:[%s152 + $0x278] sm:%s145]
                %363 = vst [vmem:[%s153 + $0x1a0] sm:%s145] %v362
                %v364 = vld [vmem:[%s152 + $0x27c] sm:%s145]
                %365 = vst [vmem:[%s153 + $0x1a4] sm:%s145] %v364
                %v366 = vld [vmem:[%s152 + $0x280] sm:%s145]
                %367 = vst [vmem:[%s153 + $0x1a8] sm:%s145] %v366
                %v368 = vld [vmem:[%s152 + $0x284] sm:%s145]
                %369 = vst [vmem:[%s153 + $0x1ac] sm:%s145] %v368
                %v370 = vld [vmem:[%s152 + $0x360] sm:%s145]
                %371 = vst [vmem:[%s153 + $0x1b0] sm:%s145] %v370
                %v372 = vld [vmem:[%s152 + $0x364] sm:%s145]
                %373 = vst [vmem:[%s153 + $0x1b4] sm:%s145] %v372
                %v374 = vld [vmem:[%s152 + $0x368] sm:%s145]
                %375 = vst [vmem:[%s153 + $0x1b8] sm:%s145] %v374
                %v376 = vld [vmem:[%s152 + $0x36c] sm:%s145]
                %377 = vst [vmem:[%s153 + $0x1bc] sm:%s145] %v376
                %v378 = vld [vmem:[%s152 + $0x370] sm:%s145]
                %379 = vst [vmem:[%s153 + $0x1c0] sm:%s145] %v378
                %v380 = vld [vmem:[%s152 + $0x374] sm:%s145]
                %381 = vst [vmem:[%s153 + $0x1c4] sm:%s145] %v380
                %v382 = vld [vmem:[%s152 + $0x378] sm:%s145]
                %383 = vst [vmem:[%s153 + $0x1c8] sm:%s145] %v382
                %v384 = vld [vmem:[%s152 + $0x37c] sm:%s145]
                %385 = vst [vmem:[%s153 + $0x1cc] sm:%s145] %v384
                %v386 = vld [vmem:[%s152 + $0x380] sm:%s145]
                %387 = vst [vmem:[%s153 + $0x1d0] sm:%s145] %v386
                %v388 = vld [vmem:[%s152 + $0x384] sm:%s145]
                %389 = vst [vmem:[%s153 + $0x1d4] sm:%s145] %v388
                %v390 = vld [vmem:[%s152 + $0x388] sm:%s145]
                %391 = vst [vmem:[%s153 + $0x1d8] sm:%s145] %v390
                %v392 = vld [vmem:[%s152 + $0x38c] sm:%s145]
                %393 = vst [vmem:[%s153 + $0x1dc] sm:%s145] %v392
                %v394 = vld [vmem:[%s152 + $0x390] sm:%s145]
                %395 = vst [vmem:[%s153 + $0x1e0] sm:%s145] %v394
                %v396 = vld [vmem:[%s152 + $0x394] sm:%s145]
                %397 = vst [vmem:[%s153 + $0x1e4] sm:%s145] %v396
                %v398 = vld [vmem:[%s152 + $0x398] sm:%s145]
                %399 = vst [vmem:[%s153 + $0x1e8] sm:%s145] %v398
                %v400 = vld [vmem:[%s152 + $0x39c] sm:%s145]
                %401 = vst [vmem:[%s153 + $0x1ec] sm:%s145] %v400
                %v402 = vld [vmem:[%s152 + $0x3a0] sm:%s145]
                %403 = vst [vmem:[%s153 + $0x1f0] sm:%s145] %v402
                %v404 = vld [vmem:[%s152 + $0x3a4] sm:%s145]
                %405 = vst [vmem:[%s153 + $0x1f4] sm:%s145] %v404
                %v406 = vld [vmem:[%s152 + $0x3a8] sm:%s145]
                %407 = vst [vmem:[%s153 + $0x1f8] sm:%s145] %v406
                %v408 = vld [vmem:[%s152 + $0x3ac] sm:%s145]
                %409 = vst [vmem:[%s153 + $0x1fc] sm:%s145] %v408
                %v410 = vld [vmem:[%s152 + $0x3b0] sm:%s145]
                %411 = vst [vmem:[%s153 + $0x200] sm:%s145] %v410
                %v412 = vld [vmem:[%s152 + $0x3b4] sm:%s145]
                %413 = vst [vmem:[%s153 + $0x204] sm:%s145] %v412
                %v414 = vld [vmem:[%s152 + $0x3b8] sm:%s145]
                %415 = vst [vmem:[%s153 + $0x208] sm:%s145] %v414
                %v416 = vld [vmem:[%s152 + $0x3bc] sm:%s145]
                %417 = vst [vmem:[%s153 + $0x20c] sm:%s145] %v416
                %v418 = vld [vmem:[%s152 + $0x3c0] sm:%s145]
                %419 = vst [vmem:[%s153 + $0x210] sm:%s145] %v418
                %v420 = vld [vmem:[%s152 + $0x3c4] sm:%s145]
                %421 = vst [vmem:[%s153 + $0x214] sm:%s145] %v420
                %v422 = vld [vmem:[%s152 + $0x3c8] sm:%s145]
                %423 = vst [vmem:[%s153 + $0x218] sm:%s145] %v422
                %v424 = vld [vmem:[%s152 + $0x3cc] sm:%s145]
                %425 = vst [vmem:[%s153 + $0x21c] sm:%s145] %v424
                %v426 = vld [vmem:[%s152 + $0x3d0] sm:%s145]
                %427 = vst [vmem:[%s153 + $0x220] sm:%s145] %v426
                %v428 = vld [vmem:[%s152 + $0x3d4] sm:%s145]
                %429 = vst [vmem:[%s153 + $0x224] sm:%s145] %v428
                %v430 = vld [vmem:[%s152 + $0x3d8] sm:%s145]
                %431 = vst [vmem:[%s153 + $0x228] sm:%s145] %v430
                %v432 = vld [vmem:[%s152 + $0x3dc] sm:%s145]
                %433 = vst [vmem:[%s153 + $0x22c] sm:%s145] %v432
                %v434 = vld [vmem:[%s152 + $0x3e0] sm:%s145]
                %435 = vst [vmem:[%s153 + $0x230] sm:%s145] %v434
                %v436 = vld [vmem:[%s152 + $0x3e4] sm:%s145]
                %437 = vst [vmem:[%s153 + $0x234] sm:%s145] %v436
                %v438 = vld [vmem:[%s152 + $0x3e8] sm:%s145]
                %439 = vst [vmem:[%s153 + $0x238] sm:%s145] %v438
                %v440 = vld [vmem:[%s152 + $0x3ec] sm:%s145]
                %441 = vst [vmem:[%s153 + $0x23c] sm:%s145] %v440
                %v442 = vld [vmem:[%s152 + $0x3f0] sm:%s145]
                %443 = vst [vmem:[%s153 + $0x240] sm:%s145] %v442
                %v444 = vld [vmem:[%s152 + $0x3f4] sm:%s145]
                %445 = vst [vmem:[%s153 + $0x244] sm:%s145] %v444
                %v446 = vld [vmem:[%s152 + $0x3f8] sm:%s145]
                %447 = vst [vmem:[%s153 + $0x248] sm:%s145] %v446
                %v448 = vld [vmem:[%s152 + $0x3fc] sm:%s145]
                %449 = vst [vmem:[%s153 + $0x24c] sm:%s145] %v448
                %v450 = vld [vmem:[%s152 + $0x400] sm:%s145]
                %451 = vst [vmem:[%s153 + $0x250] sm:%s145] %v450
                %v452 = vld [vmem:[%s152 + $0x404] sm:%s145]
                %453 = vst [vmem:[%s153 + $0x254] sm:%s145] %v452
                %v454 = vld [vmem:[%s152 + $0x408] sm:%s145]
                %455 = vst [vmem:[%s153 + $0x258] sm:%s145] %v454
                %v456 = vld [vmem:[%s152 + $0x40c] sm:%s145]
                %457 = vst [vmem:[%s153 + $0x25c] sm:%s145] %v456
                %v458 = vld [vmem:[%s152 + $0x410] sm:%s145]
                %459 = vst [vmem:[%s153 + $0x260] sm:%s145] %v458
                %v460 = vld [vmem:[%s152 + $0x414] sm:%s145]
                %461 = vst [vmem:[%s153 + $0x264] sm:%s145] %v460
                %v462 = vld [vmem:[%s152 + $0x418] sm:%s145]
                %463 = vst [vmem:[%s153 + $0x268] sm:%s145] %v462
                %v464 = vld [vmem:[%s152 + $0x41c] sm:%s145]
                %465 = vst [vmem:[%s153 + $0x26c] sm:%s145] %v464
                %v466 = vld [vmem:[%s152 + $0x420] sm:%s145]
                %467 = vst [vmem:[%s153 + $0x270] sm:%s145] %v466
                %v468 = vld [vmem:[%s152 + $0x424] sm:%s145]
                %469 = vst [vmem:[%s153 + $0x274] sm:%s145] %v468
                %v470 = vld [vmem:[%s152 + $0x428] sm:%s145]
                %471 = vst [vmem:[%s153 + $0x278] sm:%s145] %v470
                %v472 = vld [vmem:[%s152 + $0x42c] sm:%s145]
                %473 = vst [vmem:[%s153 + $0x27c] sm:%s145] %v472
                %v474 = vld [vmem:[%s152 + $0x430] sm:%s145]
                %475 = vst [vmem:[%s153 + $0x280] sm:%s145] %v474
                %v476 = vld [vmem:[%s152 + $0x434] sm:%s145]
                %477 = vst [vmem:[%s153 + $0x284] sm:%s145] %v476
                %v478 = vld [vmem:[%s152 + $0x510] sm:%s145]
                %479 = vst [vmem:[%s153 + $0x288] sm:%s145] %v478
                %v480 = vld [vmem:[%s152 + $0x514] sm:%s145]
                %481 = vst [vmem:[%s153 + $0x28c] sm:%s145] %v480
                %v482 = vld [vmem:[%s152 + $0x518] sm:%s145]
                %483 = vst [vmem:[%s153 + $0x290] sm:%s145] %v482
                %v484 = vld [vmem:[%s152 + $0x51c] sm:%s145]
                %485 = vst [vmem:[%s153 + $0x294] sm:%s145] %v484
                %v486 = vld [vmem:[%s152 + $0x520] sm:%s145]
                %487 = vst [vmem:[%s153 + $0x298] sm:%s145] %v486
                %v488 = vld [vmem:[%s152 + $0x524] sm:%s145]
                %489 = vst [vmem:[%s153 + $0x29c] sm:%s145] %v488
                %v490 = vld [vmem:[%s152 + $0x528] sm:%s145]
                %491 = vst [vmem:[%s153 + $0x2a0] sm:%s145] %v490
                %v492 = vld [vmem:[%s152 + $0x52c] sm:%s145]
                %493 = vst [vmem:[%s153 + $0x2a4] sm:%s145] %v492
                %v494 = vld [vmem:[%s152 + $0x530] sm:%s145]
                %495 = vst [vmem:[%s153 + $0x2a8] sm:%s145] %v494
                %v496 = vld [vmem:[%s152 + $0x534] sm:%s145]
                %497 = vst [vmem:[%s153 + $0x2ac] sm:%s145] %v496
                %v498 = vld [vmem:[%s152 + $0x538] sm:%s145]
                %499 = vst [vmem:[%s153 + $0x2b0] sm:%s145] %v498
                %v500 = vld [vmem:[%s152 + $0x53c] sm:%s145]
                %501 = vst [vmem:[%s153 + $0x2b4] sm:%s145] %v500
                %v502 = vld [vmem:[%s152 + $0x540] sm:%s145]
                %503 = vst [vmem:[%s153 + $0x2b8] sm:%s145] %v502
                %v504 = vld [vmem:[%s152 + $0x544] sm:%s145]
                %505 = vst [vmem:[%s153 + $0x2bc] sm:%s145] %v504
                %v506 = vld [vmem:[%s152 + $0x548] sm:%s145]
                %507 = vst [vmem:[%s153 + $0x2c0] sm:%s145] %v506
                %v508 = vld [vmem:[%s152 + $0x54c] sm:%s145]
                %509 = vst [vmem:[%s153 + $0x2c4] sm:%s145] %v508
                %v510 = vld [vmem:[%s152 + $0x550] sm:%s145]
                %511 = vst [vmem:[%s153 + $0x2c8] sm:%s145] %v510
                %v512 = vld [vmem:[%s152 + $0x554] sm:%s145]
                %513 = vst [vmem:[%s153 + $0x2cc] sm:%s145] %v512
                %v514 = vld [vmem:[%s152 + $0x558] sm:%s145]
                %515 = vst [vmem:[%s153 + $0x2d0] sm:%s145] %v514
                %v516 = vld [vmem:[%s152 + $0x55c] sm:%s145]
                %517 = vst [vmem:[%s153 + $0x2d4] sm:%s145] %v516
                %v518 = vld [vmem:[%s152 + $0x560] sm:%s145]
                %519 = vst [vmem:[%s153 + $0x2d8] sm:%s145] %v518
                %v520 = vld [vmem:[%s152 + $0x564] sm:%s145]
                %521 = vst [vmem:[%s153 + $0x2dc] sm:%s145] %v520
                %v522 = vld [vmem:[%s152 + $0x568] sm:%s145]
                %523 = vst [vmem:[%s153 + $0x2e0] sm:%s145] %v522
                %v524 = vld [vmem:[%s152 + $0x56c] sm:%s145]
                %525 = vst [vmem:[%s153 + $0x2e4] sm:%s145] %v524
                %v526 = vld [vmem:[%s152 + $0x570] sm:%s145]
                %527 = vst [vmem:[%s153 + $0x2e8] sm:%s145] %v526
                %v528 = vld [vmem:[%s152 + $0x574] sm:%s145]
                %529 = vst [vmem:[%s153 + $0x2ec] sm:%s145] %v528
                %v530 = vld [vmem:[%s152 + $0x578] sm:%s145]
                %531 = vst [vmem:[%s153 + $0x2f0] sm:%s145] %v530
                %v532 = vld [vmem:[%s152 + $0x57c] sm:%s145]
                %533 = vst [vmem:[%s153 + $0x2f4] sm:%s145] %v532
                %v534 = vld [vmem:[%s152 + $0x580] sm:%s145]
                %535 = vst [vmem:[%s153 + $0x2f8] sm:%s145] %v534
                %v536 = vld [vmem:[%s152 + $0x584] sm:%s145]
                %537 = vst [vmem:[%s153 + $0x2fc] sm:%s145] %v536
                %v538 = vld [vmem:[%s152 + $0x588] sm:%s145]
                %539 = vst [vmem:[%s153 + $0x300] sm:%s145] %v538
                %v540 = vld [vmem:[%s152 + $0x58c] sm:%s145]
                %541 = vst [vmem:[%s153 + $0x304] sm:%s145] %v540
                %v542 = vld [vmem:[%s152 + $0x590] sm:%s145]
                %543 = vst [vmem:[%s153 + $0x308] sm:%s145] %v542
                %v544 = vld [vmem:[%s152 + $0x594] sm:%s145]
                %545 = vst [vmem:[%s153 + $0x30c] sm:%s145] %v544
                %v546 = vld [vmem:[%s152 + $0x598] sm:%s145]
                %547 = vst [vmem:[%s153 + $0x310] sm:%s145] %v546
                %v548 = vld [vmem:[%s152 + $0x59c] sm:%s145]
                %549 = vst [vmem:[%s153 + $0x314] sm:%s145] %v548
                %v550 = vld [vmem:[%s152 + $0x5a0] sm:%s145]
                %551 = vst [vmem:[%s153 + $0x318] sm:%s145] %v550
                %v552 = vld [vmem:[%s152 + $0x5a4] sm:%s145]
                %553 = vst [vmem:[%s153 + $0x31c] sm:%s145] %v552
                %v554 = vld [vmem:[%s152 + $0x5a8] sm:%s145]
                %555 = vst [vmem:[%s153 + $0x320] sm:%s145] %v554
                %v556 = vld [vmem:[%s152 + $0x5ac] sm:%s145]
                %557 = vst [vmem:[%s153 + $0x324] sm:%s145] %v556
                %v558 = vld [vmem:[%s152 + $0x5b0] sm:%s145]
                %559 = vst [vmem:[%s153 + $0x328] sm:%s145] %v558
                %v560 = vld [vmem:[%s152 + $0x5b4] sm:%s145]
                %561 = vst [vmem:[%s153 + $0x32c] sm:%s145] %v560
                %v562 = vld [vmem:[%s152 + $0x5b8] sm:%s145]
                %563 = vst [vmem:[%s153 + $0x330] sm:%s145] %v562
                %v564 = vld [vmem:[%s152 + $0x5bc] sm:%s145]
                %565 = vst [vmem:[%s153 + $0x334] sm:%s145] %v564
                %v566 = vld [vmem:[%s152 + $0x5c0] sm:%s145]
                %567 = vst [vmem:[%s153 + $0x338] sm:%s145] %v566
                %v568 = vld [vmem:[%s152 + $0x5c4] sm:%s145]
                %569 = vst [vmem:[%s153 + $0x33c] sm:%s145] %v568
                %v570 = vld [vmem:[%s152 + $0x5c8] sm:%s145]
                %571 = vst [vmem:[%s153 + $0x340] sm:%s145] %v570
                %v572 = vld [vmem:[%s152 + $0x5cc] sm:%s145]
                %573 = vst [vmem:[%s153 + $0x344] sm:%s145] %v572
                %v574 = vld [vmem:[%s152 + $0x5d0] sm:%s145]
                %575 = vst [vmem:[%s153 + $0x348] sm:%s145] %v574
                %v576 = vld [vmem:[%s152 + $0x5d4] sm:%s145]
                %577 = vst [vmem:[%s153 + $0x34c] sm:%s145] %v576
                %v578 = vld [vmem:[%s152 + $0x5d8] sm:%s145]
                %579 = vst [vmem:[%s153 + $0x350] sm:%s145] %v578
                %v580 = vld [vmem:[%s152 + $0x5dc] sm:%s145]
                %581 = vst [vmem:[%s153 + $0x354] sm:%s145] %v580
                %v582 = vld [vmem:[%s152 + $0x5e0] sm:%s145]
                %583 = vst [vmem:[%s153 + $0x358] sm:%s145] %v582
                %v584 = vld [vmem:[%s152 + $0x5e4] sm:%s145]
                %585 = vst [vmem:[%s153 + $0x35c] sm:%s145] %v584
              $region45: #{additive_forward.4} parent=39 // loop_footer
                %s151 = sadd.s32 1, %s147
              $region46: #{additive_forward.4} parent=39 // loop_footer_branch
                %146 = sbr.rel target = $region42
              $region47: #{additive_forward.4} parent=39 // loop_exit
                _
            $region40: #{additive_forward.4} parent=31 // pred_fallthru
              _
          $region32: #{additive_forward.4} parent=27 // pred_fallthru
            _
          %1038 = vnop
        $region28: #{additive_forward.4} parent=23 // pred_fallthru
          _
      $region24: #{additive_forward.4} parent=5 // pred_fallthru
        _
      %p1039 = scmp.le.s32.totalorder 1, %s9
      %p1040 = scmp.lt.s32.totalorder %s9, 3
      %p1041 = pnand %p1039, %p1040
      %p1042 = pneg %p1041
      // Predicated region
      $region66: #{additive_forward.4} parent=5 // pred_check
        _
      $region67: #{additive_forward.4} parent=5 // pred_check_branch
        %1044 = sbr.rel (%p1041) target = $region69
      $region68: #{additive_forward.4} parent=5 // pred_region
        %s1045 = ssub.s32 %s9, 1
        %s1046 = sand.u32 %s22, 1
        %s1047 = sand.u32 %s22, 1
        %s1048 = smul.addr %s1047, 864
        %s1049 = scalar_lea.vmem [#allocation2], %s1048
        // Predicated region
        $region70: #{additive_forward.4} parent=68 // pred_check
          %p1050 = pneg %p35
        $region71: #{additive_forward.4} parent=68 // pred_check_branch
          %1052 = sbr.rel (%p1050) target = $region73
        $region72: #{additive_forward.4} parent=68 // pred_region
          _
        $region73: #{additive_forward.4} parent=68 // pred_fallthru
          _
        %s1053 = sand.u32 %s22, 1
        %s1054 = sand.u32 %s22, 1
        %s1055 = smul.addr %s1054, 864
        %s1056 = scalar_lea.vmem [#allocation2], %s1055
        %p1057 = pneg %p35
        %p1058 = pneg %p32
        %p1059 = pneg %p56
        %p1060 = pneg %p53
        %p1061 = pneg %p77
        %p1062 = pneg %p74
        %p1063 = pneg %p103
        %p1064 = pneg %p100
        %s1065 = smul.u32 54, %s14
        %p1066 = scmp.lt.s32.totalorder %s1065, 107
        %s1067 = scalar_select %p1066, %s1065, 107
        %s1068 = smul.addr %s1067, 4
        %s1069 = scalar_lea.vmem %s3, %s1068
        %s1070 = smul.u32 54, %s14
        %s1071 = smul.u32 54, %s14
        %p1072 = scmp.lt.s32.totalorder %s1071, 107
        %s1073 = scalar_select %p1072, %s1071, 107
        %s1074 = smul.addr %s1073, 4
        %s1075 = scalar_lea.vmem %s3, %s1074
        %s1076 = smul.u32 54, %s14
        %v1078 = vld [vmem:[%s1049] sm:$0xf]
        %v1079 = vld [vmem:[%s1049 + $0x4] sm:$0xf]
        %v1080 = vld [vmem:[%s1049 + $0x8] sm:$0xf]
        %v1081 = vld [vmem:[%s1049 + $0xc] sm:$0xf]
        %v1082 = vld [vmem:[%s1049 + $0x10] sm:$0xf]
        %v1083 = vld [vmem:[%s1049 + $0x14] sm:$0xf]
        %v1084 = vld [vmem:[%s1049 + $0x18] sm:$0xf]
        %v1085 = vld [vmem:[%s1049 + $0x1c] sm:$0xf]
        %v1086 = vld [vmem:[%s1049 + $0x20] sm:$0xf]
        %v1087 = vld [vmem:[%s1049 + $0x24] sm:$0xf]
        %v1088 = vld [vmem:[%s1049 + $0x28] sm:$0xf]
        %v1089 = vld [vmem:[%s1049 + $0x2c] sm:$0xf]
        %v1090 = vld [vmem:[%s1049 + $0x30] sm:$0xf]
        %v1091 = vld [vmem:[%s1049 + $0x34] sm:$0xf]
        %v1092 = vld [vmem:[%s1049 + $0x38] sm:$0xf]
        %v1093 = vld [vmem:[%s1049 + $0x3c] sm:$0xf]
        %v1094 = vld [vmem:[%s1049 + $0x40] sm:$0xf]
        %v1095 = vld [vmem:[%s1049 + $0x44] sm:$0xf]
        %v1096 = vld [vmem:[%s1049 + $0x48] sm:$0xf]
        %v1097 = vld [vmem:[%s1049 + $0x4c] sm:$0xf]
        %v1098 = vld [vmem:[%s1049 + $0x50] sm:$0xf]
        %v1099 = vld [vmem:[%s1049 + $0x54] sm:$0xf]
        %v1100 = vld [vmem:[%s1049 + $0x58] sm:$0xf]
        %v1101 = vld [vmem:[%s1049 + $0x5c] sm:$0xf]
        %v1102 = vld [vmem:[%s1049 + $0x60] sm:$0xf]
        %v1103 = vld [vmem:[%s1049 + $0x64] sm:$0xf]
        %v1104 = vld [vmem:[%s1049 + $0x68] sm:$0xf]
        %v1105 = vld [vmem:[%s1049 + $0x6c] sm:$0xf]
        %v1106 = vld [vmem:[%s1049 + $0x70] sm:$0xf]
        %v1107 = vld [vmem:[%s1049 + $0x74] sm:$0xf]
        %v1108 = vld [vmem:[%s1049 + $0x78] sm:$0xf]
        %v1109 = vld [vmem:[%s1049 + $0x7c] sm:$0xf]
        %v1110 = vld [vmem:[%s1049 + $0x80] sm:$0xf]
        %v1111 = vld [vmem:[%s1049 + $0x84] sm:$0xf]
        %v1112 = vld [vmem:[%s1049 + $0x88] sm:$0xf]
        %v1113 = vld [vmem:[%s1049 + $0x8c] sm:$0xf]
        %v1114 = vld [vmem:[%s1049 + $0x90] sm:$0xf]
        %v1115 = vld [vmem:[%s1049 + $0x94] sm:$0xf]
        %v1116 = vld [vmem:[%s1049 + $0x98] sm:$0xf]
        %v1117 = vld [vmem:[%s1049 + $0x9c] sm:$0xf]
        %v1118 = vld [vmem:[%s1049 + $0xa0] sm:$0xf]
        %v1119 = vld [vmem:[%s1049 + $0xa4] sm:$0xf]
        %v1120 = vld [vmem:[%s1049 + $0xa8] sm:$0xf]
        %v1121 = vld [vmem:[%s1049 + $0xac] sm:$0xf]
        %v1122 = vld [vmem:[%s1049 + $0xb0] sm:$0xf]
        %v1123 = vld [vmem:[%s1049 + $0xb4] sm:$0xf]
        %v1124 = vld [vmem:[%s1049 + $0xb8] sm:$0xf]
        %v1125 = vld [vmem:[%s1049 + $0xbc] sm:$0xf]
        %v1126 = vld [vmem:[%s1049 + $0xc0] sm:$0xf]
        %v1127 = vld [vmem:[%s1049 + $0xc4] sm:$0xf]
        %v1128 = vld [vmem:[%s1049 + $0xc8] sm:$0xf]
        %v1129 = vld [vmem:[%s1049 + $0xcc] sm:$0xf]
        %v1130 = vld [vmem:[%s1049 + $0xd0] sm:$0xf]
        %v1131 = vld [vmem:[%s1049 + $0xd4] sm:$0xf]
        %v1132 = vld [vmem:[%s1049 + $0xd8] sm:$0xf]
        %v1133 = vld [vmem:[%s1049 + $0xdc] sm:$0xf]
        %v1134 = vld [vmem:[%s1049 + $0xe0] sm:$0xf]
        %v1135 = vld [vmem:[%s1049 + $0xe4] sm:$0xf]
        %v1136 = vld [vmem:[%s1049 + $0xe8] sm:$0xf]
        %v1137 = vld [vmem:[%s1049 + $0xec] sm:$0xf]
        %v1138 = vld [vmem:[%s1049 + $0xf0] sm:$0xf]
        %v1139 = vld [vmem:[%s1049 + $0xf4] sm:$0xf]
        %v1140 = vld [vmem:[%s1049 + $0xf8] sm:$0xf]
        %v1141 = vld [vmem:[%s1049 + $0xfc] sm:$0xf]
        %v1142 = vld [vmem:[%s1049 + $0x100] sm:$0xf]
        %v1143 = vld [vmem:[%s1049 + $0x104] sm:$0xf]
        %v1144 = vld [vmem:[%s1049 + $0x108] sm:$0xf]
        %v1145 = vld [vmem:[%s1049 + $0x10c] sm:$0xf]
        %v1146 = vld [vmem:[%s1049 + $0x110] sm:$0xf]
        %v1147 = vld [vmem:[%s1049 + $0x114] sm:$0xf]
        %v1148 = vld [vmem:[%s1049 + $0x118] sm:$0xf]
        %v1149 = vld [vmem:[%s1049 + $0x11c] sm:$0xf]
        %v1150 = vld [vmem:[%s1049 + $0x120] sm:$0xf]
        %v1151 = vld [vmem:[%s1049 + $0x124] sm:$0xf]
        %v1152 = vld [vmem:[%s1049 + $0x128] sm:$0xf]
        %v1153 = vld [vmem:[%s1049 + $0x12c] sm:$0xf]
        %v1154 = vld [vmem:[%s1049 + $0x130] sm:$0xf]
        %v1155 = vld [vmem:[%s1049 + $0x134] sm:$0xf]
        %v1156 = vld [vmem:[%s1049 + $0x138] sm:$0xf]
        %v1157 = vld [vmem:[%s1049 + $0x13c] sm:$0xf]
        %v1158 = vld [vmem:[%s1049 + $0x140] sm:$0xf]
        %v1159 = vld [vmem:[%s1049 + $0x144] sm:$0xf]
        %v1160 = vld [vmem:[%s1049 + $0x148] sm:$0xf]
        %v1161 = vld [vmem:[%s1049 + $0x14c] sm:$0xf]
        %v1162 = vld [vmem:[%s1049 + $0x150] sm:$0xf]
        %v1163 = vld [vmem:[%s1049 + $0x154] sm:$0xf]
        %v1164 = vld [vmem:[%s1049 + $0x158] sm:$0xf]
        %v1165 = vld [vmem:[%s1049 + $0x15c] sm:$0xf]
        %v1166 = vld [vmem:[%s1049 + $0x160] sm:$0xf]
        %v1167 = vld [vmem:[%s1049 + $0x164] sm:$0xf]
        %v1168 = vld [vmem:[%s1049 + $0x168] sm:$0xf]
        %v1169 = vld [vmem:[%s1049 + $0x16c] sm:$0xf]
        %v1170 = vld [vmem:[%s1049 + $0x170] sm:$0xf]
        %v1171 = vld [vmem:[%s1049 + $0x174] sm:$0xf]
        %v1172 = vld [vmem:[%s1049 + $0x178] sm:$0xf]
        %v1173 = vld [vmem:[%s1049 + $0x17c] sm:$0xf]
        %v1174 = vld [vmem:[%s1049 + $0x180] sm:$0xf]
        %v1175 = vld [vmem:[%s1049 + $0x184] sm:$0xf]
        %v1176 = vld [vmem:[%s1049 + $0x188] sm:$0xf]
        %v1177 = vld [vmem:[%s1049 + $0x18c] sm:$0xf]
        %v1178 = vld [vmem:[%s1049 + $0x190] sm:$0xf]
        %v1179 = vld [vmem:[%s1049 + $0x194] sm:$0xf]
        %v1180 = vld [vmem:[%s1049 + $0x198] sm:$0xf]
        %v1181 = vld [vmem:[%s1049 + $0x19c] sm:$0xf]
        %v1182 = vld [vmem:[%s1049 + $0x1a0] sm:$0xf]
        %v1183 = vld [vmem:[%s1049 + $0x1a4] sm:$0xf]
        %v1184 = vld [vmem:[%s1049 + $0x1a8] sm:$0xf]
        %v1185 = vld [vmem:[%s1049 + $0x1ac] sm:$0xf]
        %v1186 = vld [vmem:[%s1049 + $0x1b0] sm:$0xf]
        %v1187 = vld [vmem:[%s1049 + $0x1b4] sm:$0xf]
        %v1188 = vld [vmem:[%s1049 + $0x1b8] sm:$0xf]
        %v1189 = vld [vmem:[%s1049 + $0x1bc] sm:$0xf]
        %v1190 = vld [vmem:[%s1049 + $0x1c0] sm:$0xf]
        %v1191 = vld [vmem:[%s1049 + $0x1c4] sm:$0xf]
        %v1192 = vld [vmem:[%s1049 + $0x1c8] sm:$0xf]
        %v1193 = vld [vmem:[%s1049 + $0x1cc] sm:$0xf]
        %v1194 = vld [vmem:[%s1049 + $0x1d0] sm:$0xf]
        %v1195 = vld [vmem:[%s1049 + $0x1d4] sm:$0xf]
        %v1196 = vld [vmem:[%s1049 + $0x1d8] sm:$0xf]
        %v1197 = vld [vmem:[%s1049 + $0x1dc] sm:$0xf]
        %v1198 = vld [vmem:[%s1049 + $0x1e0] sm:$0xf]
        %v1199 = vld [vmem:[%s1049 + $0x1e4] sm:$0xf]
        %v1200 = vld [vmem:[%s1049 + $0x1e8] sm:$0xf]
        %v1201 = vld [vmem:[%s1049 + $0x1ec] sm:$0xf]
        %v1202 = vld [vmem:[%s1049 + $0x1f0] sm:$0xf]
        %v1203 = vld [vmem:[%s1049 + $0x1f4] sm:$0xf]
        %v1204 = vld [vmem:[%s1049 + $0x1f8] sm:$0xf]
        %v1205 = vld [vmem:[%s1049 + $0x1fc] sm:$0xf]
        %v1206 = vld [vmem:[%s1049 + $0x200] sm:$0xf]
        %v1207 = vld [vmem:[%s1049 + $0x204] sm:$0xf]
        %v1208 = vld [vmem:[%s1049 + $0x208] sm:$0xf]
        %v1209 = vld [vmem:[%s1049 + $0x20c] sm:$0xf]
        %v1210 = vld [vmem:[%s1049 + $0x210] sm:$0xf]
        %v1211 = vld [vmem:[%s1049 + $0x214] sm:$0xf]
        %v1212 = vld [vmem:[%s1049 + $0x218] sm:$0xf]
        %v1213 = vld [vmem:[%s1049 + $0x21c] sm:$0xf]
        %v1214 = vld [vmem:[%s1049 + $0x220] sm:$0xf]
        %v1215 = vld [vmem:[%s1049 + $0x224] sm:$0xf]
        %v1216 = vld [vmem:[%s1049 + $0x228] sm:$0xf]
        %v1217 = vld [vmem:[%s1049 + $0x22c] sm:$0xf]
        %v1218 = vld [vmem:[%s1049 + $0x230] sm:$0xf]
        %v1219 = vld [vmem:[%s1049 + $0x234] sm:$0xf]
        %v1220 = vld [vmem:[%s1049 + $0x238] sm:$0xf]
        %v1221 = vld [vmem:[%s1049 + $0x23c] sm:$0xf]
        %v1222 = vld [vmem:[%s1049 + $0x240] sm:$0xf]
        %v1223 = vld [vmem:[%s1049 + $0x244] sm:$0xf]
        %v1224 = vld [vmem:[%s1049 + $0x248] sm:$0xf]
        %v1225 = vld [vmem:[%s1049 + $0x24c] sm:$0xf]
        %v1226 = vld [vmem:[%s1049 + $0x250] sm:$0xf]
        %v1227 = vld [vmem:[%s1049 + $0x254] sm:$0xf]
        %v1228 = vld [vmem:[%s1049 + $0x258] sm:$0xf]
        %v1229 = vld [vmem:[%s1049 + $0x25c] sm:$0xf]
        %v1230 = vld [vmem:[%s1049 + $0x260] sm:$0xf]
        %v1231 = vld [vmem:[%s1049 + $0x264] sm:$0xf]
        %v1232 = vld [vmem:[%s1049 + $0x268] sm:$0xf]
        %v1233 = vld [vmem:[%s1049 + $0x26c] sm:$0xf]
        %v1234 = vld [vmem:[%s1049 + $0x270] sm:$0xf]
        %v1235 = vld [vmem:[%s1049 + $0x274] sm:$0xf]
        %v1236 = vld [vmem:[%s1049 + $0x278] sm:$0xf]
        %v1237 = vld [vmem:[%s1049 + $0x27c] sm:$0xf]
        %v1238 = vld [vmem:[%s1049 + $0x280] sm:$0xf]
        %v1239 = vld [vmem:[%s1049 + $0x284] sm:$0xf]
        %v1240 = vld [vmem:[%s1049 + $0x288] sm:$0xf]
        %v1241 = vld [vmem:[%s1049 + $0x28c] sm:$0xf]
        %v1242 = vld [vmem:[%s1049 + $0x290] sm:$0xf]
        %v1243 = vld [vmem:[%s1049 + $0x294] sm:$0xf]
        %v1244 = vld [vmem:[%s1049 + $0x298] sm:$0xf]
        %v1245 = vld [vmem:[%s1049 + $0x29c] sm:$0xf]
        %v1246 = vld [vmem:[%s1049 + $0x2a0] sm:$0xf]
        %v1247 = vld [vmem:[%s1049 + $0x2a4] sm:$0xf]
        %v1248 = vld [vmem:[%s1049 + $0x2a8] sm:$0xf]
        %v1249 = vld [vmem:[%s1049 + $0x2ac] sm:$0xf]
        %v1250 = vld [vmem:[%s1049 + $0x2b0] sm:$0xf]
        %v1251 = vld [vmem:[%s1049 + $0x2b4] sm:$0xf]
        %v1252 = vld [vmem:[%s1049 + $0x2b8] sm:$0xf]
        %v1253 = vld [vmem:[%s1049 + $0x2bc] sm:$0xf]
        %v1254 = vld [vmem:[%s1049 + $0x2c0] sm:$0xf]
        %v1255 = vld [vmem:[%s1049 + $0x2c4] sm:$0xf]
        %v1256 = vld [vmem:[%s1049 + $0x2c8] sm:$0xf]
        %v1257 = vld [vmem:[%s1049 + $0x2cc] sm:$0xf]
        %v1258 = vld [vmem:[%s1049 + $0x2d0] sm:$0xf]
        %v1259 = vld [vmem:[%s1049 + $0x2d4] sm:$0xf]
        %v1260 = vld [vmem:[%s1049 + $0x2d8] sm:$0xf]
        %v1261 = vld [vmem:[%s1049 + $0x2dc] sm:$0xf]
        %v1262 = vld [vmem:[%s1049 + $0x2e0] sm:$0xf]
        %v1263 = vld [vmem:[%s1049 + $0x2e4] sm:$0xf]
        %v1264 = vld [vmem:[%s1049 + $0x2e8] sm:$0xf]
        %v1265 = vld [vmem:[%s1049 + $0x2ec] sm:$0xf]
        %v1266 = vld [vmem:[%s1049 + $0x2f0] sm:$0xf]
        %v1267 = vld [vmem:[%s1049 + $0x2f4] sm:$0xf]
        %v1268 = vld [vmem:[%s1049 + $0x2f8] sm:$0xf]
        %v1269 = vld [vmem:[%s1049 + $0x2fc] sm:$0xf]
        %v1270 = vld [vmem:[%s1049 + $0x300] sm:$0xf]
        %v1271 = vld [vmem:[%s1049 + $0x304] sm:$0xf]
        %v1272 = vld [vmem:[%s1049 + $0x308] sm:$0xf]
        %v1273 = vld [vmem:[%s1049 + $0x30c] sm:$0xf]
        %v1274 = vld [vmem:[%s1049 + $0x310] sm:$0xf]
        %v1275 = vld [vmem:[%s1049 + $0x314] sm:$0xf]
        %v1276 = vld [vmem:[%s1049 + $0x318] sm:$0xf]
        %v1277 = vld [vmem:[%s1049 + $0x31c] sm:$0xf]
        %v1278 = vld [vmem:[%s1049 + $0x320] sm:$0xf]
        %v1279 = vld [vmem:[%s1049 + $0x324] sm:$0xf]
        %v1280 = vld [vmem:[%s1049 + $0x328] sm:$0xf]
        %v1281 = vld [vmem:[%s1049 + $0x32c] sm:$0xf]
        %v1282 = vld [vmem:[%s1049 + $0x330] sm:$0xf]
        %v1283 = vld [vmem:[%s1049 + $0x334] sm:$0xf]
        %v1284 = vld [vmem:[%s1049 + $0x338] sm:$0xf]
        %v1285 = vld [vmem:[%s1049 + $0x33c] sm:$0xf]
        %v1286 = vld [vmem:[%s1049 + $0x340] sm:$0xf]
        %v1287 = vld [vmem:[%s1049 + $0x344] sm:$0xf]
        %v1288 = vld [vmem:[%s1049 + $0x348] sm:$0xf]
        %v1289 = vld [vmem:[%s1049 + $0x34c] sm:$0xf]
        %v1290 = vld [vmem:[%s1049 + $0x350] sm:$0xf]
        %v1291 = vld [vmem:[%s1049 + $0x354] sm:$0xf]
        %v1292 = vld [vmem:[%s1049 + $0x358] sm:$0xf]
        %v1293 = vld [vmem:[%s1049 + $0x35c] sm:$0xf]
        %v1294 = vld [vmem:[%s1] sm:$0xf]
        %v1295 = vld [vmem:[%s1 + $0x4] sm:$0xf]
        %v1296 = vld [vmem:[%s1 + $0x8] sm:$0xf]
        %v1297 = vld [vmem:[%s1 + $0xc] sm:$0x1]
        %v1514 = vunpack.c.l.b16 %v1078
        %v1515 = vunpack.c.l.b16 %v1079
        %v1516 = vunpack.c.l.b16 %v1080
        %v1517 = vunpack.c.l.b16 %v1081
        %v1518 = vunpack.c.l.b16 %v1082
        %v1519 = vunpack.c.l.b16 %v1083
        %v1520 = vunpack.c.l.b16 %v1084
        %v1521 = vunpack.c.l.b16 %v1085
        %v1522 = vunpack.c.l.b16 %v1086
        %v1523 = vunpack.c.l.b16 %v1087
        %v1524 = vunpack.c.l.b16 %v1088
        %v1525 = vunpack.c.l.b16 %v1089
        %v1526 = vunpack.c.l.b16 %v1090
        %v1527 = vunpack.c.l.b16 %v1091
        %v1528 = vunpack.c.l.b16 %v1092
        %v1529 = vunpack.c.l.b16 %v1093
        %v1530 = vunpack.c.l.b16 %v1094
        %v1531 = vunpack.c.l.b16 %v1095
        %v1532 = vunpack.c.l.b16 %v1096
        %v1533 = vunpack.c.l.b16 %v1097
        %v1534 = vunpack.c.l.b16 %v1098
        %v1535 = vunpack.c.l.b16 %v1099
        %v1536 = vunpack.c.l.b16 %v1100
        %v1537 = vunpack.c.l.b16 %v1101
        %v1538 = vunpack.c.l.b16 %v1102
        %v1539 = vunpack.c.l.b16 %v1103
        %v1540 = vunpack.c.l.b16 %v1104
        %v1541 = vunpack.c.l.b16 %v1105
        %v1542 = vunpack.c.l.b16 %v1106
        %v1543 = vunpack.c.l.b16 %v1107
        %v1544 = vunpack.c.l.b16 %v1108
        %v1545 = vunpack.c.l.b16 %v1109
        %v1546 = vunpack.c.l.b16 %v1110
        %v1547 = vunpack.c.l.b16 %v1111
        %v1548 = vunpack.c.l.b16 %v1112
        %v1549 = vunpack.c.l.b16 %v1113
        %v1550 = vunpack.c.l.b16 %v1114
        %v1551 = vunpack.c.l.b16 %v1115
        %v1552 = vunpack.c.l.b16 %v1116
        %v1553 = vunpack.c.l.b16 %v1117
        %v1554 = vunpack.c.l.b16 %v1118
        %v1555 = vunpack.c.l.b16 %v1119
        %v1556 = vunpack.c.l.b16 %v1120
        %v1557 = vunpack.c.l.b16 %v1121
        %v1558 = vunpack.c.l.b16 %v1122
        %v1559 = vunpack.c.l.b16 %v1123
        %v1560 = vunpack.c.l.b16 %v1124
        %v1561 = vunpack.c.l.b16 %v1125
        %v1562 = vunpack.c.l.b16 %v1126
        %v1563 = vunpack.c.l.b16 %v1127
        %v1564 = vunpack.c.l.b16 %v1128
        %v1565 = vunpack.c.l.b16 %v1129
        %v1566 = vunpack.c.l.b16 %v1130
        %v1567 = vunpack.c.l.b16 %v1131
        %v1568 = vunpack.c.l.b16 %v1132
        %v1569 = vunpack.c.l.b16 %v1133
        %v1570 = vunpack.c.l.b16 %v1134
        %v1571 = vunpack.c.l.b16 %v1135
        %v1572 = vunpack.c.l.b16 %v1136
        %v1573 = vunpack.c.l.b16 %v1137
        %v1574 = vunpack.c.l.b16 %v1138
        %v1575 = vunpack.c.l.b16 %v1139
        %v1576 = vunpack.c.l.b16 %v1140
        %v1577 = vunpack.c.l.b16 %v1141
        %v1578 = vunpack.c.l.b16 %v1142
        %v1579 = vunpack.c.l.b16 %v1143
        %v1580 = vunpack.c.l.b16 %v1144
        %v1581 = vunpack.c.l.b16 %v1145
        %v1582 = vunpack.c.l.b16 %v1146
        %v1583 = vunpack.c.l.b16 %v1147
        %v1584 = vunpack.c.l.b16 %v1148
        %v1585 = vunpack.c.l.b16 %v1149
        %v1586 = vunpack.c.l.b16 %v1150
        %v1587 = vunpack.c.l.b16 %v1151
        %v1588 = vunpack.c.l.b16 %v1152
        %v1589 = vunpack.c.l.b16 %v1153
        %v1590 = vunpack.c.l.b16 %v1154
        %v1591 = vunpack.c.l.b16 %v1155
        %v1592 = vunpack.c.l.b16 %v1156
        %v1593 = vunpack.c.l.b16 %v1157
        %v1594 = vunpack.c.l.b16 %v1158
        %v1595 = vunpack.c.l.b16 %v1159
        %v1596 = vunpack.c.l.b16 %v1160
        %v1597 = vunpack.c.l.b16 %v1161
        %v1598 = vunpack.c.l.b16 %v1162
        %v1599 = vunpack.c.l.b16 %v1163
        %v1600 = vunpack.c.l.b16 %v1164
        %v1601 = vunpack.c.l.b16 %v1165
        %v1602 = vunpack.c.l.b16 %v1166
        %v1603 = vunpack.c.l.b16 %v1167
        %v1604 = vunpack.c.l.b16 %v1168
        %v1605 = vunpack.c.l.b16 %v1169
        %v1606 = vunpack.c.l.b16 %v1170
        %v1607 = vunpack.c.l.b16 %v1171
        %v1608 = vunpack.c.l.b16 %v1172
        %v1609 = vunpack.c.l.b16 %v1173
        %v1610 = vunpack.c.l.b16 %v1174
        %v1611 = vunpack.c.l.b16 %v1175
        %v1612 = vunpack.c.l.b16 %v1176
        %v1613 = vunpack.c.l.b16 %v1177
        %v1614 = vunpack.c.l.b16 %v1178
        %v1615 = vunpack.c.l.b16 %v1179
        %v1616 = vunpack.c.l.b16 %v1180
        %v1617 = vunpack.c.l.b16 %v1181
        %v1618 = vunpack.c.l.b16 %v1182
        %v1619 = vunpack.c.l.b16 %v1183
        %v1620 = vunpack.c.l.b16 %v1184
        %v1621 = vunpack.c.l.b16 %v1185
        %v1622 = vunpack.c.l.b16 %v1186
        %v1623 = vunpack.c.l.b16 %v1187
        %v1624 = vunpack.c.l.b16 %v1188
        %v1625 = vunpack.c.l.b16 %v1189
        %v1626 = vunpack.c.l.b16 %v1190
        %v1627 = vunpack.c.l.b16 %v1191
        %v1628 = vunpack.c.l.b16 %v1192
        %v1629 = vunpack.c.l.b16 %v1193
        %v1630 = vunpack.c.l.b16 %v1194
        %v1631 = vunpack.c.l.b16 %v1195
        %v1632 = vunpack.c.l.b16 %v1196
        %v1633 = vunpack.c.l.b16 %v1197
        %v1634 = vunpack.c.l.b16 %v1198
        %v1635 = vunpack.c.l.b16 %v1199
        %v1636 = vunpack.c.l.b16 %v1200
        %v1637 = vunpack.c.l.b16 %v1201
        %v1638 = vunpack.c.l.b16 %v1202
        %v1639 = vunpack.c.l.b16 %v1203
        %v1640 = vunpack.c.l.b16 %v1204
        %v1641 = vunpack.c.l.b16 %v1205
        %v1642 = vunpack.c.l.b16 %v1206
        %v1643 = vunpack.c.l.b16 %v1207
        %v1644 = vunpack.c.l.b16 %v1208
        %v1645 = vunpack.c.l.b16 %v1209
        %v1646 = vunpack.c.l.b16 %v1210
        %v1647 = vunpack.c.l.b16 %v1211
        %v1648 = vunpack.c.l.b16 %v1212
        %v1649 = vunpack.c.l.b16 %v1213
        %v1650 = vunpack.c.l.b16 %v1214
        %v1651 = vunpack.c.l.b16 %v1215
        %v1652 = vunpack.c.l.b16 %v1216
        %v1653 = vunpack.c.l.b16 %v1217
        %v1654 = vunpack.c.l.b16 %v1218
        %v1655 = vunpack.c.l.b16 %v1219
        %v1656 = vunpack.c.l.b16 %v1220
        %v1657 = vunpack.c.l.b16 %v1221
        %v1658 = vunpack.c.l.b16 %v1222
        %v1659 = vunpack.c.l.b16 %v1223
        %v1660 = vunpack.c.l.b16 %v1224
        %v1661 = vunpack.c.l.b16 %v1225
        %v1662 = vunpack.c.l.b16 %v1226
        %v1663 = vunpack.c.l.b16 %v1227
        %v1664 = vunpack.c.l.b16 %v1228
        %v1665 = vunpack.c.l.b16 %v1229
        %v1666 = vunpack.c.l.b16 %v1230
        %v1667 = vunpack.c.l.b16 %v1231
        %v1668 = vunpack.c.l.b16 %v1232
        %v1669 = vunpack.c.l.b16 %v1233
        %v1670 = vunpack.c.l.b16 %v1234
        %v1671 = vunpack.c.l.b16 %v1235
        %v1672 = vunpack.c.l.b16 %v1236
        %v1673 = vunpack.c.l.b16 %v1237
        %v1674 = vunpack.c.l.b16 %v1238
        %v1675 = vunpack.c.l.b16 %v1239
        %v1676 = vunpack.c.l.b16 %v1240
        %v1677 = vunpack.c.l.b16 %v1241
        %v1678 = vunpack.c.l.b16 %v1242
        %v1679 = vunpack.c.l.b16 %v1243
        %v1680 = vunpack.c.l.b16 %v1244
        %v1681 = vunpack.c.l.b16 %v1245
        %v1682 = vunpack.c.l.b16 %v1246
        %v1683 = vunpack.c.l.b16 %v1247
        %v1684 = vunpack.c.l.b16 %v1248
        %v1685 = vunpack.c.l.b16 %v1249
        %v1686 = vunpack.c.l.b16 %v1250
        %v1687 = vunpack.c.l.b16 %v1251
        %v1688 = vunpack.c.l.b16 %v1252
        %v1689 = vunpack.c.l.b16 %v1253
        %v1690 = vunpack.c.l.b16 %v1254
        %v1691 = vunpack.c.l.b16 %v1255
        %v1692 = vunpack.c.l.b16 %v1256
        %v1693 = vunpack.c.l.b16 %v1257
        %v1694 = vunpack.c.l.b16 %v1258
        %v1695 = vunpack.c.l.b16 %v1259
        %v1696 = vunpack.c.l.b16 %v1260
        %v1697 = vunpack.c.l.b16 %v1261
        %v1698 = vunpack.c.l.b16 %v1262
        %v1699 = vunpack.c.l.b16 %v1263
        %v1700 = vunpack.c.l.b16 %v1264
        %v1701 = vunpack.c.l.b16 %v1265
        %v1702 = vunpack.c.l.b16 %v1266
        %v1703 = vunpack.c.l.b16 %v1267
        %v1704 = vunpack.c.l.b16 %v1268
        %v1705 = vunpack.c.l.b16 %v1269
        %v1706 = vunpack.c.l.b16 %v1270
        %v1707 = vunpack.c.l.b16 %v1271
        %v1708 = vunpack.c.l.b16 %v1272
        %v1709 = vunpack.c.l.b16 %v1273
        %v1710 = vunpack.c.l.b16 %v1274
        %v1711 = vunpack.c.l.b16 %v1275
        %v1712 = vunpack.c.l.b16 %v1276
        %v1713 = vunpack.c.l.b16 %v1277
        %v1714 = vunpack.c.l.b16 %v1278
        %v1715 = vunpack.c.l.b16 %v1279
        %v1716 = vunpack.c.l.b16 %v1280
        %v1717 = vunpack.c.l.b16 %v1281
        %v1718 = vunpack.c.l.b16 %v1282
        %v1719 = vunpack.c.l.b16 %v1283
        %v1720 = vunpack.c.l.b16 %v1284
        %v1721 = vunpack.c.l.b16 %v1285
        %v1722 = vunpack.c.l.b16 %v1286
        %v1723 = vunpack.c.l.b16 %v1287
        %v1724 = vunpack.c.l.b16 %v1288
        %v1725 = vunpack.c.l.b16 %v1289
        %v1726 = vunpack.c.l.b16 %v1290
        %v1727 = vunpack.c.l.b16 %v1291
        %v1728 = vunpack.c.l.b16 %v1292
        %v1729 = vunpack.c.l.b16 %v1293
        %v1730 = vpack.c.b16 %v1515, %v1514
        %v1731 = vpack.c.b16 %v1517, %v1516
        %v1732 = vpack.c.b16 %v1519, %v1518
        %v1733 = vpack.c.b16 %v1521, %v1520
        %v1734 = vpack.c.b16 %v1523, %v1522
        %v1735 = vpack.c.b16 %v1525, %v1524
        %v1736 = vpack.c.b16 %v1527, %v1526
        %v1737 = vpack.c.b16 %v1529, %v1528
        %v1738 = vpack.c.b16 %v1531, %v1530
        %v1739 = vpack.c.b16 %v1533, %v1532
        %v1740 = vpack.c.b16 %v1535, %v1534
        %v1741 = vpack.c.b16 %v1537, %v1536
        %v1742 = vpack.c.b16 %v1539, %v1538
        %v1743 = vpack.c.b16 %v1541, %v1540
        %v1744 = vpack.c.b16 %v1543, %v1542
        %v1745 = vpack.c.b16 %v1545, %v1544
        %v1746 = vpack.c.b16 %v1547, %v1546
        %v1747 = vpack.c.b16 %v1549, %v1548
        %v1748 = vpack.c.b16 %v1551, %v1550
        %v1749 = vpack.c.b16 %v1553, %v1552
        %v1750 = vpack.c.b16 %v1555, %v1554
        %v1751 = vpack.c.b16 %v1557, %v1556
        %v1752 = vpack.c.b16 %v1559, %v1558
        %v1753 = vpack.c.b16 %v1561, %v1560
        %v1754 = vpack.c.b16 %v1563, %v1562
        %v1755 = vpack.c.b16 %v1565, %v1564
        %v1756 = vpack.c.b16 %v1567, %v1566
        %v1757 = vpack.c.b16 %v1569, %v1568
        %v1758 = vpack.c.b16 %v1571, %v1570
        %v1759 = vpack.c.b16 %v1573, %v1572
        %v1760 = vpack.c.b16 %v1575, %v1574
        %v1761 = vpack.c.b16 %v1577, %v1576
        %v1762 = vpack.c.b16 %v1579, %v1578
        %v1763 = vpack.c.b16 %v1581, %v1580
        %v1764 = vpack.c.b16 %v1583, %v1582
        %v1765 = vpack.c.b16 %v1585, %v1584
        %v1766 = vpack.c.b16 %v1587, %v1586
        %v1767 = vpack.c.b16 %v1589, %v1588
        %v1768 = vpack.c.b16 %v1591, %v1590
        %v1769 = vpack.c.b16 %v1593, %v1592
        %v1770 = vpack.c.b16 %v1595, %v1594
        %v1771 = vpack.c.b16 %v1597, %v1596
        %v1772 = vpack.c.b16 %v1599, %v1598
        %v1773 = vpack.c.b16 %v1601, %v1600
        %v1774 = vpack.c.b16 %v1603, %v1602
        %v1775 = vpack.c.b16 %v1605, %v1604
        %v1776 = vpack.c.b16 %v1607, %v1606
        %v1777 = vpack.c.b16 %v1609, %v1608
        %v1778 = vpack.c.b16 %v1611, %v1610
        %v1779 = vpack.c.b16 %v1613, %v1612
        %v1780 = vpack.c.b16 %v1615, %v1614
        %v1781 = vpack.c.b16 %v1617, %v1616
        %v1782 = vpack.c.b16 %v1619, %v1618
        %v1783 = vpack.c.b16 %v1621, %v1620
        %v1784 = vpack.c.b16 %v1623, %v1622
        %v1785 = vpack.c.b16 %v1625, %v1624
        %v1786 = vpack.c.b16 %v1627, %v1626
        %v1787 = vpack.c.b16 %v1629, %v1628
        %v1788 = vpack.c.b16 %v1631, %v1630
        %v1789 = vpack.c.b16 %v1633, %v1632
        %v1790 = vpack.c.b16 %v1635, %v1634
        %v1791 = vpack.c.b16 %v1637, %v1636
        %v1792 = vpack.c.b16 %v1639, %v1638
        %v1793 = vpack.c.b16 %v1641, %v1640
        %v1794 = vpack.c.b16 %v1643, %v1642
        %v1795 = vpack.c.b16 %v1645, %v1644
        %v1796 = vpack.c.b16 %v1647, %v1646
        %v1797 = vpack.c.b16 %v1649, %v1648
        %v1798 = vpack.c.b16 %v1651, %v1650
        %v1799 = vpack.c.b16 %v1653, %v1652
        %v1800 = vpack.c.b16 %v1655, %v1654
        %v1801 = vpack.c.b16 %v1657, %v1656
        %v1802 = vpack.c.b16 %v1659, %v1658
        %v1803 = vpack.c.b16 %v1661, %v1660
        %v1804 = vpack.c.b16 %v1663, %v1662
        %v1805 = vpack.c.b16 %v1665, %v1664
        %v1806 = vpack.c.b16 %v1667, %v1666
        %v1807 = vpack.c.b16 %v1669, %v1668
        %v1808 = vpack.c.b16 %v1671, %v1670
        %v1809 = vpack.c.b16 %v1673, %v1672
        %v1810 = vpack.c.b16 %v1675, %v1674
        %v1811 = vpack.c.b16 %v1677, %v1676
        %v1812 = vpack.c.b16 %v1679, %v1678
        %v1813 = vpack.c.b16 %v1681, %v1680
        %v1814 = vpack.c.b16 %v1683, %v1682
        %v1815 = vpack.c.b16 %v1685, %v1684
        %v1816 = vpack.c.b16 %v1687, %v1686
        %v1817 = vpack.c.b16 %v1689, %v1688
        %v1818 = vpack.c.b16 %v1691, %v1690
        %v1819 = vpack.c.b16 %v1693, %v1692
        %v1820 = vpack.c.b16 %v1695, %v1694
        %v1821 = vpack.c.b16 %v1697, %v1696
        %v1822 = vpack.c.b16 %v1699, %v1698
        %v1823 = vpack.c.b16 %v1701, %v1700
        %v1824 = vpack.c.b16 %v1703, %v1702
        %v1825 = vpack.c.b16 %v1705, %v1704
        %v1826 = vpack.c.b16 %v1707, %v1706
        %v1827 = vpack.c.b16 %v1709, %v1708
        %v1828 = vpack.c.b16 %v1711, %v1710
        %v1829 = vpack.c.b16 %v1713, %v1712
        %v1830 = vpack.c.b16 %v1715, %v1714
        %v1831 = vpack.c.b16 %v1717, %v1716
        %v1832 = vpack.c.b16 %v1719, %v1718
        %v1833 = vpack.c.b16 %v1721, %v1720
        %v1834 = vpack.c.b16 %v1723, %v1722
        %v1835 = vpack.c.b16 %v1725, %v1724
        %v1836 = vpack.c.b16 %v1727, %v1726
        %v1837 = vpack.c.b16 %v1729, %v1728
        %v1842 = vunpack.c.l.b16 %v1294
        %v1843 = vunpack.c.l.b16 %v1295
        %v1844 = vunpack.c.l.b16 %v1296
        %v1845 = vunpack.c.l.b16 %v1297
        %v1846 = vpack.c.b16 %v1843, %v1842
        %v1847 = vpack.c.b16 %v1845, %v1844
        %vm1849 = vcmask 203776
        %v1851 = vsel %vm1849, %v1730, 0
        %v1854 = vsel %vm1849, %v1731, 0
        %v1857 = vsel %vm1849, %v1732, 0
        %v1860 = vsel %vm1849, %v1733, 0
        %v1863 = vsel %vm1849, %v1734, 0
        %v1866 = vsel %vm1849, %v1735, 0
        %v1869 = vsel %vm1849, %v1736, 0
        %v1872 = vsel %vm1849, %v1737, 0
        %v1875 = vsel %vm1849, %v1738, 0
        %v1878 = vsel %vm1849, %v1739, 0
        %v1881 = vsel %vm1849, %v1740, 0
        %v1884 = vsel %vm1849, %v1741, 0
        %v1887 = vsel %vm1849, %v1742, 0
        %v1890 = vsel %vm1849, %v1743, 0
        %v1893 = vsel %vm1849, %v1744, 0
        %v1896 = vsel %vm1849, %v1745, 0
        %v1899 = vsel %vm1849, %v1746, 0
        %v1902 = vsel %vm1849, %v1747, 0
        %v1905 = vsel %vm1849, %v1748, 0
        %v1908 = vsel %vm1849, %v1749, 0
        %v1911 = vsel %vm1849, %v1750, 0
        %v1914 = vsel %vm1849, %v1751, 0
        %v1917 = vsel %vm1849, %v1752, 0
        %v1920 = vsel %vm1849, %v1753, 0
        %v1923 = vsel %vm1849, %v1754, 0
        %v1926 = vsel %vm1849, %v1755, 0
        %v1929 = vsel %vm1849, %v1756, 0
        %v1932 = vsel %vm1849, %v1757, 0
        %v1935 = vsel %vm1849, %v1758, 0
        %v1938 = vsel %vm1849, %v1759, 0
        %v1941 = vsel %vm1849, %v1760, 0
        %v1944 = vsel %vm1849, %v1761, 0
        %v1947 = vsel %vm1849, %v1762, 0
        %v1950 = vsel %vm1849, %v1763, 0
        %v1953 = vsel %vm1849, %v1764, 0
        %v1956 = vsel %vm1849, %v1765, 0
        %v1959 = vsel %vm1849, %v1766, 0
        %v1962 = vsel %vm1849, %v1767, 0
        %v1965 = vsel %vm1849, %v1768, 0
        %v1968 = vsel %vm1849, %v1769, 0
        %v1971 = vsel %vm1849, %v1770, 0
        %v1974 = vsel %vm1849, %v1771, 0
        %v1977 = vsel %vm1849, %v1772, 0
        %v1980 = vsel %vm1849, %v1773, 0
        %v1983 = vsel %vm1849, %v1774, 0
        %v1986 = vsel %vm1849, %v1775, 0
        %v1989 = vsel %vm1849, %v1776, 0
        %v1992 = vsel %vm1849, %v1777, 0
        %v1995 = vsel %vm1849, %v1778, 0
        %v1998 = vsel %vm1849, %v1779, 0
        %v2001 = vsel %vm1849, %v1780, 0
        %v2004 = vsel %vm1849, %v1781, 0
        %v2007 = vsel %vm1849, %v1782, 0
        %v2010 = vsel %vm1849, %v1783, 0
        %v2013 = vsel %vm1849, %v1784, 0
        %v2016 = vsel %vm1849, %v1785, 0
        %v2019 = vsel %vm1849, %v1786, 0
        %v2022 = vsel %vm1849, %v1787, 0
        %v2025 = vsel %vm1849, %v1788, 0
        %v2028 = vsel %vm1849, %v1789, 0
        %v2031 = vsel %vm1849, %v1790, 0
        %v2034 = vsel %vm1849, %v1791, 0
        %v2037 = vsel %vm1849, %v1792, 0
        %v2040 = vsel %vm1849, %v1793, 0
        %v2043 = vsel %vm1849, %v1794, 0
        %v2046 = vsel %vm1849, %v1795, 0
        %v2049 = vsel %vm1849, %v1796, 0
        %v2052 = vsel %vm1849, %v1797, 0
        %v2055 = vsel %vm1849, %v1798, 0
        %v2058 = vsel %vm1849, %v1799, 0
        %v2061 = vsel %vm1849, %v1800, 0
        %v2064 = vsel %vm1849, %v1801, 0
        %v2067 = vsel %vm1849, %v1802, 0
        %v2070 = vsel %vm1849, %v1803, 0
        %v2073 = vsel %vm1849, %v1804, 0
        %v2076 = vsel %vm1849, %v1805, 0
        %v2079 = vsel %vm1849, %v1806, 0
        %v2082 = vsel %vm1849, %v1807, 0
        %v2085 = vsel %vm1849, %v1808, 0
        %v2088 = vsel %vm1849, %v1809, 0
        %v2091 = vsel %vm1849, %v1810, 0
        %v2094 = vsel %vm1849, %v1811, 0
        %v2097 = vsel %vm1849, %v1812, 0
        %v2100 = vsel %vm1849, %v1813, 0
        %v2103 = vsel %vm1849, %v1814, 0
        %v2106 = vsel %vm1849, %v1815, 0
        %v2109 = vsel %vm1849, %v1816, 0
        %v2112 = vsel %vm1849, %v1817, 0
        %v2115 = vsel %vm1849, %v1818, 0
        %v2118 = vsel %vm1849, %v1819, 0
        %v2121 = vsel %vm1849, %v1820, 0
        %v2124 = vsel %vm1849, %v1821, 0
        %v2127 = vsel %vm1849, %v1822, 0
        %v2130 = vsel %vm1849, %v1823, 0
        %v2133 = vsel %vm1849, %v1824, 0
        %v2136 = vsel %vm1849, %v1825, 0
        %v2139 = vsel %vm1849, %v1826, 0
        %v2142 = vsel %vm1849, %v1827, 0
        %v2145 = vsel %vm1849, %v1828, 0
        %v2148 = vsel %vm1849, %v1829, 0
        %v2151 = vsel %vm1849, %v1830, 0
        %v2154 = vsel %vm1849, %v1831, 0
        %v2157 = vsel %vm1849, %v1832, 0
        %v2160 = vsel %vm1849, %v1833, 0
        %v2163 = vsel %vm1849, %v1834, 0
        %v2166 = vsel %vm1849, %v1835, 0
        %v2169 = vsel %vm1849, %v1836, 0
        %v2172 = vsel %vm1849, %v1837, 0
        %vm2174 = vcmask 1043456
        %vm2175 = vcmask 1044480
        %v2176 = vsel %vm2174, 4294967295, 65535
        %v2177 = vsel %vm2175, %v2176, 0
        %v2179 = vand.u32 %v1847, %v2177
        %2181 = vmatpush.bf16.msra.mxu0 0
        %2182 = vmatpush.bf16.msra.mxu0 0
        %2183 = vmatpush.bf16.msra.mxu0 0
        %2184 = vmatpush.bf16.msra.mxu0 0
        %2185 = vmatpush.bf16.msra.mxu0 0
        %2186 = vmatpush.bf16.msra.mxu0 0
        %2187 = vmatpush.bf16.msra.mxu0 %v2179
        %2188 = vmatpush.bf16.msra.mxu0 %v1846
        %2189 = vmatmul.bf16.gmra.mxu0 %v1851
        %v2190 = vpop.f32.mrf.mxu0
        %v2191 = vadd.f32 0.0, %v2190
        %v2192 = vpop.f32.mrf.mxu0
        %v2193 = vadd.f32 0.0, %v2192
        %2194 = vmatmul.bf16.gmra.mxu0 %v1854
        %v2195 = vpop.f32.mrf.mxu0
        %v2196 = vadd.f32 0.0, %v2195
        %v2197 = vpop.f32.mrf.mxu0
        %v2198 = vadd.f32 0.0, %v2197
        %2199 = vmatmul.bf16.gmra.mxu0 %v1857
        %v2200 = vpop.f32.mrf.mxu0
        %v2201 = vadd.f32 0.0, %v2200
        %v2202 = vpop.f32.mrf.mxu0
        %v2203 = vadd.f32 0.0, %v2202
        %2204 = vmatmul.bf16.gmra.mxu0 %v1860
        %v2205 = vpop.f32.mrf.mxu0
        %v2206 = vadd.f32 0.0, %v2205
        %v2207 = vpop.f32.mrf.mxu0
        %v2208 = vadd.f32 0.0, %v2207
        %2209 = vmatmul.bf16.gmra.mxu0 %v1863
        %v2210 = vpop.f32.mrf.mxu0
        %v2211 = vadd.f32 0.0, %v2210
        %v2212 = vpop.f32.mrf.mxu0
        %v2213 = vadd.f32 0.0, %v2212
        %2214 = vmatmul.bf16.gmra.mxu0 %v1866
        %v2215 = vpop.f32.mrf.mxu0
        %v2216 = vadd.f32 0.0, %v2215
        %v2217 = vpop.f32.mrf.mxu0
        %v2218 = vadd.f32 0.0, %v2217
        %2219 = vmatmul.bf16.gmra.mxu0 %v1869
        %v2220 = vpop.f32.mrf.mxu0
        %v2221 = vadd.f32 0.0, %v2220
        %v2222 = vpop.f32.mrf.mxu0
        %v2223 = vadd.f32 0.0, %v2222
        %2224 = vmatmul.bf16.gmra.mxu0 %v1872
        %v2225 = vpop.f32.mrf.mxu0
        %v2226 = vadd.f32 0.0, %v2225
        %v2227 = vpop.f32.mrf.mxu0
        %v2228 = vadd.f32 0.0, %v2227
        %2229 = vmatmul.bf16.gmra.mxu0 %v1875
        %v2230 = vpop.f32.mrf.mxu0
        %v2231 = vadd.f32 0.0, %v2230
        %v2232 = vpop.f32.mrf.mxu0
        %v2233 = vadd.f32 0.0, %v2232
        %2234 = vmatmul.bf16.gmra.mxu0 %v1878
        %v2235 = vpop.f32.mrf.mxu0
        %v2236 = vadd.f32 0.0, %v2235
        %v2237 = vpop.f32.mrf.mxu0
        %v2238 = vadd.f32 0.0, %v2237
        %2239 = vmatmul.bf16.gmra.mxu0 %v1881
        %v2240 = vpop.f32.mrf.mxu0
        %v2241 = vadd.f32 0.0, %v2240
        %v2242 = vpop.f32.mrf.mxu0
        %v2243 = vadd.f32 0.0, %v2242
        %2244 = vmatmul.bf16.gmra.mxu0 %v1884
        %v2245 = vpop.f32.mrf.mxu0
        %v2246 = vadd.f32 0.0, %v2245
        %v2247 = vpop.f32.mrf.mxu0
        %v2248 = vadd.f32 0.0, %v2247
        %2249 = vmatmul.bf16.gmra.mxu0 %v1887
        %v2250 = vpop.f32.mrf.mxu0
        %v2251 = vadd.f32 0.0, %v2250
        %v2252 = vpop.f32.mrf.mxu0
        %v2253 = vadd.f32 0.0, %v2252
        %2254 = vmatmul.bf16.gmra.mxu0 %v1890
        %v2255 = vpop.f32.mrf.mxu0
        %v2256 = vadd.f32 0.0, %v2255
        %v2257 = vpop.f32.mrf.mxu0
        %v2258 = vadd.f32 0.0, %v2257
        %2259 = vmatmul.bf16.gmra.mxu0 %v1893
        %v2260 = vpop.f32.mrf.mxu0
        %v2261 = vadd.f32 0.0, %v2260
        %v2262 = vpop.f32.mrf.mxu0
        %v2263 = vadd.f32 0.0, %v2262
        %2264 = vmatmul.bf16.gmra.mxu0 %v1896
        %v2265 = vpop.f32.mrf.mxu0
        %v2266 = vadd.f32 0.0, %v2265
        %v2267 = vpop.f32.mrf.mxu0
        %v2268 = vadd.f32 0.0, %v2267
        %2269 = vmatmul.bf16.gmra.mxu0 %v1899
        %v2270 = vpop.f32.mrf.mxu0
        %v2271 = vadd.f32 0.0, %v2270
        %v2272 = vpop.f32.mrf.mxu0
        %v2273 = vadd.f32 0.0, %v2272
        %2274 = vmatmul.bf16.gmra.mxu0 %v1902
        %v2275 = vpop.f32.mrf.mxu0
        %v2276 = vadd.f32 0.0, %v2275
        %v2277 = vpop.f32.mrf.mxu0
        %v2278 = vadd.f32 0.0, %v2277
        %2279 = vmatmul.bf16.gmra.mxu0 %v1905
        %v2280 = vpop.f32.mrf.mxu0
        %v2281 = vadd.f32 0.0, %v2280
        %v2282 = vpop.f32.mrf.mxu0
        %v2283 = vadd.f32 0.0, %v2282
        %2284 = vmatmul.bf16.gmra.mxu0 %v1908
        %v2285 = vpop.f32.mrf.mxu0
        %v2286 = vadd.f32 0.0, %v2285
        %v2287 = vpop.f32.mrf.mxu0
        %v2288 = vadd.f32 0.0, %v2287
        %2289 = vmatmul.bf16.gmra.mxu0 %v1911
        %v2290 = vpop.f32.mrf.mxu0
        %v2291 = vadd.f32 0.0, %v2290
        %v2292 = vpop.f32.mrf.mxu0
        %v2293 = vadd.f32 0.0, %v2292
        %2294 = vmatmul.bf16.gmra.mxu0 %v1914
        %v2295 = vpop.f32.mrf.mxu0
        %v2296 = vadd.f32 0.0, %v2295
        %v2297 = vpop.f32.mrf.mxu0
        %v2298 = vadd.f32 0.0, %v2297
        %2299 = vmatmul.bf16.gmra.mxu0 %v1917
        %v2300 = vpop.f32.mrf.mxu0
        %v2301 = vadd.f32 0.0, %v2300
        %v2302 = vpop.f32.mrf.mxu0
        %v2303 = vadd.f32 0.0, %v2302
        %2304 = vmatmul.bf16.gmra.mxu0 %v1920
        %v2305 = vpop.f32.mrf.mxu0
        %v2306 = vadd.f32 0.0, %v2305
        %v2307 = vpop.f32.mrf.mxu0
        %v2308 = vadd.f32 0.0, %v2307
        %2309 = vmatmul.bf16.gmra.mxu0 %v1923
        %v2310 = vpop.f32.mrf.mxu0
        %v2311 = vadd.f32 0.0, %v2310
        %v2312 = vpop.f32.mrf.mxu0
        %v2313 = vadd.f32 0.0, %v2312
        %2314 = vmatmul.bf16.gmra.mxu0 %v1926
        %v2315 = vpop.f32.mrf.mxu0
        %v2316 = vadd.f32 0.0, %v2315
        %v2317 = vpop.f32.mrf.mxu0
        %v2318 = vadd.f32 0.0, %v2317
        %2319 = vmatmul.bf16.gmra.mxu0 %v1929
        %v2320 = vpop.f32.mrf.mxu0
        %v2321 = vadd.f32 0.0, %v2320
        %v2322 = vpop.f32.mrf.mxu0
        %v2323 = vadd.f32 0.0, %v2322
        %2324 = vmatmul.bf16.gmra.mxu0 %v1932
        %v2325 = vpop.f32.mrf.mxu0
        %v2326 = vadd.f32 0.0, %v2325
        %v2327 = vpop.f32.mrf.mxu0
        %v2328 = vadd.f32 0.0, %v2327
        %2329 = vmatmul.bf16.gmra.mxu0 %v1935
        %v2330 = vpop.f32.mrf.mxu0
        %v2331 = vadd.f32 0.0, %v2330
        %v2332 = vpop.f32.mrf.mxu0
        %v2333 = vadd.f32 0.0, %v2332
        %2334 = vmatmul.bf16.gmra.mxu0 %v1938
        %v2335 = vpop.f32.mrf.mxu0
        %v2336 = vadd.f32 0.0, %v2335
        %v2337 = vpop.f32.mrf.mxu0
        %v2338 = vadd.f32 0.0, %v2337
        %2339 = vmatmul.bf16.gmra.mxu0 %v1941
        %v2340 = vpop.f32.mrf.mxu0
        %v2341 = vadd.f32 0.0, %v2340
        %v2342 = vpop.f32.mrf.mxu0
        %v2343 = vadd.f32 0.0, %v2342
        %2344 = vmatmul.bf16.gmra.mxu0 %v1944
        %v2345 = vpop.f32.mrf.mxu0
        %v2346 = vadd.f32 0.0, %v2345
        %v2347 = vpop.f32.mrf.mxu0
        %v2348 = vadd.f32 0.0, %v2347
        %2349 = vmatmul.bf16.gmra.mxu0 %v1947
        %v2350 = vpop.f32.mrf.mxu0
        %v2351 = vadd.f32 0.0, %v2350
        %v2352 = vpop.f32.mrf.mxu0
        %v2353 = vadd.f32 0.0, %v2352
        %2354 = vmatmul.bf16.gmra.mxu0 %v1950
        %v2355 = vpop.f32.mrf.mxu0
        %v2356 = vadd.f32 0.0, %v2355
        %v2357 = vpop.f32.mrf.mxu0
        %v2358 = vadd.f32 0.0, %v2357
        %2359 = vmatmul.bf16.gmra.mxu0 %v1953
        %v2360 = vpop.f32.mrf.mxu0
        %v2361 = vadd.f32 0.0, %v2360
        %v2362 = vpop.f32.mrf.mxu0
        %v2363 = vadd.f32 0.0, %v2362
        %2364 = vmatmul.bf16.gmra.mxu0 %v1956
        %v2365 = vpop.f32.mrf.mxu0
        %v2366 = vadd.f32 0.0, %v2365
        %v2367 = vpop.f32.mrf.mxu0
        %v2368 = vadd.f32 0.0, %v2367
        %2369 = vmatmul.bf16.gmra.mxu0 %v1959
        %v2370 = vpop.f32.mrf.mxu0
        %v2371 = vadd.f32 0.0, %v2370
        %v2372 = vpop.f32.mrf.mxu0
        %v2373 = vadd.f32 0.0, %v2372
        %2374 = vmatmul.bf16.gmra.mxu0 %v1962
        %v2375 = vpop.f32.mrf.mxu0
        %v2376 = vadd.f32 0.0, %v2375
        %v2377 = vpop.f32.mrf.mxu0
        %v2378 = vadd.f32 0.0, %v2377
        %2379 = vmatmul.bf16.gmra.mxu0 %v1965
        %v2380 = vpop.f32.mrf.mxu0
        %v2381 = vadd.f32 0.0, %v2380
        %v2382 = vpop.f32.mrf.mxu0
        %v2383 = vadd.f32 0.0, %v2382
        %2384 = vmatmul.bf16.gmra.mxu0 %v1968
        %v2385 = vpop.f32.mrf.mxu0
        %v2386 = vadd.f32 0.0, %v2385
        %v2387 = vpop.f32.mrf.mxu0
        %v2388 = vadd.f32 0.0, %v2387
        %2389 = vmatmul.bf16.gmra.mxu0 %v1971
        %v2390 = vpop.f32.mrf.mxu0
        %v2391 = vadd.f32 0.0, %v2390
        %v2392 = vpop.f32.mrf.mxu0
        %v2393 = vadd.f32 0.0, %v2392
        %2394 = vmatmul.bf16.gmra.mxu0 %v1974
        %v2395 = vpop.f32.mrf.mxu0
        %v2396 = vadd.f32 0.0, %v2395
        %v2397 = vpop.f32.mrf.mxu0
        %v2398 = vadd.f32 0.0, %v2397
        %2399 = vmatmul.bf16.gmra.mxu0 %v1977
        %v2400 = vpop.f32.mrf.mxu0
        %v2401 = vadd.f32 0.0, %v2400
        %v2402 = vpop.f32.mrf.mxu0
        %v2403 = vadd.f32 0.0, %v2402
        %2404 = vmatmul.bf16.gmra.mxu0 %v1980
        %v2405 = vpop.f32.mrf.mxu0
        %v2406 = vadd.f32 0.0, %v2405
        %v2407 = vpop.f32.mrf.mxu0
        %v2408 = vadd.f32 0.0, %v2407
        %2409 = vmatmul.bf16.gmra.mxu0 %v1983
        %v2410 = vpop.f32.mrf.mxu0
        %v2411 = vadd.f32 0.0, %v2410
        %v2412 = vpop.f32.mrf.mxu0
        %v2413 = vadd.f32 0.0, %v2412
        %2414 = vmatmul.bf16.gmra.mxu0 %v1986
        %v2415 = vpop.f32.mrf.mxu0
        %v2416 = vadd.f32 0.0, %v2415
        %v2417 = vpop.f32.mrf.mxu0
        %v2418 = vadd.f32 0.0, %v2417
        %2419 = vmatmul.bf16.gmra.mxu0 %v1989
        %v2420 = vpop.f32.mrf.mxu0
        %v2421 = vadd.f32 0.0, %v2420
        %v2422 = vpop.f32.mrf.mxu0
        %v2423 = vadd.f32 0.0, %v2422
        %2424 = vmatmul.bf16.gmra.mxu0 %v1992
        %v2425 = vpop.f32.mrf.mxu0
        %v2426 = vadd.f32 0.0, %v2425
        %v2427 = vpop.f32.mrf.mxu0
        %v2428 = vadd.f32 0.0, %v2427
        %2429 = vmatmul.bf16.gmra.mxu0 %v1995
        %v2430 = vpop.f32.mrf.mxu0
        %v2431 = vadd.f32 0.0, %v2430
        %v2432 = vpop.f32.mrf.mxu0
        %v2433 = vadd.f32 0.0, %v2432
        %2434 = vmatmul.bf16.gmra.mxu0 %v1998
        %v2435 = vpop.f32.mrf.mxu0
        %v2436 = vadd.f32 0.0, %v2435
        %v2437 = vpop.f32.mrf.mxu0
        %v2438 = vadd.f32 0.0, %v2437
        %2439 = vmatmul.bf16.gmra.mxu0 %v2001
        %v2440 = vpop.f32.mrf.mxu0
        %v2441 = vadd.f32 0.0, %v2440
        %v2442 = vpop.f32.mrf.mxu0
        %v2443 = vadd.f32 0.0, %v2442
        %2444 = vmatmul.bf16.gmra.mxu0 %v2004
        %v2445 = vpop.f32.mrf.mxu0
        %v2446 = vadd.f32 0.0, %v2445
        %v2447 = vpop.f32.mrf.mxu0
        %v2448 = vadd.f32 0.0, %v2447
        %2449 = vmatmul.bf16.gmra.mxu0 %v2007
        %v2450 = vpop.f32.mrf.mxu0
        %v2451 = vadd.f32 0.0, %v2450
        %v2452 = vpop.f32.mrf.mxu0
        %v2453 = vadd.f32 0.0, %v2452
        %2454 = vmatmul.bf16.gmra.mxu0 %v2010
        %v2455 = vpop.f32.mrf.mxu0
        %v2456 = vadd.f32 0.0, %v2455
        %v2457 = vpop.f32.mrf.mxu0
        %v2458 = vadd.f32 0.0, %v2457
        %2459 = vmatmul.bf16.gmra.mxu0 %v2013
        %v2460 = vpop.f32.mrf.mxu0
        %v2461 = vadd.f32 0.0, %v2460
        %v2462 = vpop.f32.mrf.mxu0
        %v2463 = vadd.f32 0.0, %v2462
        %2464 = vmatmul.bf16.gmra.mxu0 %v2016
        %v2465 = vpop.f32.mrf.mxu0
        %v2466 = vadd.f32 0.0, %v2465
        %v2467 = vpop.f32.mrf.mxu0
        %v2468 = vadd.f32 0.0, %v2467
        %2469 = vmatmul.bf16.gmra.mxu0 %v2019
        %v2470 = vpop.f32.mrf.mxu0
        %v2471 = vadd.f32 0.0, %v2470
        %v2472 = vpop.f32.mrf.mxu0
        %v2473 = vadd.f32 0.0, %v2472
        %2474 = vmatmul.bf16.gmra.mxu0 %v2022
        %v2475 = vpop.f32.mrf.mxu0
        %v2476 = vadd.f32 0.0, %v2475
        %v2477 = vpop.f32.mrf.mxu0
        %v2478 = vadd.f32 0.0, %v2477
        %2479 = vmatmul.bf16.gmra.mxu0 %v2025
        %v2480 = vpop.f32.mrf.mxu0
        %v2481 = vadd.f32 0.0, %v2480
        %v2482 = vpop.f32.mrf.mxu0
        %v2483 = vadd.f32 0.0, %v2482
        %2484 = vmatmul.bf16.gmra.mxu0 %v2028
        %v2485 = vpop.f32.mrf.mxu0
        %v2486 = vadd.f32 0.0, %v2485
        %v2487 = vpop.f32.mrf.mxu0
        %v2488 = vadd.f32 0.0, %v2487
        %2489 = vmatmul.bf16.gmra.mxu0 %v2031
        %v2490 = vpop.f32.mrf.mxu0
        %v2491 = vadd.f32 0.0, %v2490
        %v2492 = vpop.f32.mrf.mxu0
        %v2493 = vadd.f32 0.0, %v2492
        %2494 = vmatmul.bf16.gmra.mxu0 %v2034
        %v2495 = vpop.f32.mrf.mxu0
        %v2496 = vadd.f32 0.0, %v2495
        %v2497 = vpop.f32.mrf.mxu0
        %v2498 = vadd.f32 0.0, %v2497
        %2499 = vmatmul.bf16.gmra.mxu0 %v2037
        %v2500 = vpop.f32.mrf.mxu0
        %v2501 = vadd.f32 0.0, %v2500
        %v2502 = vpop.f32.mrf.mxu0
        %v2503 = vadd.f32 0.0, %v2502
        %2504 = vmatmul.bf16.gmra.mxu0 %v2040
        %v2505 = vpop.f32.mrf.mxu0
        %v2506 = vadd.f32 0.0, %v2505
        %v2507 = vpop.f32.mrf.mxu0
        %v2508 = vadd.f32 0.0, %v2507
        %2509 = vmatmul.bf16.gmra.mxu0 %v2043
        %v2510 = vpop.f32.mrf.mxu0
        %v2511 = vadd.f32 0.0, %v2510
        %v2512 = vpop.f32.mrf.mxu0
        %v2513 = vadd.f32 0.0, %v2512
        %2514 = vmatmul.bf16.gmra.mxu0 %v2046
        %v2515 = vpop.f32.mrf.mxu0
        %v2516 = vadd.f32 0.0, %v2515
        %v2517 = vpop.f32.mrf.mxu0
        %v2518 = vadd.f32 0.0, %v2517
        %2519 = vmatmul.bf16.gmra.mxu0 %v2049
        %v2520 = vpop.f32.mrf.mxu0
        %v2521 = vadd.f32 0.0, %v2520
        %v2522 = vpop.f32.mrf.mxu0
        %v2523 = vadd.f32 0.0, %v2522
        %2524 = vmatmul.bf16.gmra.mxu0 %v2052
        %v2525 = vpop.f32.mrf.mxu0
        %v2526 = vadd.f32 0.0, %v2525
        %v2527 = vpop.f32.mrf.mxu0
        %v2528 = vadd.f32 0.0, %v2527
        %2529 = vmatmul.bf16.gmra.mxu0 %v2055
        %v2530 = vpop.f32.mrf.mxu0
        %v2531 = vadd.f32 0.0, %v2530
        %v2532 = vpop.f32.mrf.mxu0
        %v2533 = vadd.f32 0.0, %v2532
        %2534 = vmatmul.bf16.gmra.mxu0 %v2058
        %v2535 = vpop.f32.mrf.mxu0
        %v2536 = vadd.f32 0.0, %v2535
        %v2537 = vpop.f32.mrf.mxu0
        %v2538 = vadd.f32 0.0, %v2537
        %2539 = vmatmul.bf16.gmra.mxu0 %v2061
        %v2540 = vpop.f32.mrf.mxu0
        %v2541 = vadd.f32 0.0, %v2540
        %v2542 = vpop.f32.mrf.mxu0
        %v2543 = vadd.f32 0.0, %v2542
        %2544 = vmatmul.bf16.gmra.mxu0 %v2064
        %v2545 = vpop.f32.mrf.mxu0
        %v2546 = vadd.f32 0.0, %v2545
        %v2547 = vpop.f32.mrf.mxu0
        %v2548 = vadd.f32 0.0, %v2547
        %2549 = vmatmul.bf16.gmra.mxu0 %v2067
        %v2550 = vpop.f32.mrf.mxu0
        %v2551 = vadd.f32 0.0, %v2550
        %v2552 = vpop.f32.mrf.mxu0
        %v2553 = vadd.f32 0.0, %v2552
        %2554 = vmatmul.bf16.gmra.mxu0 %v2070
        %v2555 = vpop.f32.mrf.mxu0
        %v2556 = vadd.f32 0.0, %v2555
        %v2557 = vpop.f32.mrf.mxu0
        %v2558 = vadd.f32 0.0, %v2557
        %2559 = vmatmul.bf16.gmra.mxu0 %v2073
        %v2560 = vpop.f32.mrf.mxu0
        %v2561 = vadd.f32 0.0, %v2560
        %v2562 = vpop.f32.mrf.mxu0
        %v2563 = vadd.f32 0.0, %v2562
        %2564 = vmatmul.bf16.gmra.mxu0 %v2076
        %v2565 = vpop.f32.mrf.mxu0
        %v2566 = vadd.f32 0.0, %v2565
        %v2567 = vpop.f32.mrf.mxu0
        %v2568 = vadd.f32 0.0, %v2567
        %2569 = vmatmul.bf16.gmra.mxu0 %v2079
        %v2570 = vpop.f32.mrf.mxu0
        %v2571 = vadd.f32 0.0, %v2570
        %v2572 = vpop.f32.mrf.mxu0
        %v2573 = vadd.f32 0.0, %v2572
        %2574 = vmatmul.bf16.gmra.mxu0 %v2082
        %v2575 = vpop.f32.mrf.mxu0
        %v2576 = vadd.f32 0.0, %v2575
        %v2577 = vpop.f32.mrf.mxu0
        %v2578 = vadd.f32 0.0, %v2577
        %2579 = vmatmul.bf16.gmra.mxu0 %v2085
        %v2580 = vpop.f32.mrf.mxu0
        %v2581 = vadd.f32 0.0, %v2580
        %v2582 = vpop.f32.mrf.mxu0
        %v2583 = vadd.f32 0.0, %v2582
        %2584 = vmatmul.bf16.gmra.mxu0 %v2088
        %v2585 = vpop.f32.mrf.mxu0
        %v2586 = vadd.f32 0.0, %v2585
        %v2587 = vpop.f32.mrf.mxu0
        %v2588 = vadd.f32 0.0, %v2587
        %2589 = vmatmul.bf16.gmra.mxu0 %v2091
        %v2590 = vpop.f32.mrf.mxu0
        %v2591 = vadd.f32 0.0, %v2590
        %v2592 = vpop.f32.mrf.mxu0
        %v2593 = vadd.f32 0.0, %v2592
        %2594 = vmatmul.bf16.gmra.mxu0 %v2094
        %v2595 = vpop.f32.mrf.mxu0
        %v2596 = vadd.f32 0.0, %v2595
        %v2597 = vpop.f32.mrf.mxu0
        %v2598 = vadd.f32 0.0, %v2597
        %2599 = vmatmul.bf16.gmra.mxu0 %v2097
        %v2600 = vpop.f32.mrf.mxu0
        %v2601 = vadd.f32 0.0, %v2600
        %v2602 = vpop.f32.mrf.mxu0
        %v2603 = vadd.f32 0.0, %v2602
        %2604 = vmatmul.bf16.gmra.mxu0 %v2100
        %v2605 = vpop.f32.mrf.mxu0
        %v2606 = vadd.f32 0.0, %v2605
        %v2607 = vpop.f32.mrf.mxu0
        %v2608 = vadd.f32 0.0, %v2607
        %2609 = vmatmul.bf16.gmra.mxu0 %v2103
        %v2610 = vpop.f32.mrf.mxu0
        %v2611 = vadd.f32 0.0, %v2610
        %v2612 = vpop.f32.mrf.mxu0
        %v2613 = vadd.f32 0.0, %v2612
        %2614 = vmatmul.bf16.gmra.mxu0 %v2106
        %v2615 = vpop.f32.mrf.mxu0
        %v2616 = vadd.f32 0.0, %v2615
        %v2617 = vpop.f32.mrf.mxu0
        %v2618 = vadd.f32 0.0, %v2617
        %2619 = vmatmul.bf16.gmra.mxu0 %v2109
        %v2620 = vpop.f32.mrf.mxu0
        %v2621 = vadd.f32 0.0, %v2620
        %v2622 = vpop.f32.mrf.mxu0
        %v2623 = vadd.f32 0.0, %v2622
        %2624 = vmatmul.bf16.gmra.mxu0 %v2112
        %v2625 = vpop.f32.mrf.mxu0
        %v2626 = vadd.f32 0.0, %v2625
        %v2627 = vpop.f32.mrf.mxu0
        %v2628 = vadd.f32 0.0, %v2627
        %2629 = vmatmul.bf16.gmra.mxu0 %v2115
        %v2630 = vpop.f32.mrf.mxu0
        %v2631 = vadd.f32 0.0, %v2630
        %v2632 = vpop.f32.mrf.mxu0
        %v2633 = vadd.f32 0.0, %v2632
        %2634 = vmatmul.bf16.gmra.mxu0 %v2118
        %v2635 = vpop.f32.mrf.mxu0
        %v2636 = vadd.f32 0.0, %v2635
        %v2637 = vpop.f32.mrf.mxu0
        %v2638 = vadd.f32 0.0, %v2637
        %2639 = vmatmul.bf16.gmra.mxu0 %v2121
        %v2640 = vpop.f32.mrf.mxu0
        %v2641 = vadd.f32 0.0, %v2640
        %v2642 = vpop.f32.mrf.mxu0
        %v2643 = vadd.f32 0.0, %v2642
        %2644 = vmatmul.bf16.gmra.mxu0 %v2124
        %v2645 = vpop.f32.mrf.mxu0
        %v2646 = vadd.f32 0.0, %v2645
        %v2647 = vpop.f32.mrf.mxu0
        %v2648 = vadd.f32 0.0, %v2647
        %2649 = vmatmul.bf16.gmra.mxu0 %v2127
        %v2650 = vpop.f32.mrf.mxu0
        %v2651 = vadd.f32 0.0, %v2650
        %v2652 = vpop.f32.mrf.mxu0
        %v2653 = vadd.f32 0.0, %v2652
        %2654 = vmatmul.bf16.gmra.mxu0 %v2130
        %v2655 = vpop.f32.mrf.mxu0
        %v2656 = vadd.f32 0.0, %v2655
        %v2657 = vpop.f32.mrf.mxu0
        %v2658 = vadd.f32 0.0, %v2657
        %2659 = vmatmul.bf16.gmra.mxu0 %v2133
        %v2660 = vpop.f32.mrf.mxu0
        %v2661 = vadd.f32 0.0, %v2660
        %v2662 = vpop.f32.mrf.mxu0
        %v2663 = vadd.f32 0.0, %v2662
        %2664 = vmatmul.bf16.gmra.mxu0 %v2136
        %v2665 = vpop.f32.mrf.mxu0
        %v2666 = vadd.f32 0.0, %v2665
        %v2667 = vpop.f32.mrf.mxu0
        %v2668 = vadd.f32 0.0, %v2667
        %2669 = vmatmul.bf16.gmra.mxu0 %v2139
        %v2670 = vpop.f32.mrf.mxu0
        %v2671 = vadd.f32 0.0, %v2670
        %v2672 = vpop.f32.mrf.mxu0
        %v2673 = vadd.f32 0.0, %v2672
        %2674 = vmatmul.bf16.gmra.mxu0 %v2142
        %v2675 = vpop.f32.mrf.mxu0
        %v2676 = vadd.f32 0.0, %v2675
        %v2677 = vpop.f32.mrf.mxu0
        %v2678 = vadd.f32 0.0, %v2677
        %2679 = vmatmul.bf16.gmra.mxu0 %v2145
        %v2680 = vpop.f32.mrf.mxu0
        %v2681 = vadd.f32 0.0, %v2680
        %v2682 = vpop.f32.mrf.mxu0
        %v2683 = vadd.f32 0.0, %v2682
        %2684 = vmatmul.bf16.gmra.mxu0 %v2148
        %v2685 = vpop.f32.mrf.mxu0
        %v2686 = vadd.f32 0.0, %v2685
        %v2687 = vpop.f32.mrf.mxu0
        %v2688 = vadd.f32 0.0, %v2687
        %2689 = vmatmul.bf16.gmra.mxu0 %v2151
        %v2690 = vpop.f32.mrf.mxu0
        %v2691 = vadd.f32 0.0, %v2690
        %v2692 = vpop.f32.mrf.mxu0
        %v2693 = vadd.f32 0.0, %v2692
        %2694 = vmatmul.bf16.gmra.mxu0 %v2154
        %v2695 = vpop.f32.mrf.mxu0
        %v2696 = vadd.f32 0.0, %v2695
        %v2697 = vpop.f32.mrf.mxu0
        %v2698 = vadd.f32 0.0, %v2697
        %2699 = vmatmul.bf16.gmra.mxu0 %v2157
        %v2700 = vpop.f32.mrf.mxu0
        %v2701 = vadd.f32 0.0, %v2700
        %v2702 = vpop.f32.mrf.mxu0
        %v2703 = vadd.f32 0.0, %v2702
        %2704 = vmatmul.bf16.gmra.mxu0 %v2160
        %v2705 = vpop.f32.mrf.mxu0
        %v2706 = vadd.f32 0.0, %v2705
        %v2707 = vpop.f32.mrf.mxu0
        %v2708 = vadd.f32 0.0, %v2707
        %2709 = vmatmul.bf16.gmra.mxu0 %v2163
        %v2710 = vpop.f32.mrf.mxu0
        %v2711 = vadd.f32 0.0, %v2710
        %v2712 = vpop.f32.mrf.mxu0
        %v2713 = vadd.f32 0.0, %v2712
        %2714 = vmatmul.bf16.gmra.mxu0 %v2166
        %v2715 = vpop.f32.mrf.mxu0
        %v2716 = vadd.f32 0.0, %v2715
        %v2717 = vpop.f32.mrf.mxu0
        %v2718 = vadd.f32 0.0, %v2717
        %2719 = vmatmul.bf16.gmra.mxu0 %v2169
        %v2720 = vpop.f32.mrf.mxu0
        %v2721 = vadd.f32 0.0, %v2720
        %v2722 = vpop.f32.mrf.mxu0
        %v2723 = vadd.f32 0.0, %v2722
        %2724 = vmatmul.bf16.gmra.mxu0 %v2172
        %v2725 = vpop.f32.mrf.mxu0
        %v2726 = vadd.f32 0.0, %v2725
        %v2727 = vpop.f32.mrf.mxu0
        %v2728 = vadd.f32 0.0, %v2727
        %2729 = vdwg.mxu0
        %v2730 = vmax.f32 %v2191, %v2326
        %v2731 = vmax.f32 %v2193, %v2328
        %v2732 = vmax.f32 %v2196, %v2331
        %v2733 = vmax.f32 %v2198, %v2333
        %v2734 = vmax.f32 %v2201, %v2336
        %v2735 = vmax.f32 %v2203, %v2338
        %v2736 = vmax.f32 %v2206, %v2341
        %v2737 = vmax.f32 %v2208, %v2343
        %v2738 = vmax.f32 %v2211, %v2346
        %v2739 = vmax.f32 %v2213, %v2348
        %v2740 = vmax.f32 %v2216, %v2351
        %v2741 = vmax.f32 %v2218, %v2353
        %v2742 = vmax.f32 %v2221, %v2356
        %v2743 = vmax.f32 %v2223, %v2358
        %v2744 = vmax.f32 %v2226, %v2361
        %v2745 = vmax.f32 %v2228, %v2363
        %v2746 = vmax.f32 %v2231, %v2366
        %v2747 = vmax.f32 %v2233, %v2368
        %v2748 = vmax.f32 %v2236, %v2371
        %v2749 = vmax.f32 %v2238, %v2373
        %v2750 = vmax.f32 %v2241, %v2376
        %v2751 = vmax.f32 %v2243, %v2378
        %v2752 = vmax.f32 %v2246, %v2381
        %v2753 = vmax.f32 %v2248, %v2383
        %v2754 = vmax.f32 %v2251, %v2386
        %v2755 = vmax.f32 %v2253, %v2388
        %v2756 = vmax.f32 %v2256, %v2391
        %v2757 = vmax.f32 %v2258, %v2393
        %v2758 = vmax.f32 %v2261, %v2396
        %v2759 = vmax.f32 %v2263, %v2398
        %v2760 = vmax.f32 %v2266, %v2401
        %v2761 = vmax.f32 %v2268, %v2403
        %v2762 = vmax.f32 %v2271, %v2406
        %v2763 = vmax.f32 %v2273, %v2408
        %v2764 = vmax.f32 %v2276, %v2411
        %v2765 = vmax.f32 %v2278, %v2413
        %v2766 = vmax.f32 %v2281, %v2416
        %v2767 = vmax.f32 %v2283, %v2418
        %v2768 = vmax.f32 %v2286, %v2421
        %v2769 = vmax.f32 %v2288, %v2423
        %v2770 = vmax.f32 %v2291, %v2426
        %v2771 = vmax.f32 %v2293, %v2428
        %v2772 = vmax.f32 %v2296, %v2431
        %v2773 = vmax.f32 %v2298, %v2433
        %v2774 = vmax.f32 %v2301, %v2436
        %v2775 = vmax.f32 %v2303, %v2438
        %v2776 = vmax.f32 %v2306, %v2441
        %v2777 = vmax.f32 %v2308, %v2443
        %v2778 = vmax.f32 %v2311, %v2446
        %v2779 = vmax.f32 %v2313, %v2448
        %v2780 = vmax.f32 %v2316, %v2451
        %v2781 = vmax.f32 %v2318, %v2453
        %v2782 = vmax.f32 %v2321, %v2456
        %v2783 = vmax.f32 %v2323, %v2458
        %v2784 = vmax.f32 %v2730, %v2461
        %v2785 = vmax.f32 %v2731, %v2463
        %v2786 = vmax.f32 %v2732, %v2466
        %v2787 = vmax.f32 %v2733, %v2468
        %v2788 = vmax.f32 %v2734, %v2471
        %v2789 = vmax.f32 %v2735, %v2473
        %v2790 = vmax.f32 %v2736, %v2476
        %v2791 = vmax.f32 %v2737, %v2478
        %v2792 = vmax.f32 %v2738, %v2481
        %v2793 = vmax.f32 %v2739, %v2483
        %v2794 = vmax.f32 %v2740, %v2486
        %v2795 = vmax.f32 %v2741, %v2488
        %v2796 = vmax.f32 %v2742, %v2491
        %v2797 = vmax.f32 %v2743, %v2493
        %v2798 = vmax.f32 %v2744, %v2496
        %v2799 = vmax.f32 %v2745, %v2498
        %v2800 = vmax.f32 %v2746, %v2501
        %v2801 = vmax.f32 %v2747, %v2503
        %v2802 = vmax.f32 %v2748, %v2506
        %v2803 = vmax.f32 %v2749, %v2508
        %v2804 = vmax.f32 %v2750, %v2511
        %v2805 = vmax.f32 %v2751, %v2513
        %v2806 = vmax.f32 %v2752, %v2516
        %v2807 = vmax.f32 %v2753, %v2518
        %v2808 = vmax.f32 %v2754, %v2521
        %v2809 = vmax.f32 %v2755, %v2523
        %v2810 = vmax.f32 %v2756, %v2526
        %v2811 = vmax.f32 %v2757, %v2528
        %v2812 = vmax.f32 %v2758, %v2531
        %v2813 = vmax.f32 %v2759, %v2533
        %v2814 = vmax.f32 %v2760, %v2536
        %v2815 = vmax.f32 %v2761, %v2538
        %v2816 = vmax.f32 %v2762, %v2541
        %v2817 = vmax.f32 %v2763, %v2543
        %v2818 = vmax.f32 %v2764, %v2546
        %v2819 = vmax.f32 %v2765, %v2548
        %v2820 = vmax.f32 %v2766, %v2551
        %v2821 = vmax.f32 %v2767, %v2553
        %v2822 = vmax.f32 %v2768, %v2556
        %v2823 = vmax.f32 %v2769, %v2558
        %v2824 = vmax.f32 %v2770, %v2561
        %v2825 = vmax.f32 %v2771, %v2563
        %v2826 = vmax.f32 %v2772, %v2566
        %v2827 = vmax.f32 %v2773, %v2568
        %v2828 = vmax.f32 %v2774, %v2571
        %v2829 = vmax.f32 %v2775, %v2573
        %v2830 = vmax.f32 %v2776, %v2576
        %v2831 = vmax.f32 %v2777, %v2578
        %v2832 = vmax.f32 %v2778, %v2581
        %v2833 = vmax.f32 %v2779, %v2583
        %v2834 = vmax.f32 %v2780, %v2586
        %v2835 = vmax.f32 %v2781, %v2588
        %v2836 = vmax.f32 %v2782, %v2591
        %v2837 = vmax.f32 %v2783, %v2593
        %v2838 = vmax.f32 %v2784, %v2596
        %v2839 = vmax.f32 %v2785, %v2598
        %v2840 = vmax.f32 %v2786, %v2601
        %v2841 = vmax.f32 %v2787, %v2603
        %v2842 = vmax.f32 %v2788, %v2606
        %v2843 = vmax.f32 %v2789, %v2608
        %v2844 = vmax.f32 %v2790, %v2611
        %v2845 = vmax.f32 %v2791, %v2613
        %v2846 = vmax.f32 %v2792, %v2616
        %v2847 = vmax.f32 %v2793, %v2618
        %v2848 = vmax.f32 %v2794, %v2621
        %v2849 = vmax.f32 %v2795, %v2623
        %v2850 = vmax.f32 %v2796, %v2626
        %v2851 = vmax.f32 %v2797, %v2628
        %v2852 = vmax.f32 %v2798, %v2631
        %v2853 = vmax.f32 %v2799, %v2633
        %v2854 = vmax.f32 %v2800, %v2636
        %v2855 = vmax.f32 %v2801, %v2638
        %v2856 = vmax.f32 %v2802, %v2641
        %v2857 = vmax.f32 %v2803, %v2643
        %v2858 = vmax.f32 %v2804, %v2646
        %v2859 = vmax.f32 %v2805, %v2648
        %v2860 = vmax.f32 %v2806, %v2651
        %v2861 = vmax.f32 %v2807, %v2653
        %v2862 = vmax.f32 %v2808, %v2656
        %v2863 = vmax.f32 %v2809, %v2658
        %v2864 = vmax.f32 %v2810, %v2661
        %v2865 = vmax.f32 %v2811, %v2663
        %v2866 = vmax.f32 %v2812, %v2666
        %v2867 = vmax.f32 %v2813, %v2668
        %v2868 = vmax.f32 %v2814, %v2671
        %v2869 = vmax.f32 %v2815, %v2673
        %v2870 = vmax.f32 %v2816, %v2676
        %v2871 = vmax.f32 %v2817, %v2678
        %v2872 = vmax.f32 %v2818, %v2681
        %v2873 = vmax.f32 %v2819, %v2683
        %v2874 = vmax.f32 %v2820, %v2686
        %v2875 = vmax.f32 %v2821, %v2688
        %v2876 = vmax.f32 %v2822, %v2691
        %v2877 = vmax.f32 %v2823, %v2693
        %v2878 = vmax.f32 %v2824, %v2696
        %v2879 = vmax.f32 %v2825, %v2698
        %v2880 = vmax.f32 %v2826, %v2701
        %v2881 = vmax.f32 %v2827, %v2703
        %v2882 = vmax.f32 %v2828, %v2706
        %v2883 = vmax.f32 %v2829, %v2708
        %v2884 = vmax.f32 %v2830, %v2711
        %v2885 = vmax.f32 %v2831, %v2713
        %v2886 = vmax.f32 %v2832, %v2716
        %v2887 = vmax.f32 %v2833, %v2718
        %v2888 = vmax.f32 %v2834, %v2721
        %v2889 = vmax.f32 %v2835, %v2723
        %v2890 = vmax.f32 %v2836, %v2726
        %v2891 = vmax.f32 %v2837, %v2728
        %v2892 = vld [vmem:[%s2] sm:$0x1]
        %v2894 = vperm.slane %v2892, 0
        %v2896 = vadd.f32 %v2838, %v2894
        %v2897 = vadd.f32 %v2839, %v2894
        %v2898 = vadd.f32 %v2840, %v2894
        %v2899 = vadd.f32 %v2841, %v2894
        %v2900 = vadd.f32 %v2842, %v2894
        %v2901 = vadd.f32 %v2843, %v2894
        %v2902 = vadd.f32 %v2844, %v2894
        %v2903 = vadd.f32 %v2845, %v2894
        %v2904 = vadd.f32 %v2846, %v2894
        %v2905 = vadd.f32 %v2847, %v2894
        %v2906 = vadd.f32 %v2848, %v2894
        %v2907 = vadd.f32 %v2849, %v2894
        %v2908 = vadd.f32 %v2850, %v2894
        %v2909 = vadd.f32 %v2851, %v2894
        %v2910 = vadd.f32 %v2852, %v2894
        %v2911 = vadd.f32 %v2853, %v2894
        %v2912 = vadd.f32 %v2854, %v2894
        %v2913 = vadd.f32 %v2855, %v2894
        %v2914 = vadd.f32 %v2856, %v2894
        %v2915 = vadd.f32 %v2857, %v2894
        %v2916 = vadd.f32 %v2858, %v2894
        %v2917 = vadd.f32 %v2859, %v2894
        %v2918 = vadd.f32 %v2860, %v2894
        %v2919 = vadd.f32 %v2861, %v2894
        %v2920 = vadd.f32 %v2862, %v2894
        %v2921 = vadd.f32 %v2863, %v2894
        %v2922 = vadd.f32 %v2864, %v2894
        %v2923 = vadd.f32 %v2865, %v2894
        %v2924 = vadd.f32 %v2866, %v2894
        %v2925 = vadd.f32 %v2867, %v2894
        %v2926 = vadd.f32 %v2868, %v2894
        %v2927 = vadd.f32 %v2869, %v2894
        %v2928 = vadd.f32 %v2870, %v2894
        %v2929 = vadd.f32 %v2871, %v2894
        %v2930 = vadd.f32 %v2872, %v2894
        %v2931 = vadd.f32 %v2873, %v2894
        %v2932 = vadd.f32 %v2874, %v2894
        %v2933 = vadd.f32 %v2875, %v2894
        %v2934 = vadd.f32 %v2876, %v2894
        %v2935 = vadd.f32 %v2877, %v2894
        %v2936 = vadd.f32 %v2878, %v2894
        %v2937 = vadd.f32 %v2879, %v2894
        %v2938 = vadd.f32 %v2880, %v2894
        %v2939 = vadd.f32 %v2881, %v2894
        %v2940 = vadd.f32 %v2882, %v2894
        %v2941 = vadd.f32 %v2883, %v2894
        %v2942 = vadd.f32 %v2884, %v2894
        %v2943 = vadd.f32 %v2885, %v2894
        %v2944 = vadd.f32 %v2886, %v2894
        %v2945 = vadd.f32 %v2887, %v2894
        %v2946 = vadd.f32 %v2888, %v2894
        %v2947 = vadd.f32 %v2889, %v2894
        %v2948 = vadd.f32 %v2890, %v2894
        %v2949 = vadd.f32 %v2891, %v2894
        %v2950 = vmax.f32 %v2896, 0.0
        %v2951 = vmax.f32 %v2897, 0.0
        %v2952 = vmax.f32 %v2898, 0.0
        %v2953 = vmax.f32 %v2899, 0.0
        %v2954 = vmax.f32 %v2900, 0.0
        %v2955 = vmax.f32 %v2901, 0.0
        %v2956 = vmax.f32 %v2902, 0.0
        %v2957 = vmax.f32 %v2903, 0.0
        %v2958 = vmax.f32 %v2904, 0.0
        %v2959 = vmax.f32 %v2905, 0.0
        %v2960 = vmax.f32 %v2906, 0.0
        %v2961 = vmax.f32 %v2907, 0.0
        %v2962 = vmax.f32 %v2908, 0.0
        %v2963 = vmax.f32 %v2909, 0.0
        %v2964 = vmax.f32 %v2910, 0.0
        %v2965 = vmax.f32 %v2911, 0.0
        %v2966 = vmax.f32 %v2912, 0.0
        %v2967 = vmax.f32 %v2913, 0.0
        %v2968 = vmax.f32 %v2914, 0.0
        %v2969 = vmax.f32 %v2915, 0.0
        %v2970 = vmax.f32 %v2916, 0.0
        %v2971 = vmax.f32 %v2917, 0.0
        %v2972 = vmax.f32 %v2918, 0.0
        %v2973 = vmax.f32 %v2919, 0.0
        %v2974 = vmax.f32 %v2920, 0.0
        %v2975 = vmax.f32 %v2921, 0.0
        %v2976 = vmax.f32 %v2922, 0.0
        %v2977 = vmax.f32 %v2923, 0.0
        %v2978 = vmax.f32 %v2924, 0.0
        %v2979 = vmax.f32 %v2925, 0.0
        %v2980 = vmax.f32 %v2926, 0.0
        %v2981 = vmax.f32 %v2927, 0.0
        %v2982 = vmax.f32 %v2928, 0.0
        %v2983 = vmax.f32 %v2929, 0.0
        %v2984 = vmax.f32 %v2930, 0.0
        %v2985 = vmax.f32 %v2931, 0.0
        %v2986 = vmax.f32 %v2932, 0.0
        %v2987 = vmax.f32 %v2933, 0.0
        %v2988 = vmax.f32 %v2934, 0.0
        %v2989 = vmax.f32 %v2935, 0.0
        %v2990 = vmax.f32 %v2936, 0.0
        %v2991 = vmax.f32 %v2937, 0.0
        %v2992 = vmax.f32 %v2938, 0.0
        %v2993 = vmax.f32 %v2939, 0.0
        %v2994 = vmax.f32 %v2940, 0.0
        %v2995 = vmax.f32 %v2941, 0.0
        %v2996 = vmax.f32 %v2942, 0.0
        %v2997 = vmax.f32 %v2943, 0.0
        %v2998 = vmax.f32 %v2944, 0.0
        %v2999 = vmax.f32 %v2945, 0.0
        %v3000 = vmax.f32 %v2946, 0.0
        %v3001 = vmax.f32 %v2947, 0.0
        %v3002 = vmax.f32 %v2948, 0.0
        %v3003 = vmax.f32 %v2949, 0.0
        %v3004 = vpack.c.bf16 %v2950, %v2950
        %v3005 = vpack.c.bf16 %v2951, %v2951
        %v3006 = vpack.c.bf16 %v2952, %v2952
        %v3007 = vpack.c.bf16 %v2953, %v2953
        %v3008 = vpack.c.bf16 %v2954, %v2954
        %v3009 = vpack.c.bf16 %v2955, %v2955
        %v3010 = vpack.c.bf16 %v2956, %v2956
        %v3011 = vpack.c.bf16 %v2957, %v2957
        %v3012 = vpack.c.bf16 %v2958, %v2958
        %v3013 = vpack.c.bf16 %v2959, %v2959
        %v3014 = vpack.c.bf16 %v2960, %v2960
        %v3015 = vpack.c.bf16 %v2961, %v2961
        %v3016 = vpack.c.bf16 %v2962, %v2962
        %v3017 = vpack.c.bf16 %v2963, %v2963
        %v3018 = vpack.c.bf16 %v2964, %v2964
        %v3019 = vpack.c.bf16 %v2965, %v2965
        %v3020 = vpack.c.bf16 %v2966, %v2966
        %v3021 = vpack.c.bf16 %v2967, %v2967
        %v3022 = vpack.c.bf16 %v2968, %v2968
        %v3023 = vpack.c.bf16 %v2969, %v2969
        %v3024 = vpack.c.bf16 %v2970, %v2970
        %v3025 = vpack.c.bf16 %v2971, %v2971
        %v3026 = vpack.c.bf16 %v2972, %v2972
        %v3027 = vpack.c.bf16 %v2973, %v2973
        %v3028 = vpack.c.bf16 %v2974, %v2974
        %v3029 = vpack.c.bf16 %v2975, %v2975
        %v3030 = vpack.c.bf16 %v2976, %v2976
        %v3031 = vpack.c.bf16 %v2977, %v2977
        %v3032 = vpack.c.bf16 %v2978, %v2978
        %v3033 = vpack.c.bf16 %v2979, %v2979
        %v3034 = vpack.c.bf16 %v2980, %v2980
        %v3035 = vpack.c.bf16 %v2981, %v2981
        %v3036 = vpack.c.bf16 %v2982, %v2982
        %v3037 = vpack.c.bf16 %v2983, %v2983
        %v3038 = vpack.c.bf16 %v2984, %v2984
        %v3039 = vpack.c.bf16 %v2985, %v2985
        %v3040 = vpack.c.bf16 %v2986, %v2986
        %v3041 = vpack.c.bf16 %v2987, %v2987
        %v3042 = vpack.c.bf16 %v2988, %v2988
        %v3043 = vpack.c.bf16 %v2989, %v2989
        %v3044 = vpack.c.bf16 %v2990, %v2990
        %v3045 = vpack.c.bf16 %v2991, %v2991
        %v3046 = vpack.c.bf16 %v2992, %v2992
        %v3047 = vpack.c.bf16 %v2993, %v2993
        %v3048 = vpack.c.bf16 %v2994, %v2994
        %v3049 = vpack.c.bf16 %v2995, %v2995
        %v3050 = vpack.c.bf16 %v2996, %v2996
        %v3051 = vpack.c.bf16 %v2997, %v2997
        %v3052 = vpack.c.bf16 %v2998, %v2998
        %v3053 = vpack.c.bf16 %v2999, %v2999
        %v3054 = vpack.c.bf16 %v3000, %v3000
        %v3055 = vpack.c.bf16 %v3001, %v3001
        %v3056 = vpack.c.bf16 %v3002, %v3002
        %v3057 = vpack.c.bf16 %v3003, %v3003
        %vm3058 = vcmask 158720
        %3059 = vst.msk [vmem:[%s1075] sm:$0xf] %vm3058, %v3004
        %3060 = vst.msk [vmem:[%s1075 + $0x4] sm:$0xf] %vm3058, %v3005
        %3061 = vst.msk [vmem:[%s1075 + $0x8] sm:$0xf] %vm3058, %v3006
        %3062 = vst.msk [vmem:[%s1075 + $0xc] sm:$0xf] %vm3058, %v3007
        %3063 = vst.msk [vmem:[%s1075 + $0x10] sm:$0xf] %vm3058, %v3008
        %3064 = vst.msk [vmem:[%s1075 + $0x14] sm:$0xf] %vm3058, %v3009
        %3065 = vst.msk [vmem:[%s1075 + $0x18] sm:$0xf] %vm3058, %v3010
        %3066 = vst.msk [vmem:[%s1075 + $0x1c] sm:$0xf] %vm3058, %v3011
        %3067 = vst.msk [vmem:[%s1075 + $0x20] sm:$0xf] %vm3058, %v3012
        %3068 = vst.msk [vmem:[%s1075 + $0x24] sm:$0xf] %vm3058, %v3013
        %3069 = vst.msk [vmem:[%s1075 + $0x28] sm:$0xf] %vm3058, %v3014
        %3070 = vst.msk [vmem:[%s1075 + $0x2c] sm:$0xf] %vm3058, %v3015
        %3071 = vst.msk [vmem:[%s1075 + $0x30] sm:$0xf] %vm3058, %v3016
        %3072 = vst.msk [vmem:[%s1075 + $0x34] sm:$0xf] %vm3058, %v3017
        %3073 = vst.msk [vmem:[%s1075 + $0x38] sm:$0xf] %vm3058, %v3018
        %3074 = vst.msk [vmem:[%s1075 + $0x3c] sm:$0xf] %vm3058, %v3019
        %3075 = vst.msk [vmem:[%s1075 + $0x40] sm:$0xf] %vm3058, %v3020
        %3076 = vst.msk [vmem:[%s1075 + $0x44] sm:$0xf] %vm3058, %v3021
        %3077 = vst.msk [vmem:[%s1075 + $0x48] sm:$0xf] %vm3058, %v3022
        %3078 = vst.msk [vmem:[%s1075 + $0x4c] sm:$0xf] %vm3058, %v3023
        %3079 = vst.msk [vmem:[%s1075 + $0x50] sm:$0xf] %vm3058, %v3024
        %3080 = vst.msk [vmem:[%s1075 + $0x54] sm:$0xf] %vm3058, %v3025
        %3081 = vst.msk [vmem:[%s1075 + $0x58] sm:$0xf] %vm3058, %v3026
        %3082 = vst.msk [vmem:[%s1075 + $0x5c] sm:$0xf] %vm3058, %v3027
        %3083 = vst.msk [vmem:[%s1075 + $0x60] sm:$0xf] %vm3058, %v3028
        %3084 = vst.msk [vmem:[%s1075 + $0x64] sm:$0xf] %vm3058, %v3029
        %3085 = vst.msk [vmem:[%s1075 + $0x68] sm:$0xf] %vm3058, %v3030
        %3086 = vst.msk [vmem:[%s1075 + $0x6c] sm:$0xf] %vm3058, %v3031
        %3087 = vst.msk [vmem:[%s1075 + $0x70] sm:$0xf] %vm3058, %v3032
        %3088 = vst.msk [vmem:[%s1075 + $0x74] sm:$0xf] %vm3058, %v3033
        %3089 = vst.msk [vmem:[%s1075 + $0x78] sm:$0xf] %vm3058, %v3034
        %3090 = vst.msk [vmem:[%s1075 + $0x7c] sm:$0xf] %vm3058, %v3035
        %3091 = vst.msk [vmem:[%s1075 + $0x80] sm:$0xf] %vm3058, %v3036
        %3092 = vst.msk [vmem:[%s1075 + $0x84] sm:$0xf] %vm3058, %v3037
        %3093 = vst.msk [vmem:[%s1075 + $0x88] sm:$0xf] %vm3058, %v3038
        %3094 = vst.msk [vmem:[%s1075 + $0x8c] sm:$0xf] %vm3058, %v3039
        %3095 = vst.msk [vmem:[%s1075 + $0x90] sm:$0xf] %vm3058, %v3040
        %3096 = vst.msk [vmem:[%s1075 + $0x94] sm:$0xf] %vm3058, %v3041
        %3097 = vst.msk [vmem:[%s1075 + $0x98] sm:$0xf] %vm3058, %v3042
        %3098 = vst.msk [vmem:[%s1075 + $0x9c] sm:$0xf] %vm3058, %v3043
        %3099 = vst.msk [vmem:[%s1075 + $0xa0] sm:$0xf] %vm3058, %v3044
        %3100 = vst.msk [vmem:[%s1075 + $0xa4] sm:$0xf] %vm3058, %v3045
        %3101 = vst.msk [vmem:[%s1075 + $0xa8] sm:$0xf] %vm3058, %v3046
        %3102 = vst.msk [vmem:[%s1075 + $0xac] sm:$0xf] %vm3058, %v3047
        %3103 = vst.msk [vmem:[%s1075 + $0xb0] sm:$0xf] %vm3058, %v3048
        %3104 = vst.msk [vmem:[%s1075 + $0xb4] sm:$0xf] %vm3058, %v3049
        %3105 = vst.msk [vmem:[%s1075 + $0xb8] sm:$0xf] %vm3058, %v3050
        %3106 = vst.msk [vmem:[%s1075 + $0xbc] sm:$0xf] %vm3058, %v3051
        %3107 = vst.msk [vmem:[%s1075 + $0xc0] sm:$0xf] %vm3058, %v3052
        %3108 = vst.msk [vmem:[%s1075 + $0xc4] sm:$0xf] %vm3058, %v3053
        %3109 = vst.msk [vmem:[%s1075 + $0xc8] sm:$0xf] %vm3058, %v3054
        %3110 = vst.msk [vmem:[%s1075 + $0xcc] sm:$0xf] %vm3058, %v3055
        %3111 = vst.msk [vmem:[%s1075 + $0xd0] sm:$0xf] %vm3058, %v3056
        %3112 = vst.msk [vmem:[%s1075 + $0xd4] sm:$0xf] %vm3058, %v3057
        %s3113 = smul.u32 54, %s14
        %p3114 = scmp.lt.s32.totalorder %s3113, 107
        %s3115 = scalar_select %p3114, %s3113, 107
        %s3116 = smul.addr %s3115, 4
        %s3117 = scalar_lea.vmem %s3, %s3116
        // Predicated region
        $region74: #{additive_forward.4} parent=68 // pred_check
          %p3118 = pneg %p100
        $region75: #{additive_forward.4} parent=68 // pred_check_branch
          %3120 = sbr.rel (%p3118) target = $region77
        $region76: #{additive_forward.4} parent=68 // pred_region
          %s3121 = smul.u32 54, %s14
        $region77: #{additive_forward.4} parent=68 // pred_fallthru
          _
      $region69: #{additive_forward.4} parent=5 // pred_fallthru
        _
      %p3122 = scmp.le.s32.totalorder 2, %s9
      // Predicated region
      $region78: #{additive_forward.4} parent=5 // pred_check
        %p3123 = pneg %p3122
      $region79: #{additive_forward.4} parent=5 // pred_check_branch
        %3125 = sbr.rel (%p3123) target = $region81
      $region80: #{additive_forward.4} parent=5 // pred_region
        %s3126 = ssub.s32 %s9, 2
        // Predicated region
        $region82: #{additive_forward.4} parent=80 // pred_check
          %p3127 = pneg %p106
        $region83: #{additive_forward.4} parent=80 // pred_check_branch
          %3129 = sbr.rel (%p3127) target = $region85
        $region84: #{additive_forward.4} parent=80 // pred_region
          %s3130 = smul.u32 54, %s15
          %p3131 = scmp.lt.s32.totalorder %s3130, 107
          %s3132 = scalar_select %p3131, %s3130, 107
          %s3133 = smul.addr %s3132, 4
          %s3134 = scalar_lea.vmem %s3, %s3133
        $region85: #{additive_forward.4} parent=80 // pred_fallthru
          _
      $region81: #{additive_forward.4} parent=5 // pred_fallthru
        _
    $region6: #{additive_forward.4} parent=1 // loop_footer
      %s13 = sadd.s32 1, %s9
    $region7: #{additive_forward.4} parent=1 // loop_footer_branch
      %8 = sbr.rel target = $region3
    $region8: #{additive_forward.4} parent=1 // loop_exit
      _

// kernel: additive_forward.5
$region0: #{additive_forward.5}
  #allocation0 [shape = 'u32[]', space=smem, size = 0x4, offset = 0x4, fixed_abs, tag = 'smem constant byte address 0x4 - core index']
  #allocation1 [shape = 'u32[72,128]{1,0:T(1,128)}', space=vmem, size = 0x9000, scoped, tag = 'internal scratch']
  %s0 = inlined_call_operand.vmem [shape: bf16[4,96,500], index: 0, kind: input, shape index: {}]
  %s1 = inlined_call_operand.vmem [shape: bf16[500,50], index: 1, kind: input, shape index: {}]
  %s2 = inlined_call_operand.vmem [shape: f32[1,50], index: 2, kind: input, shape index: {}]
  %s3 = inlined_call_operand.vmem [shape: bf16[96,50], index: 3, kind: output, shape index: {}]
  %s4 = sld [smem:[#allocation0]]
  $region68: #{additive_forward.5} parent=0
    _
  %s6 = ssub.s32 1, %s4
  %s7 = scalar_select 0, %s6, %s4
  $region1: #{additive_forward.5} parent=0
    #allocation2 [shape = 'u8[393216]{0}', space=vmem, size = 0x60000, scoped, tag = 'input window, operand 0']
    loop: start=0, step=1, limit=4
    $region2: #{additive_forward.5} parent=1 // loop_pre_header
      _
    $region3: #{additive_forward.5} parent=1 // loop_header
      %s9 = sphi 0, %s13
      %p10 = scmp.ge.s32.totalorder %s9, 4
      %s19 = sphi 0, %s21
      %s22 = sphi 0, %s19
      %s23 = sphi 0, %s22
      %s39 = sphi 0, %s23
      %s43 = sphi 0, %s43
      %s45 = sphi 0, %s43
      %s46 = sphi 0, %s45
      %s60 = sphi 0, %s46
      %s64 = sphi 0, %s64
      %s66 = sphi 0, %s64
      %s67 = sphi 0, %s66
      %s81 = sphi 0, %s67
      %s87 = sphi 0, %s89
      %s90 = sphi 0, %s87
      %s91 = sphi 0, %s90
      %s107 = sphi 0, %s91
    $region4: #{additive_forward.5} parent=1 // loop_header_branch
      %12 = sbr.rel (%p10) target = $region8
    $region5: #{additive_forward.5} parent=1 // loop_body
      %s14 = ssub.s32 %s9, 1
      %s15 = ssub.s32 %s9, 2
      %s16 = sadd.s32 %s9, 1
      %s17 = ssub.s32 %s9, %s16
      %p18 = scmp.eq.s32.totalorder %s17, 0
      %s20 = sadd.s32 %s19, 1
      %s21 = scalar_select %p18, %s19, %s20
      %p24 = pneg %p18
      %p25 = scmp.eq.s32.totalorder %s9, 1
      %p26 = por %p24, %p25
      %p27 = scmp.ne.s32.totalorder %s19, %s22
      %p28 = scmp.eq.s32.totalorder %s9, 0
      %p29 = por %p27, %p28
      %p30 = scmp.ne.s32.totalorder %s19, %s22
      %p31 = scmp.eq.s32.totalorder %s14, 1
      %p32 = por %p30, %p31
      %p33 = scmp.ne.s32.totalorder %s22, %s23
      %p34 = scmp.eq.s32.totalorder %s14, 0
      %p35 = por %p33, %p34
      %p36 = scmp.ne.s32.totalorder %s22, %s23
      %p37 = scmp.eq.s32.totalorder %s15, 1
      %p38 = por %p36, %p37
      %p40 = scmp.ne.s32.totalorder %s23, %s39
      %p41 = scmp.eq.s32.totalorder %s15, 0
      %p42 = por %p40, %p41
      %s44 = sadd.s32 %s43, 1
      %p47 = scmp.eq.s32.totalorder %s9, 1
      %p48 = scmp.ne.s32.totalorder %s43, %s45
      %p49 = scmp.eq.s32.totalorder %s9, 0
      %p50 = por %p48, %p49
      %p51 = scmp.ne.s32.totalorder %s43, %s45
      %p52 = scmp.eq.s32.totalorder %s14, 1
      %p53 = por %p51, %p52
      %p54 = scmp.ne.s32.totalorder %s45, %s46
      %p55 = scmp.eq.s32.totalorder %s14, 0
      %p56 = por %p54, %p55
      %p57 = scmp.ne.s32.totalorder %s45, %s46
      %p58 = scmp.eq.s32.totalorder %s15, 1
      %p59 = por %p57, %p58
      %p61 = scmp.ne.s32.totalorder %s46, %s60
      %p62 = scmp.eq.s32.totalorder %s15, 0
      %p63 = por %p61, %p62
      %s65 = sadd.s32 %s64, 1
      %p68 = scmp.eq.s32.totalorder %s9, 1
      %p69 = scmp.ne.s32.totalorder %s64, %s66
      %p70 = scmp.eq.s32.totalorder %s9, 0
      %p71 = por %p69, %p70
      %p72 = scmp.ne.s32.totalorder %s64, %s66
      %p73 = scmp.eq.s32.totalorder %s14, 1
      %p74 = por %p72, %p73
      %p75 = scmp.ne.s32.totalorder %s66, %s67
      %p76 = scmp.eq.s32.totalorder %s14, 0
      %p77 = por %p75, %p76
      %p78 = scmp.ne.s32.totalorder %s66, %s67
      %p79 = scmp.eq.s32.totalorder %s15, 1
      %p80 = por %p78, %p79
      %p82 = scmp.ne.s32.totalorder %s67, %s81
      %p83 = scmp.eq.s32.totalorder %s15, 0
      %p84 = por %p82, %p83
      %s85 = ssub.s32 %s9, %s16
      %p86 = scmp.eq.s32.totalorder %s85, 0
      %s88 = sadd.s32 %s87, 1
      %s89 = scalar_select %p86, %s87, %s88
      %p92 = pneg %p86
      %p93 = scmp.eq.s32.totalorder %s9, 1
      %p94 = por %p92, %p93
      %p95 = scmp.ne.s32.totalorder %s87, %s90
      %p96 = scmp.eq.s32.totalorder %s9, 0
      %p97 = por %p95, %p96
      %p98 = scmp.ne.s32.totalorder %s87, %s90
      %p99 = scmp.eq.s32.totalorder %s14, 1
      %p100 = por %p98, %p99
      %p101 = scmp.ne.s32.totalorder %s90, %s91
      %p102 = scmp.eq.s32.totalorder %s14, 0
      %p103 = por %p101, %p102
      %p104 = scmp.ne.s32.totalorder %s90, %s91
      %p105 = scmp.eq.s32.totalorder %s15, 1
      %p106 = por %p104, %p105
      %p108 = scmp.ne.s32.totalorder %s91, %s107
      %p109 = scmp.eq.s32.totalorder %s15, 0
      %p110 = por %p108, %p109
      %p111 = scmp.le.s32.totalorder 1, %s9
      %p112 = scmp.lt.s32.totalorder %s9, 3
      %p113 = pnand %p111, %p112
      %p114 = pneg %p113
      // Predicated region
      $region9: #{additive_forward.5} parent=5 // pred_check
        _
      $region10: #{additive_forward.5} parent=5 // pred_check_branch
        %116 = sbr.rel (%p113) target = $region12
      $region11: #{additive_forward.5} parent=5 // pred_region
        %s117 = ssub.s32 %s9, 1
        // Predicated region
        $region13: #{additive_forward.5} parent=11 // pred_check
          %p118 = pneg %p56
        $region14: #{additive_forward.5} parent=11 // pred_check_branch
          %120 = sbr.rel (%p118) target = $region16
        $region15: #{additive_forward.5} parent=11 // pred_region
          _
        $region16: #{additive_forward.5} parent=11 // pred_fallthru
          _
        // Predicated region
        $region17: #{additive_forward.5} parent=11 // pred_check
          %p121 = pneg %p77
        $region18: #{additive_forward.5} parent=11 // pred_check_branch
          %123 = sbr.rel (%p121) target = $region20
        $region19: #{additive_forward.5} parent=11 // pred_region
          _
        $region20: #{additive_forward.5} parent=11 // pred_fallthru
          _
      $region12: #{additive_forward.5} parent=5 // pred_fallthru
        _
      %p124 = scmp.lt.s32.totalorder %s9, 2
      // Predicated region
      $region21: #{additive_forward.5} parent=5 // pred_check
        %p125 = pneg %p124
      $region22: #{additive_forward.5} parent=5 // pred_check_branch
        %127 = sbr.rel (%p125) target = $region24
      $region23: #{additive_forward.5} parent=5 // pred_region
        // Predicated region
        $region25: #{additive_forward.5} parent=23 // pred_check
          %p128 = pneg %p29
        $region26: #{additive_forward.5} parent=23 // pred_check_branch
          %130 = sbr.rel (%p128) target = $region28
        $region27: #{additive_forward.5} parent=23 // pred_region
          %s131 = sand.u32 %s19, 1
          %s132 = sand.u32 %s19, 1
          %s133 = smul.addr %s132, 384
          %s134 = scalar_lea.vmem [#allocation2], %s133
          %s135 = smul.u32 6, %s9
          %s136 = smul.addr %s135, 4
          %s137 = smul.addr %s136, 4
          %s138 = scalar_lea.vmem %s0, %s137
          // Predicated region
          $region29: #{additive_forward.5} parent=27 // pred_check
            _
          $region30: #{additive_forward.5} parent=27 // pred_check_branch
            %140 = sbr.rel (0) target = $region32
          $region31: #{additive_forward.5} parent=27 // pred_region
            // Predicated region
            $region33: #{additive_forward.5} parent=31 // pred_check
              _
            $region34: #{additive_forward.5} parent=31 // pred_check_branch
              %142 = sbr.rel (0) target = $region36
            $region35: #{additive_forward.5} parent=31 // pred_region
              loop: start=0, step=1, limit=1
              $region37: #{additive_forward.5} parent=35 // loop_pre_header
                _
              $region38: #{additive_forward.5} parent=35 // loop_header
                %s144 = sphi 0, %s148
                %p145 = scmp.ge.s32.totalorder %s144, 1
                %s149 = sphi %s138, %s138
                %s150 = sphi %s134, %s134
              $region39: #{additive_forward.5} parent=35 // loop_header_branch
                %147 = sbr.rel (%p145) target = $region43
              $region40: #{additive_forward.5} parent=35 // loop_body
                %v151 = vld [vmem:[%s149] sm:$0xff]
                %152 = vst [vmem:[%s150] sm:$0xff] %v151
                %v153 = vld [vmem:[%s149 + $0x8] sm:$0xff]
                %154 = vst [vmem:[%s150 + $0x8] sm:$0xff] %v153
                %v155 = vld [vmem:[%s149 + $0x10] sm:$0xff]
                %156 = vst [vmem:[%s150 + $0x10] sm:$0xff] %v155
                %v157 = vld [vmem:[%s149 + $0x18] sm:$0xff]
                %158 = vst [vmem:[%s150 + $0x18] sm:$0xff] %v157
                %v159 = vld [vmem:[%s149 + $0x20] sm:$0xff]
                %160 = vst [vmem:[%s150 + $0x20] sm:$0xff] %v159
                %v161 = vld [vmem:[%s149 + $0x28] sm:$0xff]
                %162 = vst [vmem:[%s150 + $0x28] sm:$0xff] %v161
                %v163 = vld [vmem:[%s149 + $0x30] sm:$0xff]
                %164 = vst [vmem:[%s150 + $0x30] sm:$0xff] %v163
                %v165 = vld [vmem:[%s149 + $0x38] sm:$0xff]
                %166 = vst [vmem:[%s150 + $0x38] sm:$0xff] %v165
                %v167 = vld [vmem:[%s149 + $0x40] sm:$0xff]
                %168 = vst [vmem:[%s150 + $0x40] sm:$0xff] %v167
                %v169 = vld [vmem:[%s149 + $0x48] sm:$0xff]
                %170 = vst [vmem:[%s150 + $0x48] sm:$0xff] %v169
                %v171 = vld [vmem:[%s149 + $0x50] sm:$0xff]
                %172 = vst [vmem:[%s150 + $0x50] sm:$0xff] %v171
                %v173 = vld [vmem:[%s149 + $0x58] sm:$0xff]
                %174 = vst [vmem:[%s150 + $0x58] sm:$0xff] %v173
                %v175 = vld [vmem:[%s149 + $0xc0] sm:$0xff]
                %176 = vst [vmem:[%s150 + $0x60] sm:$0xff] %v175
                %v177 = vld [vmem:[%s149 + $0xc8] sm:$0xff]
                %178 = vst [vmem:[%s150 + $0x68] sm:$0xff] %v177
                %v179 = vld [vmem:[%s149 + $0xd0] sm:$0xff]
                %180 = vst [vmem:[%s150 + $0x70] sm:$0xff] %v179
                %v181 = vld [vmem:[%s149 + $0xd8] sm:$0xff]
                %182 = vst [vmem:[%s150 + $0x78] sm:$0xff] %v181
                %v183 = vld [vmem:[%s149 + $0xe0] sm:$0xff]
                %184 = vst [vmem:[%s150 + $0x80] sm:$0xff] %v183
                %v185 = vld [vmem:[%s149 + $0xe8] sm:$0xff]
                %186 = vst [vmem:[%s150 + $0x88] sm:$0xff] %v185
                %v187 = vld [vmem:[%s149 + $0xf0] sm:$0xff]
                %188 = vst [vmem:[%s150 + $0x90] sm:$0xff] %v187
                %v189 = vld [vmem:[%s149 + $0xf8] sm:$0xff]
                %190 = vst [vmem:[%s150 + $0x98] sm:$0xff] %v189
                %v191 = vld [vmem:[%s149 + $0x100] sm:$0xff]
                %192 = vst [vmem:[%s150 + $0xa0] sm:$0xff] %v191
                %v193 = vld [vmem:[%s149 + $0x108] sm:$0xff]
                %194 = vst [vmem:[%s150 + $0xa8] sm:$0xff] %v193
                %v195 = vld [vmem:[%s149 + $0x110] sm:$0xff]
                %196 = vst [vmem:[%s150 + $0xb0] sm:$0xff] %v195
                %v197 = vld [vmem:[%s149 + $0x118] sm:$0xff]
                %198 = vst [vmem:[%s150 + $0xb8] sm:$0xff] %v197
                %v199 = vld [vmem:[%s149 + $0x180] sm:$0xff]
                %200 = vst [vmem:[%s150 + $0xc0] sm:$0xff] %v199
                %v201 = vld [vmem:[%s149 + $0x188] sm:$0xff]
                %202 = vst [vmem:[%s150 + $0xc8] sm:$0xff] %v201
                %v203 = vld [vmem:[%s149 + $0x190] sm:$0xff]
                %204 = vst [vmem:[%s150 + $0xd0] sm:$0xff] %v203
                %v205 = vld [vmem:[%s149 + $0x198] sm:$0xff]
                %206 = vst [vmem:[%s150 + $0xd8] sm:$0xff] %v205
                %v207 = vld [vmem:[%s149 + $0x1a0] sm:$0xff]
                %208 = vst [vmem:[%s150 + $0xe0] sm:$0xff] %v207
                %v209 = vld [vmem:[%s149 + $0x1a8] sm:$0xff]
                %210 = vst [vmem:[%s150 + $0xe8] sm:$0xff] %v209
                %v211 = vld [vmem:[%s149 + $0x1b0] sm:$0xff]
                %212 = vst [vmem:[%s150 + $0xf0] sm:$0xff] %v211
                %v213 = vld [vmem:[%s149 + $0x1b8] sm:$0xff]
                %214 = vst [vmem:[%s150 + $0xf8] sm:$0xff] %v213
                %v215 = vld [vmem:[%s149 + $0x1c0] sm:$0xff]
                %216 = vst [vmem:[%s150 + $0x100] sm:$0xff] %v215
                %v217 = vld [vmem:[%s149 + $0x1c8] sm:$0xff]
                %218 = vst [vmem:[%s150 + $0x108] sm:$0xff] %v217
                %v219 = vld [vmem:[%s149 + $0x1d0] sm:$0xff]
                %220 = vst [vmem:[%s150 + $0x110] sm:$0xff] %v219
                %v221 = vld [vmem:[%s149 + $0x1d8] sm:$0xff]
                %222 = vst [vmem:[%s150 + $0x118] sm:$0xff] %v221
                %v223 = vld [vmem:[%s149 + $0x240] sm:$0xff]
                %224 = vst [vmem:[%s150 + $0x120] sm:$0xff] %v223
                %v225 = vld [vmem:[%s149 + $0x248] sm:$0xff]
                %226 = vst [vmem:[%s150 + $0x128] sm:$0xff] %v225
                %v227 = vld [vmem:[%s149 + $0x250] sm:$0xff]
                %228 = vst [vmem:[%s150 + $0x130] sm:$0xff] %v227
                %v229 = vld [vmem:[%s149 + $0x258] sm:$0xff]
                %230 = vst [vmem:[%s150 + $0x138] sm:$0xff] %v229
                %v231 = vld [vmem:[%s149 + $0x260] sm:$0xff]
                %232 = vst [vmem:[%s150 + $0x140] sm:$0xff] %v231
                %v233 = vld [vmem:[%s149 + $0x268] sm:$0xff]
                %234 = vst [vmem:[%s150 + $0x148] sm:$0xff] %v233
                %v235 = vld [vmem:[%s149 + $0x270] sm:$0xff]
                %236 = vst [vmem:[%s150 + $0x150] sm:$0xff] %v235
                %v237 = vld [vmem:[%s149 + $0x278] sm:$0xff]
                %238 = vst [vmem:[%s150 + $0x158] sm:$0xff] %v237
                %v239 = vld [vmem:[%s149 + $0x280] sm:$0xff]
                %240 = vst [vmem:[%s150 + $0x160] sm:$0xff] %v239
                %v241 = vld [vmem:[%s149 + $0x288] sm:$0xff]
                %242 = vst [vmem:[%s150 + $0x168] sm:$0xff] %v241
                %v243 = vld [vmem:[%s149 + $0x290] sm:$0xff]
                %244 = vst [vmem:[%s150 + $0x170] sm:$0xff] %v243
                %v245 = vld [vmem:[%s149 + $0x298] sm:$0xff]
                %246 = vst [vmem:[%s150 + $0x178] sm:$0xff] %v245
              $region41: #{additive_forward.5} parent=35 // loop_footer
                %s148 = sadd.s32 1, %s144
              $region42: #{additive_forward.5} parent=35 // loop_footer_branch
                %143 = sbr.rel target = $region38
              $region43: #{additive_forward.5} parent=35 // loop_exit
                _
            $region36: #{additive_forward.5} parent=31 // pred_fallthru
              _
            // Predicated region
            $region44: #{additive_forward.5} parent=31 // pred_check
              _
            $region45: #{additive_forward.5} parent=31 // pred_check_branch
              %248 = sbr.rel target = $region47
            $region46: #{additive_forward.5} parent=31 // pred_region
              _
            $region47: #{additive_forward.5} parent=31 // pred_fallthru
              _
          $region32: #{additive_forward.5} parent=27 // pred_fallthru
            _
          %249 = vnop
        $region28: #{additive_forward.5} parent=23 // pred_fallthru
          _
      $region24: #{additive_forward.5} parent=5 // pred_fallthru
        _
      %p250 = scmp.le.s32.totalorder 1, %s9
      %p251 = scmp.lt.s32.totalorder %s9, 3
      %p252 = pnand %p250, %p251
      %p253 = pneg %p252
      // Predicated region
      $region48: #{additive_forward.5} parent=5 // pred_check
        _
      $region49: #{additive_forward.5} parent=5 // pred_check_branch
        %255 = sbr.rel (%p252) target = $region51
      $region50: #{additive_forward.5} parent=5 // pred_region
        %s256 = ssub.s32 %s9, 1
        %s257 = sand.u32 %s22, 1
        %s258 = sand.u32 %s22, 1
        %s259 = smul.addr %s258, 384
        %s260 = scalar_lea.vmem [#allocation2], %s259
        // Predicated region
        $region52: #{additive_forward.5} parent=50 // pred_check
          %p261 = pneg %p35
        $region53: #{additive_forward.5} parent=50 // pred_check_branch
          %263 = sbr.rel (%p261) target = $region55
        $region54: #{additive_forward.5} parent=50 // pred_region
          _
        $region55: #{additive_forward.5} parent=50 // pred_fallthru
          _
        %s264 = sand.u32 %s22, 1
        %s265 = sand.u32 %s22, 1
        %s266 = smul.addr %s265, 384
        %s267 = scalar_lea.vmem [#allocation2], %s266
        %p268 = pneg %p35
        %p269 = pneg %p32
        %p270 = pneg %p56
        %p271 = pneg %p53
        %p272 = pneg %p77
        %p273 = pneg %p74
        %p274 = pneg %p103
        %p275 = pneg %p100
        %s276 = smul.u32 6, %s14
        %p277 = scmp.lt.s32.totalorder %s276, 11
        %s278 = scalar_select %p277, %s276, 11
        %s279 = smul.addr %s278, 4
        %s280 = scalar_lea.vmem %s3, %s279
        %s281 = smul.u32 6, %s14
        %s282 = smul.u32 6, %s14
        %p283 = scmp.lt.s32.totalorder %s282, 11
        %s284 = scalar_select %p283, %s282, 11
        %s285 = smul.addr %s284, 4
        %s286 = scalar_lea.vmem %s3, %s285
        %s287 = smul.u32 6, %s14
        %v288 = vld [vmem:[%s260] sm:$0xff]
        %v289 = vld [vmem:[%s260 + $0x8] sm:$0xff]
        %v290 = vld [vmem:[%s260 + $0x10] sm:$0xff]
        %v291 = vld [vmem:[%s260 + $0x18] sm:$0xff]
        %v292 = vld [vmem:[%s260 + $0x20] sm:$0xff]
        %v293 = vld [vmem:[%s260 + $0x28] sm:$0xff]
        %v294 = vld [vmem:[%s260 + $0x30] sm:$0xff]
        %v295 = vld [vmem:[%s260 + $0x38] sm:$0xff]
        %v296 = vld [vmem:[%s260 + $0x40] sm:$0xff]
        %v297 = vld [vmem:[%s260 + $0x48] sm:$0xff]
        %v298 = vld [vmem:[%s260 + $0x50] sm:$0xff]
        %v299 = vld [vmem:[%s260 + $0x58] sm:$0xff]
        %v300 = vld [vmem:[%s260 + $0x60] sm:$0xff]
        %v301 = vld [vmem:[%s260 + $0x68] sm:$0xff]
        %v302 = vld [vmem:[%s260 + $0x70] sm:$0xff]
        %v303 = vld [vmem:[%s260 + $0x78] sm:$0xff]
        %v304 = vld [vmem:[%s260 + $0x80] sm:$0xff]
        %v305 = vld [vmem:[%s260 + $0x88] sm:$0xff]
        %v306 = vld [vmem:[%s260 + $0x90] sm:$0xff]
        %v307 = vld [vmem:[%s260 + $0x98] sm:$0xff]
        %v308 = vld [vmem:[%s260 + $0xa0] sm:$0xff]
        %v309 = vld [vmem:[%s260 + $0xa8] sm:$0xff]
        %v310 = vld [vmem:[%s260 + $0xb0] sm:$0xff]
        %v311 = vld [vmem:[%s260 + $0xb8] sm:$0xff]
        %v312 = vld [vmem:[%s260 + $0xc0] sm:$0xff]
        %v313 = vld [vmem:[%s260 + $0xc8] sm:$0xff]
        %v314 = vld [vmem:[%s260 + $0xd0] sm:$0xff]
        %v315 = vld [vmem:[%s260 + $0xd8] sm:$0xff]
        %v316 = vld [vmem:[%s260 + $0xe0] sm:$0xff]
        %v317 = vld [vmem:[%s260 + $0xe8] sm:$0xff]
        %v318 = vld [vmem:[%s260 + $0xf0] sm:$0xff]
        %v319 = vld [vmem:[%s260 + $0xf8] sm:$0xff]
        %v320 = vld [vmem:[%s260 + $0x100] sm:$0xff]
        %v321 = vld [vmem:[%s260 + $0x108] sm:$0xff]
        %v322 = vld [vmem:[%s260 + $0x110] sm:$0xff]
        %v323 = vld [vmem:[%s260 + $0x118] sm:$0xff]
        %v324 = vld [vmem:[%s260 + $0x120] sm:$0xff]
        %v325 = vld [vmem:[%s260 + $0x128] sm:$0xff]
        %v326 = vld [vmem:[%s260 + $0x130] sm:$0xff]
        %v327 = vld [vmem:[%s260 + $0x138] sm:$0xff]
        %v328 = vld [vmem:[%s260 + $0x140] sm:$0xff]
        %v329 = vld [vmem:[%s260 + $0x148] sm:$0xff]
        %v330 = vld [vmem:[%s260 + $0x150] sm:$0xff]
        %v331 = vld [vmem:[%s260 + $0x158] sm:$0xff]
        %v332 = vld [vmem:[%s260 + $0x160] sm:$0xff]
        %v333 = vld [vmem:[%s260 + $0x168] sm:$0xff]
        %v334 = vld [vmem:[%s260 + $0x170] sm:$0xff]
        %v335 = vld [vmem:[%s260 + $0x178] sm:$0xff]
        %v336 = vld [vmem:[%s1] sm:$0xf]
        %v337 = vld [vmem:[%s1 + $0x4] sm:$0xf]
        %v338 = vld [vmem:[%s1 + $0x8] sm:$0xf]
        %v339 = vld [vmem:[%s1 + $0xc] sm:$0xf]
        %v340 = vld [vmem:[%s1 + $0x10] sm:$0xf]
        %v341 = vld [vmem:[%s1 + $0x14] sm:$0xf]
        %v342 = vld [vmem:[%s1 + $0x18] sm:$0xf]
        %v343 = vld [vmem:[%s1 + $0x1c] sm:$0xf]
        %v344 = vld [vmem:[%s1 + $0x20] sm:$0xf]
        %v345 = vld [vmem:[%s1 + $0x24] sm:$0xf]
        %v346 = vld [vmem:[%s1 + $0x28] sm:$0xf]
        %v347 = vld [vmem:[%s1 + $0x2c] sm:$0xf]
        %v348 = vld [vmem:[%s1 + $0x30] sm:$0xf]
        %v349 = vld [vmem:[%s1 + $0x34] sm:$0xf]
        %v350 = vld [vmem:[%s1 + $0x38] sm:$0xf]
        %v351 = vld [vmem:[%s1 + $0x3c] sm:$0xf]
        %v352 = vld [vmem:[%s1 + $0x40] sm:$0xf]
        %v353 = vld [vmem:[%s1 + $0x44] sm:$0xf]
        %v354 = vld [vmem:[%s1 + $0x48] sm:$0xf]
        %v355 = vld [vmem:[%s1 + $0x4c] sm:$0xf]
        %v356 = vld [vmem:[%s1 + $0x50] sm:$0xf]
        %v357 = vld [vmem:[%s1 + $0x54] sm:$0xf]
        %v358 = vld [vmem:[%s1 + $0x58] sm:$0xf]
        %v359 = vld [vmem:[%s1 + $0x5c] sm:$0xf]
        %v360 = vld [vmem:[%s1 + $0x60] sm:$0xf]
        %v361 = vld [vmem:[%s1 + $0x64] sm:$0xf]
        %v362 = vld [vmem:[%s1 + $0x68] sm:$0xf]
        %v363 = vld [vmem:[%s1 + $0x6c] sm:$0xf]
        %v364 = vld [vmem:[%s1 + $0x70] sm:$0xf]
        %v365 = vld [vmem:[%s1 + $0x74] sm:$0xf]
        %v366 = vld [vmem:[%s1 + $0x78] sm:$0xf]
        %v367 = vld [vmem:[%s1 + $0x7c] sm:$0xf]
        %v368 = vld [vmem:[%s1 + $0x80] sm:$0xf]
        %v369 = vld [vmem:[%s1 + $0x84] sm:$0xf]
        %v370 = vld [vmem:[%s1 + $0x88] sm:$0xf]
        %v371 = vld [vmem:[%s1 + $0x8c] sm:$0xf]
        %v372 = vld [vmem:[%s1 + $0x90] sm:$0xf]
        %v373 = vld [vmem:[%s1 + $0x94] sm:$0xf]
        %v374 = vld [vmem:[%s1 + $0x98] sm:$0xf]
        %v375 = vld [vmem:[%s1 + $0x9c] sm:$0xf]
        %v376 = vld [vmem:[%s1 + $0xa0] sm:$0xf]
        %v377 = vld [vmem:[%s1 + $0xa4] sm:$0xf]
        %v378 = vld [vmem:[%s1 + $0xa8] sm:$0xf]
        %v379 = vld [vmem:[%s1 + $0xac] sm:$0xf]
        %v380 = vld [vmem:[%s1 + $0xb0] sm:$0xf]
        %v381 = vld [vmem:[%s1 + $0xb4] sm:$0xf]
        %v382 = vld [vmem:[%s1 + $0xb8] sm:$0xf]
        %v383 = vld [vmem:[%s1 + $0xbc] sm:$0xf]
        %v384 = vld [vmem:[%s1 + $0xc0] sm:$0xf]
        %v385 = vld [vmem:[%s1 + $0xc4] sm:$0xf]
        %v386 = vld [vmem:[%s1 + $0xc8] sm:$0xf]
        %v387 = vld [vmem:[%s1 + $0xcc] sm:$0xf]
        %v388 = vld [vmem:[%s1 + $0xd0] sm:$0xf]
        %v389 = vld [vmem:[%s1 + $0xd4] sm:$0xf]
        %v390 = vld [vmem:[%s1 + $0xd8] sm:$0xf]
        %v391 = vld [vmem:[%s1 + $0xdc] sm:$0xf]
        %v392 = vld [vmem:[%s1 + $0xe0] sm:$0xf]
        %v393 = vld [vmem:[%s1 + $0xe4] sm:$0xf]
        %v394 = vld [vmem:[%s1 + $0xe8] sm:$0xf]
        %v395 = vld [vmem:[%s1 + $0xec] sm:$0xf]
        %v396 = vld [vmem:[%s1 + $0xf0] sm:$0xf]
        %v397 = vld [vmem:[%s1 + $0xf4] sm:$0xf]
        %v398 = vld [vmem:[%s1 + $0xf8] sm:$0x3]
        %v447 = vunpack.c.l.b16 %v288
        %v448 = vunpack.c.h.b16 %v288
        %v449 = vunpack.c.l.b16 %v289
        %v450 = vunpack.c.h.b16 %v289
        %v451 = vunpack.c.l.b16 %v290
        %v452 = vunpack.c.h.b16 %v290
        %v453 = vunpack.c.l.b16 %v291
        %v454 = vunpack.c.h.b16 %v291
        %v455 = vunpack.c.l.b16 %v292
        %v456 = vunpack.c.h.b16 %v292
        %v457 = vunpack.c.l.b16 %v293
        %v458 = vunpack.c.h.b16 %v293
        %v459 = vunpack.c.l.b16 %v294
        %v460 = vunpack.c.h.b16 %v294
        %v461 = vunpack.c.l.b16 %v295
        %v462 = vunpack.c.h.b16 %v295
        %v463 = vunpack.c.l.b16 %v296
        %v464 = vunpack.c.h.b16 %v296
        %v465 = vunpack.c.l.b16 %v297
        %v466 = vunpack.c.h.b16 %v297
        %v467 = vunpack.c.l.b16 %v298
        %v468 = vunpack.c.h.b16 %v298
        %v469 = vunpack.c.l.b16 %v299
        %v470 = vunpack.c.h.b16 %v299
        %v471 = vunpack.c.l.b16 %v300
        %v472 = vunpack.c.h.b16 %v300
        %v473 = vunpack.c.l.b16 %v301
        %v474 = vunpack.c.h.b16 %v301
        %v475 = vunpack.c.l.b16 %v302
        %v476 = vunpack.c.h.b16 %v302
        %v477 = vunpack.c.l.b16 %v303
        %v478 = vunpack.c.h.b16 %v303
        %v479 = vunpack.c.l.b16 %v304
        %v480 = vunpack.c.h.b16 %v304
        %v481 = vunpack.c.l.b16 %v305
        %v482 = vunpack.c.h.b16 %v305
        %v483 = vunpack.c.l.b16 %v306
        %v484 = vunpack.c.h.b16 %v306
        %v485 = vunpack.c.l.b16 %v307
        %v486 = vunpack.c.h.b16 %v307
        %v487 = vunpack.c.l.b16 %v308
        %v488 = vunpack.c.h.b16 %v308
        %v489 = vunpack.c.l.b16 %v309
        %v490 = vunpack.c.h.b16 %v309
        %v491 = vunpack.c.l.b16 %v310
        %v492 = vunpack.c.h.b16 %v310
        %v493 = vunpack.c.l.b16 %v311
        %v494 = vunpack.c.h.b16 %v311
        %v495 = vunpack.c.l.b16 %v312
        %v496 = vunpack.c.h.b16 %v312
        %v497 = vunpack.c.l.b16 %v313
        %v498 = vunpack.c.h.b16 %v313
        %v499 = vunpack.c.l.b16 %v314
        %v500 = vunpack.c.h.b16 %v314
        %v501 = vunpack.c.l.b16 %v315
        %v502 = vunpack.c.h.b16 %v315
        %v503 = vunpack.c.l.b16 %v316
        %v504 = vunpack.c.h.b16 %v316
        %v505 = vunpack.c.l.b16 %v317
        %v506 = vunpack.c.h.b16 %v317
        %v507 = vunpack.c.l.b16 %v318
        %v508 = vunpack.c.h.b16 %v318
        %v509 = vunpack.c.l.b16 %v319
        %v510 = vunpack.c.h.b16 %v319
        %v511 = vunpack.c.l.b16 %v320
        %v512 = vunpack.c.h.b16 %v320
        %v513 = vunpack.c.l.b16 %v321
        %v514 = vunpack.c.h.b16 %v321
        %v515 = vunpack.c.l.b16 %v322
        %v516 = vunpack.c.h.b16 %v322
        %v517 = vunpack.c.l.b16 %v323
        %v518 = vunpack.c.h.b16 %v323
        %v519 = vunpack.c.l.b16 %v324
        %v520 = vunpack.c.h.b16 %v324
        %v521 = vunpack.c.l.b16 %v325
        %v522 = vunpack.c.h.b16 %v325
        %v523 = vunpack.c.l.b16 %v326
        %v524 = vunpack.c.h.b16 %v326
        %v525 = vunpack.c.l.b16 %v327
        %v526 = vunpack.c.h.b16 %v327
        %v527 = vunpack.c.l.b16 %v328
        %v528 = vunpack.c.h.b16 %v328
        %v529 = vunpack.c.l.b16 %v329
        %v530 = vunpack.c.h.b16 %v329
        %v531 = vunpack.c.l.b16 %v330
        %v532 = vunpack.c.h.b16 %v330
        %v533 = vunpack.c.l.b16 %v331
        %v534 = vunpack.c.h.b16 %v331
        %v535 = vunpack.c.l.b16 %v332
        %v536 = vunpack.c.h.b16 %v332
        %v537 = vunpack.c.l.b16 %v333
        %v538 = vunpack.c.h.b16 %v333
        %v539 = vunpack.c.l.b16 %v334
        %v540 = vunpack.c.h.b16 %v334
        %v541 = vunpack.c.l.b16 %v335
        %v542 = vunpack.c.h.b16 %v335
        %v543 = vpack.c.b16 %v451, %v447
        %v544 = vpack.c.b16 %v452, %v448
        %v545 = vpack.c.b16 %v453, %v449
        %v546 = vpack.c.b16 %v454, %v450
        %v547 = vpack.c.b16 %v459, %v455
        %v548 = vpack.c.b16 %v460, %v456
        %v549 = vpack.c.b16 %v461, %v457
        %v550 = vpack.c.b16 %v462, %v458
        %v551 = vpack.c.b16 %v467, %v463
        %v552 = vpack.c.b16 %v468, %v464
        %v553 = vpack.c.b16 %v469, %v465
        %v554 = vpack.c.b16 %v470, %v466
        %v555 = vpack.c.b16 %v475, %v471
        %v556 = vpack.c.b16 %v476, %v472
        %v557 = vpack.c.b16 %v477, %v473
        %v558 = vpack.c.b16 %v478, %v474
        %v559 = vpack.c.b16 %v483, %v479
        %v560 = vpack.c.b16 %v484, %v480
        %v561 = vpack.c.b16 %v485, %v481
        %v562 = vpack.c.b16 %v486, %v482
        %v563 = vpack.c.b16 %v491, %v487
        %v564 = vpack.c.b16 %v492, %v488
        %v565 = vpack.c.b16 %v493, %v489
        %v566 = vpack.c.b16 %v494, %v490
        %v567 = vpack.c.b16 %v499, %v495
        %v568 = vpack.c.b16 %v500, %v496
        %v569 = vpack.c.b16 %v501, %v497
        %v570 = vpack.c.b16 %v502, %v498
        %v571 = vpack.c.b16 %v507, %v503
        %v572 = vpack.c.b16 %v508, %v504
        %v573 = vpack.c.b16 %v509, %v505
        %v574 = vpack.c.b16 %v510, %v506
        %v575 = vpack.c.b16 %v515, %v511
        %v576 = vpack.c.b16 %v516, %v512
        %v577 = vpack.c.b16 %v517, %v513
        %v578 = vpack.c.b16 %v518, %v514
        %v579 = vpack.c.b16 %v523, %v519
        %v580 = vpack.c.b16 %v524, %v520
        %v581 = vpack.c.b16 %v525, %v521
        %v582 = vpack.c.b16 %v526, %v522
        %v583 = vpack.c.b16 %v531, %v527
        %v584 = vpack.c.b16 %v532, %v528
        %v585 = vpack.c.b16 %v533, %v529
        %v586 = vpack.c.b16 %v534, %v530
        %v587 = vpack.c.b16 %v539, %v535
        %v588 = vpack.c.b16 %v540, %v536
        %v589 = vpack.c.b16 %v541, %v537
        %v590 = vpack.c.b16 %v542, %v538
        %v690 = vunpack.c.l.b16 %v336
        %v691 = vunpack.c.l.b16 %v337
        %v692 = vunpack.c.l.b16 %v338
        %v693 = vunpack.c.l.b16 %v339
        %v694 = vunpack.c.l.b16 %v340
        %v695 = vunpack.c.l.b16 %v341
        %v696 = vunpack.c.l.b16 %v342
        %v697 = vunpack.c.l.b16 %v343
        %v698 = vunpack.c.l.b16 %v344
        %v699 = vunpack.c.l.b16 %v345
        %v700 = vunpack.c.l.b16 %v346
        %v701 = vunpack.c.l.b16 %v347
        %v702 = vunpack.c.l.b16 %v348
        %v703 = vunpack.c.l.b16 %v349
        %v704 = vunpack.c.l.b16 %v350
        %v705 = vunpack.c.l.b16 %v351
        %v706 = vunpack.c.l.b16 %v352
        %v707 = vunpack.c.l.b16 %v353
        %v708 = vunpack.c.l.b16 %v354
        %v709 = vunpack.c.l.b16 %v355
        %v710 = vunpack.c.l.b16 %v356
        %v711 = vunpack.c.l.b16 %v357
        %v712 = vunpack.c.l.b16 %v358
        %v713 = vunpack.c.l.b16 %v359
        %v714 = vunpack.c.l.b16 %v360
        %v715 = vunpack.c.l.b16 %v361
        %v716 = vunpack.c.l.b16 %v362
        %v717 = vunpack.c.l.b16 %v363
        %v718 = vunpack.c.l.b16 %v364
        %v719 = vunpack.c.l.b16 %v365
        %v720 = vunpack.c.l.b16 %v366
        %v721 = vunpack.c.l.b16 %v367
        %v722 = vunpack.c.l.b16 %v368
        %v723 = vunpack.c.l.b16 %v369
        %v724 = vunpack.c.l.b16 %v370
        %v725 = vunpack.c.l.b16 %v371
        %v726 = vunpack.c.l.b16 %v372
        %v727 = vunpack.c.l.b16 %v373
        %v728 = vunpack.c.l.b16 %v374
        %v729 = vunpack.c.l.b16 %v375
        %v730 = vunpack.c.l.b16 %v376
        %v731 = vunpack.c.l.b16 %v377
        %v732 = vunpack.c.l.b16 %v378
        %v733 = vunpack.c.l.b16 %v379
        %v734 = vunpack.c.l.b16 %v380
        %v735 = vunpack.c.l.b16 %v381
        %v736 = vunpack.c.l.b16 %v382
        %v737 = vunpack.c.l.b16 %v383
        %v738 = vunpack.c.l.b16 %v384
        %v739 = vunpack.c.l.b16 %v385
        %v740 = vunpack.c.l.b16 %v386
        %v741 = vunpack.c.l.b16 %v387
        %v742 = vunpack.c.l.b16 %v388
        %v743 = vunpack.c.l.b16 %v389
        %v744 = vunpack.c.l.b16 %v390
        %v745 = vunpack.c.l.b16 %v391
        %v746 = vunpack.c.l.b16 %v392
        %v747 = vunpack.c.l.b16 %v393
        %v748 = vunpack.c.l.b16 %v394
        %v749 = vunpack.c.l.b16 %v395
        %v750 = vunpack.c.l.b16 %v396
        %v751 = vunpack.c.l.b16 %v397
        %v752 = vunpack.c.l.b16 %v398
        %v753 = vpack.c.b16 %v691, %v690
        %v754 = vpack.c.b16 %v693, %v692
        %v755 = vpack.c.b16 %v695, %v694
        %v756 = vpack.c.b16 %v697, %v696
        %v757 = vpack.c.b16 %v699, %v698
        %v758 = vpack.c.b16 %v701, %v700
        %v759 = vpack.c.b16 %v703, %v702
        %v760 = vpack.c.b16 %v705, %v704
        %v761 = vpack.c.b16 %v707, %v706
        %v762 = vpack.c.b16 %v709, %v708
        %v763 = vpack.c.b16 %v711, %v710
        %v764 = vpack.c.b16 %v713, %v712
        %v765 = vpack.c.b16 %v715, %v714
        %v766 = vpack.c.b16 %v717, %v716
        %v767 = vpack.c.b16 %v719, %v718
        %v768 = vpack.c.b16 %v721, %v720
        %v769 = vpack.c.b16 %v723, %v722
        %v770 = vpack.c.b16 %v725, %v724
        %v771 = vpack.c.b16 %v727, %v726
        %v772 = vpack.c.b16 %v729, %v728
        %v773 = vpack.c.b16 %v731, %v730
        %v774 = vpack.c.b16 %v733, %v732
        %v775 = vpack.c.b16 %v735, %v734
        %v776 = vpack.c.b16 %v737, %v736
        %v777 = vpack.c.b16 %v739, %v738
        %v778 = vpack.c.b16 %v741, %v740
        %v779 = vpack.c.b16 %v743, %v742
        %v780 = vpack.c.b16 %v745, %v744
        %v781 = vpack.c.b16 %v747, %v746
        %v782 = vpack.c.b16 %v749, %v748
        %v783 = vpack.c.b16 %v751, %v750
        %v784 = vpack.c.b16 %v752, %v752
        %vm816 = vcmask 949248
        %v818 = vsel %vm816, %v546, 0
        %v821 = vsel %vm816, %v550, 0
        %v824 = vsel %vm816, %v554, 0
        %v827 = vsel %vm816, %v558, 0
        %v830 = vsel %vm816, %v562, 0
        %v833 = vsel %vm816, %v566, 0
        %v836 = vsel %vm816, %v570, 0
        %v839 = vsel %vm816, %v574, 0
        %v842 = vsel %vm816, %v578, 0
        %v845 = vsel %vm816, %v582, 0
        %v848 = vsel %vm816, %v586, 0
        %v851 = vsel %vm816, %v590, 0
        %vm853 = vcmask 1041408
        %v855 = vsel %vm853, %v784, 0
        %857 = vmatpush.bf16.msra.mxu0 %v760
        %858 = vmatpush.bf16.msra.mxu0 %v759
        %859 = vmatpush.bf16.msra.mxu0 %v758
        %860 = vmatpush.bf16.msra.mxu0 %v757
        %861 = vmatpush.bf16.msra.mxu0 %v756
        %862 = vmatpush.bf16.msra.mxu0 %v755
        %863 = vmatpush.bf16.msra.mxu0 %v754
        %864 = vmatpush.bf16.msra.mxu0 %v753
        %865 = vmatmul.bf16.gmra.mxu0 %v543
        %v866 = vpop.f32.mrf.mxu0
        %v867 = vadd.f32 0.0, %v866
        %v868 = vpop.f32.mrf.mxu0
        %v869 = vadd.f32 0.0, %v868
        %870 = vmatmul.bf16.gmra.mxu0 %v547
        %v871 = vpop.f32.mrf.mxu0
        %v872 = vadd.f32 0.0, %v871
        %v873 = vpop.f32.mrf.mxu0
        %v874 = vadd.f32 0.0, %v873
        %875 = vmatmul.bf16.gmra.mxu0 %v551
        %v876 = vpop.f32.mrf.mxu0
        %v877 = vadd.f32 0.0, %v876
        %v878 = vpop.f32.mrf.mxu0
        %v879 = vadd.f32 0.0, %v878
        %880 = vmatmul.bf16.gmra.mxu0 %v555
        %v881 = vpop.f32.mrf.mxu0
        %v882 = vadd.f32 0.0, %v881
        %v883 = vpop.f32.mrf.mxu0
        %v884 = vadd.f32 0.0, %v883
        %885 = vmatmul.bf16.gmra.mxu0 %v559
        %v886 = vpop.f32.mrf.mxu0
        %v887 = vadd.f32 0.0, %v886
        %v888 = vpop.f32.mrf.mxu0
        %v889 = vadd.f32 0.0, %v888
        %890 = vmatmul.bf16.gmra.mxu0 %v563
        %v891 = vpop.f32.mrf.mxu0
        %v892 = vadd.f32 0.0, %v891
        %v893 = vpop.f32.mrf.mxu0
        %v894 = vadd.f32 0.0, %v893
        %895 = vmatmul.bf16.gmra.mxu0 %v567
        %v896 = vpop.f32.mrf.mxu0
        %v897 = vadd.f32 0.0, %v896
        %v898 = vpop.f32.mrf.mxu0
        %v899 = vadd.f32 0.0, %v898
        %900 = vmatmul.bf16.gmra.mxu0 %v571
        %v901 = vpop.f32.mrf.mxu0
        %v902 = vadd.f32 0.0, %v901
        %v903 = vpop.f32.mrf.mxu0
        %v904 = vadd.f32 0.0, %v903
        %905 = vmatmul.bf16.gmra.mxu0 %v575
        %v906 = vpop.f32.mrf.mxu0
        %v907 = vadd.f32 0.0, %v906
        %v908 = vpop.f32.mrf.mxu0
        %v909 = vadd.f32 0.0, %v908
        %910 = vmatmul.bf16.gmra.mxu0 %v579
        %v911 = vpop.f32.mrf.mxu0
        %v912 = vadd.f32 0.0, %v911
        %v913 = vpop.f32.mrf.mxu0
        %v914 = vadd.f32 0.0, %v913
        %915 = vmatmul.bf16.gmra.mxu0 %v583
        %v916 = vpop.f32.mrf.mxu0
        %v917 = vadd.f32 0.0, %v916
        %v918 = vpop.f32.mrf.mxu0
        %v919 = vadd.f32 0.0, %v918
        %920 = vmatmul.bf16.gmra.mxu0 %v587
        %v921 = vpop.f32.mrf.mxu0
        %v922 = vadd.f32 0.0, %v921
        %v923 = vpop.f32.mrf.mxu0
        %v924 = vadd.f32 0.0, %v923
        %925 = vdwg.mxu0
        %926 = vmatpush.bf16.msra.mxu0 %v768
        %927 = vmatpush.bf16.msra.mxu0 %v767
        %928 = vmatpush.bf16.msra.mxu0 %v766
        %929 = vmatpush.bf16.msra.mxu0 %v765
        %930 = vmatpush.bf16.msra.mxu0 %v764
        %931 = vmatpush.bf16.msra.mxu0 %v763
        %932 = vmatpush.bf16.msra.mxu0 %v762
        %933 = vmatpush.bf16.msra.mxu0 %v761
        %934 = vmatmul.bf16.gmra.mxu0 %v544
        %v935 = vpop.f32.mrf.mxu0
        %v936 = vadd.f32 %v867, %v935
        %v937 = vpop.f32.mrf.mxu0
        %v938 = vadd.f32 %v869, %v937
        %939 = vmatmul.bf16.gmra.mxu0 %v548
        %v940 = vpop.f32.mrf.mxu0
        %v941 = vadd.f32 %v872, %v940
        %v942 = vpop.f32.mrf.mxu0
        %v943 = vadd.f32 %v874, %v942
        %944 = vmatmul.bf16.gmra.mxu0 %v552
        %v945 = vpop.f32.mrf.mxu0
        %v946 = vadd.f32 %v877, %v945
        %v947 = vpop.f32.mrf.mxu0
        %v948 = vadd.f32 %v879, %v947
        %949 = vmatmul.bf16.gmra.mxu0 %v556
        %v950 = vpop.f32.mrf.mxu0
        %v951 = vadd.f32 %v882, %v950
        %v952 = vpop.f32.mrf.mxu0
        %v953 = vadd.f32 %v884, %v952
        %954 = vmatmul.bf16.gmra.mxu0 %v560
        %v955 = vpop.f32.mrf.mxu0
        %v956 = vadd.f32 %v887, %v955
        %v957 = vpop.f32.mrf.mxu0
        %v958 = vadd.f32 %v889, %v957
        %959 = vmatmul.bf16.gmra.mxu0 %v564
        %v960 = vpop.f32.mrf.mxu0
        %v961 = vadd.f32 %v892, %v960
        %v962 = vpop.f32.mrf.mxu0
        %v963 = vadd.f32 %v894, %v962
        %964 = vmatmul.bf16.gmra.mxu0 %v568
        %v965 = vpop.f32.mrf.mxu0
        %v966 = vadd.f32 %v897, %v965
        %v967 = vpop.f32.mrf.mxu0
        %v968 = vadd.f32 %v899, %v967
        %969 = vmatmul.bf16.gmra.mxu0 %v572
        %v970 = vpop.f32.mrf.mxu0
        %v971 = vadd.f32 %v902, %v970
        %v972 = vpop.f32.mrf.mxu0
        %v973 = vadd.f32 %v904, %v972
        %974 = vmatmul.bf16.gmra.mxu0 %v576
        %v975 = vpop.f32.mrf.mxu0
        %v976 = vadd.f32 %v907, %v975
        %v977 = vpop.f32.mrf.mxu0
        %v978 = vadd.f32 %v909, %v977
        %979 = vmatmul.bf16.gmra.mxu0 %v580
        %v980 = vpop.f32.mrf.mxu0
        %v981 = vadd.f32 %v912, %v980
        %v982 = vpop.f32.mrf.mxu0
        %v983 = vadd.f32 %v914, %v982
        %984 = vmatmul.bf16.gmra.mxu0 %v584
        %v985 = vpop.f32.mrf.mxu0
        %v986 = vadd.f32 %v917, %v985
        %v987 = vpop.f32.mrf.mxu0
        %v988 = vadd.f32 %v919, %v987
        %989 = vmatmul.bf16.gmra.mxu0 %v588
        %v990 = vpop.f32.mrf.mxu0
        %v991 = vadd.f32 %v922, %v990
        %v992 = vpop.f32.mrf.mxu0
        %v993 = vadd.f32 %v924, %v992
        %994 = vdwg.mxu0
        %995 = vmatpush.bf16.msra.mxu0 %v776
        %996 = vmatpush.bf16.msra.mxu0 %v775
        %997 = vmatpush.bf16.msra.mxu0 %v774
        %998 = vmatpush.bf16.msra.mxu0 %v773
        %999 = vmatpush.bf16.msra.mxu0 %v772
        %1000 = vmatpush.bf16.msra.mxu0 %v771
        %1001 = vmatpush.bf16.msra.mxu0 %v770
        %1002 = vmatpush.bf16.msra.mxu0 %v769
        %1003 = vmatmul.bf16.gmra.mxu0 %v545
        %v1004 = vpop.f32.mrf.mxu0
        %v1005 = vadd.f32 %v936, %v1004
        %v1006 = vpop.f32.mrf.mxu0
        %v1007 = vadd.f32 %v938, %v1006
        %1008 = vmatmul.bf16.gmra.mxu0 %v549
        %v1009 = vpop.f32.mrf.mxu0
        %v1010 = vadd.f32 %v941, %v1009
        %v1011 = vpop.f32.mrf.mxu0
        %v1012 = vadd.f32 %v943, %v1011
        %1013 = vmatmul.bf16.gmra.mxu0 %v553
        %v1014 = vpop.f32.mrf.mxu0
        %v1015 = vadd.f32 %v946, %v1014
        %v1016 = vpop.f32.mrf.mxu0
        %v1017 = vadd.f32 %v948, %v1016
        %1018 = vmatmul.bf16.gmra.mxu0 %v557
        %v1019 = vpop.f32.mrf.mxu0
        %v1020 = vadd.f32 %v951, %v1019
        %v1021 = vpop.f32.mrf.mxu0
        %v1022 = vadd.f32 %v953, %v1021
        %1023 = vmatmul.bf16.gmra.mxu0 %v561
        %v1024 = vpop.f32.mrf.mxu0
        %v1025 = vadd.f32 %v956, %v1024
        %v1026 = vpop.f32.mrf.mxu0
        %v1027 = vadd.f32 %v958, %v1026
        %1028 = vmatmul.bf16.gmra.mxu0 %v565
        %v1029 = vpop.f32.mrf.mxu0
        %v1030 = vadd.f32 %v961, %v1029
        %v1031 = vpop.f32.mrf.mxu0
        %v1032 = vadd.f32 %v963, %v1031
        %1033 = vmatmul.bf16.gmra.mxu0 %v569
        %v1034 = vpop.f32.mrf.mxu0
        %v1035 = vadd.f32 %v966, %v1034
        %v1036 = vpop.f32.mrf.mxu0
        %v1037 = vadd.f32 %v968, %v1036
        %1038 = vmatmul.bf16.gmra.mxu0 %v573
        %v1039 = vpop.f32.mrf.mxu0
        %v1040 = vadd.f32 %v971, %v1039
        %v1041 = vpop.f32.mrf.mxu0
        %v1042 = vadd.f32 %v973, %v1041
        %1043 = vmatmul.bf16.gmra.mxu0 %v577
        %v1044 = vpop.f32.mrf.mxu0
        %v1045 = vadd.f32 %v976, %v1044
        %v1046 = vpop.f32.mrf.mxu0
        %v1047 = vadd.f32 %v978, %v1046
        %1048 = vmatmul.bf16.gmra.mxu0 %v581
        %v1049 = vpop.f32.mrf.mxu0
        %v1050 = vadd.f32 %v981, %v1049
        %v1051 = vpop.f32.mrf.mxu0
        %v1052 = vadd.f32 %v983, %v1051
        %1053 = vmatmul.bf16.gmra.mxu0 %v585
        %v1054 = vpop.f32.mrf.mxu0
        %v1055 = vadd.f32 %v986, %v1054
        %v1056 = vpop.f32.mrf.mxu0
        %v1057 = vadd.f32 %v988, %v1056
        %1058 = vmatmul.bf16.gmra.mxu0 %v589
        %v1059 = vpop.f32.mrf.mxu0
        %v1060 = vadd.f32 %v991, %v1059
        %v1061 = vpop.f32.mrf.mxu0
        %v1062 = vadd.f32 %v993, %v1061
        %1063 = vdwg.mxu0
        %1064 = vmatpush.bf16.msra.mxu0 %v855
        %1065 = vmatpush.bf16.msra.mxu0 %v783
        %1066 = vmatpush.bf16.msra.mxu0 %v782
        %1067 = vmatpush.bf16.msra.mxu0 %v781
        %1068 = vmatpush.bf16.msra.mxu0 %v780
        %1069 = vmatpush.bf16.msra.mxu0 %v779
        %1070 = vmatpush.bf16.msra.mxu0 %v778
        %1071 = vmatpush.bf16.msra.mxu0 %v777
        %1072 = vmatmul.bf16.gmra.mxu0 %v818
        %v1073 = vpop.f32.mrf.mxu0
        %v1074 = vadd.f32 %v1005, %v1073
        %v1075 = vpop.f32.mrf.mxu0
        %v1076 = vadd.f32 %v1007, %v1075
        %1077 = vmatmul.bf16.gmra.mxu0 %v821
        %v1078 = vpop.f32.mrf.mxu0
        %v1079 = vadd.f32 %v1010, %v1078
        %v1080 = vpop.f32.mrf.mxu0
        %v1081 = vadd.f32 %v1012, %v1080
        %1082 = vmatmul.bf16.gmra.mxu0 %v824
        %v1083 = vpop.f32.mrf.mxu0
        %v1084 = vadd.f32 %v1015, %v1083
        %v1085 = vpop.f32.mrf.mxu0
        %v1086 = vadd.f32 %v1017, %v1085
        %1087 = vmatmul.bf16.gmra.mxu0 %v827
        %v1088 = vpop.f32.mrf.mxu0
        %v1089 = vadd.f32 %v1020, %v1088
        %v1090 = vpop.f32.mrf.mxu0
        %v1091 = vadd.f32 %v1022, %v1090
        %1092 = vmatmul.bf16.gmra.mxu0 %v830
        %v1093 = vpop.f32.mrf.mxu0
        %v1094 = vadd.f32 %v1025, %v1093
        %v1095 = vpop.f32.mrf.mxu0
        %v1096 = vadd.f32 %v1027, %v1095
        %1097 = vmatmul.bf16.gmra.mxu0 %v833
        %v1098 = vpop.f32.mrf.mxu0
        %v1099 = vadd.f32 %v1030, %v1098
        %v1100 = vpop.f32.mrf.mxu0
        %v1101 = vadd.f32 %v1032, %v1100
        %1102 = vmatmul.bf16.gmra.mxu0 %v836
        %v1103 = vpop.f32.mrf.mxu0
        %v1104 = vadd.f32 %v1035, %v1103
        %v1105 = vpop.f32.mrf.mxu0
        %v1106 = vadd.f32 %v1037, %v1105
        %1107 = vmatmul.bf16.gmra.mxu0 %v839
        %v1108 = vpop.f32.mrf.mxu0
        %v1109 = vadd.f32 %v1040, %v1108
        %v1110 = vpop.f32.mrf.mxu0
        %v1111 = vadd.f32 %v1042, %v1110
        %1112 = vmatmul.bf16.gmra.mxu0 %v842
        %v1113 = vpop.f32.mrf.mxu0
        %v1114 = vadd.f32 %v1045, %v1113
        %v1115 = vpop.f32.mrf.mxu0
        %v1116 = vadd.f32 %v1047, %v1115
        %1117 = vmatmul.bf16.gmra.mxu0 %v845
        %v1118 = vpop.f32.mrf.mxu0
        %v1119 = vadd.f32 %v1050, %v1118
        %v1120 = vpop.f32.mrf.mxu0
        %v1121 = vadd.f32 %v1052, %v1120
        %1122 = vmatmul.bf16.gmra.mxu0 %v848
        %v1123 = vpop.f32.mrf.mxu0
        %v1124 = vadd.f32 %v1055, %v1123
        %v1125 = vpop.f32.mrf.mxu0
        %v1126 = vadd.f32 %v1057, %v1125
        %1127 = vmatmul.bf16.gmra.mxu0 %v851
        %v1128 = vpop.f32.mrf.mxu0
        %v1129 = vadd.f32 %v1060, %v1128
        %v1130 = vpop.f32.mrf.mxu0
        %v1131 = vadd.f32 %v1062, %v1130
        %1132 = vdwg.mxu0
        %v1133 = vmax.f32 %v1074, %v1089
        %v1134 = vmax.f32 %v1076, %v1091
        %v1135 = vmax.f32 %v1079, %v1094
        %v1136 = vmax.f32 %v1081, %v1096
        %v1137 = vmax.f32 %v1084, %v1099
        %v1138 = vmax.f32 %v1086, %v1101
        %v1139 = vmax.f32 %v1133, %v1104
        %v1140 = vmax.f32 %v1134, %v1106
        %v1141 = vmax.f32 %v1135, %v1109
        %v1142 = vmax.f32 %v1136, %v1111
        %v1143 = vmax.f32 %v1137, %v1114
        %v1144 = vmax.f32 %v1138, %v1116
        %v1145 = vmax.f32 %v1139, %v1119
        %v1146 = vmax.f32 %v1140, %v1121
        %v1147 = vmax.f32 %v1141, %v1124
        %v1148 = vmax.f32 %v1142, %v1126
        %v1149 = vmax.f32 %v1143, %v1129
        %v1150 = vmax.f32 %v1144, %v1131
        %v1151 = vld [vmem:[%s2] sm:$0x1]
        %v1153 = vperm.slane %v1151, 0
        %v1155 = vadd.f32 %v1145, %v1153
        %v1156 = vadd.f32 %v1146, %v1153
        %v1157 = vadd.f32 %v1147, %v1153
        %v1158 = vadd.f32 %v1148, %v1153
        %v1159 = vadd.f32 %v1149, %v1153
        %v1160 = vadd.f32 %v1150, %v1153
        %v1161 = vmax.f32 %v1155, 0.0
        %v1162 = vmax.f32 %v1156, 0.0
        %v1163 = vmax.f32 %v1157, 0.0
        %v1164 = vmax.f32 %v1158, 0.0
        %v1165 = vmax.f32 %v1159, 0.0
        %v1166 = vmax.f32 %v1160, 0.0
        %v1167 = vpack.c.bf16 %v1161, %v1161
        %v1168 = vpack.c.bf16 %v1162, %v1162
        %v1169 = vpack.c.bf16 %v1163, %v1163
        %v1170 = vpack.c.bf16 %v1164, %v1164
        %v1171 = vpack.c.bf16 %v1165, %v1165
        %v1172 = vpack.c.bf16 %v1166, %v1166
        %vm1173 = vcmask 404480
        %1174 = vst.msk [vmem:[%s286] sm:$0xf] %vm1173, %v1167
        %1175 = vst.msk [vmem:[%s286 + $0x4] sm:$0xf] %vm1173, %v1168
        %1176 = vst.msk [vmem:[%s286 + $0x8] sm:$0xf] %vm1173, %v1169
        %1177 = vst.msk [vmem:[%s286 + $0xc] sm:$0xf] %vm1173, %v1170
        %1178 = vst.msk [vmem:[%s286 + $0x10] sm:$0xf] %vm1173, %v1171
        %1179 = vst.msk [vmem:[%s286 + $0x14] sm:$0xf] %vm1173, %v1172
        %s1180 = smul.u32 6, %s14
        %p1181 = scmp.lt.s32.totalorder %s1180, 11
        %s1182 = scalar_select %p1181, %s1180, 11
        %s1183 = smul.addr %s1182, 4
        %s1184 = scalar_lea.vmem %s3, %s1183
        // Predicated region
        $region56: #{additive_forward.5} parent=50 // pred_check
          %p1185 = pneg %p100
        $region57: #{additive_forward.5} parent=50 // pred_check_branch
          %1187 = sbr.rel (%p1185) target = $region59
        $region58: #{additive_forward.5} parent=50 // pred_region
          %s1188 = smul.u32 6, %s14
        $region59: #{additive_forward.5} parent=50 // pred_fallthru
          _
      $region51: #{additive_forward.5} parent=5 // pred_fallthru
        _
      %p1189 = scmp.le.s32.totalorder 2, %s9
      // Predicated region
      $region60: #{additive_forward.5} parent=5 // pred_check
        %p1190 = pneg %p1189
      $region61: #{additive_forward.5} parent=5 // pred_check_branch
        %1192 = sbr.rel (%p1190) target = $region63
      $region62: #{additive_forward.5} parent=5 // pred_region
        %s1193 = ssub.s32 %s9, 2
        // Predicated region
        $region64: #{additive_forward.5} parent=62 // pred_check
          %p1194 = pneg %p106
        $region65: #{additive_forward.5} parent=62 // pred_check_branch
          %1196 = sbr.rel (%p1194) target = $region67
        $region66: #{additive_forward.5} parent=62 // pred_region
          %s1197 = smul.u32 6, %s15
          %p1198 = scmp.lt.s32.totalorder %s1197, 11
          %s1199 = scalar_select %p1198, %s1197, 11
          %s1200 = smul.addr %s1199, 4
          %s1201 = scalar_lea.vmem %s3, %s1200
        $region67: #{additive_forward.5} parent=62 // pred_fallthru
          _
      $region63: #{additive_forward.5} parent=5 // pred_fallthru
        _
    $region6: #{additive_forward.5} parent=1 // loop_footer
      %s13 = sadd.s32 1, %s9
    $region7: #{additive_forward.5} parent=1 // loop_footer_branch
      %8 = sbr.rel target = $region3
    $region8: #{additive_forward.5} parent=1 // loop_exit
      _

// kernel: additive_forward.7
$region0: #{additive_forward.7}
  #allocation0 [shape = 'u32[]', space=smem, size = 0x4, offset = 0x4, fixed_abs, tag = 'smem constant byte address 0x4 - core index']
  #allocation1 [shape = 'u32[72,128]{1,0:T(1,128)}', space=vmem, size = 0x9000, scoped, tag = 'internal scratch']
  %s0 = inlined_call_operand.vmem [shape: f32[2,3,8], index: 0, kind: input, shape index: {}]
  %s1 = inlined_call_operand.vmem [shape: f32[1,4], index: 1, kind: input, shape index: {}]
  %s2 = inlined_call_operand.vmem [shape: f32[2,4], index: 2, kind: output, shape index: {0}]
  %s3 = inlined_call_operand.vmem [shape: f32[2,3,1], index: 3, kind: output, shape index: {1}]
  %s4 = inlined_call_operand.vmem [shape: f32[2,3,4], index: 4, kind: output, shape index: {2}]
  %5 = xla_tuple %s2, %s3, %s4
  %s6 = sld [smem:[#allocation0]]
  $region34: #{additive_forward.7} parent=0
    _
  %s8 = ssub.s32 1, %s6
  %s9 = scalar_select 0, %s8, %s6
  // Predicated region
  $region2: #{additive_forward.7} parent=0 // pred_check
    _
  $region3: #{additive_forward.7} parent=0 // pred_check_branch
    %11 = sbr.rel (0) target = $region5
  $region4: #{additive_forward.7} parent=0 // pred_region
    _
  $region5: #{additive_forward.7} parent=0 // pred_fallthru
    _
  // Predicated region
  $region6: #{additive_forward.7} parent=0 // pred_check
    _
  $region7: #{additive_forward.7} parent=0 // pred_check_branch
    %13 = sbr.rel (0) target = $region9
  $region8: #{additive_forward.7} parent=0 // pred_region
    _
  $region9: #{additive_forward.7} parent=0 // pred_fallthru
    _
  %v14 = vld [vmem:[%s0] sm:$0x7]
  %v15 = vld [vmem:[%s0 + $0x4] sm:$0x7]
  %vm16 = vcmask 2048
  %v17 = vsel %vm16, %v14, -inf
  %v18 = vrot.slane %v17, 4
  %v19 = vmax.f32 %v17, %v18
  %v20 = vrot.slane %v19, 2
  %v21 = vmax.f32 %v19, %v20
  %v22 = vrot.slane %v21, 1
  %v23 = vmax.f32 %v21, %v22
  %v24 = vsel %vm16, %v15, -inf
  %v25 = vrot.slane %v24, 4
  %v26 = vmax.f32 %v24, %v25
  %v27 = vrot.slane %v26, 2
  %v28 = vmax.f32 %v26, %v27
  %v29 = vrot.slane %v28, 1
  %v30 = vmax.f32 %v28, %v29
  %v31 = vsub.f32 %v14, %v23
  %v32 = vsub.f32 %v15, %v30
  %v33 = vmul.f32 %v31, 1.442695
  %v34 = vpow.pop %v33
  %v35 = vmul.f32 %v32, 1.442695
  %v36 = vpow.pop %v35
  %v37 = vsel %vm16, %v34, 0.0
  %v38 = vrot.slane %v37, 4
  %v39 = vadd.f32 %v37, %v38
  %v40 = vrot.slane %v39, 2
  %v41 = vadd.f32 %v39, %v40
  %v42 = vrot.slane %v41, 1
  %v43 = vadd.f32 %v41, %v42
  %v44 = vsel %vm16, %v36, 0.0
  %v45 = vrot.slane %v44, 4
  %v46 = vadd.f32 %v44, %v45
  %v47 = vrot.slane %v46, 2
  %v48 = vadd.f32 %v46, %v47
  %v49 = vrot.slane %v48, 1
  %v50 = vadd.f32 %v48, %v49
  %v51 = vrcp.pop %v43
  %v52 = vmul.f32 %v43, %v51
  %v53 = vsub.f32 1.0, %v52
  %v54 = vmul.f32 %v51, %v53
  %v55 = vadd.f32 %v51, %v54
  %vm56 = vweird.f32 %v43
  %vm57 = vweird.f32 %v51
  %vm58 = vmor %vm56, %vm57
  %v59 = vsel %vm58, %v51, %v55
  %v60 = vand.u32 2147483647, %v43
  %vm61 = vcmp.eq.f32.partialorder %v60, 8.507059e+37
  %v62 = vand.u32 %v43, 2147483648
  %v63 = vor.u32 1.1754944e-38, %v62
  %v64 = vsel %vm61, %v63, %v59
  %v65 = vmul.f32 %v34, %v64
  %v66 = vrcp.pop %v50
  %v67 = vmul.f32 %v50, %v66
  %v68 = vsub.f32 1.0, %v67
  %v69 = vmul.f32 %v66, %v68
  %v70 = vadd.f32 %v66, %v69
  %vm71 = vweird.f32 %v50
  %vm72 = vweird.f32 %v66
  %vm73 = vmor %vm71, %vm72
  %v74 = vsel %vm73, %v66, %v70
  %v75 = vand.u32 2147483647, %v50
  %vm76 = vcmp.eq.f32.partialorder %v75, 8.507059e+37
  %v77 = vand.u32 %v50, 2147483648
  %v78 = vor.u32 1.1754944e-38, %v77
  %v79 = vsel %vm76, %v78, %v74
  %v80 = vmul.f32 %v36, %v79
  %82 = vset.pattern.permute.xlu0 0
  %83 = vperm.xlu0 %82, %v65
  %v84 = vpop.permute.xlu0 %83
  %87 = vset.pattern.permute.xlu0 0
  %88 = vperm.xlu0 %87, %v80
  %v89 = vpop.permute.xlu0 %88
  %v91 = vmul.f32 %v84, %v14
  %v92 = vmul.f32 %v89, %v15
  %v93 = vld [vmem:[%s1] sm:$0x1]
  %v95 = vperm.slane %v93, 0
  %96 = vrot.lane.b32.xlu0 %v95, 1
  %v97 = vpop.permute.xlu0 %96
  %v99 = vadd.f32 %v91, %v97
  %v100 = vadd.f32 %v92, %v97
  %v101 = vxor.u32 %v99, 2147483648
  %v102 = vxor.u32 %v100, 2147483648
  %v103 = vmul.f32 %v101, 1.442695
  %v104 = vpow.pop %v103
  %v105 = vmul.f32 %v102, 1.442695
  %v106 = vpow.pop %v105
  %v107 = vadd.f32 %v104, 1.0
  %v108 = vadd.f32 %v106, 1.0
  %v109 = vrcp.pop %v107
  %v110 = vmul.f32 %v107, %v109
  %v111 = vsub.f32 1.0, %v110
  %v112 = vmul.f32 %v109, %v111
  %v113 = vadd.f32 %v109, %v112
  %vm114 = vweird.f32 %v107
  %vm115 = vweird.f32 %v109
  %vm116 = vmor %vm114, %vm115
  %v117 = vsel %vm116, %v109, %v113
  %v118 = vand.u32 2147483647, %v107
  %vm119 = vcmp.eq.f32.partialorder %v118, 8.507059e+37
  %v120 = vand.u32 %v107, 2147483648
  %v121 = vor.u32 1.1754944e-38, %v120
  %v122 = vsel %vm119, %v121, %v117
  %v123 = vmul.f32 1.0, %v122
  %v124 = vrcp.pop %v108
  %v125 = vmul.f32 %v108, %v124
  %v126 = vsub.f32 1.0, %v125
  %v127 = vmul.f32 %v124, %v126
  %v128 = vadd.f32 %v124, %v127
  %vm129 = vweird.f32 %v108
  %vm130 = vweird.f32 %v124
  %vm131 = vmor %vm129, %vm130
  %v132 = vsel %vm131, %v124, %v128
  %v133 = vand.u32 2147483647, %v108
  %vm134 = vcmp.eq.f32.partialorder %v133, 8.507059e+37
  %v135 = vand.u32 %v108, 2147483648
  %v136 = vor.u32 1.1754944e-38, %v135
  %v137 = vsel %vm134, %v136, %v132
  %v138 = vmul.f32 1.0, %v137
  %vm139 = vcmask 34824
  %v140 = vsel %vm139, %v123, 0.0
  %v141 = vrot.slane %v140, 4
  %v142 = vadd.f32 %v140, %v141
  %v143 = vrot.slane %v142, 2
  %v144 = vadd.f32 %v142, %v143
  %v145 = vrot.slane %v144, 1
  %v146 = vadd.f32 %v144, %v145
  %v147 = vsel %vm139, %v138, 0.0
  %v148 = vrot.slane %v147, 4
  %v149 = vadd.f32 %v147, %v148
  %v150 = vrot.slane %v149, 2
  %v151 = vadd.f32 %v149, %v150
  %v152 = vrot.slane %v151, 1
  %v153 = vadd.f32 %v151, %v152
  %v154 = vrcp.pop 3.0
  %v155 = vmul.f32 3.0, %v154
  %v156 = vsub.f32 1.0, %v155
  %v157 = vmul.f32 %v154, %v156
  %v158 = vadd.f32 %v154, %v157
  %vm159 = vweird.f32 %v154
  %v160 = vsel %vm159, %v154, %v158
  %v161 = vmul.f32 %v146, %v160
  %v162 = vmul.f32 %v153, %v160
  %vm165 = vcmask 1041409
  %v166 = vsel %vm165, %v162, %v161
  %167 = vrot.lane.b32.xlu0 %v166, 127
  %v168 = vpop.permute.xlu0 %167
  %vm170 = vcmask 25600
  %171 = vst.msk [vmem:[%s2] sm:$0x3] %vm170, %v168
  %172 = vst.msk [vmem:[%s3] sm:$0x7] %vm16, %v65
  %173 = vst.msk [vmem:[%s3 + $0x4] sm:$0x7] %vm16, %v80
  %176 = vrot.lane.b32.xlu0 %v123, 127
  %v177 = vpop.permute.xlu0 %176
  %178 = vrot.lane.b32.xlu0 %v138, 127
  %v179 = vpop.permute.xlu0 %178
  %vm182 = vcmask 26624
  %183 = vst.msk [vmem:[%s4] sm:$0x7] %vm182, %v177
  %184 = vst.msk [vmem:[%s4 + $0x4] sm:$0x7] %vm182, %v179
  // Predicated region
  $region10: #{additive_forward.7} parent=0 // pred_check
    _
  $region11: #{additive_forward.7} parent=0 // pred_check_branch
    %186 = sbr.rel (0) target = $region13
  $region12: #{additive_forward.7} parent=0 // pred_region
    _
  $region13: #{additive_forward.7} parent=0 // pred_fallthru
    _
  // Predicated region
  $region14: #{additive_forward.7} parent=0 // pred_check
    _
  $region15: #{additive_forward.7} parent=0 // pred_check_branch
    %188 = sbr.rel (0) target = $region17
  $region16: #{additive_forward.7} parent=0 // pred_region
    _
  $region17: #{additive_forward.7} parent=0 // pred_fallthru
    _
  // Predicated region
  $region18: #{additive_forward.7} parent=0 // pred_check
    _
  $region19: #{additive_forward.7} parent=0 // pred_check_branch
    %190 = sbr.rel (0) target = $region21
  $region20: #{additive_forward.7} parent=0 // pred_region
    _
  $region21: #{additive_forward.7} parent=0 // pred_fallthru
    _
  // Predicated region
  $region22: #{additive_forward.7} parent=0 // pred_check
    _
  $region23: #{additive_forward.7} parent=0 // pred_check_branch
    %192 = sbr.rel (0) target = $region25
  $region24: #{additive_forward.7} parent=0 // pred_region
    _
  $region25: #{additive_forward.7} parent=0 // pred_fallthru
    _
  // Predicated region
  $region26: #{additive_forward.7} parent=0 // pred_check
    _
  $region27: #{additive_forward.7} parent=0 // pred_check_branch
    %194 = sbr.rel (0) target = $region29
  $region28: #{additive_forward.7} parent=0 // pred_region
    _
  $region29: #{additive_forward.7} parent=0 // pred_fallthru
    _
  // Predicated region
  $region30: #{additive_forward.7} parent=0 // pred_check
    _
  $region31: #{additive_forward.7} parent=0 // pred_check_branch
    %196 = sbr.rel (0) target = $region33
  $region32: #{additive_forward.7} parent=0 // pred_region
    _
  $region33: #{additive_forward.7} parent=0 // pred_fallthru
    _

// kernel: additive_forward.6
$region0: #{additive_forward.6}
  #allocation0 [shape = 'u32[]', space=smem, size = 0x4, offset = 0x4, fixed_abs, tag = 'smem constant byte address 0x4 - core index']
  #allocation1 [shape = 'u32[72,128]{1,0:T(1,128)}', space=vmem, size = 0x9000, scoped, tag = 'internal scratch']
  #allocation2 [shape = 'f32[1,1]{1,0:T(1,128)S(1)}', space=vmem, size = 0x200, scoped, tag = 'scoped memory for additive_forward.6']
  %s0 = inlined_call_operand.vmem [shape: bf16[6,800], index: 0, kind: input, shape index: {}]
  %s1 = inlined_call_operand.vmem [shape: bf16[800,500], index: 1, kind: input, shape index: {}]
  %s2 = inlined_call_operand.vmem [shape: f32[1,500], index: 2, kind: input, shape index: {}]
  %s3 = inlined_call_operand.vmem [shape: bf16[500,132], index: 3, kind: input, shape index: {}]
  %s4 = inlined_call_operand.vmem [shape: f32[1,128], index: 4, kind: input, shape index: {}]
  %s5 = inlined_call_operand.vmem [shape: f32[1,128], index: 5, kind: input, shape index: {}]
  %s6 = inlined_call_operand.<no memory space> [shape: f32[1,1], index: 6, kind: input, shape index: {}]
  %s7 = inlined_call_operand.vmem [shape: f32[6,8], index: 7, kind: output, shape index: {}]
  %s8 = sld [smem:[#allocation0]]
  $region38: #{additive_forward.6} parent=0
    _
  %s10 = ssub.s32 1, %s8
  %s11 = scalar_select 0, %s10, %s8
  %v12 = vstv %s6
  %13 = vst [vmem:[#allocation2] sm:$0x1] %v12
  // Predicated region
  $region2: #{additive_forward.6} parent=0 // pred_check
    _
  $region3: #{additive_forward.6} parent=0 // pred_check_branch
    %15 = sbr.rel (0) target = $region5
  $region4: #{additive_forward.6} parent=0 // pred_region
    _
  $region5: #{additive_forward.6} parent=0 // pred_fallthru
    _
  // Predicated region
  $region6: #{additive_forward.6} parent=0 // pred_check
    _
  $region7: #{additive_forward.6} parent=0 // pred_check_branch
    %17 = sbr.rel (0) target = $region9
  $region8: #{additive_forward.6} parent=0 // pred_region
    _
  $region9: #{additive_forward.6} parent=0 // pred_fallthru
    _
  // Predicated region
  $region10: #{additive_forward.6} parent=0 // pred_check
    _
  $region11: #{additive_forward.6} parent=0 // pred_check_branch
    %19 = sbr.rel (0) target = $region13
  $region12: #{additive_forward.6} parent=0 // pred_region
    _
  $region13: #{additive_forward.6} parent=0 // pred_fallthru
    _
  // Predicated region
  $region14: #{additive_forward.6} parent=0 // pred_check
    _
  $region15: #{additive_forward.6} parent=0 // pred_check_branch
    %21 = sbr.rel (0) target = $region17
  $region16: #{additive_forward.6} parent=0 // pred_region
    _
  $region17: #{additive_forward.6} parent=0 // pred_fallthru
    _
  // Predicated region
  $region18: #{additive_forward.6} parent=0 // pred_check
    _
  $region19: #{additive_forward.6} parent=0 // pred_check_branch
    %23 = sbr.rel (0) target = $region21
  $region20: #{additive_forward.6} parent=0 // pred_region
    _
  $region21: #{additive_forward.6} parent=0 // pred_fallthru
    _
  // Predicated region
  $region22: #{additive_forward.6} parent=0 // pred_check
    _
  $region23: #{additive_forward.6} parent=0 // pred_check_branch
    %25 = sbr.rel (0) target = $region25
  $region24: #{additive_forward.6} parent=0 // pred_region
    _
  $region25: #{additive_forward.6} parent=0 // pred_fallthru
    _
  // Predicated region
  $region26: #{additive_forward.6} parent=0 // pred_check
    _
  $region27: #{additive_forward.6} parent=0 // pred_check_branch
    %27 = sbr.rel (0) target = $region29
  $region28: #{additive_forward.6} parent=0 // pred_region
    _
  $region29: #{additive_forward.6} parent=0 // pred_fallthru
    _
  %v29 = vld [vmem:[%s0] sm:$0x77]
  %v30 = vld [vmem:[%s0 + $0x8] sm:$0x77]
  %v31 = vld [vmem:[%s0 + $0x10] sm:$0x77]
  %v32 = vld [vmem:[%s0 + $0x18] sm:$0x7]
  %v33 = vld [vmem:[%s1] sm:$0xff]
  %v34 = vld [vmem:[%s1 + $0x8] sm:$0xff]
  %v35 = vld [vmem:[%s1 + $0x10] sm:$0xff]
  %v36 = vld [vmem:[%s1 + $0x18] sm:$0xff]
  %v37 = vld [vmem:[%s1 + $0x20] sm:$0xff]
  %v38 = vld [vmem:[%s1 + $0x28] sm:$0xff]
  %v39 = vld [vmem:[%s1 + $0x30] sm:$0xff]
  %v40 = vld [vmem:[%s1 + $0x38] sm:$0xff]
  %v41 = vld [vmem:[%s1 + $0x40] sm:$0xff]
  %v42 = vld [vmem:[%s1 + $0x48] sm:$0xff]
  %v43 = vld [vmem:[%s1 + $0x50] sm:$0xff]
  %v44 = vld [vmem:[%s1 + $0x58] sm:$0xff]
  %v45 = vld [vmem:[%s1 + $0x60] sm:$0xff]
  %v46 = vld [vmem:[%s1 + $0x68] sm:$0xff]
  %v47 = vld [vmem:[%s1 + $0x70] sm:$0xff]
  %v48 = vld [vmem:[%s1 + $0x78] sm:$0xff]
  %v49 = vld [vmem:[%s1 + $0x80] sm:$0xff]
  %v50 = vld [vmem:[%s1 + $0x88] sm:$0xff]
  %v51 = vld [vmem:[%s1 + $0x90] sm:$0xff]
  %v52 = vld [vmem:[%s1 + $0x98] sm:$0xff]
  %v53 = vld [vmem:[%s1 + $0xa0] sm:$0xff]
  %v54 = vld [vmem:[%s1 + $0xa8] sm:$0xff]
  %v55 = vld [vmem:[%s1 + $0xb0] sm:$0xff]
  %v56 = vld [vmem:[%s1 + $0xb8] sm:$0xff]
  %v57 = vld [vmem:[%s1 + $0xc0] sm:$0xff]
  %v58 = vld [vmem:[%s1 + $0xc8] sm:$0xff]
  %v59 = vld [vmem:[%s1 + $0xd0] sm:$0xff]
  %v60 = vld [vmem:[%s1 + $0xd8] sm:$0xff]
  %v61 = vld [vmem:[%s1 + $0xe0] sm:$0xff]
  %v62 = vld [vmem:[%s1 + $0xe8] sm:$0xff]
  %v63 = vld [vmem:[%s1 + $0xf0] sm:$0xff]
  %v64 = vld [vmem:[%s1 + $0xf8] sm:$0xff]
  %v65 = vld [vmem:[%s1 + $0x100] sm:$0xff]
  %v66 = vld [vmem:[%s1 + $0x108] sm:$0xff]
  %v67 = vld [vmem:[%s1 + $0x110] sm:$0xff]
  %v68 = vld [vmem:[%s1 + $0x118] sm:$0xff]
  %v69 = vld [vmem:[%s1 + $0x120] sm:$0xff]
  %v70 = vld [vmem:[%s1 + $0x128] sm:$0xff]
  %v71 = vld [vmem:[%s1 + $0x130] sm:$0xff]
  %v72 = vld [vmem:[%s1 + $0x138] sm:$0xff]
  %v73 = vld [vmem:[%s1 + $0x140] sm:$0xff]
  %v74 = vld [vmem:[%s1 + $0x148] sm:$0xff]
  %v75 = vld [vmem:[%s1 + $0x150] sm:$0xff]
  %v76 = vld [vmem:[%s1 + $0x158] sm:$0xff]
  %v77 = vld [vmem:[%s1 + $0x160] sm:$0xff]
  %v78 = vld [vmem:[%s1 + $0x168] sm:$0xff]
  %v79 = vld [vmem:[%s1 + $0x170] sm:$0xff]
  %v80 = vld [vmem:[%s1 + $0x178] sm:$0xff]
  %v81 = vld [vmem:[%s1 + $0x180] sm:$0xff]
  %v82 = vld [vmem:[%s1 + $0x188] sm:$0xff]
  %v83 = vld [vmem:[%s1 + $0x190] sm:$0xff]
  %v84 = vld [vmem:[%s1 + $0x198] sm:$0xff]
  %v85 = vld [vmem:[%s1 + $0x1a0] sm:$0xff]
  %v86 = vld [vmem:[%s1 + $0x1a8] sm:$0xff]
  %v87 = vld [vmem:[%s1 + $0x1b0] sm:$0xff]
  %v88 = vld [vmem:[%s1 + $0x1b8] sm:$0xff]
  %v89 = vld [vmem:[%s1 + $0x1c0] sm:$0xff]
  %v90 = vld [vmem:[%s1 + $0x1c8] sm:$0xff]
  %v91 = vld [vmem:[%s1 + $0x1d0] sm:$0xff]
  %v92 = vld [vmem:[%s1 + $0x1d8] sm:$0xff]
  %v93 = vld [vmem:[%s1 + $0x1e0] sm:$0xff]
  %v94 = vld [vmem:[%s1 + $0x1e8] sm:$0xff]
  %v95 = vld [vmem:[%s1 + $0x1f0] sm:$0xff]
  %v96 = vld [vmem:[%s1 + $0x1f8] sm:$0xff]
  %v97 = vld [vmem:[%s1 + $0x200] sm:$0xff]
  %v98 = vld [vmem:[%s1 + $0x208] sm:$0xff]
  %v99 = vld [vmem:[%s1 + $0x210] sm:$0xff]
  %v100 = vld [vmem:[%s1 + $0x218] sm:$0xff]
  %v101 = vld [vmem:[%s1 + $0x220] sm:$0xff]
  %v102 = vld [vmem:[%s1 + $0x228] sm:$0xff]
  %v103 = vld [vmem:[%s1 + $0x230] sm:$0xff]
  %v104 = vld [vmem:[%s1 + $0x238] sm:$0xff]
  %v105 = vld [vmem:[%s1 + $0x240] sm:$0xff]
  %v106 = vld [vmem:[%s1 + $0x248] sm:$0xff]
  %v107 = vld [vmem:[%s1 + $0x250] sm:$0xff]
  %v108 = vld [vmem:[%s1 + $0x258] sm:$0xff]
  %v109 = vld [vmem:[%s1 + $0x260] sm:$0xff]
  %v110 = vld [vmem:[%s1 + $0x268] sm:$0xff]
  %v111 = vld [vmem:[%s1 + $0x270] sm:$0xff]
  %v112 = vld [vmem:[%s1 + $0x278] sm:$0xff]
  %v113 = vld [vmem:[%s1 + $0x280] sm:$0xff]
  %v114 = vld [vmem:[%s1 + $0x288] sm:$0xff]
  %v115 = vld [vmem:[%s1 + $0x290] sm:$0xff]
  %v116 = vld [vmem:[%s1 + $0x298] sm:$0xff]
  %v117 = vld [vmem:[%s1 + $0x2a0] sm:$0xff]
  %v118 = vld [vmem:[%s1 + $0x2a8] sm:$0xff]
  %v119 = vld [vmem:[%s1 + $0x2b0] sm:$0xff]
  %v120 = vld [vmem:[%s1 + $0x2b8] sm:$0xff]
  %v121 = vld [vmem:[%s1 + $0x2c0] sm:$0xff]
  %v122 = vld [vmem:[%s1 + $0x2c8] sm:$0xff]
  %v123 = vld [vmem:[%s1 + $0x2d0] sm:$0xff]
  %v124 = vld [vmem:[%s1 + $0x2d8] sm:$0xff]
  %v125 = vld [vmem:[%s1 + $0x2e0] sm:$0xff]
  %v126 = vld [vmem:[%s1 + $0x2e8] sm:$0xff]
  %v127 = vld [vmem:[%s1 + $0x2f0] sm:$0xff]
  %v128 = vld [vmem:[%s1 + $0x2f8] sm:$0xff]
  %v129 = vld [vmem:[%s1 + $0x300] sm:$0xff]
  %v130 = vld [vmem:[%s1 + $0x308] sm:$0xff]
  %v131 = vld [vmem:[%s1 + $0x310] sm:$0xff]
  %v132 = vld [vmem:[%s1 + $0x318] sm:$0xff]
  %v133 = vld [vmem:[%s1 + $0x320] sm:$0xff]
  %v134 = vld [vmem:[%s1 + $0x328] sm:$0xff]
  %v135 = vld [vmem:[%s1 + $0x330] sm:$0xff]
  %v136 = vld [vmem:[%s1 + $0x338] sm:$0xff]
  %v137 = vld [vmem:[%s1 + $0x340] sm:$0xff]
  %v138 = vld [vmem:[%s1 + $0x348] sm:$0xff]
  %v139 = vld [vmem:[%s1 + $0x350] sm:$0xff]
  %v140 = vld [vmem:[%s1 + $0x358] sm:$0xff]
  %v141 = vld [vmem:[%s1 + $0x360] sm:$0xff]
  %v142 = vld [vmem:[%s1 + $0x368] sm:$0xff]
  %v143 = vld [vmem:[%s1 + $0x370] sm:$0xff]
  %v144 = vld [vmem:[%s1 + $0x378] sm:$0xff]
  %v145 = vld [vmem:[%s1 + $0x380] sm:$0xff]
  %v146 = vld [vmem:[%s1 + $0x388] sm:$0xff]
  %v147 = vld [vmem:[%s1 + $0x390] sm:$0xff]
  %v148 = vld [vmem:[%s1 + $0x398] sm:$0xff]
  %v149 = vld [vmem:[%s1 + $0x3a0] sm:$0xff]
  %v150 = vld [vmem:[%s1 + $0x3a8] sm:$0xff]
  %v151 = vld [vmem:[%s1 + $0x3b0] sm:$0xff]
  %v152 = vld [vmem:[%s1 + $0x3b8] sm:$0xff]
  %v153 = vld [vmem:[%s1 + $0x3c0] sm:$0xff]
  %v154 = vld [vmem:[%s1 + $0x3c8] sm:$0xff]
  %v155 = vld [vmem:[%s1 + $0x3d0] sm:$0xff]
  %v156 = vld [vmem:[%s1 + $0x3d8] sm:$0xff]
  %v157 = vld [vmem:[%s1 + $0x3e0] sm:$0xff]
  %v158 = vld [vmem:[%s1 + $0x3e8] sm:$0xff]
  %v159 = vld [vmem:[%s1 + $0x3f0] sm:$0xff]
  %v160 = vld [vmem:[%s1 + $0x3f8] sm:$0xff]
  %v161 = vld [vmem:[%s1 + $0x400] sm:$0xff]
  %v162 = vld [vmem:[%s1 + $0x408] sm:$0xff]
  %v163 = vld [vmem:[%s1 + $0x410] sm:$0xff]
  %v164 = vld [vmem:[%s1 + $0x418] sm:$0xff]
  %v165 = vld [vmem:[%s1 + $0x420] sm:$0xff]
  %v166 = vld [vmem:[%s1 + $0x428] sm:$0xff]
  %v167 = vld [vmem:[%s1 + $0x430] sm:$0xff]
  %v168 = vld [vmem:[%s1 + $0x438] sm:$0xff]
  %v169 = vld [vmem:[%s1 + $0x440] sm:$0xff]
  %v170 = vld [vmem:[%s1 + $0x448] sm:$0xff]
  %v171 = vld [vmem:[%s1 + $0x450] sm:$0xff]
  %v172 = vld [vmem:[%s1 + $0x458] sm:$0xff]
  %v173 = vld [vmem:[%s1 + $0x460] sm:$0xff]
  %v174 = vld [vmem:[%s1 + $0x468] sm:$0xff]
  %v175 = vld [vmem:[%s1 + $0x470] sm:$0xff]
  %v176 = vld [vmem:[%s1 + $0x478] sm:$0xff]
  %v177 = vld [vmem:[%s1 + $0x480] sm:$0xff]
  %v178 = vld [vmem:[%s1 + $0x488] sm:$0xff]
  %v179 = vld [vmem:[%s1 + $0x490] sm:$0xff]
  %v180 = vld [vmem:[%s1 + $0x498] sm:$0xff]
  %v181 = vld [vmem:[%s1 + $0x4a0] sm:$0xff]
  %v182 = vld [vmem:[%s1 + $0x4a8] sm:$0xff]
  %v183 = vld [vmem:[%s1 + $0x4b0] sm:$0xff]
  %v184 = vld [vmem:[%s1 + $0x4b8] sm:$0xff]
  %v185 = vld [vmem:[%s1 + $0x4c0] sm:$0xff]
  %v186 = vld [vmem:[%s1 + $0x4c8] sm:$0xff]
  %v187 = vld [vmem:[%s1 + $0x4d0] sm:$0xff]
  %v188 = vld [vmem:[%s1 + $0x4d8] sm:$0xff]
  %v189 = vld [vmem:[%s1 + $0x4e0] sm:$0xff]
  %v190 = vld [vmem:[%s1 + $0x4e8] sm:$0xff]
  %v191 = vld [vmem:[%s1 + $0x4f0] sm:$0xff]
  %v192 = vld [vmem:[%s1 + $0x4f8] sm:$0xff]
  %v193 = vld [vmem:[%s1 + $0x500] sm:$0xff]
  %v194 = vld [vmem:[%s1 + $0x508] sm:$0xff]
  %v195 = vld [vmem:[%s1 + $0x510] sm:$0xff]
  %v196 = vld [vmem:[%s1 + $0x518] sm:$0xff]
  %v197 = vld [vmem:[%s1 + $0x520] sm:$0xff]
  %v198 = vld [vmem:[%s1 + $0x528] sm:$0xff]
  %v199 = vld [vmem:[%s1 + $0x530] sm:$0xff]
  %v200 = vld [vmem:[%s1 + $0x538] sm:$0xff]
  %v201 = vld [vmem:[%s1 + $0x540] sm:$0xff]
  %v202 = vld [vmem:[%s1 + $0x548] sm:$0xff]
  %v203 = vld [vmem:[%s1 + $0x550] sm:$0xff]
  %v204 = vld [vmem:[%s1 + $0x558] sm:$0xff]
  %v205 = vld [vmem:[%s1 + $0x560] sm:$0xff]
  %v206 = vld [vmem:[%s1 + $0x568] sm:$0xff]
  %v207 = vld [vmem:[%s1 + $0x570] sm:$0xff]
  %v208 = vld [vmem:[%s1 + $0x578] sm:$0xff]
  %v209 = vld [vmem:[%s1 + $0x580] sm:$0xff]
  %v210 = vld [vmem:[%s1 + $0x588] sm:$0xff]
  %v211 = vld [vmem:[%s1 + $0x590] sm:$0xff]
  %v212 = vld [vmem:[%s1 + $0x598] sm:$0xff]
  %v213 = vld [vmem:[%s1 + $0x5a0] sm:$0xff]
  %v214 = vld [vmem:[%s1 + $0x5a8] sm:$0xff]
  %v215 = vld [vmem:[%s1 + $0x5b0] sm:$0xff]
  %v216 = vld [vmem:[%s1 + $0x5b8] sm:$0xff]
  %v217 = vld [vmem:[%s1 + $0x5c0] sm:$0xff]
  %v218 = vld [vmem:[%s1 + $0x5c8] sm:$0xff]
  %v219 = vld [vmem:[%s1 + $0x5d0] sm:$0xff]
  %v220 = vld [vmem:[%s1 + $0x5d8] sm:$0xff]
  %v221 = vld [vmem:[%s1 + $0x5e0] sm:$0xff]
  %v222 = vld [vmem:[%s1 + $0x5e8] sm:$0xff]
  %v223 = vld [vmem:[%s1 + $0x5f0] sm:$0xff]
  %v224 = vld [vmem:[%s1 + $0x5f8] sm:$0xff]
  %v225 = vld [vmem:[%s1 + $0x600] sm:$0xff]
  %v226 = vld [vmem:[%s1 + $0x608] sm:$0xff]
  %v227 = vld [vmem:[%s1 + $0x610] sm:$0xff]
  %v228 = vld [vmem:[%s1 + $0x618] sm:$0xff]
  %v229 = vld [vmem:[%s1 + $0x620] sm:$0xff]
  %v230 = vld [vmem:[%s1 + $0x628] sm:$0xff]
  %v231 = vld [vmem:[%s1 + $0x630] sm:$0xff]
  %v232 = vld [vmem:[%s1 + $0x638] sm:$0xff]
  %v233 = vld [vmem:[%s2] sm:$0xf]
  %v235 = vperm.slane %v233, 0
  %v236 = vperm.slane %v233, 1
  %v237 = vperm.slane %v233, 2
  %v238 = vperm.slane %v233, 3
  %v247 = vunpack.c.l.b16 %v29
  %v248 = vunpack.c.h.b16 %v29
  %v249 = vunpack.c.l.b16 %v30
  %v250 = vunpack.c.h.b16 %v30
  %v251 = vunpack.c.l.b16 %v31
  %v252 = vunpack.c.h.b16 %v31
  %v253 = vunpack.c.l.b16 %v32
  %v254 = vpack.c.b16 %v247, %v247
  %v255 = vpack.c.b16 %v248, %v248
  %v256 = vpack.c.b16 %v249, %v249
  %v257 = vpack.c.b16 %v250, %v250
  %v258 = vpack.c.b16 %v251, %v251
  %v259 = vpack.c.b16 %v252, %v252
  %v260 = vpack.c.b16 %v253, %v253
  %v467 = vunpack.c.l.b16 %v33
  %v468 = vunpack.c.h.b16 %v33
  %v469 = vunpack.c.l.b16 %v34
  %v470 = vunpack.c.h.b16 %v34
  %v471 = vunpack.c.l.b16 %v35
  %v472 = vunpack.c.h.b16 %v35
  %v473 = vunpack.c.l.b16 %v36
  %v474 = vunpack.c.h.b16 %v36
  %v475 = vunpack.c.l.b16 %v37
  %v476 = vunpack.c.h.b16 %v37
  %v477 = vunpack.c.l.b16 %v38
  %v478 = vunpack.c.h.b16 %v38
  %v479 = vunpack.c.l.b16 %v39
  %v480 = vunpack.c.h.b16 %v39
  %v481 = vunpack.c.l.b16 %v40
  %v482 = vunpack.c.h.b16 %v40
  %v483 = vunpack.c.l.b16 %v41
  %v484 = vunpack.c.h.b16 %v41
  %v485 = vunpack.c.l.b16 %v42
  %v486 = vunpack.c.h.b16 %v42
  %v487 = vunpack.c.l.b16 %v43
  %v488 = vunpack.c.h.b16 %v43
  %v489 = vunpack.c.l.b16 %v44
  %v490 = vunpack.c.h.b16 %v44
  %v491 = vunpack.c.l.b16 %v45
  %v492 = vunpack.c.h.b16 %v45
  %v493 = vunpack.c.l.b16 %v46
  %v494 = vunpack.c.h.b16 %v46
  %v495 = vunpack.c.l.b16 %v47
  %v496 = vunpack.c.h.b16 %v47
  %v497 = vunpack.c.l.b16 %v48
  %v498 = vunpack.c.h.b16 %v48
  %v499 = vunpack.c.l.b16 %v49
  %v500 = vunpack.c.h.b16 %v49
  %v501 = vunpack.c.l.b16 %v50
  %v502 = vunpack.c.h.b16 %v50
  %v503 = vunpack.c.l.b16 %v51
  %v504 = vunpack.c.h.b16 %v51
  %v505 = vunpack.c.l.b16 %v52
  %v506 = vunpack.c.h.b16 %v52
  %v507 = vunpack.c.l.b16 %v53
  %v508 = vunpack.c.h.b16 %v53
  %v509 = vunpack.c.l.b16 %v54
  %v510 = vunpack.c.h.b16 %v54
  %v511 = vunpack.c.l.b16 %v55
  %v512 = vunpack.c.h.b16 %v55
  %v513 = vunpack.c.l.b16 %v56
  %v514 = vunpack.c.h.b16 %v56
  %v515 = vunpack.c.l.b16 %v57
  %v516 = vunpack.c.h.b16 %v57
  %v517 = vunpack.c.l.b16 %v58
  %v518 = vunpack.c.h.b16 %v58
  %v519 = vunpack.c.l.b16 %v59
  %v520 = vunpack.c.h.b16 %v59
  %v521 = vunpack.c.l.b16 %v60
  %v522 = vunpack.c.h.b16 %v60
  %v523 = vunpack.c.l.b16 %v61
  %v524 = vunpack.c.h.b16 %v61
  %v525 = vunpack.c.l.b16 %v62
  %v526 = vunpack.c.h.b16 %v62
  %v527 = vunpack.c.l.b16 %v63
  %v528 = vunpack.c.h.b16 %v63
  %v529 = vunpack.c.l.b16 %v64
  %v530 = vunpack.c.h.b16 %v64
  %v531 = vunpack.c.l.b16 %v65
  %v532 = vunpack.c.h.b16 %v65
  %v533 = vunpack.c.l.b16 %v66
  %v534 = vunpack.c.h.b16 %v66
  %v535 = vunpack.c.l.b16 %v67
  %v536 = vunpack.c.h.b16 %v67
  %v537 = vunpack.c.l.b16 %v68
  %v538 = vunpack.c.h.b16 %v68
  %v539 = vunpack.c.l.b16 %v69
  %v540 = vunpack.c.h.b16 %v69
  %v541 = vunpack.c.l.b16 %v70
  %v542 = vunpack.c.h.b16 %v70
  %v543 = vunpack.c.l.b16 %v71
  %v544 = vunpack.c.h.b16 %v71
  %v545 = vunpack.c.l.b16 %v72
  %v546 = vunpack.c.h.b16 %v72
  %v547 = vunpack.c.l.b16 %v73
  %v548 = vunpack.c.h.b16 %v73
  %v549 = vunpack.c.l.b16 %v74
  %v550 = vunpack.c.h.b16 %v74
  %v551 = vunpack.c.l.b16 %v75
  %v552 = vunpack.c.h.b16 %v75
  %v553 = vunpack.c.l.b16 %v76
  %v554 = vunpack.c.h.b16 %v76
  %v555 = vunpack.c.l.b16 %v77
  %v556 = vunpack.c.h.b16 %v77
  %v557 = vunpack.c.l.b16 %v78
  %v558 = vunpack.c.h.b16 %v78
  %v559 = vunpack.c.l.b16 %v79
  %v560 = vunpack.c.h.b16 %v79
  %v561 = vunpack.c.l.b16 %v80
  %v562 = vunpack.c.h.b16 %v80
  %v563 = vunpack.c.l.b16 %v81
  %v564 = vunpack.c.h.b16 %v81
  %v565 = vunpack.c.l.b16 %v82
  %v566 = vunpack.c.h.b16 %v82
  %v567 = vunpack.c.l.b16 %v83
  %v568 = vunpack.c.h.b16 %v83
  %v569 = vunpack.c.l.b16 %v84
  %v570 = vunpack.c.h.b16 %v84
  %v571 = vunpack.c.l.b16 %v85
  %v572 = vunpack.c.h.b16 %v85
  %v573 = vunpack.c.l.b16 %v86
  %v574 = vunpack.c.h.b16 %v86
  %v575 = vunpack.c.l.b16 %v87
  %v576 = vunpack.c.h.b16 %v87
  %v577 = vunpack.c.l.b16 %v88
  %v578 = vunpack.c.h.b16 %v88
  %v579 = vunpack.c.l.b16 %v89
  %v580 = vunpack.c.h.b16 %v89
  %v581 = vunpack.c.l.b16 %v90
  %v582 = vunpack.c.h.b16 %v90
  %v583 = vunpack.c.l.b16 %v91
  %v584 = vunpack.c.h.b16 %v91
  %v585 = vunpack.c.l.b16 %v92
  %v586 = vunpack.c.h.b16 %v92
  %v587 = vunpack.c.l.b16 %v93
  %v588 = vunpack.c.h.b16 %v93
  %v589 = vunpack.c.l.b16 %v94
  %v590 = vunpack.c.h.b16 %v94
  %v591 = vunpack.c.l.b16 %v95
  %v592 = vunpack.c.h.b16 %v95
  %v593 = vunpack.c.l.b16 %v96
  %v594 = vunpack.c.h.b16 %v96
  %v595 = vunpack.c.l.b16 %v97
  %v596 = vunpack.c.h.b16 %v97
  %v597 = vunpack.c.l.b16 %v98
  %v598 = vunpack.c.h.b16 %v98
  %v599 = vunpack.c.l.b16 %v99
  %v600 = vunpack.c.h.b16 %v99
  %v601 = vunpack.c.l.b16 %v100
  %v602 = vunpack.c.h.b16 %v100
  %v603 = vunpack.c.l.b16 %v101
  %v604 = vunpack.c.h.b16 %v101
  %v605 = vunpack.c.l.b16 %v102
  %v606 = vunpack.c.h.b16 %v102
  %v607 = vunpack.c.l.b16 %v103
  %v608 = vunpack.c.h.b16 %v103
  %v609 = vunpack.c.l.b16 %v104
  %v610 = vunpack.c.h.b16 %v104
  %v611 = vunpack.c.l.b16 %v105
  %v612 = vunpack.c.h.b16 %v105
  %v613 = vunpack.c.l.b16 %v106
  %v614 = vunpack.c.h.b16 %v106
  %v615 = vunpack.c.l.b16 %v107
  %v616 = vunpack.c.h.b16 %v107
  %v617 = vunpack.c.l.b16 %v108
  %v618 = vunpack.c.h.b16 %v108
  %v619 = vunpack.c.l.b16 %v109
  %v620 = vunpack.c.h.b16 %v109
  %v621 = vunpack.c.l.b16 %v110
  %v622 = vunpack.c.h.b16 %v110
  %v623 = vunpack.c.l.b16 %v111
  %v624 = vunpack.c.h.b16 %v111
  %v625 = vunpack.c.l.b16 %v112
  %v626 = vunpack.c.h.b16 %v112
  %v627 = vunpack.c.l.b16 %v113
  %v628 = vunpack.c.h.b16 %v113
  %v629 = vunpack.c.l.b16 %v114
  %v630 = vunpack.c.h.b16 %v114
  %v631 = vunpack.c.l.b16 %v115
  %v632 = vunpack.c.h.b16 %v115
  %v633 = vunpack.c.l.b16 %v116
  %v634 = vunpack.c.h.b16 %v116
  %v635 = vunpack.c.l.b16 %v117
  %v636 = vunpack.c.h.b16 %v117
  %v637 = vunpack.c.l.b16 %v118
  %v638 = vunpack.c.h.b16 %v118
  %v639 = vunpack.c.l.b16 %v119
  %v640 = vunpack.c.h.b16 %v119
  %v641 = vunpack.c.l.b16 %v120
  %v642 = vunpack.c.h.b16 %v120
  %v643 = vunpack.c.l.b16 %v121
  %v644 = vunpack.c.h.b16 %v121
  %v645 = vunpack.c.l.b16 %v122
  %v646 = vunpack.c.h.b16 %v122
  %v647 = vunpack.c.l.b16 %v123
  %v648 = vunpack.c.h.b16 %v123
  %v649 = vunpack.c.l.b16 %v124
  %v650 = vunpack.c.h.b16 %v124
  %v651 = vunpack.c.l.b16 %v125
  %v652 = vunpack.c.h.b16 %v125
  %v653 = vunpack.c.l.b16 %v126
  %v654 = vunpack.c.h.b16 %v126
  %v655 = vunpack.c.l.b16 %v127
  %v656 = vunpack.c.h.b16 %v127
  %v657 = vunpack.c.l.b16 %v128
  %v658 = vunpack.c.h.b16 %v128
  %v659 = vunpack.c.l.b16 %v129
  %v660 = vunpack.c.h.b16 %v129
  %v661 = vunpack.c.l.b16 %v130
  %v662 = vunpack.c.h.b16 %v130
  %v663 = vunpack.c.l.b16 %v131
  %v664 = vunpack.c.h.b16 %v131
  %v665 = vunpack.c.l.b16 %v132
  %v666 = vunpack.c.h.b16 %v132
  %v667 = vunpack.c.l.b16 %v133
  %v668 = vunpack.c.h.b16 %v133
  %v669 = vunpack.c.l.b16 %v134
  %v670 = vunpack.c.h.b16 %v134
  %v671 = vunpack.c.l.b16 %v135
  %v672 = vunpack.c.h.b16 %v135
  %v673 = vunpack.c.l.b16 %v136
  %v674 = vunpack.c.h.b16 %v136
  %v675 = vunpack.c.l.b16 %v137
  %v676 = vunpack.c.h.b16 %v137
  %v677 = vunpack.c.l.b16 %v138
  %v678 = vunpack.c.h.b16 %v138
  %v679 = vunpack.c.l.b16 %v139
  %v680 = vunpack.c.h.b16 %v139
  %v681 = vunpack.c.l.b16 %v140
  %v682 = vunpack.c.h.b16 %v140
  %v683 = vunpack.c.l.b16 %v141
  %v684 = vunpack.c.h.b16 %v141
  %v685 = vunpack.c.l.b16 %v142
  %v686 = vunpack.c.h.b16 %v142
  %v687 = vunpack.c.l.b16 %v143
  %v688 = vunpack.c.h.b16 %v143
  %v689 = vunpack.c.l.b16 %v144
  %v690 = vunpack.c.h.b16 %v144
  %v691 = vunpack.c.l.b16 %v145
  %v692 = vunpack.c.h.b16 %v145
  %v693 = vunpack.c.l.b16 %v146
  %v694 = vunpack.c.h.b16 %v146
  %v695 = vunpack.c.l.b16 %v147
  %v696 = vunpack.c.h.b16 %v147
  %v697 = vunpack.c.l.b16 %v148
  %v698 = vunpack.c.h.b16 %v148
  %v699 = vunpack.c.l.b16 %v149
  %v700 = vunpack.c.h.b16 %v149
  %v701 = vunpack.c.l.b16 %v150
  %v702 = vunpack.c.h.b16 %v150
  %v703 = vunpack.c.l.b16 %v151
  %v704 = vunpack.c.h.b16 %v151
  %v705 = vunpack.c.l.b16 %v152
  %v706 = vunpack.c.h.b16 %v152
  %v707 = vunpack.c.l.b16 %v153
  %v708 = vunpack.c.h.b16 %v153
  %v709 = vunpack.c.l.b16 %v154
  %v710 = vunpack.c.h.b16 %v154
  %v711 = vunpack.c.l.b16 %v155
  %v712 = vunpack.c.h.b16 %v155
  %v713 = vunpack.c.l.b16 %v156
  %v714 = vunpack.c.h.b16 %v156
  %v715 = vunpack.c.l.b16 %v157
  %v716 = vunpack.c.h.b16 %v157
  %v717 = vunpack.c.l.b16 %v158
  %v718 = vunpack.c.h.b16 %v158
  %v719 = vunpack.c.l.b16 %v159
  %v720 = vunpack.c.h.b16 %v159
  %v721 = vunpack.c.l.b16 %v160
  %v722 = vunpack.c.h.b16 %v160
  %v723 = vunpack.c.l.b16 %v161
  %v724 = vunpack.c.h.b16 %v161
  %v725 = vunpack.c.l.b16 %v162
  %v726 = vunpack.c.h.b16 %v162
  %v727 = vunpack.c.l.b16 %v163
  %v728 = vunpack.c.h.b16 %v163
  %v729 = vunpack.c.l.b16 %v164
  %v730 = vunpack.c.h.b16 %v164
  %v731 = vunpack.c.l.b16 %v165
  %v732 = vunpack.c.h.b16 %v165
  %v733 = vunpack.c.l.b16 %v166
  %v734 = vunpack.c.h.b16 %v166
  %v735 = vunpack.c.l.b16 %v167
  %v736 = vunpack.c.h.b16 %v167
  %v737 = vunpack.c.l.b16 %v168
  %v738 = vunpack.c.h.b16 %v168
  %v739 = vunpack.c.l.b16 %v169
  %v740 = vunpack.c.h.b16 %v169
  %v741 = vunpack.c.l.b16 %v170
  %v742 = vunpack.c.h.b16 %v170
  %v743 = vunpack.c.l.b16 %v171
  %v744 = vunpack.c.h.b16 %v171
  %v745 = vunpack.c.l.b16 %v172
  %v746 = vunpack.c.h.b16 %v172
  %v747 = vunpack.c.l.b16 %v173
  %v748 = vunpack.c.h.b16 %v173
  %v749 = vunpack.c.l.b16 %v174
  %v750 = vunpack.c.h.b16 %v174
  %v751 = vunpack.c.l.b16 %v175
  %v752 = vunpack.c.h.b16 %v175
  %v753 = vunpack.c.l.b16 %v176
  %v754 = vunpack.c.h.b16 %v176
  %v755 = vunpack.c.l.b16 %v177
  %v756 = vunpack.c.h.b16 %v177
  %v757 = vunpack.c.l.b16 %v178
  %v758 = vunpack.c.h.b16 %v178
  %v759 = vunpack.c.l.b16 %v179
  %v760 = vunpack.c.h.b16 %v179
  %v761 = vunpack.c.l.b16 %v180
  %v762 = vunpack.c.h.b16 %v180
  %v763 = vunpack.c.l.b16 %v181
  %v764 = vunpack.c.h.b16 %v181
  %v765 = vunpack.c.l.b16 %v182
  %v766 = vunpack.c.h.b16 %v182
  %v767 = vunpack.c.l.b16 %v183
  %v768 = vunpack.c.h.b16 %v183
  %v769 = vunpack.c.l.b16 %v184
  %v770 = vunpack.c.h.b16 %v184
  %v771 = vunpack.c.l.b16 %v185
  %v772 = vunpack.c.h.b16 %v185
  %v773 = vunpack.c.l.b16 %v186
  %v774 = vunpack.c.h.b16 %v186
  %v775 = vunpack.c.l.b16 %v187
  %v776 = vunpack.c.h.b16 %v187
  %v777 = vunpack.c.l.b16 %v188
  %v778 = vunpack.c.h.b16 %v188
  %v779 = vunpack.c.l.b16 %v189
  %v780 = vunpack.c.h.b16 %v189
  %v781 = vunpack.c.l.b16 %v190
  %v782 = vunpack.c.h.b16 %v190
  %v783 = vunpack.c.l.b16 %v191
  %v784 = vunpack.c.h.b16 %v191
  %v785 = vunpack.c.l.b16 %v192
  %v786 = vunpack.c.h.b16 %v192
  %v787 = vunpack.c.l.b16 %v193
  %v788 = vunpack.c.h.b16 %v193
  %v789 = vunpack.c.l.b16 %v194
  %v790 = vunpack.c.h.b16 %v194
  %v791 = vunpack.c.l.b16 %v195
  %v792 = vunpack.c.h.b16 %v195
  %v793 = vunpack.c.l.b16 %v196
  %v794 = vunpack.c.h.b16 %v196
  %v795 = vunpack.c.l.b16 %v197
  %v796 = vunpack.c.h.b16 %v197
  %v797 = vunpack.c.l.b16 %v198
  %v798 = vunpack.c.h.b16 %v198
  %v799 = vunpack.c.l.b16 %v199
  %v800 = vunpack.c.h.b16 %v199
  %v801 = vunpack.c.l.b16 %v200
  %v802 = vunpack.c.h.b16 %v200
  %v803 = vunpack.c.l.b16 %v201
  %v804 = vunpack.c.h.b16 %v201
  %v805 = vunpack.c.l.b16 %v202
  %v806 = vunpack.c.h.b16 %v202
  %v807 = vunpack.c.l.b16 %v203
  %v808 = vunpack.c.h.b16 %v203
  %v809 = vunpack.c.l.b16 %v204
  %v810 = vunpack.c.h.b16 %v204
  %v811 = vunpack.c.l.b16 %v205
  %v812 = vunpack.c.h.b16 %v205
  %v813 = vunpack.c.l.b16 %v206
  %v814 = vunpack.c.h.b16 %v206
  %v815 = vunpack.c.l.b16 %v207
  %v816 = vunpack.c.h.b16 %v207
  %v817 = vunpack.c.l.b16 %v208
  %v818 = vunpack.c.h.b16 %v208
  %v819 = vunpack.c.l.b16 %v209
  %v820 = vunpack.c.h.b16 %v209
  %v821 = vunpack.c.l.b16 %v210
  %v822 = vunpack.c.h.b16 %v210
  %v823 = vunpack.c.l.b16 %v211
  %v824 = vunpack.c.h.b16 %v211
  %v825 = vunpack.c.l.b16 %v212
  %v826 = vunpack.c.h.b16 %v212
  %v827 = vunpack.c.l.b16 %v213
  %v828 = vunpack.c.h.b16 %v213
  %v829 = vunpack.c.l.b16 %v214
  %v830 = vunpack.c.h.b16 %v214
  %v831 = vunpack.c.l.b16 %v215
  %v832 = vunpack.c.h.b16 %v215
  %v833 = vunpack.c.l.b16 %v216
  %v834 = vunpack.c.h.b16 %v216
  %v835 = vunpack.c.l.b16 %v217
  %v836 = vunpack.c.h.b16 %v217
  %v837 = vunpack.c.l.b16 %v218
  %v838 = vunpack.c.h.b16 %v218
  %v839 = vunpack.c.l.b16 %v219
  %v840 = vunpack.c.h.b16 %v219
  %v841 = vunpack.c.l.b16 %v220
  %v842 = vunpack.c.h.b16 %v220
  %v843 = vunpack.c.l.b16 %v221
  %v844 = vunpack.c.h.b16 %v221
  %v845 = vunpack.c.l.b16 %v222
  %v846 = vunpack.c.h.b16 %v222
  %v847 = vunpack.c.l.b16 %v223
  %v848 = vunpack.c.h.b16 %v223
  %v849 = vunpack.c.l.b16 %v224
  %v850 = vunpack.c.h.b16 %v224
  %v851 = vunpack.c.l.b16 %v225
  %v852 = vunpack.c.h.b16 %v225
  %v853 = vunpack.c.l.b16 %v226
  %v854 = vunpack.c.h.b16 %v226
  %v855 = vunpack.c.l.b16 %v227
  %v856 = vunpack.c.h.b16 %v227
  %v857 = vunpack.c.l.b16 %v228
  %v858 = vunpack.c.h.b16 %v228
  %v859 = vunpack.c.l.b16 %v229
  %v860 = vunpack.c.h.b16 %v229
  %v861 = vunpack.c.l.b16 %v230
  %v862 = vunpack.c.h.b16 %v230
  %v863 = vunpack.c.l.b16 %v231
  %v864 = vunpack.c.h.b16 %v231
  %v865 = vunpack.c.l.b16 %v232
  %v866 = vunpack.c.h.b16 %v232
  %v867 = vpack.c.b16 %v471, %v467
  %v868 = vpack.c.b16 %v472, %v468
  %v869 = vpack.c.b16 %v473, %v469
  %v870 = vpack.c.b16 %v474, %v470
  %v871 = vpack.c.b16 %v479, %v475
  %v872 = vpack.c.b16 %v480, %v476
  %v873 = vpack.c.b16 %v481, %v477
  %v874 = vpack.c.b16 %v482, %v478
  %v875 = vpack.c.b16 %v487, %v483
  %v876 = vpack.c.b16 %v488, %v484
  %v877 = vpack.c.b16 %v489, %v485
  %v878 = vpack.c.b16 %v490, %v486
  %v879 = vpack.c.b16 %v495, %v491
  %v880 = vpack.c.b16 %v496, %v492
  %v881 = vpack.c.b16 %v497, %v493
  %v882 = vpack.c.b16 %v498, %v494
  %v883 = vpack.c.b16 %v503, %v499
  %v884 = vpack.c.b16 %v504, %v500
  %v885 = vpack.c.b16 %v505, %v501
  %v886 = vpack.c.b16 %v506, %v502
  %v887 = vpack.c.b16 %v511, %v507
  %v888 = vpack.c.b16 %v512, %v508
  %v889 = vpack.c.b16 %v513, %v509
  %v890 = vpack.c.b16 %v514, %v510
  %v891 = vpack.c.b16 %v519, %v515
  %v892 = vpack.c.b16 %v520, %v516
  %v893 = vpack.c.b16 %v521, %v517
  %v894 = vpack.c.b16 %v522, %v518
  %v895 = vpack.c.b16 %v527, %v523
  %v896 = vpack.c.b16 %v528, %v524
  %v897 = vpack.c.b16 %v529, %v525
  %v898 = vpack.c.b16 %v530, %v526
  %v899 = vpack.c.b16 %v535, %v531
  %v900 = vpack.c.b16 %v536, %v532
  %v901 = vpack.c.b16 %v537, %v533
  %v902 = vpack.c.b16 %v538, %v534
  %v903 = vpack.c.b16 %v543, %v539
  %v904 = vpack.c.b16 %v544, %v540
  %v905 = vpack.c.b16 %v545, %v541
  %v906 = vpack.c.b16 %v546, %v542
  %v907 = vpack.c.b16 %v551, %v547
  %v908 = vpack.c.b16 %v552, %v548
  %v909 = vpack.c.b16 %v553, %v549
  %v910 = vpack.c.b16 %v554, %v550
  %v911 = vpack.c.b16 %v559, %v555
  %v912 = vpack.c.b16 %v560, %v556
  %v913 = vpack.c.b16 %v561, %v557
  %v914 = vpack.c.b16 %v562, %v558
  %v915 = vpack.c.b16 %v567, %v563
  %v916 = vpack.c.b16 %v568, %v564
  %v917 = vpack.c.b16 %v569, %v565
  %v918 = vpack.c.b16 %v570, %v566
  %v919 = vpack.c.b16 %v575, %v571
  %v920 = vpack.c.b16 %v576, %v572
  %v921 = vpack.c.b16 %v577, %v573
  %v922 = vpack.c.b16 %v578, %v574
  %v923 = vpack.c.b16 %v583, %v579
  %v924 = vpack.c.b16 %v584, %v580
  %v925 = vpack.c.b16 %v585, %v581
  %v926 = vpack.c.b16 %v586, %v582
  %v927 = vpack.c.b16 %v591, %v587
  %v928 = vpack.c.b16 %v592, %v588
  %v929 = vpack.c.b16 %v593, %v589
  %v930 = vpack.c.b16 %v594, %v590
  %v931 = vpack.c.b16 %v599, %v595
  %v932 = vpack.c.b16 %v600, %v596
  %v933 = vpack.c.b16 %v601, %v597
  %v934 = vpack.c.b16 %v602, %v598
  %v935 = vpack.c.b16 %v607, %v603
  %v936 = vpack.c.b16 %v608, %v604
  %v937 = vpack.c.b16 %v609, %v605
  %v938 = vpack.c.b16 %v610, %v606
  %v939 = vpack.c.b16 %v615, %v611
  %v940 = vpack.c.b16 %v616, %v612
  %v941 = vpack.c.b16 %v617, %v613
  %v942 = vpack.c.b16 %v618, %v614
  %v943 = vpack.c.b16 %v623, %v619
  %v944 = vpack.c.b16 %v624, %v620
  %v945 = vpack.c.b16 %v625, %v621
  %v946 = vpack.c.b16 %v626, %v622
  %v947 = vpack.c.b16 %v631, %v627
  %v948 = vpack.c.b16 %v632, %v628
  %v949 = vpack.c.b16 %v633, %v629
  %v950 = vpack.c.b16 %v634, %v630
  %v951 = vpack.c.b16 %v639, %v635
  %v952 = vpack.c.b16 %v640, %v636
  %v953 = vpack.c.b16 %v641, %v637
  %v954 = vpack.c.b16 %v642, %v638
  %v955 = vpack.c.b16 %v647, %v643
  %v956 = vpack.c.b16 %v648, %v644
  %v957 = vpack.c.b16 %v649, %v645
  %v958 = vpack.c.b16 %v650, %v646
  %v959 = vpack.c.b16 %v655, %v651
  %v960 = vpack.c.b16 %v656, %v652
  %v961 = vpack.c.b16 %v657, %v653
  %v962 = vpack.c.b16 %v658, %v654
  %v963 = vpack.c.b16 %v663, %v659
  %v964 = vpack.c.b16 %v664, %v660
  %v965 = vpack.c.b16 %v665, %v661
  %v966 = vpack.c.b16 %v666, %v662
  %v967 = vpack.c.b16 %v671, %v667
  %v968 = vpack.c.b16 %v672, %v668
  %v969 = vpack.c.b16 %v673, %v669
  %v970 = vpack.c.b16 %v674, %v670
  %v971 = vpack.c.b16 %v679, %v675
  %v972 = vpack.c.b16 %v680, %v676
  %v973 = vpack.c.b16 %v681, %v677
  %v974 = vpack.c.b16 %v682, %v678
  %v975 = vpack.c.b16 %v687, %v683
  %v976 = vpack.c.b16 %v688, %v684
  %v977 = vpack.c.b16 %v689, %v685
  %v978 = vpack.c.b16 %v690, %v686
  %v979 = vpack.c.b16 %v695, %v691
  %v980 = vpack.c.b16 %v696, %v692
  %v981 = vpack.c.b16 %v697, %v693
  %v982 = vpack.c.b16 %v698, %v694
  %v983 = vpack.c.b16 %v703, %v699
  %v984 = vpack.c.b16 %v704, %v700
  %v985 = vpack.c.b16 %v705, %v701
  %v986 = vpack.c.b16 %v706, %v702
  %v987 = vpack.c.b16 %v711, %v707
  %v988 = vpack.c.b16 %v712, %v708
  %v989 = vpack.c.b16 %v713, %v709
  %v990 = vpack.c.b16 %v714, %v710
  %v991 = vpack.c.b16 %v719, %v715
  %v992 = vpack.c.b16 %v720, %v716
  %v993 = vpack.c.b16 %v721, %v717
  %v994 = vpack.c.b16 %v722, %v718
  %v995 = vpack.c.b16 %v727, %v723
  %v996 = vpack.c.b16 %v728, %v724
  %v997 = vpack.c.b16 %v729, %v725
  %v998 = vpack.c.b16 %v730, %v726
  %v999 = vpack.c.b16 %v735, %v731
  %v1000 = vpack.c.b16 %v736, %v732
  %v1001 = vpack.c.b16 %v737, %v733
  %v1002 = vpack.c.b16 %v738, %v734
  %v1003 = vpack.c.b16 %v743, %v739
  %v1004 = vpack.c.b16 %v744, %v740
  %v1005 = vpack.c.b16 %v745, %v741
  %v1006 = vpack.c.b16 %v746, %v742
  %v1007 = vpack.c.b16 %v751, %v747
  %v1008 = vpack.c.b16 %v752, %v748
  %v1009 = vpack.c.b16 %v753, %v749
  %v1010 = vpack.c.b16 %v754, %v750
  %v1011 = vpack.c.b16 %v759, %v755
  %v1012 = vpack.c.b16 %v760, %v756
  %v1013 = vpack.c.b16 %v761, %v757
  %v1014 = vpack.c.b16 %v762, %v758
  %v1015 = vpack.c.b16 %v767, %v763
  %v1016 = vpack.c.b16 %v768, %v764
  %v1017 = vpack.c.b16 %v769, %v765
  %v1018 = vpack.c.b16 %v770, %v766
  %v1019 = vpack.c.b16 %v775, %v771
  %v1020 = vpack.c.b16 %v776, %v772
  %v1021 = vpack.c.b16 %v777, %v773
  %v1022 = vpack.c.b16 %v778, %v774
  %v1023 = vpack.c.b16 %v783, %v779
  %v1024 = vpack.c.b16 %v784, %v780
  %v1025 = vpack.c.b16 %v785, %v781
  %v1026 = vpack.c.b16 %v786, %v782
  %v1027 = vpack.c.b16 %v791, %v787
  %v1028 = vpack.c.b16 %v792, %v788
  %v1029 = vpack.c.b16 %v793, %v789
  %v1030 = vpack.c.b16 %v794, %v790
  %v1031 = vpack.c.b16 %v799, %v795
  %v1032 = vpack.c.b16 %v800, %v796
  %v1033 = vpack.c.b16 %v801, %v797
  %v1034 = vpack.c.b16 %v802, %v798
  %v1035 = vpack.c.b16 %v807, %v803
  %v1036 = vpack.c.b16 %v808, %v804
  %v1037 = vpack.c.b16 %v809, %v805
  %v1038 = vpack.c.b16 %v810, %v806
  %v1039 = vpack.c.b16 %v815, %v811
  %v1040 = vpack.c.b16 %v816, %v812
  %v1041 = vpack.c.b16 %v817, %v813
  %v1042 = vpack.c.b16 %v818, %v814
  %v1043 = vpack.c.b16 %v823, %v819
  %v1044 = vpack.c.b16 %v824, %v820
  %v1045 = vpack.c.b16 %v825, %v821
  %v1046 = vpack.c.b16 %v826, %v822
  %v1047 = vpack.c.b16 %v831, %v827
  %v1048 = vpack.c.b16 %v832, %v828
  %v1049 = vpack.c.b16 %v833, %v829
  %v1050 = vpack.c.b16 %v834, %v830
  %v1051 = vpack.c.b16 %v839, %v835
  %v1052 = vpack.c.b16 %v840, %v836
  %v1053 = vpack.c.b16 %v841, %v837
  %v1054 = vpack.c.b16 %v842, %v838
  %v1055 = vpack.c.b16 %v847, %v843
  %v1056 = vpack.c.b16 %v848, %v844
  %v1057 = vpack.c.b16 %v849, %v845
  %v1058 = vpack.c.b16 %v850, %v846
  %v1059 = vpack.c.b16 %v855, %v851
  %v1060 = vpack.c.b16 %v856, %v852
  %v1061 = vpack.c.b16 %v857, %v853
  %v1062 = vpack.c.b16 %v858, %v854
  %v1063 = vpack.c.b16 %v863, %v859
  %v1064 = vpack.c.b16 %v864, %v860
  %v1065 = vpack.c.b16 %v865, %v861
  %v1066 = vpack.c.b16 %v866, %v862
  %vm1267 = vcmask 261120
  %v1269 = vsel %vm1267, %v260, 0
  %1271 = vmatpush.bf16.msra.mxu0 %v895
  %1272 = vmatpush.bf16.msra.mxu0 %v891
  %1273 = vmatpush.bf16.msra.mxu0 %v887
  %1274 = vmatpush.bf16.msra.mxu0 %v883
  %1275 = vmatpush.bf16.msra.mxu0 %v879
  %1276 = vmatpush.bf16.msra.mxu0 %v875
  %1277 = vmatpush.bf16.msra.mxu0 %v871
  %1278 = vmatpush.bf16.msra.mxu0 %v867
  %1279 = vmatmul.bf16.gmra.mxu0 %v254
  %v1280 = vpop.f32.mrf.mxu0
  %v1281 = vadd.f32 %v235, %v1280
  %v1282 = vpop.f32.mrf.mxu0
  %1283 = vdwg.mxu0
  %1284 = vmatpush.bf16.msra.mxu0 %v927
  %1285 = vmatpush.bf16.msra.mxu0 %v923
  %1286 = vmatpush.bf16.msra.mxu0 %v919
  %1287 = vmatpush.bf16.msra.mxu0 %v915
  %1288 = vmatpush.bf16.msra.mxu0 %v911
  %1289 = vmatpush.bf16.msra.mxu0 %v907
  %1290 = vmatpush.bf16.msra.mxu0 %v903
  %1291 = vmatpush.bf16.msra.mxu0 %v899
  %1292 = vmatmul.bf16.gmra.mxu0 %v255
  %v1293 = vpop.f32.mrf.mxu0
  %v1294 = vadd.f32 %v1281, %v1293
  %v1295 = vpop.f32.mrf.mxu0
  %1296 = vdwg.mxu0
  %1297 = vmatpush.bf16.msra.mxu0 %v959
  %1298 = vmatpush.bf16.msra.mxu0 %v955
  %1299 = vmatpush.bf16.msra.mxu0 %v951
  %1300 = vmatpush.bf16.msra.mxu0 %v947
  %1301 = vmatpush.bf16.msra.mxu0 %v943
  %1302 = vmatpush.bf16.msra.mxu0 %v939
  %1303 = vmatpush.bf16.msra.mxu0 %v935
  %1304 = vmatpush.bf16.msra.mxu0 %v931
  %1305 = vmatmul.bf16.gmra.mxu0 %v256
  %v1306 = vpop.f32.mrf.mxu0
  %v1307 = vadd.f32 %v1294, %v1306
  %v1308 = vpop.f32.mrf.mxu0
  %1309 = vdwg.mxu0
  %1310 = vmatpush.bf16.msra.mxu0 %v991
  %1311 = vmatpush.bf16.msra.mxu0 %v987
  %1312 = vmatpush.bf16.msra.mxu0 %v983
  %1313 = vmatpush.bf16.msra.mxu0 %v979
  %1314 = vmatpush.bf16.msra.mxu0 %v975
  %1315 = vmatpush.bf16.msra.mxu0 %v971
  %1316 = vmatpush.bf16.msra.mxu0 %v967
  %1317 = vmatpush.bf16.msra.mxu0 %v963
  %1318 = vmatmul.bf16.gmra.mxu0 %v257
  %v1319 = vpop.f32.mrf.mxu0
  %v1320 = vadd.f32 %v1307, %v1319
  %v1321 = vpop.f32.mrf.mxu0
  %1322 = vdwg.mxu0
  %1323 = vmatpush.bf16.msra.mxu0 %v1023
  %1324 = vmatpush.bf16.msra.mxu0 %v1019
  %1325 = vmatpush.bf16.msra.mxu0 %v1015
  %1326 = vmatpush.bf16.msra.mxu0 %v1011
  %1327 = vmatpush.bf16.msra.mxu0 %v1007
  %1328 = vmatpush.bf16.msra.mxu0 %v1003
  %1329 = vmatpush.bf16.msra.mxu0 %v999
  %1330 = vmatpush.bf16.msra.mxu0 %v995
  %1331 = vmatmul.bf16.gmra.mxu0 %v258
  %v1332 = vpop.f32.mrf.mxu0
  %v1333 = vadd.f32 %v1320, %v1332
  %v1334 = vpop.f32.mrf.mxu0
  %1335 = vdwg.mxu0
  %1336 = vmatpush.bf16.msra.mxu0 %v1055
  %1337 = vmatpush.bf16.msra.mxu0 %v1051
  %1338 = vmatpush.bf16.msra.mxu0 %v1047
  %1339 = vmatpush.bf16.msra.mxu0 %v1043
  %1340 = vmatpush.bf16.msra.mxu0 %v1039
  %1341 = vmatpush.bf16.msra.mxu0 %v1035
  %1342 = vmatpush.bf16.msra.mxu0 %v1031
  %1343 = vmatpush.bf16.msra.mxu0 %v1027
  %1344 = vmatmul.bf16.gmra.mxu0 %v259
  %v1345 = vpop.f32.mrf.mxu0
  %v1346 = vadd.f32 %v1333, %v1345
  %v1347 = vpop.f32.mrf.mxu0
  %1348 = vdwg.mxu0
  %1349 = vmatpush.bf16.msra.mxu0 0
  %1350 = vmatpush.bf16.msra.mxu0 0
  %1351 = vmatpush.bf16.msra.mxu0 0
  %1352 = vmatpush.bf16.msra.mxu0 0
  %1353 = vmatpush.bf16.msra.mxu0 0
  %1354 = vmatpush.bf16.msra.mxu0 0
  %1355 = vmatpush.bf16.msra.mxu0 %v1063
  %1356 = vmatpush.bf16.msra.mxu0 %v1059
  %1357 = vmatmul.bf16.gmra.mxu0 %v1269
  %v1358 = vpop.f32.mrf.mxu0
  %v1359 = vadd.f32 %v1346, %v1358
  %v1360 = vpop.f32.mrf.mxu0
  %1361 = vdwg.mxu0
  %1362 = vmatpush.bf16.msra.mxu0 %v896
  %1363 = vmatpush.bf16.msra.mxu0 %v892
  %1364 = vmatpush.bf16.msra.mxu0 %v888
  %1365 = vmatpush.bf16.msra.mxu0 %v884
  %1366 = vmatpush.bf16.msra.mxu0 %v880
  %1367 = vmatpush.bf16.msra.mxu0 %v876
  %1368 = vmatpush.bf16.msra.mxu0 %v872
  %1369 = vmatpush.bf16.msra.mxu0 %v868
  %1370 = vmatmul.bf16.gmra.mxu0 %v254
  %v1371 = vpop.f32.mrf.mxu0
  %v1372 = vadd.f32 %v236, %v1371
  %v1373 = vpop.f32.mrf.mxu0
  %1374 = vdwg.mxu0
  %1375 = vmatpush.bf16.msra.mxu0 %v928
  %1376 = vmatpush.bf16.msra.mxu0 %v924
  %1377 = vmatpush.bf16.msra.mxu0 %v920
  %1378 = vmatpush.bf16.msra.mxu0 %v916
  %1379 = vmatpush.bf16.msra.mxu0 %v912
  %1380 = vmatpush.bf16.msra.mxu0 %v908
  %1381 = vmatpush.bf16.msra.mxu0 %v904
  %1382 = vmatpush.bf16.msra.mxu0 %v900
  %1383 = vmatmul.bf16.gmra.mxu0 %v255
  %v1384 = vpop.f32.mrf.mxu0
  %v1385 = vadd.f32 %v1372, %v1384
  %v1386 = vpop.f32.mrf.mxu0
  %1387 = vdwg.mxu0
  %1388 = vmatpush.bf16.msra.mxu0 %v960
  %1389 = vmatpush.bf16.msra.mxu0 %v956
  %1390 = vmatpush.bf16.msra.mxu0 %v952
  %1391 = vmatpush.bf16.msra.mxu0 %v948
  %1392 = vmatpush.bf16.msra.mxu0 %v944
  %1393 = vmatpush.bf16.msra.mxu0 %v940
  %1394 = vmatpush.bf16.msra.mxu0 %v936
  %1395 = vmatpush.bf16.msra.mxu0 %v932
  %1396 = vmatmul.bf16.gmra.mxu0 %v256
  %v1397 = vpop.f32.mrf.mxu0
  %v1398 = vadd.f32 %v1385, %v1397
  %v1399 = vpop.f32.mrf.mxu0
  %1400 = vdwg.mxu0
  %1401 = vmatpush.bf16.msra.mxu0 %v992
  %1402 = vmatpush.bf16.msra.mxu0 %v988
  %1403 = vmatpush.bf16.msra.mxu0 %v984
  %1404 = vmatpush.bf16.msra.mxu0 %v980
  %1405 = vmatpush.bf16.msra.mxu0 %v976
  %1406 = vmatpush.bf16.msra.mxu0 %v972
  %1407 = vmatpush.bf16.msra.mxu0 %v968
  %1408 = vmatpush.bf16.msra.mxu0 %v964
  %1409 = vmatmul.bf16.gmra.mxu0 %v257
  %v1410 = vpop.f32.mrf.mxu0
  %v1411 = vadd.f32 %v1398, %v1410
  %v1412 = vpop.f32.mrf.mxu0
  %1413 = vdwg.mxu0
  %1414 = vmatpush.bf16.msra.mxu0 %v1024
  %1415 = vmatpush.bf16.msra.mxu0 %v1020
  %1416 = vmatpush.bf16.msra.mxu0 %v1016
  %1417 = vmatpush.bf16.msra.mxu0 %v1012
  %1418 = vmatpush.bf16.msra.mxu0 %v1008
  %1419 = vmatpush.bf16.msra.mxu0 %v1004
  %1420 = vmatpush.bf16.msra.mxu0 %v1000
  %1421 = vmatpush.bf16.msra.mxu0 %v996
  %1422 = vmatmul.bf16.gmra.mxu0 %v258
  %v1423 = vpop.f32.mrf.mxu0
  %v1424 = vadd.f32 %v1411, %v1423
  %v1425 = vpop.f32.mrf.mxu0
  %1426 = vdwg.mxu0
  %1427 = vmatpush.bf16.msra.mxu0 %v1056
  %1428 = vmatpush.bf16.msra.mxu0 %v1052
  %1429 = vmatpush.bf16.msra.mxu0 %v1048
  %1430 = vmatpush.bf16.msra.mxu0 %v1044
  %1431 = vmatpush.bf16.msra.mxu0 %v1040
  %1432 = vmatpush.bf16.msra.mxu0 %v1036
  %1433 = vmatpush.bf16.msra.mxu0 %v1032
  %1434 = vmatpush.bf16.msra.mxu0 %v1028
  %1435 = vmatmul.bf16.gmra.mxu0 %v259
  %v1436 = vpop.f32.mrf.mxu0
  %v1437 = vadd.f32 %v1424, %v1436
  %v1438 = vpop.f32.mrf.mxu0
  %1439 = vdwg.mxu0
  %1440 = vmatpush.bf16.msra.mxu0 0
  %1441 = vmatpush.bf16.msra.mxu0 0
  %1442 = vmatpush.bf16.msra.mxu0 0
  %1443 = vmatpush.bf16.msra.mxu0 0
  %1444 = vmatpush.bf16.msra.mxu0 0
  %1445 = vmatpush.bf16.msra.mxu0 0
  %1446 = vmatpush.bf16.msra.mxu0 %v1064
  %1447 = vmatpush.bf16.msra.mxu0 %v1060
  %1448 = vmatmul.bf16.gmra.mxu0 %v1269
  %v1449 = vpop.f32.mrf.mxu0
  %v1450 = vadd.f32 %v1437, %v1449
  %v1451 = vpop.f32.mrf.mxu0
  %1452 = vdwg.mxu0
  %1453 = vmatpush.bf16.msra.mxu0 %v897
  %1454 = vmatpush.bf16.msra.mxu0 %v893
  %1455 = vmatpush.bf16.msra.mxu0 %v889
  %1456 = vmatpush.bf16.msra.mxu0 %v885
  %1457 = vmatpush.bf16.msra.mxu0 %v881
  %1458 = vmatpush.bf16.msra.mxu0 %v877
  %1459 = vmatpush.bf16.msra.mxu0 %v873
  %1460 = vmatpush.bf16.msra.mxu0 %v869
  %1461 = vmatmul.bf16.gmra.mxu0 %v254
  %v1462 = vpop.f32.mrf.mxu0
  %v1463 = vadd.f32 %v237, %v1462
  %v1464 = vpop.f32.mrf.mxu0
  %1465 = vdwg.mxu0
  %1466 = vmatpush.bf16.msra.mxu0 %v929
  %1467 = vmatpush.bf16.msra.mxu0 %v925
  %1468 = vmatpush.bf16.msra.mxu0 %v921
  %1469 = vmatpush.bf16.msra.mxu0 %v917
  %1470 = vmatpush.bf16.msra.mxu0 %v913
  %1471 = vmatpush.bf16.msra.mxu0 %v909
  %1472 = vmatpush.bf16.msra.mxu0 %v905
  %1473 = vmatpush.bf16.msra.mxu0 %v901
  %1474 = vmatmul.bf16.gmra.mxu0 %v255
  %v1475 = vpop.f32.mrf.mxu0
  %v1476 = vadd.f32 %v1463, %v1475
  %v1477 = vpop.f32.mrf.mxu0
  %1478 = vdwg.mxu0
  %1479 = vmatpush.bf16.msra.mxu0 %v961
  %1480 = vmatpush.bf16.msra.mxu0 %v957
  %1481 = vmatpush.bf16.msra.mxu0 %v953
  %1482 = vmatpush.bf16.msra.mxu0 %v949
  %1483 = vmatpush.bf16.msra.mxu0 %v945
  %1484 = vmatpush.bf16.msra.mxu0 %v941
  %1485 = vmatpush.bf16.msra.mxu0 %v937
  %1486 = vmatpush.bf16.msra.mxu0 %v933
  %1487 = vmatmul.bf16.gmra.mxu0 %v256
  %v1488 = vpop.f32.mrf.mxu0
  %v1489 = vadd.f32 %v1476, %v1488
  %v1490 = vpop.f32.mrf.mxu0
  %1491 = vdwg.mxu0
  %1492 = vmatpush.bf16.msra.mxu0 %v993
  %1493 = vmatpush.bf16.msra.mxu0 %v989
  %1494 = vmatpush.bf16.msra.mxu0 %v985
  %1495 = vmatpush.bf16.msra.mxu0 %v981
  %1496 = vmatpush.bf16.msra.mxu0 %v977
  %1497 = vmatpush.bf16.msra.mxu0 %v973
  %1498 = vmatpush.bf16.msra.mxu0 %v969
  %1499 = vmatpush.bf16.msra.mxu0 %v965
  %1500 = vmatmul.bf16.gmra.mxu0 %v257
  %v1501 = vpop.f32.mrf.mxu0
  %v1502 = vadd.f32 %v1489, %v1501
  %v1503 = vpop.f32.mrf.mxu0
  %1504 = vdwg.mxu0
  %1505 = vmatpush.bf16.msra.mxu0 %v1025
  %1506 = vmatpush.bf16.msra.mxu0 %v1021
  %1507 = vmatpush.bf16.msra.mxu0 %v1017
  %1508 = vmatpush.bf16.msra.mxu0 %v1013
  %1509 = vmatpush.bf16.msra.mxu0 %v1009
  %1510 = vmatpush.bf16.msra.mxu0 %v1005
  %1511 = vmatpush.bf16.msra.mxu0 %v1001
  %1512 = vmatpush.bf16.msra.mxu0 %v997
  %1513 = vmatmul.bf16.gmra.mxu0 %v258
  %v1514 = vpop.f32.mrf.mxu0
  %v1515 = vadd.f32 %v1502, %v1514
  %v1516 = vpop.f32.mrf.mxu0
  %1517 = vdwg.mxu0
  %1518 = vmatpush.bf16.msra.mxu0 %v1057
  %1519 = vmatpush.bf16.msra.mxu0 %v1053
  %1520 = vmatpush.bf16.msra.mxu0 %v1049
  %1521 = vmatpush.bf16.msra.mxu0 %v1045
  %1522 = vmatpush.bf16.msra.mxu0 %v1041
  %1523 = vmatpush.bf16.msra.mxu0 %v1037
  %1524 = vmatpush.bf16.msra.mxu0 %v1033
  %1525 = vmatpush.bf16.msra.mxu0 %v1029
  %1526 = vmatmul.bf16.gmra.mxu0 %v259
  %v1527 = vpop.f32.mrf.mxu0
  %v1528 = vadd.f32 %v1515, %v1527
  %v1529 = vpop.f32.mrf.mxu0
  %1530 = vdwg.mxu0
  %1531 = vmatpush.bf16.msra.mxu0 0
  %1532 = vmatpush.bf16.msra.mxu0 0
  %1533 = vmatpush.bf16.msra.mxu0 0
  %1534 = vmatpush.bf16.msra.mxu0 0
  %1535 = vmatpush.bf16.msra.mxu0 0
  %1536 = vmatpush.bf16.msra.mxu0 0
  %1537 = vmatpush.bf16.msra.mxu0 %v1065
  %1538 = vmatpush.bf16.msra.mxu0 %v1061
  %1539 = vmatmul.bf16.gmra.mxu0 %v1269
  %v1540 = vpop.f32.mrf.mxu0
  %v1541 = vadd.f32 %v1528, %v1540
  %v1542 = vpop.f32.mrf.mxu0
  %1543 = vdwg.mxu0
  %1544 = vmatpush.bf16.msra.mxu0 %v898
  %1545 = vmatpush.bf16.msra.mxu0 %v894
  %1546 = vmatpush.bf16.msra.mxu0 %v890
  %1547 = vmatpush.bf16.msra.mxu0 %v886
  %1548 = vmatpush.bf16.msra.mxu0 %v882
  %1549 = vmatpush.bf16.msra.mxu0 %v878
  %1550 = vmatpush.bf16.msra.mxu0 %v874
  %1551 = vmatpush.bf16.msra.mxu0 %v870
  %1552 = vmatmul.bf16.gmra.mxu0 %v254
  %v1553 = vpop.f32.mrf.mxu0
  %v1554 = vadd.f32 %v238, %v1553
  %v1555 = vpop.f32.mrf.mxu0
  %1556 = vdwg.mxu0
  %1557 = vmatpush.bf16.msra.mxu0 %v930
  %1558 = vmatpush.bf16.msra.mxu0 %v926
  %1559 = vmatpush.bf16.msra.mxu0 %v922
  %1560 = vmatpush.bf16.msra.mxu0 %v918
  %1561 = vmatpush.bf16.msra.mxu0 %v914
  %1562 = vmatpush.bf16.msra.mxu0 %v910
  %1563 = vmatpush.bf16.msra.mxu0 %v906
  %1564 = vmatpush.bf16.msra.mxu0 %v902
  %1565 = vmatmul.bf16.gmra.mxu0 %v255
  %v1566 = vpop.f32.mrf.mxu0
  %v1567 = vadd.f32 %v1554, %v1566
  %v1568 = vpop.f32.mrf.mxu0
  %1569 = vdwg.mxu0
  %1570 = vmatpush.bf16.msra.mxu0 %v962
  %1571 = vmatpush.bf16.msra.mxu0 %v958
  %1572 = vmatpush.bf16.msra.mxu0 %v954
  %1573 = vmatpush.bf16.msra.mxu0 %v950
  %1574 = vmatpush.bf16.msra.mxu0 %v946
  %1575 = vmatpush.bf16.msra.mxu0 %v942
  %1576 = vmatpush.bf16.msra.mxu0 %v938
  %1577 = vmatpush.bf16.msra.mxu0 %v934
  %1578 = vmatmul.bf16.gmra.mxu0 %v256
  %v1579 = vpop.f32.mrf.mxu0
  %v1580 = vadd.f32 %v1567, %v1579
  %v1581 = vpop.f32.mrf.mxu0
  %1582 = vdwg.mxu0
  %1583 = vmatpush.bf16.msra.mxu0 %v994
  %1584 = vmatpush.bf16.msra.mxu0 %v990
  %1585 = vmatpush.bf16.msra.mxu0 %v986
  %1586 = vmatpush.bf16.msra.mxu0 %v982
  %1587 = vmatpush.bf16.msra.mxu0 %v978
  %1588 = vmatpush.bf16.msra.mxu0 %v974
  %1589 = vmatpush.bf16.msra.mxu0 %v970
  %1590 = vmatpush.bf16.msra.mxu0 %v966
  %1591 = vmatmul.bf16.gmra.mxu0 %v257
  %v1592 = vpop.f32.mrf.mxu0
  %v1593 = vadd.f32 %v1580, %v1592
  %v1594 = vpop.f32.mrf.mxu0
  %1595 = vdwg.mxu0
  %1596 = vmatpush.bf16.msra.mxu0 %v1026
  %1597 = vmatpush.bf16.msra.mxu0 %v1022
  %1598 = vmatpush.bf16.msra.mxu0 %v1018
  %1599 = vmatpush.bf16.msra.mxu0 %v1014
  %1600 = vmatpush.bf16.msra.mxu0 %v1010
  %1601 = vmatpush.bf16.msra.mxu0 %v1006
  %1602 = vmatpush.bf16.msra.mxu0 %v1002
  %1603 = vmatpush.bf16.msra.mxu0 %v998
  %1604 = vmatmul.bf16.gmra.mxu0 %v258
  %v1605 = vpop.f32.mrf.mxu0
  %v1606 = vadd.f32 %v1593, %v1605
  %v1607 = vpop.f32.mrf.mxu0
  %1608 = vdwg.mxu0
  %1609 = vmatpush.bf16.msra.mxu0 %v1058
  %1610 = vmatpush.bf16.msra.mxu0 %v1054
  %1611 = vmatpush.bf16.msra.mxu0 %v1050
  %1612 = vmatpush.bf16.msra.mxu0 %v1046
  %1613 = vmatpush.bf16.msra.mxu0 %v1042
  %1614 = vmatpush.bf16.msra.mxu0 %v1038
  %1615 = vmatpush.bf16.msra.mxu0 %v1034
  %1616 = vmatpush.bf16.msra.mxu0 %v1030
  %1617 = vmatmul.bf16.gmra.mxu0 %v259
  %v1618 = vpop.f32.mrf.mxu0
  %v1619 = vadd.f32 %v1606, %v1618
  %v1620 = vpop.f32.mrf.mxu0
  %1621 = vdwg.mxu0
  %1622 = vmatpush.bf16.msra.mxu0 0
  %1623 = vmatpush.bf16.msra.mxu0 0
  %1624 = vmatpush.bf16.msra.mxu0 0
  %1625 = vmatpush.bf16.msra.mxu0 0
  %1626 = vmatpush.bf16.msra.mxu0 0
  %1627 = vmatpush.bf16.msra.mxu0 0
  %1628 = vmatpush.bf16.msra.mxu0 %v1066
  %1629 = vmatpush.bf16.msra.mxu0 %v1062
  %1630 = vmatmul.bf16.gmra.mxu0 %v1269
  %v1631 = vpop.f32.mrf.mxu0
  %v1632 = vadd.f32 %v1619, %v1631
  %v1633 = vpop.f32.mrf.mxu0
  %1634 = vdwg.mxu0
  %v1635 = vmax.f32 %v1359, 0.0
  %v1636 = vmax.f32 %v1450, 0.0
  %v1637 = vmax.f32 %v1541, 0.0
  %v1638 = vmax.f32 %v1632, 0.0
  %v1639 = vpack.c.bf16 %v1635, %v1635
  %v1640 = vpack.c.bf16 %v1636, %v1636
  %v1641 = vpack.c.bf16 %v1637, %v1637
  %v1642 = vpack.c.bf16 %v1638, %v1638
  %v1643 = vld [vmem:[%s3] sm:$0xff]
  %v1644 = vld [vmem:[%s3 + $0x8] sm:$0xff]
  %v1645 = vld [vmem:[%s3 + $0x10] sm:$0xff]
  %v1646 = vld [vmem:[%s3 + $0x18] sm:$0xff]
  %v1647 = vld [vmem:[%s3 + $0x20] sm:$0xff]
  %v1648 = vld [vmem:[%s3 + $0x28] sm:$0xff]
  %v1649 = vld [vmem:[%s3 + $0x30] sm:$0xff]
  %v1650 = vld [vmem:[%s3 + $0x38] sm:$0xff]
  %v1651 = vld [vmem:[%s3 + $0x40] sm:$0xff]
  %v1652 = vld [vmem:[%s3 + $0x48] sm:$0xff]
  %v1653 = vld [vmem:[%s3 + $0x50] sm:$0xff]
  %v1654 = vld [vmem:[%s3 + $0x58] sm:$0xff]
  %v1655 = vld [vmem:[%s3 + $0x60] sm:$0xff]
  %v1656 = vld [vmem:[%s3 + $0x68] sm:$0xff]
  %v1657 = vld [vmem:[%s3 + $0x70] sm:$0xff]
  %v1658 = vld [vmem:[%s3 + $0x78] sm:$0xff]
  %v1659 = vld [vmem:[%s3 + $0x80] sm:$0xff]
  %v1660 = vld [vmem:[%s3 + $0x88] sm:$0xff]
  %v1661 = vld [vmem:[%s3 + $0x90] sm:$0xff]
  %v1662 = vld [vmem:[%s3 + $0x98] sm:$0xff]
  %v1663 = vld [vmem:[%s3 + $0xa0] sm:$0xff]
  %v1664 = vld [vmem:[%s3 + $0xa8] sm:$0xff]
  %v1665 = vld [vmem:[%s3 + $0xb0] sm:$0xff]
  %v1666 = vld [vmem:[%s3 + $0xb8] sm:$0xff]
  %v1667 = vld [vmem:[%s3 + $0xc0] sm:$0xff]
  %v1668 = vld [vmem:[%s3 + $0xc8] sm:$0xff]
  %v1669 = vld [vmem:[%s3 + $0xd0] sm:$0xff]
  %v1670 = vld [vmem:[%s3 + $0xd8] sm:$0xff]
  %v1671 = vld [vmem:[%s3 + $0xe0] sm:$0xff]
  %v1672 = vld [vmem:[%s3 + $0xe8] sm:$0xff]
  %v1673 = vld [vmem:[%s3 + $0xf0] sm:$0xff]
  %v1674 = vld [vmem:[%s3 + $0xf8] sm:$0xff]
  %v1675 = vld [vmem:[%s3 + $0x100] sm:$0xff]
  %v1676 = vld [vmem:[%s3 + $0x108] sm:$0xff]
  %v1677 = vld [vmem:[%s3 + $0x110] sm:$0xff]
  %v1678 = vld [vmem:[%s3 + $0x118] sm:$0xff]
  %v1679 = vld [vmem:[%s3 + $0x120] sm:$0xff]
  %v1680 = vld [vmem:[%s3 + $0x128] sm:$0xff]
  %v1681 = vld [vmem:[%s3 + $0x130] sm:$0xff]
  %v1682 = vld [vmem:[%s3 + $0x138] sm:$0xff]
  %v1683 = vld [vmem:[%s3 + $0x140] sm:$0xff]
  %v1684 = vld [vmem:[%s3 + $0x148] sm:$0xff]
  %v1685 = vld [vmem:[%s3 + $0x150] sm:$0xff]
  %v1686 = vld [vmem:[%s3 + $0x158] sm:$0xff]
  %v1687 = vld [vmem:[%s3 + $0x160] sm:$0xff]
  %v1688 = vld [vmem:[%s3 + $0x168] sm:$0xff]
  %v1689 = vld [vmem:[%s3 + $0x170] sm:$0xff]
  %v1690 = vld [vmem:[%s3 + $0x178] sm:$0xff]
  %v1691 = vld [vmem:[%s3 + $0x180] sm:$0xff]
  %v1692 = vld [vmem:[%s3 + $0x188] sm:$0xff]
  %v1693 = vld [vmem:[%s3 + $0x190] sm:$0xff]
  %v1694 = vld [vmem:[%s3 + $0x198] sm:$0xff]
  %v1695 = vld [vmem:[%s3 + $0x1a0] sm:$0xff]
  %v1696 = vld [vmem:[%s3 + $0x1a8] sm:$0xff]
  %v1697 = vld [vmem:[%s3 + $0x1b0] sm:$0xff]
  %v1698 = vld [vmem:[%s3 + $0x1b8] sm:$0xff]
  %v1699 = vld [vmem:[%s3 + $0x1c0] sm:$0xff]
  %v1700 = vld [vmem:[%s3 + $0x1c8] sm:$0xff]
  %v1701 = vld [vmem:[%s3 + $0x1d0] sm:$0xff]
  %v1702 = vld [vmem:[%s3 + $0x1d8] sm:$0xff]
  %v1703 = vld [vmem:[%s3 + $0x1e0] sm:$0xff]
  %v1704 = vld [vmem:[%s3 + $0x1e8] sm:$0xff]
  %v1705 = vld [vmem:[%s3 + $0x1f0] sm:$0x33]
  %v1769 = vunpack.c.l.b16 %v1643
  %v1770 = vunpack.c.h.b16 %v1643
  %v1771 = vunpack.c.l.b16 %v1644
  %v1772 = vunpack.c.h.b16 %v1644
  %v1773 = vunpack.c.l.b16 %v1645
  %v1774 = vunpack.c.h.b16 %v1645
  %v1775 = vunpack.c.l.b16 %v1646
  %v1776 = vunpack.c.h.b16 %v1646
  %v1777 = vunpack.c.l.b16 %v1647
  %v1778 = vunpack.c.h.b16 %v1647
  %v1779 = vunpack.c.l.b16 %v1648
  %v1780 = vunpack.c.h.b16 %v1648
  %v1781 = vunpack.c.l.b16 %v1649
  %v1782 = vunpack.c.h.b16 %v1649
  %v1783 = vunpack.c.l.b16 %v1650
  %v1784 = vunpack.c.h.b16 %v1650
  %v1785 = vunpack.c.l.b16 %v1651
  %v1786 = vunpack.c.h.b16 %v1651
  %v1787 = vunpack.c.l.b16 %v1652
  %v1788 = vunpack.c.h.b16 %v1652
  %v1789 = vunpack.c.l.b16 %v1653
  %v1790 = vunpack.c.h.b16 %v1653
  %v1791 = vunpack.c.l.b16 %v1654
  %v1792 = vunpack.c.h.b16 %v1654
  %v1793 = vunpack.c.l.b16 %v1655
  %v1794 = vunpack.c.h.b16 %v1655
  %v1795 = vunpack.c.l.b16 %v1656
  %v1796 = vunpack.c.h.b16 %v1656
  %v1797 = vunpack.c.l.b16 %v1657
  %v1798 = vunpack.c.h.b16 %v1657
  %v1799 = vunpack.c.l.b16 %v1658
  %v1800 = vunpack.c.h.b16 %v1658
  %v1801 = vunpack.c.l.b16 %v1659
  %v1802 = vunpack.c.h.b16 %v1659
  %v1803 = vunpack.c.l.b16 %v1660
  %v1804 = vunpack.c.h.b16 %v1660
  %v1805 = vunpack.c.l.b16 %v1661
  %v1806 = vunpack.c.h.b16 %v1661
  %v1807 = vunpack.c.l.b16 %v1662
  %v1808 = vunpack.c.h.b16 %v1662
  %v1809 = vunpack.c.l.b16 %v1663
  %v1810 = vunpack.c.h.b16 %v1663
  %v1811 = vunpack.c.l.b16 %v1664
  %v1812 = vunpack.c.h.b16 %v1664
  %v1813 = vunpack.c.l.b16 %v1665
  %v1814 = vunpack.c.h.b16 %v1665
  %v1815 = vunpack.c.l.b16 %v1666
  %v1816 = vunpack.c.h.b16 %v1666
  %v1817 = vunpack.c.l.b16 %v1667
  %v1818 = vunpack.c.h.b16 %v1667
  %v1819 = vunpack.c.l.b16 %v1668
  %v1820 = vunpack.c.h.b16 %v1668
  %v1821 = vunpack.c.l.b16 %v1669
  %v1822 = vunpack.c.h.b16 %v1669
  %v1823 = vunpack.c.l.b16 %v1670
  %v1824 = vunpack.c.h.b16 %v1670
  %v1825 = vunpack.c.l.b16 %v1671
  %v1826 = vunpack.c.h.b16 %v1671
  %v1827 = vunpack.c.l.b16 %v1672
  %v1828 = vunpack.c.h.b16 %v1672
  %v1829 = vunpack.c.l.b16 %v1673
  %v1830 = vunpack.c.h.b16 %v1673
  %v1831 = vunpack.c.l.b16 %v1674
  %v1832 = vunpack.c.h.b16 %v1674
  %v1833 = vunpack.c.l.b16 %v1675
  %v1834 = vunpack.c.h.b16 %v1675
  %v1835 = vunpack.c.l.b16 %v1676
  %v1836 = vunpack.c.h.b16 %v1676
  %v1837 = vunpack.c.l.b16 %v1677
  %v1838 = vunpack.c.h.b16 %v1677
  %v1839 = vunpack.c.l.b16 %v1678
  %v1840 = vunpack.c.h.b16 %v1678
  %v1841 = vunpack.c.l.b16 %v1679
  %v1842 = vunpack.c.h.b16 %v1679
  %v1843 = vunpack.c.l.b16 %v1680
  %v1844 = vunpack.c.h.b16 %v1680
  %v1845 = vunpack.c.l.b16 %v1681
  %v1846 = vunpack.c.h.b16 %v1681
  %v1847 = vunpack.c.l.b16 %v1682
  %v1848 = vunpack.c.h.b16 %v1682
  %v1849 = vunpack.c.l.b16 %v1683
  %v1850 = vunpack.c.h.b16 %v1683
  %v1851 = vunpack.c.l.b16 %v1684
  %v1852 = vunpack.c.h.b16 %v1684
  %v1853 = vunpack.c.l.b16 %v1685
  %v1854 = vunpack.c.h.b16 %v1685
  %v1855 = vunpack.c.l.b16 %v1686
  %v1856 = vunpack.c.h.b16 %v1686
  %v1857 = vunpack.c.l.b16 %v1687
  %v1858 = vunpack.c.h.b16 %v1687
  %v1859 = vunpack.c.l.b16 %v1688
  %v1860 = vunpack.c.h.b16 %v1688
  %v1861 = vunpack.c.l.b16 %v1689
  %v1862 = vunpack.c.h.b16 %v1689
  %v1863 = vunpack.c.l.b16 %v1690
  %v1864 = vunpack.c.h.b16 %v1690
  %v1865 = vunpack.c.l.b16 %v1691
  %v1866 = vunpack.c.h.b16 %v1691
  %v1867 = vunpack.c.l.b16 %v1692
  %v1868 = vunpack.c.h.b16 %v1692
  %v1869 = vunpack.c.l.b16 %v1693
  %v1870 = vunpack.c.h.b16 %v1693
  %v1871 = vunpack.c.l.b16 %v1694
  %v1872 = vunpack.c.h.b16 %v1694
  %v1873 = vunpack.c.l.b16 %v1695
  %v1874 = vunpack.c.h.b16 %v1695
  %v1875 = vunpack.c.l.b16 %v1696
  %v1876 = vunpack.c.h.b16 %v1696
  %v1877 = vunpack.c.l.b16 %v1697
  %v1878 = vunpack.c.h.b16 %v1697
  %v1879 = vunpack.c.l.b16 %v1698
  %v1880 = vunpack.c.h.b16 %v1698
  %v1881 = vunpack.c.l.b16 %v1699
  %v1882 = vunpack.c.h.b16 %v1699
  %v1883 = vunpack.c.l.b16 %v1700
  %v1884 = vunpack.c.h.b16 %v1700
  %v1885 = vunpack.c.l.b16 %v1701
  %v1886 = vunpack.c.h.b16 %v1701
  %v1887 = vunpack.c.l.b16 %v1702
  %v1888 = vunpack.c.h.b16 %v1702
  %v1889 = vunpack.c.l.b16 %v1703
  %v1890 = vunpack.c.h.b16 %v1703
  %v1891 = vunpack.c.l.b16 %v1704
  %v1892 = vunpack.c.h.b16 %v1704
  %v1893 = vunpack.c.l.b16 %v1705
  %v1894 = vunpack.c.h.b16 %v1705
  %v1895 = vpack.c.b16 %v1771, %v1769
  %v1896 = vpack.c.b16 %v1772, %v1770
  %v1897 = vpack.c.b16 %v1775, %v1773
  %v1898 = vpack.c.b16 %v1776, %v1774
  %v1899 = vpack.c.b16 %v1779, %v1777
  %v1900 = vpack.c.b16 %v1780, %v1778
  %v1901 = vpack.c.b16 %v1783, %v1781
  %v1902 = vpack.c.b16 %v1784, %v1782
  %v1903 = vpack.c.b16 %v1787, %v1785
  %v1904 = vpack.c.b16 %v1788, %v1786
  %v1905 = vpack.c.b16 %v1791, %v1789
  %v1906 = vpack.c.b16 %v1792, %v1790
  %v1907 = vpack.c.b16 %v1795, %v1793
  %v1908 = vpack.c.b16 %v1796, %v1794
  %v1909 = vpack.c.b16 %v1799, %v1797
  %v1910 = vpack.c.b16 %v1800, %v1798
  %v1911 = vpack.c.b16 %v1803, %v1801
  %v1912 = vpack.c.b16 %v1804, %v1802
  %v1913 = vpack.c.b16 %v1807, %v1805
  %v1914 = vpack.c.b16 %v1808, %v1806
  %v1915 = vpack.c.b16 %v1811, %v1809
  %v1916 = vpack.c.b16 %v1812, %v1810
  %v1917 = vpack.c.b16 %v1815, %v1813
  %v1918 = vpack.c.b16 %v1816, %v1814
  %v1919 = vpack.c.b16 %v1819, %v1817
  %v1920 = vpack.c.b16 %v1820, %v1818
  %v1921 = vpack.c.b16 %v1823, %v1821
  %v1922 = vpack.c.b16 %v1824, %v1822
  %v1923 = vpack.c.b16 %v1827, %v1825
  %v1924 = vpack.c.b16 %v1828, %v1826
  %v1925 = vpack.c.b16 %v1831, %v1829
  %v1926 = vpack.c.b16 %v1832, %v1830
  %v1927 = vpack.c.b16 %v1835, %v1833
  %v1928 = vpack.c.b16 %v1836, %v1834
  %v1929 = vpack.c.b16 %v1839, %v1837
  %v1930 = vpack.c.b16 %v1840, %v1838
  %v1931 = vpack.c.b16 %v1843, %v1841
  %v1932 = vpack.c.b16 %v1844, %v1842
  %v1933 = vpack.c.b16 %v1847, %v1845
  %v1934 = vpack.c.b16 %v1848, %v1846
  %v1935 = vpack.c.b16 %v1851, %v1849
  %v1936 = vpack.c.b16 %v1852, %v1850
  %v1937 = vpack.c.b16 %v1855, %v1853
  %v1938 = vpack.c.b16 %v1856, %v1854
  %v1939 = vpack.c.b16 %v1859, %v1857
  %v1940 = vpack.c.b16 %v1860, %v1858
  %v1941 = vpack.c.b16 %v1863, %v1861
  %v1942 = vpack.c.b16 %v1864, %v1862
  %v1943 = vpack.c.b16 %v1867, %v1865
  %v1944 = vpack.c.b16 %v1868, %v1866
  %v1945 = vpack.c.b16 %v1871, %v1869
  %v1946 = vpack.c.b16 %v1872, %v1870
  %v1947 = vpack.c.b16 %v1875, %v1873
  %v1948 = vpack.c.b16 %v1876, %v1874
  %v1949 = vpack.c.b16 %v1879, %v1877
  %v1950 = vpack.c.b16 %v1880, %v1878
  %v1951 = vpack.c.b16 %v1883, %v1881
  %v1952 = vpack.c.b16 %v1884, %v1882
  %v1953 = vpack.c.b16 %v1887, %v1885
  %v1954 = vpack.c.b16 %v1888, %v1886
  %v1955 = vpack.c.b16 %v1891, %v1889
  %v1956 = vpack.c.b16 %v1892, %v1890
  %v1957 = vpack.c.b16 %v1893, %v1893
  %v1958 = vpack.c.b16 %v1894, %v1894
  %vm2021 = vcmask 949248
  %v2023 = vsel %vm2021, %v1642, 0
  %vm2025 = vcmask 1041408
  %v2027 = vsel %vm2025, %v1957, 0
  %v2030 = vsel %vm2025, %v1958, 0
  %2032 = vmatpush.bf16.msra.mxu0 %v1909
  %2033 = vmatpush.bf16.msra.mxu0 %v1907
  %2034 = vmatpush.bf16.msra.mxu0 %v1905
  %2035 = vmatpush.bf16.msra.mxu0 %v1903
  %2036 = vmatpush.bf16.msra.mxu0 %v1901
  %2037 = vmatpush.bf16.msra.mxu0 %v1899
  %2038 = vmatpush.bf16.msra.mxu0 %v1897
  %2039 = vmatpush.bf16.msra.mxu0 %v1895
  %2040 = vmatmul.bf16.gmra.mxu0 %v1639
  %v2041 = vpop.f32.mrf.mxu0
  %v2042 = vadd.f32 0.0, %v2041
  %v2043 = vpop.f32.mrf.mxu0
  %2044 = vdwg.mxu0
  %2045 = vmatpush.bf16.msra.mxu0 %v1925
  %2046 = vmatpush.bf16.msra.mxu0 %v1923
  %2047 = vmatpush.bf16.msra.mxu0 %v1921
  %2048 = vmatpush.bf16.msra.mxu0 %v1919
  %2049 = vmatpush.bf16.msra.mxu0 %v1917
  %2050 = vmatpush.bf16.msra.mxu0 %v1915
  %2051 = vmatpush.bf16.msra.mxu0 %v1913
  %2052 = vmatpush.bf16.msra.mxu0 %v1911
  %2053 = vmatmul.bf16.gmra.mxu0 %v1640
  %v2054 = vpop.f32.mrf.mxu0
  %v2055 = vadd.f32 %v2042, %v2054
  %v2056 = vpop.f32.mrf.mxu0
  %2057 = vdwg.mxu0
  %2058 = vmatpush.bf16.msra.mxu0 %v1941
  %2059 = vmatpush.bf16.msra.mxu0 %v1939
  %2060 = vmatpush.bf16.msra.mxu0 %v1937
  %2061 = vmatpush.bf16.msra.mxu0 %v1935
  %2062 = vmatpush.bf16.msra.mxu0 %v1933
  %2063 = vmatpush.bf16.msra.mxu0 %v1931
  %2064 = vmatpush.bf16.msra.mxu0 %v1929
  %2065 = vmatpush.bf16.msra.mxu0 %v1927
  %2066 = vmatmul.bf16.gmra.mxu0 %v1641
  %v2067 = vpop.f32.mrf.mxu0
  %v2068 = vadd.f32 %v2055, %v2067
  %v2069 = vpop.f32.mrf.mxu0
  %2070 = vdwg.mxu0
  %2071 = vmatpush.bf16.msra.mxu0 %v2027
  %2072 = vmatpush.bf16.msra.mxu0 %v1955
  %2073 = vmatpush.bf16.msra.mxu0 %v1953
  %2074 = vmatpush.bf16.msra.mxu0 %v1951
  %2075 = vmatpush.bf16.msra.mxu0 %v1949
  %2076 = vmatpush.bf16.msra.mxu0 %v1947
  %2077 = vmatpush.bf16.msra.mxu0 %v1945
  %2078 = vmatpush.bf16.msra.mxu0 %v1943
  %2079 = vmatmul.bf16.gmra.mxu0 %v2023
  %v2080 = vpop.f32.mrf.mxu0
  %v2081 = vadd.f32 %v2068, %v2080
  %v2082 = vpop.f32.mrf.mxu0
  %2083 = vdwg.mxu0
  %2084 = vmatpush.bf16.msra.mxu0 %v1910
  %2085 = vmatpush.bf16.msra.mxu0 %v1908
  %2086 = vmatpush.bf16.msra.mxu0 %v1906
  %2087 = vmatpush.bf16.msra.mxu0 %v1904
  %2088 = vmatpush.bf16.msra.mxu0 %v1902
  %2089 = vmatpush.bf16.msra.mxu0 %v1900
  %2090 = vmatpush.bf16.msra.mxu0 %v1898
  %2091 = vmatpush.bf16.msra.mxu0 %v1896
  %2092 = vmatmul.bf16.gmra.mxu0 %v1639
  %v2093 = vpop.f32.mrf.mxu0
  %v2094 = vadd.f32 0.0, %v2093
  %v2095 = vpop.f32.mrf.mxu0
  %2096 = vdwg.mxu0
  %2097 = vmatpush.bf16.msra.mxu0 %v1926
  %2098 = vmatpush.bf16.msra.mxu0 %v1924
  %2099 = vmatpush.bf16.msra.mxu0 %v1922
  %2100 = vmatpush.bf16.msra.mxu0 %v1920
  %2101 = vmatpush.bf16.msra.mxu0 %v1918
  %2102 = vmatpush.bf16.msra.mxu0 %v1916
  %2103 = vmatpush.bf16.msra.mxu0 %v1914
  %2104 = vmatpush.bf16.msra.mxu0 %v1912
  %2105 = vmatmul.bf16.gmra.mxu0 %v1640
  %v2106 = vpop.f32.mrf.mxu0
  %v2107 = vadd.f32 %v2094, %v2106
  %v2108 = vpop.f32.mrf.mxu0
  %2109 = vdwg.mxu0
  %2110 = vmatpush.bf16.msra.mxu0 %v1942
  %2111 = vmatpush.bf16.msra.mxu0 %v1940
  %2112 = vmatpush.bf16.msra.mxu0 %v1938
  %2113 = vmatpush.bf16.msra.mxu0 %v1936
  %2114 = vmatpush.bf16.msra.mxu0 %v1934
  %2115 = vmatpush.bf16.msra.mxu0 %v1932
  %2116 = vmatpush.bf16.msra.mxu0 %v1930
  %2117 = vmatpush.bf16.msra.mxu0 %v1928
  %2118 = vmatmul.bf16.gmra.mxu0 %v1641
  %v2119 = vpop.f32.mrf.mxu0
  %v2120 = vadd.f32 %v2107, %v2119
  %v2121 = vpop.f32.mrf.mxu0
  %2122 = vdwg.mxu0
  %2123 = vmatpush.bf16.msra.mxu0 %v2030
  %2124 = vmatpush.bf16.msra.mxu0 %v1956
  %2125 = vmatpush.bf16.msra.mxu0 %v1954
  %2126 = vmatpush.bf16.msra.mxu0 %v1952
  %2127 = vmatpush.bf16.msra.mxu0 %v1950
  %2128 = vmatpush.bf16.msra.mxu0 %v1948
  %2129 = vmatpush.bf16.msra.mxu0 %v1946
  %2130 = vmatpush.bf16.msra.mxu0 %v1944
  %2131 = vmatmul.bf16.gmra.mxu0 %v2023
  %v2132 = vpop.f32.mrf.mxu0
  %v2133 = vadd.f32 %v2120, %v2132
  %v2134 = vpop.f32.mrf.mxu0
  %2135 = vdwg.mxu0
  %v2136 = vld [vmem:[%s4] sm:$0x1]
  %v2138 = vperm.slane %v2136, 0
  %v2140 = vadd.f32 %v2081, %v2138
  %v2141 = vtanh.pop %v2140
  %v2142 = vld [vmem:[%s5] sm:$0x1]
  %v2144 = vperm.slane %v2142, 0
  %v2146 = vmul.f32 %v2141, %v2144
  %vm2147 = vcmask 1045504
  %v2148 = vsel %vm2147, %v2146, 0.0
  %2149 = vadd.xlane.f32.xlu0 %v2148
  %v2150 = vpop.xlane.xlu0 %2149
  %v2151 = vld [vmem:[#allocation2] sm:$0x1]
  %v2153 = vperm.slane %v2151, 0
  %v2155 = vadd.f32 %v2150, %v2153
  %2157 = vrot.lane.b32.xlu0 %v2133, 1
  %v2158 = vpop.permute.xlu0 %2157
  %vm2160 = vcmask 7168
  %v2161 = vsel %vm2160, %v2155, %v2158
  %vm2162 = vcmask 39936
  %v2163 = vsel %vm2162, %v2161, 0.0
  %vm2164 = vcmask 62464
  %2165 = vst.msk [vmem:[%s7] sm:$0x3f] %vm2164, %v2163
  // Predicated region
  $region30: #{additive_forward.6} parent=0 // pred_check
    _
  $region31: #{additive_forward.6} parent=0 // pred_check_branch
    %2167 = sbr.rel (0) target = $region33
  $region32: #{additive_forward.6} parent=0 // pred_region
    _
  $region33: #{additive_forward.6} parent=0 // pred_fallthru
    _
  // Predicated region
  $region34: #{additive_forward.6} parent=0 // pred_check
    _
  $region35: #{additive_forward.6} parent=0 // pred_check_branch
    %2169 = sbr.rel (0) target = $region37
  $region36: #{additive_forward.6} parent=0 // pred_region
    _
  $region37: #{additive_forward.6} parent=0 // pred_fallthru
    _

</llo_original>
